<compile_context>
chip_gen: v6e
topology: v6e:2x2x1
jax: 0.10.0
libtpu: 0.0.40
codegen_flags: <defaults>
</compile_context>

<pallas_src>
import jax
import jax.numpy as jnp
from jax.experimental import pallas as pl
from jax.experimental.pallas import tpu as pltpu

EPS = 1e-5
LANES = 128


def _round_up(x, m):
    return (x + m - 1) // m * m


# ---------------------------------------------------------------------------
# Shared in-kernel helpers (traced inline; loops are tiny and unrolled).
# ---------------------------------------------------------------------------
def _store_padded(pad_scr, img_bf16, H, W, Cp):
    """Write a zero-halo (H+2, W+2, Cp) bf16 image into VMEM with aligned row stores."""
    zcol = jnp.zeros((H, 1, Cp), jnp.bfloat16)
    zrow = jnp.zeros((1, W + 2, Cp), jnp.bfloat16)
    pad_scr[0:1, :, :] = zrow                    # top halo row
    pad_scr[H + 1:H + 2, :, :] = zrow            # bottom halo row
    # pad W in registers -> full-width, sublane-aligned interior stores
    pad_scr[1:H + 1, :, :] = jnp.concatenate([zcol, img_bf16, zcol], axis=1)


def _conv3x3(pad_scr, patch_scr, w_ref, b_ref, H, W, Cp):
    """3x3 conv via K-chunked im2col: 3 accumulated bf16 MXU dots, f32 accumulate."""
    HW = H * W
    acc = None
    for r in range(3):
        for c in range(3):
            patch_scr[:, c * Cp:(c + 1) * Cp] = (
                pad_scr[r:r + H, c:c + W, :].reshape(HW, Cp))
        d = jnp.dot(patch_scr[...], w_ref[r],
                    preferred_element_type=jnp.float32)
        acc = d if acc is None else acc + d
    return acc + b_ref[...]                      # (H*W, Cp) f32


def _emit_stats(st_ref, y):
    s = jnp.sum(y, axis=0, keepdims=True)        # (1, Cp)
    ss = jnp.sum(y * y, axis=0, keepdims=True)   # (1, Cp)
    st_ref[...] = jnp.concatenate([s, ss], axis=0).reshape(1, 2, -1)


# ---------------------------------------------------------------------------
# Kernel A: pad x in VMEM, conv1 (+bias) as bf16 im2col matmul, per-image
#           per-channel partial sum / sum-of-squares (global BN1 statistics).
# ---------------------------------------------------------------------------
def _conv_stats_kernel(x_ref, w_ref, b_ref, y_ref, st_ref, pad_scr, patch_scr):
    _, H, W, Cp = x_ref.shape
    _store_padded(pad_scr, x_ref[0].astype(jnp.bfloat16), H, W, Cp)
    y = _conv3x3(pad_scr, patch_scr, w_ref, b_ref, H, W, Cp)
    _emit_stats(st_ref, y)
    y_ref[...] = y.reshape(1, H, W, Cp).astype(y_ref.dtype)


# ---------------------------------------------------------------------------
# Kernel B: fused BN1 (scale/shift) + PReLU in f32, re-pad in VMEM, conv2
#           (+bias) as bf16 im2col matmul, partial BN2 statistics.
# ---------------------------------------------------------------------------
def _bn_prelu_conv_stats_kernel(y1_ref, sc_ref, sh_ref, alpha_ref, w_ref, b_ref,
                                z_ref, st_ref, pad_scr, patch_scr):
    _, H, W, Cp = y1_ref.shape
    alpha = alpha_ref[0, 0]                                  # SMEM scalar

    a = y1_ref[0].astype(jnp.float32) * sc_ref[...] + sh_ref[...]   # fused BN1
    a = jnp.where(a > 0, a, alpha * a)                               # PReLU
    _store_padded(pad_scr, a.astype(jnp.bfloat16), H, W, Cp)

    z = _conv3x3(pad_scr, patch_scr, w_ref, b_ref, H, W, Cp)
    _emit_stats(st_ref, z)
    z_ref[...] = z.reshape(1, H, W, Cp).astype(z_ref.dtype)


# ---------------------------------------------------------------------------
# Kernel C: fused BN2 (scale/shift) + skip connection (row-tiled, streaming).
# ---------------------------------------------------------------------------
def _bn_skip_kernel(x_ref, z_ref, sc_ref, sh_ref, out_ref):
    out_ref[...] = (x_ref[...]
                    + z_ref[...].astype(jnp.float32) * sc_ref[...]
                    + sh_ref[...])


# ---------------------------------------------------------------------------
# Wrapper
# ---------------------------------------------------------------------------
def _fused_bn_coeffs(stats, gamma, beta, count):
    """stats: (N, 2, Cp) partial (sum, sumsq) -> per-channel scale/shift."""
    s = jnp.sum(stats[:, 0, :], axis=0)
    ss = jnp.sum(stats[:, 1, :], axis=0)
    mean = s / count
    var = jnp.maximum(ss / count - mean * mean, 0.0)         # biased variance
    scale = gamma * jax.lax.rsqrt(var + EPS)
    shift = beta - mean * scale
    return scale.reshape(1, -1), shift.reshape(1, -1)


def residual_block(x_nhwc, params):
    """x_nhwc: (N, H, W, C) float32.  params: dict of conv/bn/prelu params."""
    N, H, W, C = x_nhwc.shape
    Cp = _round_up(max(C, LANES), LANES)                     # lane-dense channel axis
    pc = Cp - C
    f32, bf16 = jnp.float32, jnp.bfloat16

    def pad_c(v):                                            # (C,) -> (1, Cp) f32
        return jnp.pad(v.astype(f32), (0, pc)).reshape(1, Cp)

    def pad_w(w):                                            # (3,3,C,C) HWIO -> (3, 3*Cp, Cp) bf16
        wp = jnp.pad(w.astype(f32), ((0, 0), (0, 0), (0, pc), (0, pc)))
        return wp.reshape(3, 3 * Cp, Cp).astype(bf16)

    x_cp = jnp.pad(x_nhwc.astype(f32), ((0, 0), (0, 0), (0, 0), (0, pc)))

    w1, b1 = pad_w(params["w1"]), pad_c(params["b1"])
    w2, b2 = pad_w(params["w2"]), pad_c(params["b2"])
    g1 = jnp.pad(params["g1"].astype(f32), (0, pc))
    be1 = jnp.pad(params["be1"].astype(f32), (0, pc))
    g2 = jnp.pad(params["g2"].astype(f32), (0, pc))
    be2 = jnp.pad(params["be2"].astype(f32), (0, pc))
    alpha = jnp.asarray(params["alpha"], f32).reshape(1, 1)

    VMEM_LIMIT = 40 * 1024 * 1024      # safe on v7x (64 MiB physical), fine on v5e/v6e
    cparams1 = pltpu.CompilerParams(
        dimension_semantics=("parallel",), vmem_limit_bytes=VMEM_LIMIT)

    img = lambda: pl.BlockSpec((1, H, W, Cp), lambda n: (n, 0, 0, 0))
    row = lambda: pl.BlockSpec((1, Cp), lambda n: (0, 0))
    wspec = lambda: pl.BlockSpec((3, 3 * Cp, Cp), lambda n: (0, 0, 0))
    stspec = lambda: pl.BlockSpec((1, 2, Cp), lambda n: (n, 0, 0))
    conv_scratch = lambda: [pltpu.VMEM((H + 2, W + 2, Cp), bf16),    # halo-padded image
                            pltpu.VMEM((H * W, 3 * Cp), bf16)]       # 3-tap im2col chunk

    # ---- phase 1: conv1 + BN1 partial stats --------------------------------
    grid_a = pltpu.PrefetchScalarGridSpec(
        num_scalar_prefetch=0, grid=(N,),
        in_specs=[img(), wspec(), row()],
        out_specs=[img(), stspec()],
        scratch_shapes=conv_scratch(),
    )
    y1, st1 = pl.pallas_call(
        _conv_stats_kernel,
        grid_spec=grid_a,
        out_shape=(jax.ShapeDtypeStruct((N, H, W, Cp), bf16),
                   jax.ShapeDtypeStruct((N, 2, Cp), f32)),
        compiler_params=cparams1,
    )(x_cp, w1, b1)

    sc1, sh1 = _fused_bn_coeffs(st1, g1, be1, N * H * W)

    # ---- phase 2: BN1 apply + PReLU + conv2 + BN2 partial stats ------------
    grid_b = pltpu.PrefetchScalarGridSpec(
        num_scalar_prefetch=0, grid=(N,),
        in_specs=[
            img(), row(), row(),
            pl.BlockSpec(memory_space=pltpu.MemorySpace.SMEM),       # PReLU alpha
            wspec(), row(),
        ],
        out_specs=[img(), stspec()],
        scratch_shapes=conv_scratch(),
    )
    z2, st2 = pl.pallas_call(
        _bn_prelu_conv_stats_kernel,
        grid_spec=grid_b,
        out_shape=(jax.ShapeDtypeStruct((N, H, W, Cp), bf16),
                   jax.ShapeDtypeStruct((N, 2, Cp), f32)),
        compiler_params=cparams1,
    )(y1, sc1, sh1, alpha, w2, b2)

    sc2, sh2 = _fused_bn_coeffs(st2, g2, be2, N * H * W)

    # ---- phase 3: BN2 apply + skip connection (row-tiled, x aliased to out) -
    TH = 8 if H % 8 == 0 else H
    nh = H // TH
    tile = lambda: pl.BlockSpec((1, TH, W, Cp), lambda n, h: (n, h, 0, 0))
    row2 = lambda: pl.BlockSpec((1, Cp), lambda n, h: (0, 0))
    grid_c = pltpu.PrefetchScalarGridSpec(
        num_scalar_prefetch=0, grid=(N, nh),
        in_specs=[tile(), tile(), row2(), row2()],
        out_specs=[tile()],
    )
    out = pl.pallas_call(
        _bn_skip_kernel,
        grid_spec=grid_c,
        out_shape=(jax.ShapeDtypeStruct((N, H, W, Cp), f32),),
        input_output_aliases={0: 0},                       # write into x_cp's buffer
        compiler_params=pltpu.CompilerParams(
            dimension_semantics=("parallel", "parallel"),
            vmem_limit_bytes=VMEM_LIMIT),
    )(x_cp, z2, sc2, sh2)[0]

    return out[..., :C]


# ---------------------------------------------------------------- reference --
def _reference(x_nhwc, p):
    def conv(x, w, b):
        y = jax.lax.conv_general_dilated(
            x, w, window_strides=(1, 1), padding="SAME",
            dimension_numbers=("NHWC", "HWIO", "NHWC"))
        return y + b

    def bn(y, g, be):
        mean = y.mean(axis=(0, 1, 2), keepdims=True)
        var = ((y - mean) ** 2).mean(axis=(0, 1, 2), keepdims=True)
        return (y - mean) / jnp.sqrt(var + EPS) * g + be

    r = conv(x_nhwc, p["w1"], p["b1"])
    r = bn(r, p["g1"], p["be1"])
    r = jnp.where(r > 0, r, p["alpha"] * r)
    r = conv(r, p["w2"], p["b2"])
    r = bn(r, p["g2"], p["be2"])
    return x_nhwc + r


if __name__ == "__main__":
    N, C, H, W = 2, 4, 16, 16   # PyTorch input would be NCHW (2, 4, 16, 16)

    key = jax.random.PRNGKey(0)
    ks = jax.random.split(key, 9)

    fan_in = C * 3 * 3
    scale = 1.0 / jnp.sqrt(fan_in)
    params = {
        "w1": jax.random.uniform(ks[0], (3, 3, C, C), jnp.float32, -scale, scale),
        "b1": jax.random.uniform(ks[1], (C,), jnp.float32, -scale, scale),
        "g1": 1.0 + 0.1 * jax.random.normal(ks[2], (C,), jnp.float32),
        "be1": 0.1 * jax.random.normal(ks[3], (C,), jnp.float32),
        "alpha": jnp.asarray(0.25, jnp.float32),            # PReLU default init
        "w2": jax.random.uniform(ks[4], (3, 3, C, C), jnp.float32, -scale, scale),
        "b2": jax.random.uniform(ks[5], (C,), jnp.float32, -scale, scale),
        "g2": 1.0 + 0.1 * jax.random.normal(ks[6], (C,), jnp.float32),
        "be2": 0.1 * jax.random.normal(ks[7], (C,), jnp.float32),
    }

    # input: PyTorch NCHW -> NHWC layout
    x_nchw = jax.random.normal(ks[8], (N, C, H, W), jnp.float32)
    x_nhwc = jnp.transpose(x_nchw, (0, 2, 3, 1))

    out = jax.jit(residual_block)(x_nhwc, params)
    out = jax.block_until_ready(out)

    ref = _reference(x_nhwc, params)
    assert out.shape == (N, H, W, C)
    # bf16 MXU operands + bf16 interphase intermediates -> bf16-appropriate tolerance.
    assert jnp.allclose(out, ref, atol=3e-2, rtol=3e-2), "mismatch vs JAX reference"

    print("KERNEL_OK")
</pallas_src>

<mosaic_0001>
module attributes {stable_mosaic.version = 11 : i64} {
  func.func @_bn_prelu_conv_stats_kernel(%arg0: i32, %arg1: memref<1x16x16x128xbf16, #tpu.memory_space<vmem>>, %arg2: memref<1x128xf32, #tpu.memory_space<vmem>>, %arg3: memref<1x128xf32, #tpu.memory_space<vmem>>, %arg4: memref<1x1xf32, #tpu.memory_space<smem>>, %arg5: memref<3x384x128xbf16, #tpu.memory_space<vmem>>, %arg6: memref<1x128xf32, #tpu.memory_space<vmem>>, %arg7: memref<1x16x16x128xbf16, #tpu.memory_space<vmem>>, %arg8: memref<1x2x128xf32, #tpu.memory_space<vmem>>, %arg9: memref<18x18x128xbf16, #tpu.memory_space<vmem>>, %arg10: memref<256x384xbf16, #tpu.memory_space<vmem>>) attributes {dimension_semantics = [#tpu.dimension_semantics<parallel>], iteration_bounds = array<i64: 2>, scalar_prefetch = 0 : i64, scratch_operands = 2 : i64, tpu.core_type = #tpu.core_type<tc>, window_params = [{transform_indices = @transform_0, window_bounds = array<i64: 1, 16, 16, 128>}, {pipeline_mode = #tpu.pipeline_mode<synchronous>, transform_indices = @transform_1, window_bounds = array<i64: 1, 128>}, {pipeline_mode = #tpu.pipeline_mode<synchronous>, transform_indices = @transform_2, window_bounds = array<i64: 1, 128>}, {transform_indices = @transform_3, window_bounds = array<i64: 1, 1>}, {pipeline_mode = #tpu.pipeline_mode<synchronous>, transform_indices = @transform_4, window_bounds = array<i64: 3, 384, 128>}, {pipeline_mode = #tpu.pipeline_mode<synchronous>, transform_indices = @transform_5, window_bounds = array<i64: 1, 128>}, {transform_indices = @transform_6, window_bounds = array<i64: 1, 16, 16, 128>}, {transform_indices = @transform_7, window_bounds = array<i64: 1, 2, 128>}]} {
    %c0 = arith.constant 0 : index
    %c0_0 = arith.constant 0 : index
    %0 = memref.load %arg4[%c0, %c0_0] : memref<1x1xf32, #tpu.memory_space<smem>>
    %c0_1 = arith.constant 0 : index
    %c0_2 = arith.constant 0 : index
    %c0_3 = arith.constant 0 : index
    %c0_4 = arith.constant 0 : index
    %1 = vector.load %arg1[%c0_1, %c0_2, %c0_3, %c0_4] : memref<1x16x16x128xbf16, #tpu.memory_space<vmem>>, vector<1x16x16x128xbf16>
    %2 = vector.shape_cast %1 : vector<1x16x16x128xbf16> to vector<16x16x128xbf16>
    %3 = arith.extf %2 : vector<16x16x128xbf16> to vector<16x16x128xf32>
    %c0_5 = arith.constant 0 : index
    %c0_6 = arith.constant 0 : index
    %4 = vector.load %arg2[%c0_5, %c0_6] : memref<1x128xf32, #tpu.memory_space<vmem>>, vector<1x128xf32>
    %5 = vector.shape_cast %4 : vector<1x128xf32> to vector<1x1x128xf32>
    %6 = vector.broadcast %5 : vector<1x1x128xf32> to vector<16x16x128xf32>
    %7 = arith.mulf %3, %6 : vector<16x16x128xf32>
    %c0_7 = arith.constant 0 : index
    %c0_8 = arith.constant 0 : index
    %8 = vector.load %arg3[%c0_7, %c0_8] : memref<1x128xf32, #tpu.memory_space<vmem>>, vector<1x128xf32>
    %9 = vector.shape_cast %8 : vector<1x128xf32> to vector<1x1x128xf32>
    %10 = vector.broadcast %9 : vector<1x1x128xf32> to vector<16x16x128xf32>
    %11 = arith.addf %7, %10 : vector<16x16x128xf32>
    %cst = arith.constant 0.000000e+00 : f32
    %12 = vector.broadcast %cst : f32 to vector<16x16x128xf32>
    %13 = arith.cmpf ogt, %11, %12 : vector<16x16x128xf32>
    %14 = vector.broadcast %0 : f32 to vector<16x16x128xf32>
    %15 = arith.mulf %14, %11 : vector<16x16x128xf32>
    %16 = arith.select %13, %11, %15 : vector<16x16x128xi1>, vector<16x16x128xf32>
    %17 = arith.truncf %16 : vector<16x16x128xf32> to vector<16x16x128xbf16>
    %cst_9 = arith.constant 0.000000e+00 : bf16
    %18 = vector.broadcast %cst_9 : bf16 to vector<16x1x128xbf16>
    %cst_10 = arith.constant 0.000000e+00 : bf16
    %19 = vector.broadcast %cst_10 : bf16 to vector<1x18x128xbf16>
    %c0_11 = arith.constant 0 : index
    %c0_12 = arith.constant 0 : index
    %c0_13 = arith.constant 0 : index
    %20 = vector.load %arg9[%c0_11, %c0_12, %c0_13] : memref<18x18x128xbf16, #tpu.memory_space<vmem>>, vector<1x18x128xbf16>
    tpu.vector_store %arg9[%c0_11, %c0_12, %c0_13], %19 {strides = array<i32>} : memref<18x18x128xbf16, #tpu.memory_space<vmem>>, vector<1x18x128xbf16>,
    %c17 = arith.constant 17 : index
    %c0_14 = arith.constant 0 : index
    %c0_15 = arith.constant 0 : index
    %21 = vector.load %arg9[%c17, %c0_14, %c0_15] : memref<18x18x128xbf16, #tpu.memory_space<vmem>>, vector<1x18x128xbf16>
    tpu.vector_store %arg9[%c17, %c0_14, %c0_15], %19 {strides = array<i32>} : memref<18x18x128xbf16, #tpu.memory_space<vmem>>, vector<1x18x128xbf16>,
    %22 = tpu.concatenate %18, %17, %18 in 1 : vector<16x1x128xbf16>, vector<16x16x128xbf16>, vector<16x1x128xbf16> -> vector<16x18x128xbf16>
    %c1 = arith.constant 1 : index
    %c0_16 = arith.constant 0 : index
    %c0_17 = arith.constant 0 : index
    %23 = vector.load %arg9[%c1, %c0_16, %c0_17] : memref<18x18x128xbf16, #tpu.memory_space<vmem>>, vector<16x18x128xbf16>
    tpu.vector_store %arg9[%c1, %c0_16, %c0_17], %22 {strides = array<i32>} : memref<18x18x128xbf16, #tpu.memory_space<vmem>>, vector<16x18x128xbf16>,
    %c0_18 = arith.constant 0 : index
    %c0_19 = arith.constant 0 : index
    %c0_20 = arith.constant 0 : index
    %24 = vector.load %arg9[%c0_18, %c0_19, %c0_20] : memref<18x18x128xbf16, #tpu.memory_space<vmem>>, vector<16x16x128xbf16>
    %25 = vector.shape_cast %24 : vector<16x16x128xbf16> to vector<256x128xbf16>
    %c0_21 = arith.constant 0 : index
    %c0_22 = arith.constant 0 : index
    %26 = vector.load %arg10[%c0_21, %c0_22] : memref<256x384xbf16, #tpu.memory_space<vmem>>, vector<256x128xbf16>
    tpu.vector_store %arg10[%c0_21, %c0_22], %25 {strides = array<i32>} : memref<256x384xbf16, #tpu.memory_space<vmem>>, vector<256x128xbf16>,
    %c0_23 = arith.constant 0 : index
    %c1_24 = arith.constant 1 : index
    %c0_25 = arith.constant 0 : index
    %27 = vector.load %arg9[%c0_23, %c1_24, %c0_25] : memref<18x18x128xbf16, #tpu.memory_space<vmem>>, vector<16x16x128xbf16>
    %28 = vector.shape_cast %27 : vector<16x16x128xbf16> to vector<256x128xbf16>
    %c0_26 = arith.constant 0 : index
    %c128 = arith.constant 128 : index
    %29 = vector.load %arg10[%c0_26, %c128] : memref<256x384xbf16, #tpu.memory_space<vmem>>, vector<256x128xbf16>
    tpu.vector_store %arg10[%c0_26, %c128], %28 {strides = array<i32>} : memref<256x384xbf16, #tpu.memory_space<vmem>>, vector<256x128xbf16>,
    %c0_27 = arith.constant 0 : index
    %c2 = arith.constant 2 : index
    %c0_28 = arith.constant 0 : index
    %30 = vector.load %arg9[%c0_27, %c2, %c0_28] : memref<18x18x128xbf16, #tpu.memory_space<vmem>>, vector<16x16x128xbf16>
    %31 = vector.shape_cast %30 : vector<16x16x128xbf16> to vector<256x128xbf16>
    %c0_29 = arith.constant 0 : index
    %c256 = arith.constant 256 : index
    %32 = vector.load %arg10[%c0_29, %c256] : memref<256x384xbf16, #tpu.memory_space<vmem>>, vector<256x128xbf16>
    tpu.vector_store %arg10[%c0_29, %c256], %31 {strides = array<i32>} : memref<256x384xbf16, #tpu.memory_space<vmem>>, vector<256x128xbf16>,
    %c0_30 = arith.constant 0 : index
    %c0_31 = arith.constant 0 : index
    %33 = vector.load %arg10[%c0_30, %c0_31] : memref<256x384xbf16, #tpu.memory_space<vmem>>, vector<256x384xbf16>
    %c0_32 = arith.constant 0 : index
    %c0_33 = arith.constant 0 : index
    %c0_34 = arith.constant 0 : index
    %34 = vector.load %arg5[%c0_32, %c0_33, %c0_34] : memref<3x384x128xbf16, #tpu.memory_space<vmem>>, vector<1x384x128xbf16>
    %35 = vector.shape_cast %34 : vector<1x384x128xbf16> to vector<384x128xbf16>
    %cst_35 = arith.constant dense<0.000000e+00> : vector<256x128xf32>
    %36 = tpu.matmul %33, %35, %cst_35 {dimension_numbers = #tpu.dot_dimension_numbers<[1], [0], [0], [1], [0, 0, 1, 1], [], []>} : vector<256x384xbf16>, vector<384x128xbf16>, vector<256x128xf32> -> vector<256x128xf32>
    %c1_36 = arith.constant 1 : index
    %c0_37 = arith.constant 0 : index
    %c0_38 = arith.constant 0 : index
    %37 = vector.load %arg9[%c1_36, %c0_37, %c0_38] : memref<18x18x128xbf16, #tpu.memory_space<vmem>>, vector<16x16x128xbf16>
    %38 = vector.shape_cast %37 : vector<16x16x128xbf16> to vector<256x128xbf16>
    %c0_39 = arith.constant 0 : index
    %c0_40 = arith.constant 0 : index
    %39 = vector.load %arg10[%c0_39, %c0_40] : memref<256x384xbf16, #tpu.memory_space<vmem>>, vector<256x128xbf16>
    tpu.vector_store %arg10[%c0_39, %c0_40], %38 {strides = array<i32>} : memref<256x384xbf16, #tpu.memory_space<vmem>>, vector<256x128xbf16>,
    %c1_41 = arith.constant 1 : index
    %c1_42 = arith.constant 1 : index
    %c0_43 = arith.constant 0 : index
    %40 = vector.load %arg9[%c1_41, %c1_42, %c0_43] : memref<18x18x128xbf16, #tpu.memory_space<vmem>>, vector<16x16x128xbf16>
    %41 = vector.shape_cast %40 : vector<16x16x128xbf16> to vector<256x128xbf16>
    %c0_44 = arith.constant 0 : index
    %c128_45 = arith.constant 128 : index
    %42 = vector.load %arg10[%c0_44, %c128_45] : memref<256x384xbf16, #tpu.memory_space<vmem>>, vector<256x128xbf16>
    tpu.vector_store %arg10[%c0_44, %c128_45], %41 {strides = array<i32>} : memref<256x384xbf16, #tpu.memory_space<vmem>>, vector<256x128xbf16>,
    %c1_46 = arith.constant 1 : index
    %c2_47 = arith.constant 2 : index
    %c0_48 = arith.constant 0 : index
    %43 = vector.load %arg9[%c1_46, %c2_47, %c0_48] : memref<18x18x128xbf16, #tpu.memory_space<vmem>>, vector<16x16x128xbf16>
    %44 = vector.shape_cast %43 : vector<16x16x128xbf16> to vector<256x128xbf16>
    %c0_49 = arith.constant 0 : index
    %c256_50 = arith.constant 256 : index
    %45 = vector.load %arg10[%c0_49, %c256_50] : memref<256x384xbf16, #tpu.memory_space<vmem>>, vector<256x128xbf16>
    tpu.vector_store %arg10[%c0_49, %c256_50], %44 {strides = array<i32>} : memref<256x384xbf16, #tpu.memory_space<vmem>>, vector<256x128xbf16>,
    %c0_51 = arith.constant 0 : index
    %c0_52 = arith.constant 0 : index
    %46 = vector.load %arg10[%c0_51, %c0_52] : memref<256x384xbf16, #tpu.memory_space<vmem>>, vector<256x384xbf16>
    %c1_53 = arith.constant 1 : index
    %c0_54 = arith.constant 0 : index
    %c0_55 = arith.constant 0 : index
    %47 = vector.load %arg5[%c1_53, %c0_54, %c0_55] : memref<3x384x128xbf16, #tpu.memory_space<vmem>>, vector<1x384x128xbf16>
    %48 = vector.shape_cast %47 : vector<1x384x128xbf16> to vector<384x128xbf16>
    %cst_56 = arith.constant dense<0.000000e+00> : vector<256x128xf32>
    %49 = tpu.matmul %46, %48, %cst_56 {dimension_numbers = #tpu.dot_dimension_numbers<[1], [0], [0], [1], [0, 0, 1, 1], [], []>} : vector<256x384xbf16>, vector<384x128xbf16>, vector<256x128xf32> -> vector<256x128xf32>
    %50 = arith.addf %36, %49 : vector<256x128xf32>
    %c2_57 = arith.constant 2 : index
    %c0_58 = arith.constant 0 : index
    %c0_59 = arith.constant 0 : index
    %51 = vector.load %arg9[%c2_57, %c0_58, %c0_59] : memref<18x18x128xbf16, #tpu.memory_space<vmem>>, vector<16x16x128xbf16>
    %52 = vector.shape_cast %51 : vector<16x16x128xbf16> to vector<256x128xbf16>
    %c0_60 = arith.constant 0 : index
    %c0_61 = arith.constant 0 : index
    %53 = vector.load %arg10[%c0_60, %c0_61] : memref<256x384xbf16, #tpu.memory_space<vmem>>, vector<256x128xbf16>
    tpu.vector_store %arg10[%c0_60, %c0_61], %52 {strides = array<i32>} : memref<256x384xbf16, #tpu.memory_space<vmem>>, vector<256x128xbf16>,
    %c2_62 = arith.constant 2 : index
    %c1_63 = arith.constant 1 : index
    %c0_64 = arith.constant 0 : index
    %54 = vector.load %arg9[%c2_62, %c1_63, %c0_64] : memref<18x18x128xbf16, #tpu.memory_space<vmem>>, vector<16x16x128xbf16>
    %55 = vector.shape_cast %54 : vector<16x16x128xbf16> to vector<256x128xbf16>
    %c0_65 = arith.constant 0 : index
    %c128_66 = arith.constant 128 : index
    %56 = vector.load %arg10[%c0_65, %c128_66] : memref<256x384xbf16, #tpu.memory_space<vmem>>, vector<256x128xbf16>
    tpu.vector_store %arg10[%c0_65, %c128_66], %55 {strides = array<i32>} : memref<256x384xbf16, #tpu.memory_space<vmem>>, vector<256x128xbf16>,
    %c2_67 = arith.constant 2 : index
    %c2_68 = arith.constant 2 : index
    %c0_69 = arith.constant 0 : index
    %57 = vector.load %arg9[%c2_67, %c2_68, %c0_69] : memref<18x18x128xbf16, #tpu.memory_space<vmem>>, vector<16x16x128xbf16>
    %58 = vector.shape_cast %57 : vector<16x16x128xbf16> to vector<256x128xbf16>
    %c0_70 = arith.constant 0 : index
    %c256_71 = arith.constant 256 : index
    %59 = vector.load %arg10[%c0_70, %c256_71] : memref<256x384xbf16, #tpu.memory_space<vmem>>, vector<256x128xbf16>
    tpu.vector_store %arg10[%c0_70, %c256_71], %58 {strides = array<i32>} : memref<256x384xbf16, #tpu.memory_space<vmem>>, vector<256x128xbf16>,
    %c0_72 = arith.constant 0 : index
    %c0_73 = arith.constant 0 : index
    %60 = vector.load %arg10[%c0_72, %c0_73] : memref<256x384xbf16, #tpu.memory_space<vmem>>, vector<256x384xbf16>
    %c2_74 = arith.constant 2 : index
    %c0_75 = arith.constant 0 : index
    %c0_76 = arith.constant 0 : index
    %61 = vector.load %arg5[%c2_74, %c0_75, %c0_76] : memref<3x384x128xbf16, #tpu.memory_space<vmem>>, vector<1x384x128xbf16>
    %62 = vector.shape_cast %61 : vector<1x384x128xbf16> to vector<384x128xbf16>
    %cst_77 = arith.constant dense<0.000000e+00> : vector<256x128xf32>
    %63 = tpu.matmul %60, %62, %cst_77 {dimension_numbers = #tpu.dot_dimension_numbers<[1], [0], [0], [1], [0, 0, 1, 1], [], []>} : vector<256x384xbf16>, vector<384x128xbf16>, vector<256x128xf32> -> vector<256x128xf32>
    %64 = arith.addf %50, %63 : vector<256x128xf32>
    %c0_78 = arith.constant 0 : index
    %c0_79 = arith.constant 0 : index
    %65 = vector.load %arg6[%c0_78, %c0_79] : memref<1x128xf32, #tpu.memory_space<vmem>>, vector<1x128xf32>
    %66 = vector.broadcast %65 : vector<1x128xf32> to vector<256x128xf32>
    %67 = arith.addf %64, %66 : vector<256x128xf32>
    %cst_80 = arith.constant dense<0.000000e+00> : vector<128xf32>
    %68 = vector.multi_reduction <add>, %67, %cst_80 [0] : vector<256x128xf32> to vector<128xf32>
    %69 = vector.shape_cast %68 : vector<128xf32> to vector<1x128xf32>
    %70 = arith.mulf %67, %67 : vector<256x128xf32>
    %cst_81 = arith.constant dense<0.000000e+00> : vector<128xf32>
    %71 = vector.multi_reduction <add>, %70, %cst_81 [0] : vector<256x128xf32> to vector<128xf32>
    %72 = vector.shape_cast %71 : vector<128xf32> to vector<1x128xf32>
    %73 = tpu.concatenate %69, %72 in 0 : vector<1x128xf32>, vector<1x128xf32> -> vector<2x128xf32>
    %74 = vector.shape_cast %73 : vector<2x128xf32> to vector<1x2x128xf32>
    %c0_82 = arith.constant 0 : index
    %c0_83 = arith.constant 0 : index
    %c0_84 = arith.constant 0 : index
    %75 = vector.load %arg8[%c0_82, %c0_83, %c0_84] : memref<1x2x128xf32, #tpu.memory_space<vmem>>, vector<1x2x128xf32>
    tpu.vector_store %arg8[%c0_82, %c0_83, %c0_84], %74 {strides = array<i32>} : memref<1x2x128xf32, #tpu.memory_space<vmem>>, vector<1x2x128xf32>,
    %76 = vector.shape_cast %67 : vector<256x128xf32> to vector<1x16x16x128xf32>
    %77 = arith.truncf %76 : vector<1x16x16x128xf32> to vector<1x16x16x128xbf16>
    %c0_85 = arith.constant 0 : index
    %c0_86 = arith.constant 0 : index
    %c0_87 = arith.constant 0 : index
    %c0_88 = arith.constant 0 : index
    %78 = vector.load %arg7[%c0_85, %c0_86, %c0_87, %c0_88] : memref<1x16x16x128xbf16, #tpu.memory_space<vmem>>, vector<1x16x16x128xbf16>
    tpu.vector_store %arg7[%c0_85, %c0_86, %c0_87, %c0_88], %77 {strides = array<i32>} : memref<1x16x16x128xbf16, #tpu.memory_space<vmem>>, vector<1x16x16x128xbf16>,
    return
  }
  func.func @transform_0(%arg0: i32) -> (i32, i32, i32, i32) {
    %c0_i32 = arith.constant 0 : i32
    %c0_i32_0 = arith.constant 0 : i32
    %c0_i32_1 = arith.constant 0 : i32
    %c0_i32_2 = arith.constant 0 : i32
    return %arg0, %c0_i32, %c0_i32_0, %c0_i32_1 : i32, i32, i32, i32
  }
  func.func @transform_1(%arg0: i32) -> (i32, i32) {
    %c0_i32 = arith.constant 0 : i32
    %c0_i32_0 = arith.constant 0 : i32
    %c0_i32_1 = arith.constant 0 : i32
    return %c0_i32, %c0_i32_0 : i32, i32
  }
  func.func @transform_2(%arg0: i32) -> (i32, i32) {
    %c0_i32 = arith.constant 0 : i32
    %c0_i32_0 = arith.constant 0 : i32
    %c0_i32_1 = arith.constant 0 : i32
    return %c0_i32, %c0_i32_0 : i32, i32
  }
  func.func @transform_3(%arg0: i32) -> (i32, i32) {
    %c0_i32 = arith.constant 0 : i32
    %c0_i32_0 = arith.constant 0 : i32
    %c0_i32_1 = arith.constant 0 : i32
    return %c0_i32, %c0_i32_0 : i32, i32
  }
  func.func @transform_4(%arg0: i32) -> (i32, i32, i32) {
    %c0_i32 = arith.constant 0 : i32
    %c0_i32_0 = arith.constant 0 : i32
    %c0_i32_1 = arith.constant 0 : i32
    %c0_i32_2 = arith.constant 0 : i32
    return %c0_i32, %c0_i32_0, %c0_i32_1 : i32, i32, i32
  }
  func.func @transform_5(%arg0: i32) -> (i32, i32) {
    %c0_i32 = arith.constant 0 : i32
    %c0_i32_0 = arith.constant 0 : i32
    %c0_i32_1 = arith.constant 0 : i32
    return %c0_i32, %c0_i32_0 : i32, i32
  }
  func.func @transform_6(%arg0: i32) -> (i32, i32, i32, i32) {
    %c0_i32 = arith.constant 0 : i32
    %c0_i32_0 = arith.constant 0 : i32
    %c0_i32_1 = arith.constant 0 : i32
    %c0_i32_2 = arith.constant 0 : i32
    return %arg0, %c0_i32, %c0_i32_0, %c0_i32_1 : i32, i32, i32, i32
  }
  func.func @transform_7(%arg0: i32) -> (i32, i32, i32) {
    %c0_i32 = arith.constant 0 : i32
    %c0_i32_0 = arith.constant 0 : i32
    %c0_i32_1 = arith.constant 0 : i32
    return %arg0, %c0_i32, %c0_i32_0 : i32, i32, i32
  }
}

module attributes {stable_mosaic.version = 11 : i64} {
  func.func @_bn_skip_kernel(%arg0: i32, %arg1: i32, %arg2: memref<1x8x16x128xf32, #tpu.memory_space<vmem>>, %arg3: memref<1x8x16x128xbf16, #tpu.memory_space<vmem>>, %arg4: memref<1x128xf32, #tpu.memory_space<vmem>>, %arg5: memref<1x128xf32, #tpu.memory_space<vmem>>, %arg6: memref<1x8x16x128xf32, #tpu.memory_space<vmem>>) attributes {dimension_semantics = [#tpu.dimension_semantics<parallel>, #tpu.dimension_semantics<parallel>], iteration_bounds = array<i64: 2, 2>, scalar_prefetch = 0 : i64, scratch_operands = 0 : i64, tpu.core_type = #tpu.core_type<tc>, window_params = [{transform_indices = @transform_0, window_bounds = array<i64: 1, 8, 16, 128>}, {transform_indices = @transform_1, window_bounds = array<i64: 1, 8, 16, 128>}, {pipeline_mode = #tpu.pipeline_mode<synchronous>, transform_indices = @transform_2, window_bounds = array<i64: 1, 128>}, {pipeline_mode = #tpu.pipeline_mode<synchronous>, transform_indices = @transform_3, window_bounds = array<i64: 1, 128>}, {transform_indices = @transform_4, window_bounds = array<i64: 1, 8, 16, 128>}]} {
    %c0 = arith.constant 0 : index
    %c0_0 = arith.constant 0 : index
    %c0_1 = arith.constant 0 : index
    %c0_2 = arith.constant 0 : index
    %0 = vector.load %arg2[%c0, %c0_0, %c0_1, %c0_2] : memref<1x8x16x128xf32, #tpu.memory_space<vmem>>, vector<1x8x16x128xf32>
    %c0_3 = arith.constant 0 : index
    %c0_4 = arith.constant 0 : index
    %c0_5 = arith.constant 0 : index
    %c0_6 = arith.constant 0 : index
    %1 = vector.load %arg3[%c0_3, %c0_4, %c0_5, %c0_6] : memref<1x8x16x128xbf16, #tpu.memory_space<vmem>>, vector<1x8x16x128xbf16>
    %2 = arith.extf %1 : vector<1x8x16x128xbf16> to vector<1x8x16x128xf32>
    %c0_7 = arith.constant 0 : index
    %c0_8 = arith.constant 0 : index
    %3 = vector.load %arg4[%c0_7, %c0_8] : memref<1x128xf32, #tpu.memory_space<vmem>>, vector<1x128xf32>
    %4 = vector.shape_cast %3 : vector<1x128xf32> to vector<1x1x1x128xf32>
    %5 = vector.broadcast %4 : vector<1x1x1x128xf32> to vector<1x8x16x128xf32>
    %6 = arith.mulf %2, %5 : vector<1x8x16x128xf32>
    %7 = arith.addf %0, %6 : vector<1x8x16x128xf32>
    %c0_9 = arith.constant 0 : index
    %c0_10 = arith.constant 0 : index
    %8 = vector.load %arg5[%c0_9, %c0_10] : memref<1x128xf32, #tpu.memory_space<vmem>>, vector<1x128xf32>
    %9 = vector.shape_cast %8 : vector<1x128xf32> to vector<1x1x1x128xf32>
    %10 = vector.broadcast %9 : vector<1x1x1x128xf32> to vector<1x8x16x128xf32>
    %11 = arith.addf %7, %10 : vector<1x8x16x128xf32>
    %c0_11 = arith.constant 0 : index
    %c0_12 = arith.constant 0 : index
    %c0_13 = arith.constant 0 : index
    %c0_14 = arith.constant 0 : index
    %12 = vector.load %arg6[%c0_11, %c0_12, %c0_13, %c0_14] : memref<1x8x16x128xf32, #tpu.memory_space<vmem>>, vector<1x8x16x128xf32>
    tpu.vector_store %arg6[%c0_11, %c0_12, %c0_13, %c0_14], %11 {strides = array<i32>} : memref<1x8x16x128xf32, #tpu.memory_space<vmem>>, vector<1x8x16x128xf32>,
    return
  }
  func.func @transform_0(%arg0: i32, %arg1: i32) -> (i32, i32, i32, i32) {
    %c0_i32 = arith.constant 0 : i32
    %c0_i32_0 = arith.constant 0 : i32
    %c0_i32_1 = arith.constant 0 : i32
    return %arg0, %arg1, %c0_i32, %c0_i32_0 : i32, i32, i32, i32
  }
  func.func @transform_1(%arg0: i32, %arg1: i32) -> (i32, i32, i32, i32) {
    %c0_i32 = arith.constant 0 : i32
    %c0_i32_0 = arith.constant 0 : i32
    %c0_i32_1 = arith.constant 0 : i32
    return %arg0, %arg1, %c0_i32, %c0_i32_0 : i32, i32, i32, i32
  }
  func.func @transform_2(%arg0: i32, %arg1: i32) -> (i32, i32) {
    %c0_i32 = arith.constant 0 : i32
    %c0_i32_0 = arith.constant 0 : i32
    %c0_i32_1 = arith.constant 0 : i32
    return %c0_i32, %c0_i32_0 : i32, i32
  }
  func.func @transform_3(%arg0: i32, %arg1: i32) -> (i32, i32) {
    %c0_i32 = arith.constant 0 : i32
    %c0_i32_0 = arith.constant 0 : i32
    %c0_i32_1 = arith.constant 0 : i32
    return %c0_i32, %c0_i32_0 : i32, i32
  }
  func.func @transform_4(%arg0: i32, %arg1: i32) -> (i32, i32, i32, i32) {
    %c0_i32 = arith.constant 0 : i32
    %c0_i32_0 = arith.constant 0 : i32
    %c0_i32_1 = arith.constant 0 : i32
    return %arg0, %arg1, %c0_i32, %c0_i32_0 : i32, i32, i32, i32
  }
}

module attributes {stable_mosaic.version = 11 : i64} {
  func.func @_conv_stats_kernel(%arg0: i32, %arg1: memref<1x16x16x128xf32, #tpu.memory_space<vmem>>, %arg2: memref<3x384x128xbf16, #tpu.memory_space<vmem>>, %arg3: memref<1x128xf32, #tpu.memory_space<vmem>>, %arg4: memref<1x16x16x128xbf16, #tpu.memory_space<vmem>>, %arg5: memref<1x2x128xf32, #tpu.memory_space<vmem>>, %arg6: memref<18x18x128xbf16, #tpu.memory_space<vmem>>, %arg7: memref<256x384xbf16, #tpu.memory_space<vmem>>) attributes {dimension_semantics = [#tpu.dimension_semantics<parallel>], iteration_bounds = array<i64: 2>, scalar_prefetch = 0 : i64, scratch_operands = 2 : i64, tpu.core_type = #tpu.core_type<tc>, window_params = [{transform_indices = @transform_0, window_bounds = array<i64: 1, 16, 16, 128>}, {pipeline_mode = #tpu.pipeline_mode<synchronous>, transform_indices = @transform_1, window_bounds = array<i64: 3, 384, 128>}, {pipeline_mode = #tpu.pipeline_mode<synchronous>, transform_indices = @transform_2, window_bounds = array<i64: 1, 128>}, {transform_indices = @transform_3, window_bounds = array<i64: 1, 16, 16, 128>}, {transform_indices = @transform_4, window_bounds = array<i64: 1, 2, 128>}]} {
    %c0 = arith.constant 0 : index
    %c0_0 = arith.constant 0 : index
    %c0_1 = arith.constant 0 : index
    %c0_2 = arith.constant 0 : index
    %0 = vector.load %arg1[%c0, %c0_0, %c0_1, %c0_2] : memref<1x16x16x128xf32, #tpu.memory_space<vmem>>, vector<1x16x16x128xf32>
    %1 = vector.shape_cast %0 : vector<1x16x16x128xf32> to vector<16x16x128xf32>
    %2 = arith.truncf %1 : vector<16x16x128xf32> to vector<16x16x128xbf16>
    %cst = arith.constant 0.000000e+00 : bf16
    %3 = vector.broadcast %cst : bf16 to vector<16x1x128xbf16>
    %cst_3 = arith.constant 0.000000e+00 : bf16
    %4 = vector.broadcast %cst_3 : bf16 to vector<1x18x128xbf16>
    %c0_4 = arith.constant 0 : index
    %c0_5 = arith.constant 0 : index
    %c0_6 = arith.constant 0 : index
    %5 = vector.load %arg6[%c0_4, %c0_5, %c0_6] : memref<18x18x128xbf16, #tpu.memory_space<vmem>>, vector<1x18x128xbf16>
    tpu.vector_store %arg6[%c0_4, %c0_5, %c0_6], %4 {strides = array<i32>} : memref<18x18x128xbf16, #tpu.memory_space<vmem>>, vector<1x18x128xbf16>,
    %c17 = arith.constant 17 : index
    %c0_7 = arith.constant 0 : index
    %c0_8 = arith.constant 0 : index
    %6 = vector.load %arg6[%c17, %c0_7, %c0_8] : memref<18x18x128xbf16, #tpu.memory_space<vmem>>, vector<1x18x128xbf16>
    tpu.vector_store %arg6[%c17, %c0_7, %c0_8], %4 {strides = array<i32>} : memref<18x18x128xbf16, #tpu.memory_space<vmem>>, vector<1x18x128xbf16>,
    %7 = tpu.concatenate %3, %2, %3 in 1 : vector<16x1x128xbf16>, vector<16x16x128xbf16>, vector<16x1x128xbf16> -> vector<16x18x128xbf16>
    %c1 = arith.constant 1 : index
    %c0_9 = arith.constant 0 : index
    %c0_10 = arith.constant 0 : index
    %8 = vector.load %arg6[%c1, %c0_9, %c0_10] : memref<18x18x128xbf16, #tpu.memory_space<vmem>>, vector<16x18x128xbf16>
    tpu.vector_store %arg6[%c1, %c0_9, %c0_10], %7 {strides = array<i32>} : memref<18x18x128xbf16, #tpu.memory_space<vmem>>, vector<16x18x128xbf16>,
    %c0_11 = arith.constant 0 : index
    %c0_12 = arith.constant 0 : index
    %c0_13 = arith.constant 0 : index
    %9 = vector.load %arg6[%c0_11, %c0_12, %c0_13] : memref<18x18x128xbf16, #tpu.memory_space<vmem>>, vector<16x16x128xbf16>
    %10 = vector.shape_cast %9 : vector<16x16x128xbf16> to vector<256x128xbf16>
    %c0_14 = arith.constant 0 : index
    %c0_15 = arith.constant 0 : index
    %11 = vector.load %arg7[%c0_14, %c0_15] : memref<256x384xbf16, #tpu.memory_space<vmem>>, vector<256x128xbf16>
    tpu.vector_store %arg7[%c0_14, %c0_15], %10 {strides = array<i32>} : memref<256x384xbf16, #tpu.memory_space<vmem>>, vector<256x128xbf16>,
    %c0_16 = arith.constant 0 : index
    %c1_17 = arith.constant 1 : index
    %c0_18 = arith.constant 0 : index
    %12 = vector.load %arg6[%c0_16, %c1_17, %c0_18] : memref<18x18x128xbf16, #tpu.memory_space<vmem>>, vector<16x16x128xbf16>
    %13 = vector.shape_cast %12 : vector<16x16x128xbf16> to vector<256x128xbf16>
    %c0_19 = arith.constant 0 : index
    %c128 = arith.constant 128 : index
    %14 = vector.load %arg7[%c0_19, %c128] : memref<256x384xbf16, #tpu.memory_space<vmem>>, vector<256x128xbf16>
    tpu.vector_store %arg7[%c0_19, %c128], %13 {strides = array<i32>} : memref<256x384xbf16, #tpu.memory_space<vmem>>, vector<256x128xbf16>,
    %c0_20 = arith.constant 0 : index
    %c2 = arith.constant 2 : index
    %c0_21 = arith.constant 0 : index
    %15 = vector.load %arg6[%c0_20, %c2, %c0_21] : memref<18x18x128xbf16, #tpu.memory_space<vmem>>, vector<16x16x128xbf16>
    %16 = vector.shape_cast %15 : vector<16x16x128xbf16> to vector<256x128xbf16>
    %c0_22 = arith.constant 0 : index
    %c256 = arith.constant 256 : index
    %17 = vector.load %arg7[%c0_22, %c256] : memref<256x384xbf16, #tpu.memory_space<vmem>>, vector<256x128xbf16>
    tpu.vector_store %arg7[%c0_22, %c256], %16 {strides = array<i32>} : memref<256x384xbf16, #tpu.memory_space<vmem>>, vector<256x128xbf16>,
    %c0_23 = arith.constant 0 : index
    %c0_24 = arith.constant 0 : index
    %18 = vector.load %arg7[%c0_23, %c0_24] : memref<256x384xbf16, #tpu.memory_space<vmem>>, vector<256x384xbf16>
    %c0_25 = arith.constant 0 : index
    %c0_26 = arith.constant 0 : index
    %c0_27 = arith.constant 0 : index
    %19 = vector.load %arg2[%c0_25, %c0_26, %c0_27] : memref<3x384x128xbf16, #tpu.memory_space<vmem>>, vector<1x384x128xbf16>
    %20 = vector.shape_cast %19 : vector<1x384x128xbf16> to vector<384x128xbf16>
    %cst_28 = arith.constant dense<0.000000e+00> : vector<256x128xf32>
    %21 = tpu.matmul %18, %20, %cst_28 {dimension_numbers = #tpu.dot_dimension_numbers<[1], [0], [0], [1], [0, 0, 1, 1], [], []>} : vector<256x384xbf16>, vector<384x128xbf16>, vector<256x128xf32> -> vector<256x128xf32>
    %c1_29 = arith.constant 1 : index
    %c0_30 = arith.constant 0 : index
    %c0_31 = arith.constant 0 : index
    %22 = vector.load %arg6[%c1_29, %c0_30, %c0_31] : memref<18x18x128xbf16, #tpu.memory_space<vmem>>, vector<16x16x128xbf16>
    %23 = vector.shape_cast %22 : vector<16x16x128xbf16> to vector<256x128xbf16>
    %c0_32 = arith.constant 0 : index
    %c0_33 = arith.constant 0 : index
    %24 = vector.load %arg7[%c0_32, %c0_33] : memref<256x384xbf16, #tpu.memory_space<vmem>>, vector<256x128xbf16>
    tpu.vector_store %arg7[%c0_32, %c0_33], %23 {strides = array<i32>} : memref<256x384xbf16, #tpu.memory_space<vmem>>, vector<256x128xbf16>,
    %c1_34 = arith.constant 1 : index
    %c1_35 = arith.constant 1 : index
    %c0_36 = arith.constant 0 : index
    %25 = vector.load %arg6[%c1_34, %c1_35, %c0_36] : memref<18x18x128xbf16, #tpu.memory_space<vmem>>, vector<16x16x128xbf16>
    %26 = vector.shape_cast %25 : vector<16x16x128xbf16> to vector<256x128xbf16>
    %c0_37 = arith.constant 0 : index
    %c128_38 = arith.constant 128 : index
    %27 = vector.load %arg7[%c0_37, %c128_38] : memref<256x384xbf16, #tpu.memory_space<vmem>>, vector<256x128xbf16>
    tpu.vector_store %arg7[%c0_37, %c128_38], %26 {strides = array<i32>} : memref<256x384xbf16, #tpu.memory_space<vmem>>, vector<256x128xbf16>,
    %c1_39 = arith.constant 1 : index
    %c2_40 = arith.constant 2 : index
    %c0_41 = arith.constant 0 : index
    %28 = vector.load %arg6[%c1_39, %c2_40, %c0_41] : memref<18x18x128xbf16, #tpu.memory_space<vmem>>, vector<16x16x128xbf16>
    %29 = vector.shape_cast %28 : vector<16x16x128xbf16> to vector<256x128xbf16>
    %c0_42 = arith.constant 0 : index
    %c256_43 = arith.constant 256 : index
    %30 = vector.load %arg7[%c0_42, %c256_43] : memref<256x384xbf16, #tpu.memory_space<vmem>>, vector<256x128xbf16>
    tpu.vector_store %arg7[%c0_42, %c256_43], %29 {strides = array<i32>} : memref<256x384xbf16, #tpu.memory_space<vmem>>, vector<256x128xbf16>,
    %c0_44 = arith.constant 0 : index
    %c0_45 = arith.constant 0 : index
    %31 = vector.load %arg7[%c0_44, %c0_45] : memref<256x384xbf16, #tpu.memory_space<vmem>>, vector<256x384xbf16>
    %c1_46 = arith.constant 1 : index
    %c0_47 = arith.constant 0 : index
    %c0_48 = arith.constant 0 : index
    %32 = vector.load %arg2[%c1_46, %c0_47, %c0_48] : memref<3x384x128xbf16, #tpu.memory_space<vmem>>, vector<1x384x128xbf16>
    %33 = vector.shape_cast %32 : vector<1x384x128xbf16> to vector<384x128xbf16>
    %cst_49 = arith.constant dense<0.000000e+00> : vector<256x128xf32>
    %34 = tpu.matmul %31, %33, %cst_49 {dimension_numbers = #tpu.dot_dimension_numbers<[1], [0], [0], [1], [0, 0, 1, 1], [], []>} : vector<256x384xbf16>, vector<384x128xbf16>, vector<256x128xf32> -> vector<256x128xf32>
    %35 = arith.addf %21, %34 : vector<256x128xf32>
    %c2_50 = arith.constant 2 : index
    %c0_51 = arith.constant 0 : index
    %c0_52 = arith.constant 0 : index
    %36 = vector.load %arg6[%c2_50, %c0_51, %c0_52] : memref<18x18x128xbf16, #tpu.memory_space<vmem>>, vector<16x16x128xbf16>
    %37 = vector.shape_cast %36 : vector<16x16x128xbf16> to vector<256x128xbf16>
    %c0_53 = arith.constant 0 : index
    %c0_54 = arith.constant 0 : index
    %38 = vector.load %arg7[%c0_53, %c0_54] : memref<256x384xbf16, #tpu.memory_space<vmem>>, vector<256x128xbf16>
    tpu.vector_store %arg7[%c0_53, %c0_54], %37 {strides = array<i32>} : memref<256x384xbf16, #tpu.memory_space<vmem>>, vector<256x128xbf16>,
    %c2_55 = arith.constant 2 : index
    %c1_56 = arith.constant 1 : index
    %c0_57 = arith.constant 0 : index
    %39 = vector.load %arg6[%c2_55, %c1_56, %c0_57] : memref<18x18x128xbf16, #tpu.memory_space<vmem>>, vector<16x16x128xbf16>
    %40 = vector.shape_cast %39 : vector<16x16x128xbf16> to vector<256x128xbf16>
    %c0_58 = arith.constant 0 : index
    %c128_59 = arith.constant 128 : index
    %41 = vector.load %arg7[%c0_58, %c128_59] : memref<256x384xbf16, #tpu.memory_space<vmem>>, vector<256x128xbf16>
    tpu.vector_store %arg7[%c0_58, %c128_59], %40 {strides = array<i32>} : memref<256x384xbf16, #tpu.memory_space<vmem>>, vector<256x128xbf16>,
    %c2_60 = arith.constant 2 : index
    %c2_61 = arith.constant 2 : index
    %c0_62 = arith.constant 0 : index
    %42 = vector.load %arg6[%c2_60, %c2_61, %c0_62] : memref<18x18x128xbf16, #tpu.memory_space<vmem>>, vector<16x16x128xbf16>
    %43 = vector.shape_cast %42 : vector<16x16x128xbf16> to vector<256x128xbf16>
    %c0_63 = arith.constant 0 : index
    %c256_64 = arith.constant 256 : index
    %44 = vector.load %arg7[%c0_63, %c256_64] : memref<256x384xbf16, #tpu.memory_space<vmem>>, vector<256x128xbf16>
    tpu.vector_store %arg7[%c0_63, %c256_64], %43 {strides = array<i32>} : memref<256x384xbf16, #tpu.memory_space<vmem>>, vector<256x128xbf16>,
    %c0_65 = arith.constant 0 : index
    %c0_66 = arith.constant 0 : index
    %45 = vector.load %arg7[%c0_65, %c0_66] : memref<256x384xbf16, #tpu.memory_space<vmem>>, vector<256x384xbf16>
    %c2_67 = arith.constant 2 : index
    %c0_68 = arith.constant 0 : index
    %c0_69 = arith.constant 0 : index
    %46 = vector.load %arg2[%c2_67, %c0_68, %c0_69] : memref<3x384x128xbf16, #tpu.memory_space<vmem>>, vector<1x384x128xbf16>
    %47 = vector.shape_cast %46 : vector<1x384x128xbf16> to vector<384x128xbf16>
    %cst_70 = arith.constant dense<0.000000e+00> : vector<256x128xf32>
    %48 = tpu.matmul %45, %47, %cst_70 {dimension_numbers = #tpu.dot_dimension_numbers<[1], [0], [0], [1], [0, 0, 1, 1], [], []>} : vector<256x384xbf16>, vector<384x128xbf16>, vector<256x128xf32> -> vector<256x128xf32>
    %49 = arith.addf %35, %48 : vector<256x128xf32>
    %c0_71 = arith.constant 0 : index
    %c0_72 = arith.constant 0 : index
    %50 = vector.load %arg3[%c0_71, %c0_72] : memref<1x128xf32, #tpu.memory_space<vmem>>, vector<1x128xf32>
    %51 = vector.broadcast %50 : vector<1x128xf32> to vector<256x128xf32>
    %52 = arith.addf %49, %51 : vector<256x128xf32>
    %cst_73 = arith.constant dense<0.000000e+00> : vector<128xf32>
    %53 = vector.multi_reduction <add>, %52, %cst_73 [0] : vector<256x128xf32> to vector<128xf32>
    %54 = vector.shape_cast %53 : vector<128xf32> to vector<1x128xf32>
    %55 = arith.mulf %52, %52 : vector<256x128xf32>
    %cst_74 = arith.constant dense<0.000000e+00> : vector<128xf32>
    %56 = vector.multi_reduction <add>, %55, %cst_74 [0] : vector<256x128xf32> to vector<128xf32>
    %57 = vector.shape_cast %56 : vector<128xf32> to vector<1x128xf32>
    %58 = tpu.concatenate %54, %57 in 0 : vector<1x128xf32>, vector<1x128xf32> -> vector<2x128xf32>
    %59 = vector.shape_cast %58 : vector<2x128xf32> to vector<1x2x128xf32>
    %c0_75 = arith.constant 0 : index
    %c0_76 = arith.constant 0 : index
    %c0_77 = arith.constant 0 : index
    %60 = vector.load %arg5[%c0_75, %c0_76, %c0_77] : memref<1x2x128xf32, #tpu.memory_space<vmem>>, vector<1x2x128xf32>
    tpu.vector_store %arg5[%c0_75, %c0_76, %c0_77], %59 {strides = array<i32>} : memref<1x2x128xf32, #tpu.memory_space<vmem>>, vector<1x2x128xf32>,
    %61 = vector.shape_cast %52 : vector<256x128xf32> to vector<1x16x16x128xf32>
    %62 = arith.truncf %61 : vector<1x16x16x128xf32> to vector<1x16x16x128xbf16>
    %c0_78 = arith.constant 0 : index
    %c0_79 = arith.constant 0 : index
    %c0_80 = arith.constant 0 : index
    %c0_81 = arith.constant 0 : index
    %63 = vector.load %arg4[%c0_78, %c0_79, %c0_80, %c0_81] : memref<1x16x16x128xbf16, #tpu.memory_space<vmem>>, vector<1x16x16x128xbf16>
    tpu.vector_store %arg4[%c0_78, %c0_79, %c0_80, %c0_81], %62 {strides = array<i32>} : memref<1x16x16x128xbf16, #tpu.memory_space<vmem>>, vector<1x16x16x128xbf16>,
    return
  }
  func.func @transform_0(%arg0: i32) -> (i32, i32, i32, i32) {
    %c0_i32 = arith.constant 0 : i32
    %c0_i32_0 = arith.constant 0 : i32
    %c0_i32_1 = arith.constant 0 : i32
    %c0_i32_2 = arith.constant 0 : i32
    return %arg0, %c0_i32, %c0_i32_0, %c0_i32_1 : i32, i32, i32, i32
  }
  func.func @transform_1(%arg0: i32) -> (i32, i32, i32) {
    %c0_i32 = arith.constant 0 : i32
    %c0_i32_0 = arith.constant 0 : i32
    %c0_i32_1 = arith.constant 0 : i32
    %c0_i32_2 = arith.constant 0 : i32
    return %c0_i32, %c0_i32_0, %c0_i32_1 : i32, i32, i32
  }
  func.func @transform_2(%arg0: i32) -> (i32, i32) {
    %c0_i32 = arith.constant 0 : i32
    %c0_i32_0 = arith.constant 0 : i32
    %c0_i32_1 = arith.constant 0 : i32
    return %c0_i32, %c0_i32_0 : i32, i32
  }
  func.func @transform_3(%arg0: i32) -> (i32, i32, i32, i32) {
    %c0_i32 = arith.constant 0 : i32
    %c0_i32_0 = arith.constant 0 : i32
    %c0_i32_1 = arith.constant 0 : i32
    %c0_i32_2 = arith.constant 0 : i32
    return %arg0, %c0_i32, %c0_i32_0, %c0_i32_1 : i32, i32, i32, i32
  }
  func.func @transform_4(%arg0: i32) -> (i32, i32, i32) {
    %c0_i32 = arith.constant 0 : i32
    %c0_i32_0 = arith.constant 0 : i32
    %c0_i32_1 = arith.constant 0 : i32
    return %arg0, %c0_i32, %c0_i32_0 : i32, i32, i32
  }
}

</mosaic_0001>

<llo_original>
// kernel: residual_block.5
$region0: #{residual_block.5}
  #allocation0 [shape = 'u32[]', space=smem, size = 0x4, offset = 0x4, fixed_abs, tag = 'smem constant byte address 0x4 - core index']
  #allocation1 [shape = 'u32[144,128]{1,0:T(1,128)}', space=vmem, size = 0x12000, scoped, tag = 'internal scratch']
  %s0 = inlined_call_operand.vmem [shape: f32[2,16,16,128], index: 0, kind: input, shape index: {}, may-alias: {0,4}]
  %s1 = inlined_call_operand.vmem [shape: bf16[2,16,16,128], index: 1, kind: input, shape index: {}]
  %s2 = inlined_call_operand.vmem [shape: f32[1,128], index: 2, kind: input, shape index: {}]
  %s3 = inlined_call_operand.vmem [shape: f32[1,128], index: 3, kind: input, shape index: {}]
  %s4 = inlined_call_operand.vmem [shape: f32[2,16,16,128], index: 4, kind: output, shape index: {}, may-alias: {0,4}]
  %s5 = sld [smem:[#allocation0]]
  $region49: #{residual_block.5} parent=0
    _
  %s7 = ssub.s32 1, %s5
  %s8 = scalar_select 0, %s7, %s5
  loop: start=0, step=1, limit=6
  $region2: #{residual_block.5} parent=0 // loop_pre_header
    _
  $region3: #{residual_block.5} parent=0 // loop_header
    %s10 = sphi 0, %s14
    %p11 = scmp.ge.s32.totalorder %s10, 6
    %s17 = sphi 0, %s29
    %s18 = sphi 0, %s25
    %s19 = sphi 0, %s17
    %s20 = sphi 0, %s18
    %s21 = sphi 0, %s19
    %s22 = sphi 0, %s20
    %s34 = sphi 0, %s36
    %s37 = sphi 0, %s34
    %s38 = sphi 0, %s37
    %s54 = sphi 0, %s38
    %s62 = sphi 0, %s64
    %s65 = sphi 0, %s62
    %s66 = sphi 0, %s65
    %s82 = sphi 0, %s66
    %s86 = sphi 0, %s86
    %s88 = sphi 0, %s86
    %s89 = sphi 0, %s88
    %s103 = sphi 0, %s89
    %s107 = sphi 0, %s107
    %s109 = sphi 0, %s107
    %s110 = sphi 0, %s109
    %s124 = sphi 0, %s110
    %s132 = sphi 0, %s134
    %s135 = sphi 0, %s132
    %s136 = sphi 0, %s135
    %s152 = sphi 0, %s136
  $region4: #{residual_block.5} parent=0 // loop_header_branch
    %13 = sbr.rel (%p11) target = $region8
  $region5: #{residual_block.5} parent=0 // loop_body
    %s15 = ssub.s32 %s10, 1
    %s16 = ssub.s32 %s10, 2
    %s23 = sadd.s32 1, %s18
    %p24 = scmp.ge.s32.totalorder %s23, 2
    %s25 = scalar_select %p24, 0, %s23
    %s26 = sadd.s32 1, %s17
    %s27 = scalar_select %p24, %s26, %s17
    %p28 = scmp.ge.s32.totalorder %s27, 2
    %s29 = scalar_select %p28, 0, %s27
    %s30 = ssub.s32 %s17, %s29
    %s31 = ssub.s32 %s18, %s25
    %s32 = sor.u32 %s30, %s31
    %p33 = scmp.eq.s32.totalorder %s32, 0
    %s35 = sadd.s32 %s34, 1
    %s36 = scalar_select %p33, %s34, %s35
    %p39 = pneg %p33
    %p40 = scmp.eq.s32.totalorder %s10, 3
    %p41 = por %p39, %p40
    %p42 = scmp.ne.s32.totalorder %s34, %s37
    %p43 = scmp.eq.s32.totalorder %s10, 0
    %p44 = por %p42, %p43
    %p45 = scmp.ne.s32.totalorder %s34, %s37
    %p46 = scmp.eq.s32.totalorder %s15, 3
    %p47 = por %p45, %p46
    %p48 = scmp.ne.s32.totalorder %s37, %s38
    %p49 = scmp.eq.s32.totalorder %s15, 0
    %p50 = por %p48, %p49
    %p51 = scmp.ne.s32.totalorder %s37, %s38
    %p52 = scmp.eq.s32.totalorder %s16, 3
    %p53 = por %p51, %p52
    %p55 = scmp.ne.s32.totalorder %s38, %s54
    %p56 = scmp.eq.s32.totalorder %s16, 0
    %p57 = por %p55, %p56
    %s58 = ssub.s32 %s17, %s29
    %s59 = ssub.s32 %s18, %s25
    %s60 = sor.u32 %s58, %s59
    %p61 = scmp.eq.s32.totalorder %s60, 0
    %s63 = sadd.s32 %s62, 1
    %s64 = scalar_select %p61, %s62, %s63
    %p67 = pneg %p61
    %p68 = scmp.eq.s32.totalorder %s10, 3
    %p69 = por %p67, %p68
    %p70 = scmp.ne.s32.totalorder %s62, %s65
    %p71 = scmp.eq.s32.totalorder %s10, 0
    %p72 = por %p70, %p71
    %p73 = scmp.ne.s32.totalorder %s62, %s65
    %p74 = scmp.eq.s32.totalorder %s15, 3
    %p75 = por %p73, %p74
    %p76 = scmp.ne.s32.totalorder %s65, %s66
    %p77 = scmp.eq.s32.totalorder %s15, 0
    %p78 = por %p76, %p77
    %p79 = scmp.ne.s32.totalorder %s65, %s66
    %p80 = scmp.eq.s32.totalorder %s16, 3
    %p81 = por %p79, %p80
    %p83 = scmp.ne.s32.totalorder %s66, %s82
    %p84 = scmp.eq.s32.totalorder %s16, 0
    %p85 = por %p83, %p84
    %s87 = sadd.s32 %s86, 1
    %p90 = scmp.eq.s32.totalorder %s10, 3
    %p91 = scmp.ne.s32.totalorder %s86, %s88
    %p92 = scmp.eq.s32.totalorder %s10, 0
    %p93 = por %p91, %p92
    %p94 = scmp.ne.s32.totalorder %s86, %s88
    %p95 = scmp.eq.s32.totalorder %s15, 3
    %p96 = por %p94, %p95
    %p97 = scmp.ne.s32.totalorder %s88, %s89
    %p98 = scmp.eq.s32.totalorder %s15, 0
    %p99 = por %p97, %p98
    %p100 = scmp.ne.s32.totalorder %s88, %s89
    %p101 = scmp.eq.s32.totalorder %s16, 3
    %p102 = por %p100, %p101
    %p104 = scmp.ne.s32.totalorder %s89, %s103
    %p105 = scmp.eq.s32.totalorder %s16, 0
    %p106 = por %p104, %p105
    %s108 = sadd.s32 %s107, 1
    %p111 = scmp.eq.s32.totalorder %s10, 3
    %p112 = scmp.ne.s32.totalorder %s107, %s109
    %p113 = scmp.eq.s32.totalorder %s10, 0
    %p114 = por %p112, %p113
    %p115 = scmp.ne.s32.totalorder %s107, %s109
    %p116 = scmp.eq.s32.totalorder %s15, 3
    %p117 = por %p115, %p116
    %p118 = scmp.ne.s32.totalorder %s109, %s110
    %p119 = scmp.eq.s32.totalorder %s15, 0
    %p120 = por %p118, %p119
    %p121 = scmp.ne.s32.totalorder %s109, %s110
    %p122 = scmp.eq.s32.totalorder %s16, 3
    %p123 = por %p121, %p122
    %p125 = scmp.ne.s32.totalorder %s110, %s124
    %p126 = scmp.eq.s32.totalorder %s16, 0
    %p127 = por %p125, %p126
    %s128 = ssub.s32 %s17, %s29
    %s129 = ssub.s32 %s18, %s25
    %s130 = sor.u32 %s128, %s129
    %p131 = scmp.eq.s32.totalorder %s130, 0
    %s133 = sadd.s32 %s132, 1
    %s134 = scalar_select %p131, %s132, %s133
    %p137 = pneg %p131
    %p138 = scmp.eq.s32.totalorder %s10, 3
    %p139 = por %p137, %p138
    %p140 = scmp.ne.s32.totalorder %s132, %s135
    %p141 = scmp.eq.s32.totalorder %s10, 0
    %p142 = por %p140, %p141
    %p143 = scmp.ne.s32.totalorder %s132, %s135
    %p144 = scmp.eq.s32.totalorder %s15, 3
    %p145 = por %p143, %p144
    %p146 = scmp.ne.s32.totalorder %s135, %s136
    %p147 = scmp.eq.s32.totalorder %s15, 0
    %p148 = por %p146, %p147
    %p149 = scmp.ne.s32.totalorder %s135, %s136
    %p150 = scmp.eq.s32.totalorder %s16, 3
    %p151 = por %p149, %p150
    %p153 = scmp.ne.s32.totalorder %s136, %s152
    %p154 = scmp.eq.s32.totalorder %s16, 0
    %p155 = por %p153, %p154
    %p156 = scmp.le.s32.totalorder 1, %s10
    %p157 = scmp.lt.s32.totalorder %s10, 5
    %p158 = pnand %p156, %p157
    %p159 = pneg %p158
    // Predicated region
    $region9: #{residual_block.5} parent=5 // pred_check
      _
    $region10: #{residual_block.5} parent=5 // pred_check_branch
      %161 = sbr.rel (%p158) target = $region12
    $region11: #{residual_block.5} parent=5 // pred_region
      %s162 = ssub.s32 %s10, 1
      // Predicated region
      $region13: #{residual_block.5} parent=11 // pred_check
        %p163 = pneg %p99
      $region14: #{residual_block.5} parent=11 // pred_check_branch
        %165 = sbr.rel (%p163) target = $region16
      $region15: #{residual_block.5} parent=11 // pred_region
        _
      $region16: #{residual_block.5} parent=11 // pred_fallthru
        _
      // Predicated region
      $region17: #{residual_block.5} parent=11 // pred_check
        %p166 = pneg %p120
      $region18: #{residual_block.5} parent=11 // pred_check_branch
        %168 = sbr.rel (%p166) target = $region20
      $region19: #{residual_block.5} parent=11 // pred_region
        _
      $region20: #{residual_block.5} parent=11 // pred_fallthru
        _
    $region12: #{residual_block.5} parent=5 // pred_fallthru
      _
    %p169 = scmp.lt.s32.totalorder %s10, 4
    // Predicated region
    $region21: #{residual_block.5} parent=5 // pred_check
      %p170 = pneg %p169
    $region22: #{residual_block.5} parent=5 // pred_check_branch
      %172 = sbr.rel (%p170) target = $region24
    $region23: #{residual_block.5} parent=5 // pred_region
      // Predicated region
      $region25: #{residual_block.5} parent=23 // pred_check
        %p173 = pneg %p44
      $region26: #{residual_block.5} parent=23 // pred_check_branch
        %175 = sbr.rel (%p173) target = $region28
      $region27: #{residual_block.5} parent=23 // pred_region
        %s176 = smul.u32 8, %s18
        %p177 = scmp.lt.s32.totalorder %s17, 1
        %s178 = scalar_select %p177, %s17, 1
        %p179 = scmp.lt.s32.totalorder %s176, 15
        %s180 = scalar_select %p179, %s176, 15
        %s181 = smul.addr %s180, 2
        %s182 = smul.addr %s178, 32
        %s183 = sadd.s32 %s181, %s182
        %s184 = smul.addr %s183, 8
        %s185 = scalar_lea.vmem %s0, %s184
        %s186 = smul.u32 8, %s18
      $region28: #{residual_block.5} parent=23 // pred_fallthru
        _
      // Predicated region
      $region29: #{residual_block.5} parent=23 // pred_check
        %p187 = pneg %p72
      $region30: #{residual_block.5} parent=23 // pred_check_branch
        %189 = sbr.rel (%p187) target = $region32
      $region31: #{residual_block.5} parent=23 // pred_region
        %s190 = smul.u32 8, %s18
        %p191 = scmp.lt.s32.totalorder %s17, 1
        %s192 = scalar_select %p191, %s17, 1
        %p193 = scmp.lt.s32.totalorder %s190, 15
        %s194 = scalar_select %p193, %s190, 15
        %s195 = smul.addr %s194, 2
        %s196 = smul.addr %s192, 32
        %s197 = sadd.s32 %s195, %s196
        %s198 = smul.addr %s197, 4
        %s199 = scalar_lea.vmem %s1, %s198
        %s200 = smul.u32 8, %s18
      $region32: #{residual_block.5} parent=23 // pred_fallthru
        _
    $region24: #{residual_block.5} parent=5 // pred_fallthru
      _
    %p201 = scmp.le.s32.totalorder 1, %s10
    %p202 = scmp.lt.s32.totalorder %s10, 5
    %p203 = pnand %p201, %p202
    %p204 = pneg %p203
    // Predicated region
    $region33: #{residual_block.5} parent=5 // pred_check
      _
    $region34: #{residual_block.5} parent=5 // pred_check_branch
      %206 = sbr.rel (%p203) target = $region36
    $region35: #{residual_block.5} parent=5 // pred_region
      %s207 = ssub.s32 %s10, 1
      %s208 = smul.u32 8, %s20
      %p209 = scmp.lt.s32.totalorder %s19, 1
      %s210 = scalar_select %p209, %s19, 1
      %p211 = scmp.lt.s32.totalorder %s208, 15
      %s212 = scalar_select %p211, %s208, 15
      %s213 = smul.addr %s212, 2
      %s214 = smul.addr %s210, 32
      %s215 = sadd.s32 %s213, %s214
      %s216 = smul.addr %s215, 8
      %s217 = scalar_lea.vmem %s0, %s216
      %p218 = pneg %p50
      %p219 = pneg %p47
      %s220 = smul.u32 8, %s20
      %p221 = scmp.lt.s32.totalorder %s19, 1
      %s222 = scalar_select %p221, %s19, 1
      %p223 = scmp.lt.s32.totalorder %s220, 15
      %s224 = scalar_select %p223, %s220, 15
      %s225 = smul.addr %s224, 2
      %s226 = smul.addr %s222, 32
      %s227 = sadd.s32 %s225, %s226
      %s228 = smul.addr %s227, 4
      %s229 = scalar_lea.vmem %s1, %s228
      %p230 = pneg %p78
      %p231 = pneg %p75
      %p232 = pneg %p99
      %p233 = pneg %p96
      %p234 = pneg %p120
      %p235 = pneg %p117
      %p236 = pneg %p148
      %p237 = pneg %p145
      %s238 = smul.u32 8, %s20
      %p239 = scmp.lt.s32.totalorder %s19, 1
      %s240 = scalar_select %p239, %s19, 1
      %p241 = scmp.lt.s32.totalorder %s238, 15
      %s242 = scalar_select %p241, %s238, 15
      %s243 = smul.addr %s242, 2
      %s244 = smul.addr %s240, 32
      %s245 = sadd.s32 %s243, %s244
      %s246 = smul.addr %s245, 8
      %s247 = scalar_lea.vmem %s4, %s246
      %s248 = smul.u32 8, %s20
      %p249 = scmp.lt.s32.totalorder %s19, 1
      %s250 = scalar_select %p249, %s19, 1
      %p251 = scmp.lt.s32.totalorder %s248, 15
      %s252 = scalar_select %p251, %s248, 15
      %s253 = smul.addr %s252, 2
      %s254 = smul.addr %s250, 32
      %s255 = sadd.s32 %s253, %s254
      %s256 = smul.addr %s255, 8
      %s257 = scalar_lea.vmem %s0, %s256
      %s258 = smul.u32 8, %s20
      %s259 = smul.u32 8, %s20
      %p260 = scmp.lt.s32.totalorder %s19, 1
      %s261 = scalar_select %p260, %s19, 1
      %p262 = scmp.lt.s32.totalorder %s259, 15
      %s263 = scalar_select %p262, %s259, 15
      %s264 = smul.addr %s263, 2
      %s265 = smul.addr %s261, 32
      %s266 = sadd.s32 %s264, %s265
      %s267 = smul.addr %s266, 4
      %s268 = scalar_lea.vmem %s1, %s267
      %s269 = smul.u32 8, %s20
      %s270 = smul.u32 8, %s20
      %p271 = scmp.lt.s32.totalorder %s19, 1
      %s272 = scalar_select %p271, %s19, 1
      %p273 = scmp.lt.s32.totalorder %s270, 15
      %s274 = scalar_select %p273, %s270, 15
      %s275 = smul.addr %s274, 2
      %s276 = smul.addr %s272, 32
      %s277 = sadd.s32 %s275, %s276
      %s278 = smul.addr %s277, 8
      %s279 = scalar_lea.vmem %s4, %s278
      %s280 = smul.u32 8, %s20
      %v281 = vld [vmem:[%s257] sm:$0xff]
      %v282 = vld [vmem:[%s257 + $0x8] sm:$0xff]
      %v283 = vld [vmem:[%s257 + $0x10] sm:$0xff]
      %v284 = vld [vmem:[%s257 + $0x18] sm:$0xff]
      %v285 = vld [vmem:[%s257 + $0x20] sm:$0xff]
      %v286 = vld [vmem:[%s257 + $0x28] sm:$0xff]
      %v287 = vld [vmem:[%s257 + $0x30] sm:$0xff]
      %v288 = vld [vmem:[%s257 + $0x38] sm:$0xff]
      %v289 = vld [vmem:[%s257 + $0x40] sm:$0xff]
      %v290 = vld [vmem:[%s257 + $0x48] sm:$0xff]
      %v291 = vld [vmem:[%s257 + $0x50] sm:$0xff]
      %v292 = vld [vmem:[%s257 + $0x58] sm:$0xff]
      %v293 = vld [vmem:[%s257 + $0x60] sm:$0xff]
      %v294 = vld [vmem:[%s257 + $0x68] sm:$0xff]
      %v295 = vld [vmem:[%s257 + $0x70] sm:$0xff]
      %v296 = vld [vmem:[%s257 + $0x78] sm:$0xff]
      %v297 = vld [vmem:[%s268] sm:$0xf]
      %v298 = vld [vmem:[%s268 + $0x4] sm:$0xf]
      %v299 = vld [vmem:[%s268 + $0x8] sm:$0xf]
      %v300 = vld [vmem:[%s268 + $0xc] sm:$0xf]
      %v301 = vld [vmem:[%s268 + $0x10] sm:$0xf]
      %v302 = vld [vmem:[%s268 + $0x14] sm:$0xf]
      %v303 = vld [vmem:[%s268 + $0x18] sm:$0xf]
      %v304 = vld [vmem:[%s268 + $0x1c] sm:$0xf]
      %v305 = vld [vmem:[%s268 + $0x20] sm:$0xf]
      %v306 = vld [vmem:[%s268 + $0x24] sm:$0xf]
      %v307 = vld [vmem:[%s268 + $0x28] sm:$0xf]
      %v308 = vld [vmem:[%s268 + $0x2c] sm:$0xf]
      %v309 = vld [vmem:[%s268 + $0x30] sm:$0xf]
      %v310 = vld [vmem:[%s268 + $0x34] sm:$0xf]
      %v311 = vld [vmem:[%s268 + $0x38] sm:$0xf]
      %v312 = vld [vmem:[%s268 + $0x3c] sm:$0xf]
      %v313 = vunpack.c.l.bf16 %v297
      %v314 = vunpack.c.l.bf16 %v298
      %v315 = vunpack.c.l.bf16 %v299
      %v316 = vunpack.c.l.bf16 %v300
      %v317 = vunpack.c.l.bf16 %v301
      %v318 = vunpack.c.l.bf16 %v302
      %v319 = vunpack.c.l.bf16 %v303
      %v320 = vunpack.c.l.bf16 %v304
      %v321 = vunpack.c.l.bf16 %v305
      %v322 = vunpack.c.l.bf16 %v306
      %v323 = vunpack.c.l.bf16 %v307
      %v324 = vunpack.c.l.bf16 %v308
      %v325 = vunpack.c.l.bf16 %v309
      %v326 = vunpack.c.l.bf16 %v310
      %v327 = vunpack.c.l.bf16 %v311
      %v328 = vunpack.c.l.bf16 %v312
      %v329 = vld [vmem:[%s2] sm:$0x1]
      %v331 = vlaneseq
      %v332 = vshrl.u32 %v331, 7
      %v333 = vsub.s32 0, %v332
      %v334 = vrot.slane %v329, %v333
      %v336 = vmul.f32 %v313, %v334
      %v337 = vmul.f32 %v314, %v334
      %v338 = vmul.f32 %v315, %v334
      %v339 = vmul.f32 %v316, %v334
      %v340 = vmul.f32 %v317, %v334
      %v341 = vmul.f32 %v318, %v334
      %v342 = vmul.f32 %v319, %v334
      %v343 = vmul.f32 %v320, %v334
      %v344 = vmul.f32 %v321, %v334
      %v345 = vmul.f32 %v322, %v334
      %v346 = vmul.f32 %v323, %v334
      %v347 = vmul.f32 %v324, %v334
      %v348 = vmul.f32 %v325, %v334
      %v349 = vmul.f32 %v326, %v334
      %v350 = vmul.f32 %v327, %v334
      %v351 = vmul.f32 %v328, %v334
      %v352 = vadd.f32 %v281, %v336
      %v353 = vadd.f32 %v282, %v337
      %v354 = vadd.f32 %v283, %v338
      %v355 = vadd.f32 %v284, %v339
      %v356 = vadd.f32 %v285, %v340
      %v357 = vadd.f32 %v286, %v341
      %v358 = vadd.f32 %v287, %v342
      %v359 = vadd.f32 %v288, %v343
      %v360 = vadd.f32 %v289, %v344
      %v361 = vadd.f32 %v290, %v345
      %v362 = vadd.f32 %v291, %v346
      %v363 = vadd.f32 %v292, %v347
      %v364 = vadd.f32 %v293, %v348
      %v365 = vadd.f32 %v294, %v349
      %v366 = vadd.f32 %v295, %v350
      %v367 = vadd.f32 %v296, %v351
      %v368 = vld [vmem:[%s3] sm:$0x1]
      %v370 = vlaneseq
      %v371 = vshrl.u32 %v370, 7
      %v372 = vsub.s32 0, %v371
      %v373 = vrot.slane %v368, %v372
      %v375 = vadd.f32 %v352, %v373
      %v376 = vadd.f32 %v353, %v373
      %v377 = vadd.f32 %v354, %v373
      %v378 = vadd.f32 %v355, %v373
      %v379 = vadd.f32 %v356, %v373
      %v380 = vadd.f32 %v357, %v373
      %v381 = vadd.f32 %v358, %v373
      %v382 = vadd.f32 %v359, %v373
      %v383 = vadd.f32 %v360, %v373
      %v384 = vadd.f32 %v361, %v373
      %v385 = vadd.f32 %v362, %v373
      %v386 = vadd.f32 %v363, %v373
      %v387 = vadd.f32 %v364, %v373
      %v388 = vadd.f32 %v365, %v373
      %v389 = vadd.f32 %v366, %v373
      %v390 = vadd.f32 %v367, %v373
      %391 = vst [vmem:[%s279] sm:$0xff] %v375
      %392 = vst [vmem:[%s279 + $0x8] sm:$0xff] %v376
      %393 = vst [vmem:[%s279 + $0x10] sm:$0xff] %v377
      %394 = vst [vmem:[%s279 + $0x18] sm:$0xff] %v378
      %395 = vst [vmem:[%s279 + $0x20] sm:$0xff] %v379
      %396 = vst [vmem:[%s279 + $0x28] sm:$0xff] %v380
      %397 = vst [vmem:[%s279 + $0x30] sm:$0xff] %v381
      %398 = vst [vmem:[%s279 + $0x38] sm:$0xff] %v382
      %399 = vst [vmem:[%s279 + $0x40] sm:$0xff] %v383
      %400 = vst [vmem:[%s279 + $0x48] sm:$0xff] %v384
      %401 = vst [vmem:[%s279 + $0x50] sm:$0xff] %v385
      %402 = vst [vmem:[%s279 + $0x58] sm:$0xff] %v386
      %403 = vst [vmem:[%s279 + $0x60] sm:$0xff] %v387
      %404 = vst [vmem:[%s279 + $0x68] sm:$0xff] %v388
      %405 = vst [vmem:[%s279 + $0x70] sm:$0xff] %v389
      %406 = vst [vmem:[%s279 + $0x78] sm:$0xff] %v390
      %s407 = smul.u32 8, %s20
      %p408 = scmp.lt.s32.totalorder %s19, 1
      %s409 = scalar_select %p408, %s19, 1
      %p410 = scmp.lt.s32.totalorder %s407, 15
      %s411 = scalar_select %p410, %s407, 15
      %s412 = smul.addr %s411, 2
      %s413 = smul.addr %s409, 32
      %s414 = sadd.s32 %s412, %s413
      %s415 = smul.addr %s414, 8
      %s416 = scalar_lea.vmem %s4, %s415
      // Predicated region
      $region37: #{residual_block.5} parent=35 // pred_check
        %p417 = pneg %p145
      $region38: #{residual_block.5} parent=35 // pred_check_branch
        %419 = sbr.rel (%p417) target = $region40
      $region39: #{residual_block.5} parent=35 // pred_region
        %s420 = smul.u32 8, %s20
      $region40: #{residual_block.5} parent=35 // pred_fallthru
        _
    $region36: #{residual_block.5} parent=5 // pred_fallthru
      _
    %p421 = scmp.le.s32.totalorder 2, %s10
    // Predicated region
    $region41: #{residual_block.5} parent=5 // pred_check
      %p422 = pneg %p421
    $region42: #{residual_block.5} parent=5 // pred_check_branch
      %424 = sbr.rel (%p422) target = $region44
    $region43: #{residual_block.5} parent=5 // pred_region
      %s425 = ssub.s32 %s10, 2
      // Predicated region
      $region45: #{residual_block.5} parent=43 // pred_check
        %p426 = pneg %p151
      $region46: #{residual_block.5} parent=43 // pred_check_branch
        %428 = sbr.rel (%p426) target = $region48
      $region47: #{residual_block.5} parent=43 // pred_region
        %s429 = smul.u32 8, %s22
        %p430 = scmp.lt.s32.totalorder %s21, 1
        %s431 = scalar_select %p430, %s21, 1
        %p432 = scmp.lt.s32.totalorder %s429, 15
        %s433 = scalar_select %p432, %s429, 15
        %s434 = smul.addr %s433, 2
        %s435 = smul.addr %s431, 32
        %s436 = sadd.s32 %s434, %s435
        %s437 = smul.addr %s436, 8
        %s438 = scalar_lea.vmem %s4, %s437
      $region48: #{residual_block.5} parent=43 // pred_fallthru
        _
    $region44: #{residual_block.5} parent=5 // pred_fallthru
      _
  $region6: #{residual_block.5} parent=0 // loop_footer
    %s14 = sadd.s32 1, %s10
  $region7: #{residual_block.5} parent=0 // loop_footer_branch
    %9 = sbr.rel target = $region3
  $region8: #{residual_block.5} parent=0 // loop_exit
    _

// kernel: residual_block.3
$region0: #{residual_block.3}
  #allocation0 [shape = 'u32[]', space=smem, size = 0x4, offset = 0x4, fixed_abs, tag = 'smem constant byte address 0x4 - core index']
  #allocation1 [shape = 'u32[144,128]{1,0:T(1,128)}', space=vmem, size = 0x12000, scoped, tag = 'internal scratch']
  #allocation2 [shape = 'bf16[18,18,128]{2,1,0:T(8,128)(2,1)}', space=vmem, size = 0x1b000, scoped, tag = 'scratch operand']
  #allocation3 [shape = 'bf16[256,384]{1,0:T(8,128)(2,1)}', space=vmem, size = 0x30000, scoped, tag = 'scratch operand']
  %s0 = inlined_call_operand.vmem [shape: f32[2,16,16,128], index: 0, kind: input, shape index: {}]
  %s1 = inlined_call_operand.vmem [shape: bf16[3,384,128], index: 1, kind: input, shape index: {}]
  %s2 = inlined_call_operand.vmem [shape: f32[1,128], index: 2, kind: input, shape index: {}]
  %s3 = inlined_call_operand.vmem [shape: bf16[2,16,16,128], index: 3, kind: output, shape index: {0}]
  %s4 = inlined_call_operand.vmem [shape: f32[2,2,128], index: 4, kind: output, shape index: {1}]
  %5 = xla_tuple %s3, %s4
  %s6 = sld [smem:[#allocation0]]
  $region53: #{residual_block.3} parent=0
    _
  %s8 = ssub.s32 1, %s6
  %s9 = scalar_select 0, %s8, %s6
  loop: start=0, step=1, limit=4
  $region2: #{residual_block.3} parent=0 // loop_pre_header
    _
  $region3: #{residual_block.3} parent=0 // loop_header
    %s11 = sphi 0, %s15
    %p12 = scmp.ge.s32.totalorder %s11, 4
    %s21 = sphi 0, %s23
    %s24 = sphi 0, %s21
    %s25 = sphi 0, %s24
    %s41 = sphi 0, %s25
    %s45 = sphi 0, %s45
    %s47 = sphi 0, %s45
    %s48 = sphi 0, %s47
    %s62 = sphi 0, %s48
    %s66 = sphi 0, %s66
    %s68 = sphi 0, %s66
    %s69 = sphi 0, %s68
    %s83 = sphi 0, %s69
    %s89 = sphi 0, %s91
    %s92 = sphi 0, %s89
    %s93 = sphi 0, %s92
    %s109 = sphi 0, %s93
    %s115 = sphi 0, %s117
    %s118 = sphi 0, %s115
    %s119 = sphi 0, %s118
    %s135 = sphi 0, %s119
  $region4: #{residual_block.3} parent=0 // loop_header_branch
    %14 = sbr.rel (%p12) target = $region8
  $region5: #{residual_block.3} parent=0 // loop_body
    %s16 = ssub.s32 %s11, 1
    %s17 = ssub.s32 %s11, 2
    %s18 = sadd.s32 %s11, 1
    %s19 = ssub.s32 %s11, %s18
    %p20 = scmp.eq.s32.totalorder %s19, 0
    %s22 = sadd.s32 %s21, 1
    %s23 = scalar_select %p20, %s21, %s22
    %p26 = pneg %p20
    %p27 = scmp.eq.s32.totalorder %s11, 1
    %p28 = por %p26, %p27
    %p29 = scmp.ne.s32.totalorder %s21, %s24
    %p30 = scmp.eq.s32.totalorder %s11, 0
    %p31 = por %p29, %p30
    %p32 = scmp.ne.s32.totalorder %s21, %s24
    %p33 = scmp.eq.s32.totalorder %s16, 1
    %p34 = por %p32, %p33
    %p35 = scmp.ne.s32.totalorder %s24, %s25
    %p36 = scmp.eq.s32.totalorder %s16, 0
    %p37 = por %p35, %p36
    %p38 = scmp.ne.s32.totalorder %s24, %s25
    %p39 = scmp.eq.s32.totalorder %s17, 1
    %p40 = por %p38, %p39
    %p42 = scmp.ne.s32.totalorder %s25, %s41
    %p43 = scmp.eq.s32.totalorder %s17, 0
    %p44 = por %p42, %p43
    %s46 = sadd.s32 %s45, 1
    %p49 = scmp.eq.s32.totalorder %s11, 1
    %p50 = scmp.ne.s32.totalorder %s45, %s47
    %p51 = scmp.eq.s32.totalorder %s11, 0
    %p52 = por %p50, %p51
    %p53 = scmp.ne.s32.totalorder %s45, %s47
    %p54 = scmp.eq.s32.totalorder %s16, 1
    %p55 = por %p53, %p54
    %p56 = scmp.ne.s32.totalorder %s47, %s48
    %p57 = scmp.eq.s32.totalorder %s16, 0
    %p58 = por %p56, %p57
    %p59 = scmp.ne.s32.totalorder %s47, %s48
    %p60 = scmp.eq.s32.totalorder %s17, 1
    %p61 = por %p59, %p60
    %p63 = scmp.ne.s32.totalorder %s48, %s62
    %p64 = scmp.eq.s32.totalorder %s17, 0
    %p65 = por %p63, %p64
    %s67 = sadd.s32 %s66, 1
    %p70 = scmp.eq.s32.totalorder %s11, 1
    %p71 = scmp.ne.s32.totalorder %s66, %s68
    %p72 = scmp.eq.s32.totalorder %s11, 0
    %p73 = por %p71, %p72
    %p74 = scmp.ne.s32.totalorder %s66, %s68
    %p75 = scmp.eq.s32.totalorder %s16, 1
    %p76 = por %p74, %p75
    %p77 = scmp.ne.s32.totalorder %s68, %s69
    %p78 = scmp.eq.s32.totalorder %s16, 0
    %p79 = por %p77, %p78
    %p80 = scmp.ne.s32.totalorder %s68, %s69
    %p81 = scmp.eq.s32.totalorder %s17, 1
    %p82 = por %p80, %p81
    %p84 = scmp.ne.s32.totalorder %s69, %s83
    %p85 = scmp.eq.s32.totalorder %s17, 0
    %p86 = por %p84, %p85
    %s87 = ssub.s32 %s11, %s18
    %p88 = scmp.eq.s32.totalorder %s87, 0
    %s90 = sadd.s32 %s89, 1
    %s91 = scalar_select %p88, %s89, %s90
    %p94 = pneg %p88
    %p95 = scmp.eq.s32.totalorder %s11, 1
    %p96 = por %p94, %p95
    %p97 = scmp.ne.s32.totalorder %s89, %s92
    %p98 = scmp.eq.s32.totalorder %s11, 0
    %p99 = por %p97, %p98
    %p100 = scmp.ne.s32.totalorder %s89, %s92
    %p101 = scmp.eq.s32.totalorder %s16, 1
    %p102 = por %p100, %p101
    %p103 = scmp.ne.s32.totalorder %s92, %s93
    %p104 = scmp.eq.s32.totalorder %s16, 0
    %p105 = por %p103, %p104
    %p106 = scmp.ne.s32.totalorder %s92, %s93
    %p107 = scmp.eq.s32.totalorder %s17, 1
    %p108 = por %p106, %p107
    %p110 = scmp.ne.s32.totalorder %s93, %s109
    %p111 = scmp.eq.s32.totalorder %s17, 0
    %p112 = por %p110, %p111
    %s113 = ssub.s32 %s11, %s18
    %p114 = scmp.eq.s32.totalorder %s113, 0
    %s116 = sadd.s32 %s115, 1
    %s117 = scalar_select %p114, %s115, %s116
    %p120 = pneg %p114
    %p121 = scmp.eq.s32.totalorder %s11, 1
    %p122 = por %p120, %p121
    %p123 = scmp.ne.s32.totalorder %s115, %s118
    %p124 = scmp.eq.s32.totalorder %s11, 0
    %p125 = por %p123, %p124
    %p126 = scmp.ne.s32.totalorder %s115, %s118
    %p127 = scmp.eq.s32.totalorder %s16, 1
    %p128 = por %p126, %p127
    %p129 = scmp.ne.s32.totalorder %s118, %s119
    %p130 = scmp.eq.s32.totalorder %s16, 0
    %p131 = por %p129, %p130
    %p132 = scmp.ne.s32.totalorder %s118, %s119
    %p133 = scmp.eq.s32.totalorder %s17, 1
    %p134 = por %p132, %p133
    %p136 = scmp.ne.s32.totalorder %s119, %s135
    %p137 = scmp.eq.s32.totalorder %s17, 0
    %p138 = por %p136, %p137
    %p139 = scmp.le.s32.totalorder 1, %s11
    %p140 = scmp.lt.s32.totalorder %s11, 3
    %p141 = pnand %p139, %p140
    %p142 = pneg %p141
    // Predicated region
    $region9: #{residual_block.3} parent=5 // pred_check
      _
    $region10: #{residual_block.3} parent=5 // pred_check_branch
      %144 = sbr.rel (%p141) target = $region12
    $region11: #{residual_block.3} parent=5 // pred_region
      %s145 = ssub.s32 %s11, 1
      // Predicated region
      $region13: #{residual_block.3} parent=11 // pred_check
        %p146 = pneg %p58
      $region14: #{residual_block.3} parent=11 // pred_check_branch
        %148 = sbr.rel (%p146) target = $region16
      $region15: #{residual_block.3} parent=11 // pred_region
        _
      $region16: #{residual_block.3} parent=11 // pred_fallthru
        _
      // Predicated region
      $region17: #{residual_block.3} parent=11 // pred_check
        %p149 = pneg %p79
      $region18: #{residual_block.3} parent=11 // pred_check_branch
        %151 = sbr.rel (%p149) target = $region20
      $region19: #{residual_block.3} parent=11 // pred_region
        _
      $region20: #{residual_block.3} parent=11 // pred_fallthru
        _
    $region12: #{residual_block.3} parent=5 // pred_fallthru
      _
    %p152 = scmp.lt.s32.totalorder %s11, 2
    // Predicated region
    $region21: #{residual_block.3} parent=5 // pred_check
      %p153 = pneg %p152
    $region22: #{residual_block.3} parent=5 // pred_check_branch
      %155 = sbr.rel (%p153) target = $region24
    $region23: #{residual_block.3} parent=5 // pred_region
      // Predicated region
      $region25: #{residual_block.3} parent=23 // pred_check
        %p156 = pneg %p31
      $region26: #{residual_block.3} parent=23 // pred_check_branch
        %158 = sbr.rel (%p156) target = $region28
      $region27: #{residual_block.3} parent=23 // pred_region
        %p159 = scmp.lt.s32.totalorder %s11, 1
        %s160 = scalar_select %p159, %s11, 1
        %s161 = smul.addr %s160, 32
        %s162 = smul.addr %s161, 8
        %s163 = scalar_lea.vmem %s0, %s162
      $region28: #{residual_block.3} parent=23 // pred_fallthru
        _
    $region24: #{residual_block.3} parent=5 // pred_fallthru
      _
    %p164 = scmp.le.s32.totalorder 1, %s11
    %p165 = scmp.lt.s32.totalorder %s11, 3
    %p166 = pnand %p164, %p165
    %p167 = pneg %p166
    // Predicated region
    $region29: #{residual_block.3} parent=5 // pred_check
      _
    $region30: #{residual_block.3} parent=5 // pred_check_branch
      %169 = sbr.rel (%p166) target = $region32
    $region31: #{residual_block.3} parent=5 // pred_region
      %s170 = ssub.s32 %s11, 1
      %p171 = scmp.lt.s32.totalorder %s16, 1
      %s172 = scalar_select %p171, %s16, 1
      %s173 = smul.addr %s172, 32
      %s174 = smul.addr %s173, 8
      %s175 = scalar_lea.vmem %s0, %s174
      %p176 = pneg %p37
      %p177 = pneg %p34
      %p178 = pneg %p58
      %p179 = pneg %p55
      %p180 = pneg %p79
      %p181 = pneg %p76
      %p182 = pneg %p105
      %p183 = pneg %p102
      %p184 = scmp.lt.s32.totalorder %s16, 1
      %s185 = scalar_select %p184, %s16, 1
      %s186 = smul.addr %s185, 32
      %s187 = smul.addr %s186, 4
      %s188 = scalar_lea.vmem %s3, %s187
      %p189 = pneg %p131
      %p190 = pneg %p128
      %p191 = scmp.lt.s32.totalorder %s16, 1
      %s192 = scalar_select %p191, %s16, 1
      %s193 = smul.addr %s192, 2
      %s194 = scalar_lea.vmem %s4, %s193
      %p195 = scmp.lt.s32.totalorder %s16, 1
      %s196 = scalar_select %p195, %s16, 1
      %s197 = smul.addr %s196, 32
      %s198 = smul.addr %s197, 8
      %s199 = scalar_lea.vmem %s0, %s198
      %p200 = scmp.lt.s32.totalorder %s16, 1
      %s201 = scalar_select %p200, %s16, 1
      %s202 = smul.addr %s201, 32
      %s203 = smul.addr %s202, 4
      %s204 = scalar_lea.vmem %s3, %s203
      %p205 = scmp.lt.s32.totalorder %s16, 1
      %s206 = scalar_select %p205, %s16, 1
      %s207 = smul.addr %s206, 2
      %s208 = scalar_lea.vmem %s4, %s207
      %v210 = vld [vmem:[%s199] sm:$0xff]
      %v211 = vld [vmem:[%s199 + $0x8] sm:$0xff]
      %v212 = vld [vmem:[%s199 + $0x10] sm:$0xff]
      %v213 = vld [vmem:[%s199 + $0x18] sm:$0xff]
      %v214 = vld [vmem:[%s199 + $0x20] sm:$0xff]
      %v215 = vld [vmem:[%s199 + $0x28] sm:$0xff]
      %v216 = vld [vmem:[%s199 + $0x30] sm:$0xff]
      %v217 = vld [vmem:[%s199 + $0x38] sm:$0xff]
      %v218 = vld [vmem:[%s199 + $0x40] sm:$0xff]
      %v219 = vld [vmem:[%s199 + $0x48] sm:$0xff]
      %v220 = vld [vmem:[%s199 + $0x50] sm:$0xff]
      %v221 = vld [vmem:[%s199 + $0x58] sm:$0xff]
      %v222 = vld [vmem:[%s199 + $0x60] sm:$0xff]
      %v223 = vld [vmem:[%s199 + $0x68] sm:$0xff]
      %v224 = vld [vmem:[%s199 + $0x70] sm:$0xff]
      %v225 = vld [vmem:[%s199 + $0x78] sm:$0xff]
      %v226 = vld [vmem:[%s199 + $0x80] sm:$0xff]
      %v227 = vld [vmem:[%s199 + $0x88] sm:$0xff]
      %v228 = vld [vmem:[%s199 + $0x90] sm:$0xff]
      %v229 = vld [vmem:[%s199 + $0x98] sm:$0xff]
      %v230 = vld [vmem:[%s199 + $0xa0] sm:$0xff]
      %v231 = vld [vmem:[%s199 + $0xa8] sm:$0xff]
      %v232 = vld [vmem:[%s199 + $0xb0] sm:$0xff]
      %v233 = vld [vmem:[%s199 + $0xb8] sm:$0xff]
      %v234 = vld [vmem:[%s199 + $0xc0] sm:$0xff]
      %v235 = vld [vmem:[%s199 + $0xc8] sm:$0xff]
      %v236 = vld [vmem:[%s199 + $0xd0] sm:$0xff]
      %v237 = vld [vmem:[%s199 + $0xd8] sm:$0xff]
      %v238 = vld [vmem:[%s199 + $0xe0] sm:$0xff]
      %v239 = vld [vmem:[%s199 + $0xe8] sm:$0xff]
      %v240 = vld [vmem:[%s199 + $0xf0] sm:$0xff]
      %v241 = vld [vmem:[%s199 + $0xf8] sm:$0xff]
      %v242 = vpack.c.bf16 %v211, %v210
      %v243 = vpack.c.bf16 %v213, %v212
      %v244 = vpack.c.bf16 %v215, %v214
      %v245 = vpack.c.bf16 %v217, %v216
      %v246 = vpack.c.bf16 %v219, %v218
      %v247 = vpack.c.bf16 %v221, %v220
      %v248 = vpack.c.bf16 %v223, %v222
      %v249 = vpack.c.bf16 %v225, %v224
      %v250 = vpack.c.bf16 %v227, %v226
      %v251 = vpack.c.bf16 %v229, %v228
      %v252 = vpack.c.bf16 %v231, %v230
      %v253 = vpack.c.bf16 %v233, %v232
      %v254 = vpack.c.bf16 %v235, %v234
      %v255 = vpack.c.bf16 %v237, %v236
      %v256 = vpack.c.bf16 %v239, %v238
      %v257 = vpack.c.bf16 %v241, %v240
      %258 = vst [vmem:[#allocation2] sm:$0xf] 0
      %259 = vst [vmem:[#allocation2 + $0x4] sm:$0xf] 0
      %260 = vst [vmem:[#allocation2 + $0x8] sm:$0x1] 0
      %s261 = scalar_lea.vmem [#allocation2], 204
      %262 = vst [vmem:[%s261] sm:$0xf] 0
      %263 = vst [vmem:[%s261 + $0x4] sm:$0xf] 0
      %264 = vst [vmem:[%s261 + $0x8] sm:$0x1] 0
      %v266 = vshrl.u32 %v242, 16
      %v268 = vrot.slane %v266, 7
      %v269 = vshll.u32 %v242, 16
      %v271 = vor.u32 %v268, %v269
      %v273 = vshrl.u32 %v243, 16
      %v275 = vrot.slane %v273, 7
      %v276 = vshll.u32 %v243, 16
      %v278 = vor.u32 %v275, %v276
      %v280 = vshrl.u32 %v244, 16
      %v282 = vrot.slane %v280, 7
      %v283 = vshll.u32 %v244, 16
      %v285 = vor.u32 %v282, %v283
      %v287 = vshrl.u32 %v245, 16
      %v289 = vrot.slane %v287, 7
      %v290 = vshll.u32 %v245, 16
      %v292 = vor.u32 %v289, %v290
      %v294 = vshrl.u32 %v246, 16
      %v296 = vrot.slane %v294, 7
      %v297 = vshll.u32 %v246, 16
      %v299 = vor.u32 %v296, %v297
      %v301 = vshrl.u32 %v247, 16
      %v303 = vrot.slane %v301, 7
      %v304 = vshll.u32 %v247, 16
      %v306 = vor.u32 %v303, %v304
      %v308 = vshrl.u32 %v248, 16
      %v310 = vrot.slane %v308, 7
      %v311 = vshll.u32 %v248, 16
      %v313 = vor.u32 %v310, %v311
      %v315 = vshrl.u32 %v249, 16
      %v317 = vrot.slane %v315, 7
      %v318 = vshll.u32 %v249, 16
      %v320 = vor.u32 %v317, %v318
      %v322 = vshrl.u32 %v250, 16
      %v324 = vrot.slane %v322, 7
      %v325 = vshll.u32 %v250, 16
      %v327 = vor.u32 %v324, %v325
      %v329 = vshrl.u32 %v251, 16
      %v331 = vrot.slane %v329, 7
      %v332 = vshll.u32 %v251, 16
      %v334 = vor.u32 %v331, %v332
      %v336 = vshrl.u32 %v252, 16
      %v338 = vrot.slane %v336, 7
      %v339 = vshll.u32 %v252, 16
      %v341 = vor.u32 %v338, %v339
      %v343 = vshrl.u32 %v253, 16
      %v345 = vrot.slane %v343, 7
      %v346 = vshll.u32 %v253, 16
      %v348 = vor.u32 %v345, %v346
      %v350 = vshrl.u32 %v254, 16
      %v352 = vrot.slane %v350, 7
      %v353 = vshll.u32 %v254, 16
      %v355 = vor.u32 %v352, %v353
      %v357 = vshrl.u32 %v255, 16
      %v359 = vrot.slane %v357, 7
      %v360 = vshll.u32 %v255, 16
      %v362 = vor.u32 %v359, %v360
      %v364 = vshrl.u32 %v256, 16
      %v366 = vrot.slane %v364, 7
      %v367 = vshll.u32 %v256, 16
      %v369 = vor.u32 %v366, %v367
      %v371 = vshrl.u32 %v257, 16
      %v373 = vrot.slane %v371, 7
      %v374 = vshll.u32 %v257, 16
      %v376 = vor.u32 %v373, %v374
      %vm409 = vcmask 1040384
      %vm410 = vsmask.f32 256
      %vm411 = vmand %vm409, %vm410
      %v412 = vsel %vm411, 0, %v271
      %v413 = vsel %vm411, 0, %v278
      %v414 = vsel %vm411, 0, %v285
      %v415 = vsel %vm411, 0, %v292
      %v416 = vsel %vm411, 0, %v299
      %v417 = vsel %vm411, 0, %v306
      %v418 = vsel %vm411, 0, %v313
      %v419 = vsel %vm411, 0, %v320
      %v420 = vsel %vm411, 0, %v327
      %v421 = vsel %vm411, 0, %v334
      %v422 = vsel %vm411, 0, %v341
      %v423 = vsel %vm411, 0, %v348
      %v424 = vsel %vm411, 0, %v355
      %v425 = vsel %vm411, 0, %v362
      %v426 = vsel %vm411, 0, %v369
      %v427 = vsel %vm411, 0, %v376
      %v428 = vsel %vm411, %v268, 0
      %v429 = vsel %vm411, %v275, 0
      %v430 = vsel %vm411, %v282, 0
      %v431 = vsel %vm411, %v289, 0
      %v432 = vsel %vm411, %v296, 0
      %v433 = vsel %vm411, %v303, 0
      %v434 = vsel %vm411, %v310, 0
      %v435 = vsel %vm411, %v317, 0
      %v436 = vsel %vm411, %v324, 0
      %v437 = vsel %vm411, %v331, 0
      %v438 = vsel %vm411, %v338, 0
      %v439 = vsel %vm411, %v345, 0
      %v440 = vsel %vm411, %v352, 0
      %v441 = vsel %vm411, %v359, 0
      %v442 = vsel %vm411, %v366, 0
      %v443 = vsel %vm411, %v373, 0
      %v476 = vunpack.c.l.b16 %v412
      %v477 = vunpack.c.h.b16 %v412
      %v478 = vunpack.c.l.b16 %v428
      %v479 = vunpack.c.l.b16 %v413
      %v480 = vunpack.c.h.b16 %v413
      %v481 = vunpack.c.l.b16 %v429
      %v482 = vunpack.c.l.b16 %v414
      %v483 = vunpack.c.h.b16 %v414
      %v484 = vunpack.c.l.b16 %v430
      %v485 = vunpack.c.l.b16 %v415
      %v486 = vunpack.c.h.b16 %v415
      %v487 = vunpack.c.l.b16 %v431
      %v488 = vunpack.c.l.b16 %v416
      %v489 = vunpack.c.h.b16 %v416
      %v490 = vunpack.c.l.b16 %v432
      %v491 = vunpack.c.l.b16 %v417
      %v492 = vunpack.c.h.b16 %v417
      %v493 = vunpack.c.l.b16 %v433
      %v494 = vunpack.c.l.b16 %v418
      %v495 = vunpack.c.h.b16 %v418
      %v496 = vunpack.c.l.b16 %v434
      %v497 = vunpack.c.l.b16 %v419
      %v498 = vunpack.c.h.b16 %v419
      %v499 = vunpack.c.l.b16 %v435
      %v500 = vunpack.c.l.b16 %v420
      %v501 = vunpack.c.h.b16 %v420
      %v502 = vunpack.c.l.b16 %v436
      %v503 = vunpack.c.l.b16 %v421
      %v504 = vunpack.c.h.b16 %v421
      %v505 = vunpack.c.l.b16 %v437
      %v506 = vunpack.c.l.b16 %v422
      %v507 = vunpack.c.h.b16 %v422
      %v508 = vunpack.c.l.b16 %v438
      %v509 = vunpack.c.l.b16 %v423
      %v510 = vunpack.c.h.b16 %v423
      %v511 = vunpack.c.l.b16 %v439
      %v512 = vunpack.c.l.b16 %v424
      %v513 = vunpack.c.h.b16 %v424
      %v514 = vunpack.c.l.b16 %v440
      %v515 = vunpack.c.l.b16 %v425
      %v516 = vunpack.c.h.b16 %v425
      %v517 = vunpack.c.l.b16 %v441
      %v518 = vunpack.c.l.b16 %v426
      %v519 = vunpack.c.h.b16 %v426
      %v520 = vunpack.c.l.b16 %v442
      %v521 = vunpack.c.l.b16 %v427
      %v522 = vunpack.c.h.b16 %v427
      %v523 = vunpack.c.l.b16 %v443
      %v524 = vpack.c.b16 %v476, %v476
      %v525 = vpack.c.b16 %v477, %v477
      %v526 = vpack.c.b16 %v478, %v478
      %v527 = vpack.c.b16 %v479, %v479
      %v528 = vpack.c.b16 %v480, %v480
      %v529 = vpack.c.b16 %v481, %v481
      %v530 = vpack.c.b16 %v482, %v482
      %v531 = vpack.c.b16 %v483, %v483
      %v532 = vpack.c.b16 %v484, %v484
      %v533 = vpack.c.b16 %v485, %v485
      %v534 = vpack.c.b16 %v486, %v486
      %v535 = vpack.c.b16 %v487, %v487
      %v536 = vpack.c.b16 %v488, %v488
      %v537 = vpack.c.b16 %v489, %v489
      %v538 = vpack.c.b16 %v490, %v490
      %v539 = vpack.c.b16 %v491, %v491
      %v540 = vpack.c.b16 %v492, %v492
      %v541 = vpack.c.b16 %v493, %v493
      %v542 = vpack.c.b16 %v494, %v494
      %v543 = vpack.c.b16 %v495, %v495
      %v544 = vpack.c.b16 %v496, %v496
      %v545 = vpack.c.b16 %v497, %v497
      %v546 = vpack.c.b16 %v498, %v498
      %v547 = vpack.c.b16 %v499, %v499
      %v548 = vpack.c.b16 %v500, %v500
      %v549 = vpack.c.b16 %v501, %v501
      %v550 = vpack.c.b16 %v502, %v502
      %v551 = vpack.c.b16 %v503, %v503
      %v552 = vpack.c.b16 %v504, %v504
      %v553 = vpack.c.b16 %v505, %v505
      %v554 = vpack.c.b16 %v506, %v506
      %v555 = vpack.c.b16 %v507, %v507
      %v556 = vpack.c.b16 %v508, %v508
      %v557 = vpack.c.b16 %v509, %v509
      %v558 = vpack.c.b16 %v510, %v510
      %v559 = vpack.c.b16 %v511, %v511
      %v560 = vpack.c.b16 %v512, %v512
      %v561 = vpack.c.b16 %v513, %v513
      %v562 = vpack.c.b16 %v514, %v514
      %v563 = vpack.c.b16 %v515, %v515
      %v564 = vpack.c.b16 %v516, %v516
      %v565 = vpack.c.b16 %v517, %v517
      %v566 = vpack.c.b16 %v518, %v518
      %v567 = vpack.c.b16 %v519, %v519
      %v568 = vpack.c.b16 %v520, %v520
      %v569 = vpack.c.b16 %v521, %v521
      %v570 = vpack.c.b16 %v522, %v522
      %v571 = vpack.c.b16 %v523, %v523
      %s620 = scalar_lea.vmem [#allocation2], 12
      %621 = vst [vmem:[%s620] sm:$0xf] %v524
      %622 = vst [vmem:[%s620 + $0x4] sm:$0xf] %v525
      %623 = vst [vmem:[%s620 + $0x8] sm:$0x1] %v526
      %624 = vst [vmem:[%s620 + $0xc] sm:$0xf] %v527
      %625 = vst [vmem:[%s620 + $0x10] sm:$0xf] %v528
      %626 = vst [vmem:[%s620 + $0x14] sm:$0x1] %v529
      %627 = vst [vmem:[%s620 + $0x18] sm:$0xf] %v530
      %628 = vst [vmem:[%s620 + $0x1c] sm:$0xf] %v531
      %629 = vst [vmem:[%s620 + $0x20] sm:$0x1] %v532
      %630 = vst [vmem:[%s620 + $0x24] sm:$0xf] %v533
      %631 = vst [vmem:[%s620 + $0x28] sm:$0xf] %v534
      %632 = vst [vmem:[%s620 + $0x2c] sm:$0x1] %v535
      %633 = vst [vmem:[%s620 + $0x30] sm:$0xf] %v536
      %634 = vst [vmem:[%s620 + $0x34] sm:$0xf] %v537
      %635 = vst [vmem:[%s620 + $0x38] sm:$0x1] %v538
      %636 = vst [vmem:[%s620 + $0x3c] sm:$0xf] %v539
      %637 = vst [vmem:[%s620 + $0x40] sm:$0xf] %v540
      %638 = vst [vmem:[%s620 + $0x44] sm:$0x1] %v541
      %639 = vst [vmem:[%s620 + $0x48] sm:$0xf] %v542
      %640 = vst [vmem:[%s620 + $0x4c] sm:$0xf] %v543
      %641 = vst [vmem:[%s620 + $0x50] sm:$0x1] %v544
      %642 = vst [vmem:[%s620 + $0x54] sm:$0xf] %v545
      %643 = vst [vmem:[%s620 + $0x58] sm:$0xf] %v546
      %644 = vst [vmem:[%s620 + $0x5c] sm:$0x1] %v547
      %645 = vst [vmem:[%s620 + $0x60] sm:$0xf] %v548
      %646 = vst [vmem:[%s620 + $0x64] sm:$0xf] %v549
      %647 = vst [vmem:[%s620 + $0x68] sm:$0x1] %v550
      %648 = vst [vmem:[%s620 + $0x6c] sm:$0xf] %v551
      %649 = vst [vmem:[%s620 + $0x70] sm:$0xf] %v552
      %650 = vst [vmem:[%s620 + $0x74] sm:$0x1] %v553
      %651 = vst [vmem:[%s620 + $0x78] sm:$0xf] %v554
      %652 = vst [vmem:[%s620 + $0x7c] sm:$0xf] %v555
      %653 = vst [vmem:[%s620 + $0x80] sm:$0x1] %v556
      %654 = vst [vmem:[%s620 + $0x84] sm:$0xf] %v557
      %655 = vst [vmem:[%s620 + $0x88] sm:$0xf] %v558
      %656 = vst [vmem:[%s620 + $0x8c] sm:$0x1] %v559
      %657 = vst [vmem:[%s620 + $0x90] sm:$0xf] %v560
      %658 = vst [vmem:[%s620 + $0x94] sm:$0xf] %v561
      %659 = vst [vmem:[%s620 + $0x98] sm:$0x1] %v562
      %660 = vst [vmem:[%s620 + $0x9c] sm:$0xf] %v563
      %661 = vst [vmem:[%s620 + $0xa0] sm:$0xf] %v564
      %662 = vst [vmem:[%s620 + $0xa4] sm:$0x1] %v565
      %663 = vst [vmem:[%s620 + $0xa8] sm:$0xf] %v566
      %664 = vst [vmem:[%s620 + $0xac] sm:$0xf] %v567
      %665 = vst [vmem:[%s620 + $0xb0] sm:$0x1] %v568
      %666 = vst [vmem:[%s620 + $0xb4] sm:$0xf] %v569
      %667 = vst [vmem:[%s620 + $0xb8] sm:$0xf] %v570
      %668 = vst [vmem:[%s620 + $0xbc] sm:$0x1] %v571
      %v669 = vld [vmem:[#allocation2] sm:$0xf]
      %v670 = vld [vmem:[#allocation2 + $0x4] sm:$0xf]
      %v671 = vld [vmem:[#allocation2 + $0xc] sm:$0xf]
      %v672 = vld [vmem:[#allocation2 + $0x10] sm:$0xf]
      %v673 = vld [vmem:[#allocation2 + $0x18] sm:$0xf]
      %v674 = vld [vmem:[#allocation2 + $0x1c] sm:$0xf]
      %v675 = vld [vmem:[#allocation2 + $0x24] sm:$0xf]
      %v676 = vld [vmem:[#allocation2 + $0x28] sm:$0xf]
      %v677 = vld [vmem:[#allocation2 + $0x30] sm:$0xf]
      %v678 = vld [vmem:[#allocation2 + $0x34] sm:$0xf]
      %v679 = vld [vmem:[#allocation2 + $0x3c] sm:$0xf]
      %v680 = vld [vmem:[#allocation2 + $0x40] sm:$0xf]
      %v681 = vld [vmem:[#allocation2 + $0x48] sm:$0xf]
      %v682 = vld [vmem:[#allocation2 + $0x4c] sm:$0xf]
      %v683 = vld [vmem:[#allocation2 + $0x54] sm:$0xf]
      %v684 = vld [vmem:[#allocation2 + $0x58] sm:$0xf]
      %v685 = vld [vmem:[#allocation2 + $0x60] sm:$0xf]
      %v686 = vld [vmem:[#allocation2 + $0x64] sm:$0xf]
      %v687 = vld [vmem:[#allocation2 + $0x6c] sm:$0xf]
      %v688 = vld [vmem:[#allocation2 + $0x70] sm:$0xf]
      %v689 = vld [vmem:[#allocation2 + $0x78] sm:$0xf]
      %v690 = vld [vmem:[#allocation2 + $0x7c] sm:$0xf]
      %v691 = vld [vmem:[#allocation2 + $0x84] sm:$0xf]
      %v692 = vld [vmem:[#allocation2 + $0x88] sm:$0xf]
      %v693 = vld [vmem:[#allocation2 + $0x90] sm:$0xf]
      %v694 = vld [vmem:[#allocation2 + $0x94] sm:$0xf]
      %v695 = vld [vmem:[#allocation2 + $0x9c] sm:$0xf]
      %v696 = vld [vmem:[#allocation2 + $0xa0] sm:$0xf]
      %v697 = vld [vmem:[#allocation2 + $0xa8] sm:$0xf]
      %v698 = vld [vmem:[#allocation2 + $0xac] sm:$0xf]
      %v699 = vld [vmem:[#allocation2 + $0xb4] sm:$0xf]
      %v700 = vld [vmem:[#allocation2 + $0xb8] sm:$0xf]
      %701 = vst [vmem:[#allocation3] sm:$0xf] %v669
      %702 = vst [vmem:[#allocation3 + $0xc] sm:$0xf] %v670
      %703 = vst [vmem:[#allocation3 + $0x18] sm:$0xf] %v671
      %704 = vst [vmem:[#allocation3 + $0x24] sm:$0xf] %v672
      %705 = vst [vmem:[#allocation3 + $0x30] sm:$0xf] %v673
      %706 = vst [vmem:[#allocation3 + $0x3c] sm:$0xf] %v674
      %707 = vst [vmem:[#allocation3 + $0x48] sm:$0xf] %v675
      %708 = vst [vmem:[#allocation3 + $0x54] sm:$0xf] %v676
      %709 = vst [vmem:[#allocation3 + $0x60] sm:$0xf] %v677
      %710 = vst [vmem:[#allocation3 + $0x6c] sm:$0xf] %v678
      %711 = vst [vmem:[#allocation3 + $0x78] sm:$0xf] %v679
      %712 = vst [vmem:[#allocation3 + $0x84] sm:$0xf] %v680
      %713 = vst [vmem:[#allocation3 + $0x90] sm:$0xf] %v681
      %714 = vst [vmem:[#allocation3 + $0x9c] sm:$0xf] %v682
      %715 = vst [vmem:[#allocation3 + $0xa8] sm:$0xf] %v683
      %716 = vst [vmem:[#allocation3 + $0xb4] sm:$0xf] %v684
      %717 = vst [vmem:[#allocation3 + $0xc0] sm:$0xf] %v685
      %718 = vst [vmem:[#allocation3 + $0xcc] sm:$0xf] %v686
      %719 = vst [vmem:[#allocation3 + $0xd8] sm:$0xf] %v687
      %720 = vst [vmem:[#allocation3 + $0xe4] sm:$0xf] %v688
      %721 = vst [vmem:[#allocation3 + $0xf0] sm:$0xf] %v689
      %722 = vst [vmem:[#allocation3 + $0xfc] sm:$0xf] %v690
      %723 = vst [vmem:[#allocation3 + $0x108] sm:$0xf] %v691
      %724 = vst [vmem:[#allocation3 + $0x114] sm:$0xf] %v692
      %725 = vst [vmem:[#allocation3 + $0x120] sm:$0xf] %v693
      %726 = vst [vmem:[#allocation3 + $0x12c] sm:$0xf] %v694
      %727 = vst [vmem:[#allocation3 + $0x138] sm:$0xf] %v695
      %728 = vst [vmem:[#allocation3 + $0x144] sm:$0xf] %v696
      %729 = vst [vmem:[#allocation3 + $0x150] sm:$0xf] %v697
      %730 = vst [vmem:[#allocation3 + $0x15c] sm:$0xf] %v698
      %731 = vst [vmem:[#allocation3 + $0x168] sm:$0xf] %v699
      %732 = vst [vmem:[#allocation3 + $0x174] sm:$0xf] %v700
      %v733 = vld [vmem:[#allocation2] sm:$0xf]
      %v734 = vld [vmem:[#allocation2 + $0x4] sm:$0xf]
      %v735 = vld [vmem:[#allocation2 + $0x8] sm:$0x1]
      %v736 = vld [vmem:[#allocation2 + $0xc] sm:$0xf]
      %v737 = vld [vmem:[#allocation2 + $0x10] sm:$0xf]
      %v738 = vld [vmem:[#allocation2 + $0x14] sm:$0x1]
      %v739 = vld [vmem:[#allocation2 + $0x18] sm:$0xf]
      %v740 = vld [vmem:[#allocation2 + $0x1c] sm:$0xf]
      %v741 = vld [vmem:[#allocation2 + $0x20] sm:$0x1]
      %v742 = vld [vmem:[#allocation2 + $0x24] sm:$0xf]
      %v743 = vld [vmem:[#allocation2 + $0x28] sm:$0xf]
      %v744 = vld [vmem:[#allocation2 + $0x2c] sm:$0x1]
      %v745 = vld [vmem:[#allocation2 + $0x30] sm:$0xf]
      %v746 = vld [vmem:[#allocation2 + $0x34] sm:$0xf]
      %v747 = vld [vmem:[#allocation2 + $0x38] sm:$0x1]
      %v748 = vld [vmem:[#allocation2 + $0x3c] sm:$0xf]
      %v749 = vld [vmem:[#allocation2 + $0x40] sm:$0xf]
      %v750 = vld [vmem:[#allocation2 + $0x44] sm:$0x1]
      %v751 = vld [vmem:[#allocation2 + $0x48] sm:$0xf]
      %v752 = vld [vmem:[#allocation2 + $0x4c] sm:$0xf]
      %v753 = vld [vmem:[#allocation2 + $0x50] sm:$0x1]
      %v754 = vld [vmem:[#allocation2 + $0x54] sm:$0xf]
      %v755 = vld [vmem:[#allocation2 + $0x58] sm:$0xf]
      %v756 = vld [vmem:[#allocation2 + $0x5c] sm:$0x1]
      %v757 = vld [vmem:[#allocation2 + $0x60] sm:$0xf]
      %v758 = vld [vmem:[#allocation2 + $0x64] sm:$0xf]
      %v759 = vld [vmem:[#allocation2 + $0x68] sm:$0x1]
      %v760 = vld [vmem:[#allocation2 + $0x6c] sm:$0xf]
      %v761 = vld [vmem:[#allocation2 + $0x70] sm:$0xf]
      %v762 = vld [vmem:[#allocation2 + $0x74] sm:$0x1]
      %v763 = vld [vmem:[#allocation2 + $0x78] sm:$0xf]
      %v764 = vld [vmem:[#allocation2 + $0x7c] sm:$0xf]
      %v765 = vld [vmem:[#allocation2 + $0x80] sm:$0x1]
      %v766 = vld [vmem:[#allocation2 + $0x84] sm:$0xf]
      %v767 = vld [vmem:[#allocation2 + $0x88] sm:$0xf]
      %v768 = vld [vmem:[#allocation2 + $0x8c] sm:$0x1]
      %v769 = vld [vmem:[#allocation2 + $0x90] sm:$0xf]
      %v770 = vld [vmem:[#allocation2 + $0x94] sm:$0xf]
      %v771 = vld [vmem:[#allocation2 + $0x98] sm:$0x1]
      %v772 = vld [vmem:[#allocation2 + $0x9c] sm:$0xf]
      %v773 = vld [vmem:[#allocation2 + $0xa0] sm:$0xf]
      %v774 = vld [vmem:[#allocation2 + $0xa4] sm:$0x1]
      %v775 = vld [vmem:[#allocation2 + $0xa8] sm:$0xf]
      %v776 = vld [vmem:[#allocation2 + $0xac] sm:$0xf]
      %v777 = vld [vmem:[#allocation2 + $0xb0] sm:$0x1]
      %v778 = vld [vmem:[#allocation2 + $0xb4] sm:$0xf]
      %v779 = vld [vmem:[#allocation2 + $0xb8] sm:$0xf]
      %v780 = vld [vmem:[#allocation2 + $0xbc] sm:$0x1]
      %vm781 = vsmask.f32 3328
      %vm782 = vsmask.f32 7440
      %vm783 = vmor %vm781, %vm782
      %v785 = vshrl.u32 %v733, 16
      %v787 = vrot.slane %v785, 4
      %v788 = vshll.u32 %v733, 16
      %v790 = vrot.slane %v788, 5
      %v791 = vor.u32 %v787, %v790
      %v792 = vrot.slane %v791, 4
      %v794 = vshll.u32 %v734, 16
      %v796 = vrot.slane %v794, 5
      %v797 = vsel %vm783, %v792, %v796
      %v798 = vshrl.u32 %v734, 16
      %v800 = vrot.slane %v798, 4
      %v801 = vor.u32 %v800, %v796
      %v802 = vrot.slane %v801, 4
      %v804 = vshll.u32 %v735, 16
      %v806 = vrot.slane %v804, 5
      %v807 = vsel %vm783, %v802, %v806
      %v809 = vshrl.u32 %v736, 16
      %v811 = vrot.slane %v809, 4
      %v812 = vshll.u32 %v736, 16
      %v814 = vrot.slane %v812, 5
      %v815 = vor.u32 %v811, %v814
      %v816 = vrot.slane %v815, 4
      %v818 = vshll.u32 %v737, 16
      %v820 = vrot.slane %v818, 5
      %v821 = vsel %vm783, %v816, %v820
      %v822 = vshrl.u32 %v737, 16
      %v824 = vrot.slane %v822, 4
      %v825 = vor.u32 %v824, %v820
      %v826 = vrot.slane %v825, 4
      %v828 = vshll.u32 %v738, 16
      %v830 = vrot.slane %v828, 5
      %v831 = vsel %vm783, %v826, %v830
      %v833 = vshrl.u32 %v739, 16
      %v835 = vrot.slane %v833, 4
      %v836 = vshll.u32 %v739, 16
      %v838 = vrot.slane %v836, 5
      %v839 = vor.u32 %v835, %v838
      %v840 = vrot.slane %v839, 4
      %v842 = vshll.u32 %v740, 16
      %v844 = vrot.slane %v842, 5
      %v845 = vsel %vm783, %v840, %v844
      %v846 = vshrl.u32 %v740, 16
      %v848 = vrot.slane %v846, 4
      %v849 = vor.u32 %v848, %v844
      %v850 = vrot.slane %v849, 4
      %v852 = vshll.u32 %v741, 16
      %v854 = vrot.slane %v852, 5
      %v855 = vsel %vm783, %v850, %v854
      %v857 = vshrl.u32 %v742, 16
      %v859 = vrot.slane %v857, 4
      %v860 = vshll.u32 %v742, 16
      %v862 = vrot.slane %v860, 5
      %v863 = vor.u32 %v859, %v862
      %v864 = vrot.slane %v863, 4
      %v866 = vshll.u32 %v743, 16
      %v868 = vrot.slane %v866, 5
      %v869 = vsel %vm783, %v864, %v868
      %v870 = vshrl.u32 %v743, 16
      %v872 = vrot.slane %v870, 4
      %v873 = vor.u32 %v872, %v868
      %v874 = vrot.slane %v873, 4
      %v876 = vshll.u32 %v744, 16
      %v878 = vrot.slane %v876, 5
      %v879 = vsel %vm783, %v874, %v878
      %v881 = vshrl.u32 %v745, 16
      %v883 = vrot.slane %v881, 4
      %v884 = vshll.u32 %v745, 16
      %v886 = vrot.slane %v884, 5
      %v887 = vor.u32 %v883, %v886
      %v888 = vrot.slane %v887, 4
      %v890 = vshll.u32 %v746, 16
      %v892 = vrot.slane %v890, 5
      %v893 = vsel %vm783, %v888, %v892
      %v894 = vshrl.u32 %v746, 16
      %v896 = vrot.slane %v894, 4
      %v897 = vor.u32 %v896, %v892
      %v898 = vrot.slane %v897, 4
      %v900 = vshll.u32 %v747, 16
      %v902 = vrot.slane %v900, 5
      %v903 = vsel %vm783, %v898, %v902
      %v905 = vshrl.u32 %v748, 16
      %v907 = vrot.slane %v905, 4
      %v908 = vshll.u32 %v748, 16
      %v910 = vrot.slane %v908, 5
      %v911 = vor.u32 %v907, %v910
      %v912 = vrot.slane %v911, 4
      %v914 = vshll.u32 %v749, 16
      %v916 = vrot.slane %v914, 5
      %v917 = vsel %vm783, %v912, %v916
      %v918 = vshrl.u32 %v749, 16
      %v920 = vrot.slane %v918, 4
      %v921 = vor.u32 %v920, %v916
      %v922 = vrot.slane %v921, 4
      %v924 = vshll.u32 %v750, 16
      %v926 = vrot.slane %v924, 5
      %v927 = vsel %vm783, %v922, %v926
      %v929 = vshrl.u32 %v751, 16
      %v931 = vrot.slane %v929, 4
      %v932 = vshll.u32 %v751, 16
      %v934 = vrot.slane %v932, 5
      %v935 = vor.u32 %v931, %v934
      %v936 = vrot.slane %v935, 4
      %v938 = vshll.u32 %v752, 16
      %v940 = vrot.slane %v938, 5
      %v941 = vsel %vm783, %v936, %v940
      %v942 = vshrl.u32 %v752, 16
      %v944 = vrot.slane %v942, 4
      %v945 = vor.u32 %v944, %v940
      %v946 = vrot.slane %v945, 4
      %v948 = vshll.u32 %v753, 16
      %v950 = vrot.slane %v948, 5
      %v951 = vsel %vm783, %v946, %v950
      %v953 = vshrl.u32 %v754, 16
      %v955 = vrot.slane %v953, 4
      %v956 = vshll.u32 %v754, 16
      %v958 = vrot.slane %v956, 5
      %v959 = vor.u32 %v955, %v958
      %v960 = vrot.slane %v959, 4
      %v962 = vshll.u32 %v755, 16
      %v964 = vrot.slane %v962, 5
      %v965 = vsel %vm783, %v960, %v964
      %v966 = vshrl.u32 %v755, 16
      %v968 = vrot.slane %v966, 4
      %v969 = vor.u32 %v968, %v964
      %v970 = vrot.slane %v969, 4
      %v972 = vshll.u32 %v756, 16
      %v974 = vrot.slane %v972, 5
      %v975 = vsel %vm783, %v970, %v974
      %v977 = vshrl.u32 %v757, 16
      %v979 = vrot.slane %v977, 4
      %v980 = vshll.u32 %v757, 16
      %v982 = vrot.slane %v980, 5
      %v983 = vor.u32 %v979, %v982
      %v984 = vrot.slane %v983, 4
      %v986 = vshll.u32 %v758, 16
      %v988 = vrot.slane %v986, 5
      %v989 = vsel %vm783, %v984, %v988
      %v990 = vshrl.u32 %v758, 16
      %v992 = vrot.slane %v990, 4
      %v993 = vor.u32 %v992, %v988
      %v994 = vrot.slane %v993, 4
      %v996 = vshll.u32 %v759, 16
      %v998 = vrot.slane %v996, 5
      %v999 = vsel %vm783, %v994, %v998
      %v1001 = vshrl.u32 %v760, 16
      %v1003 = vrot.slane %v1001, 4
      %v1004 = vshll.u32 %v760, 16
      %v1006 = vrot.slane %v1004, 5
      %v1007 = vor.u32 %v1003, %v1006
      %v1008 = vrot.slane %v1007, 4
      %v1010 = vshll.u32 %v761, 16
      %v1012 = vrot.slane %v1010, 5
      %v1013 = vsel %vm783, %v1008, %v1012
      %v1014 = vshrl.u32 %v761, 16
      %v1016 = vrot.slane %v1014, 4
      %v1017 = vor.u32 %v1016, %v1012
      %v1018 = vrot.slane %v1017, 4
      %v1020 = vshll.u32 %v762, 16
      %v1022 = vrot.slane %v1020, 5
      %v1023 = vsel %vm783, %v1018, %v1022
      %v1025 = vshrl.u32 %v763, 16
      %v1027 = vrot.slane %v1025, 4
      %v1028 = vshll.u32 %v763, 16
      %v1030 = vrot.slane %v1028, 5
      %v1031 = vor.u32 %v1027, %v1030
      %v1032 = vrot.slane %v1031, 4
      %v1034 = vshll.u32 %v764, 16
      %v1036 = vrot.slane %v1034, 5
      %v1037 = vsel %vm783, %v1032, %v1036
      %v1038 = vshrl.u32 %v764, 16
      %v1040 = vrot.slane %v1038, 4
      %v1041 = vor.u32 %v1040, %v1036
      %v1042 = vrot.slane %v1041, 4
      %v1044 = vshll.u32 %v765, 16
      %v1046 = vrot.slane %v1044, 5
      %v1047 = vsel %vm783, %v1042, %v1046
      %v1049 = vshrl.u32 %v766, 16
      %v1051 = vrot.slane %v1049, 4
      %v1052 = vshll.u32 %v766, 16
      %v1054 = vrot.slane %v1052, 5
      %v1055 = vor.u32 %v1051, %v1054
      %v1056 = vrot.slane %v1055, 4
      %v1058 = vshll.u32 %v767, 16
      %v1060 = vrot.slane %v1058, 5
      %v1061 = vsel %vm783, %v1056, %v1060
      %v1062 = vshrl.u32 %v767, 16
      %v1064 = vrot.slane %v1062, 4
      %v1065 = vor.u32 %v1064, %v1060
      %v1066 = vrot.slane %v1065, 4
      %v1068 = vshll.u32 %v768, 16
      %v1070 = vrot.slane %v1068, 5
      %v1071 = vsel %vm783, %v1066, %v1070
      %v1073 = vshrl.u32 %v769, 16
      %v1075 = vrot.slane %v1073, 4
      %v1076 = vshll.u32 %v769, 16
      %v1078 = vrot.slane %v1076, 5
      %v1079 = vor.u32 %v1075, %v1078
      %v1080 = vrot.slane %v1079, 4
      %v1082 = vshll.u32 %v770, 16
      %v1084 = vrot.slane %v1082, 5
      %v1085 = vsel %vm783, %v1080, %v1084
      %v1086 = vshrl.u32 %v770, 16
      %v1088 = vrot.slane %v1086, 4
      %v1089 = vor.u32 %v1088, %v1084
      %v1090 = vrot.slane %v1089, 4
      %v1092 = vshll.u32 %v771, 16
      %v1094 = vrot.slane %v1092, 5
      %v1095 = vsel %vm783, %v1090, %v1094
      %v1097 = vshrl.u32 %v772, 16
      %v1099 = vrot.slane %v1097, 4
      %v1100 = vshll.u32 %v772, 16
      %v1102 = vrot.slane %v1100, 5
      %v1103 = vor.u32 %v1099, %v1102
      %v1104 = vrot.slane %v1103, 4
      %v1106 = vshll.u32 %v773, 16
      %v1108 = vrot.slane %v1106, 5
      %v1109 = vsel %vm783, %v1104, %v1108
      %v1110 = vshrl.u32 %v773, 16
      %v1112 = vrot.slane %v1110, 4
      %v1113 = vor.u32 %v1112, %v1108
      %v1114 = vrot.slane %v1113, 4
      %v1116 = vshll.u32 %v774, 16
      %v1118 = vrot.slane %v1116, 5
      %v1119 = vsel %vm783, %v1114, %v1118
      %v1121 = vshrl.u32 %v775, 16
      %v1123 = vrot.slane %v1121, 4
      %v1124 = vshll.u32 %v775, 16
      %v1126 = vrot.slane %v1124, 5
      %v1127 = vor.u32 %v1123, %v1126
      %v1128 = vrot.slane %v1127, 4
      %v1130 = vshll.u32 %v776, 16
      %v1132 = vrot.slane %v1130, 5
      %v1133 = vsel %vm783, %v1128, %v1132
      %v1134 = vshrl.u32 %v776, 16
      %v1136 = vrot.slane %v1134, 4
      %v1137 = vor.u32 %v1136, %v1132
      %v1138 = vrot.slane %v1137, 4
      %v1140 = vshll.u32 %v777, 16
      %v1142 = vrot.slane %v1140, 5
      %v1143 = vsel %vm783, %v1138, %v1142
      %v1145 = vshrl.u32 %v778, 16
      %v1147 = vrot.slane %v1145, 4
      %v1148 = vshll.u32 %v778, 16
      %v1150 = vrot.slane %v1148, 5
      %v1151 = vor.u32 %v1147, %v1150
      %v1152 = vrot.slane %v1151, 4
      %v1154 = vshll.u32 %v779, 16
      %v1156 = vrot.slane %v1154, 5
      %v1157 = vsel %vm783, %v1152, %v1156
      %v1158 = vshrl.u32 %v779, 16
      %v1160 = vrot.slane %v1158, 4
      %v1161 = vor.u32 %v1160, %v1156
      %v1162 = vrot.slane %v1161, 4
      %v1164 = vshll.u32 %v780, 16
      %v1166 = vrot.slane %v1164, 5
      %v1167 = vsel %vm783, %v1162, %v1166
      %1200 = vst [vmem:[#allocation3 + $0x4] sm:$0xf] %v797
      %1201 = vst [vmem:[#allocation3 + $0x10] sm:$0xf] %v807
      %1202 = vst [vmem:[#allocation3 + $0x1c] sm:$0xf] %v821
      %1203 = vst [vmem:[#allocation3 + $0x28] sm:$0xf] %v831
      %1204 = vst [vmem:[#allocation3 + $0x34] sm:$0xf] %v845
      %1205 = vst [vmem:[#allocation3 + $0x40] sm:$0xf] %v855
      %1206 = vst [vmem:[#allocation3 + $0x4c] sm:$0xf] %v869
      %1207 = vst [vmem:[#allocation3 + $0x58] sm:$0xf] %v879
      %1208 = vst [vmem:[#allocation3 + $0x64] sm:$0xf] %v893
      %1209 = vst [vmem:[#allocation3 + $0x70] sm:$0xf] %v903
      %1210 = vst [vmem:[#allocation3 + $0x7c] sm:$0xf] %v917
      %1211 = vst [vmem:[#allocation3 + $0x88] sm:$0xf] %v927
      %1212 = vst [vmem:[#allocation3 + $0x94] sm:$0xf] %v941
      %1213 = vst [vmem:[#allocation3 + $0xa0] sm:$0xf] %v951
      %1214 = vst [vmem:[#allocation3 + $0xac] sm:$0xf] %v965
      %1215 = vst [vmem:[#allocation3 + $0xb8] sm:$0xf] %v975
      %1216 = vst [vmem:[#allocation3 + $0xc4] sm:$0xf] %v989
      %1217 = vst [vmem:[#allocation3 + $0xd0] sm:$0xf] %v999
      %1218 = vst [vmem:[#allocation3 + $0xdc] sm:$0xf] %v1013
      %1219 = vst [vmem:[#allocation3 + $0xe8] sm:$0xf] %v1023
      %1220 = vst [vmem:[#allocation3 + $0xf4] sm:$0xf] %v1037
      %1221 = vst [vmem:[#allocation3 + $0x100] sm:$0xf] %v1047
      %1222 = vst [vmem:[#allocation3 + $0x10c] sm:$0xf] %v1061
      %1223 = vst [vmem:[#allocation3 + $0x118] sm:$0xf] %v1071
      %1224 = vst [vmem:[#allocation3 + $0x124] sm:$0xf] %v1085
      %1225 = vst [vmem:[#allocation3 + $0x130] sm:$0xf] %v1095
      %1226 = vst [vmem:[#allocation3 + $0x13c] sm:$0xf] %v1109
      %1227 = vst [vmem:[#allocation3 + $0x148] sm:$0xf] %v1119
      %1228 = vst [vmem:[#allocation3 + $0x154] sm:$0xf] %v1133
      %1229 = vst [vmem:[#allocation3 + $0x160] sm:$0xf] %v1143
      %1230 = vst [vmem:[#allocation3 + $0x16c] sm:$0xf] %v1157
      %1231 = vst [vmem:[#allocation3 + $0x178] sm:$0xf] %v1167
      %v1232 = vld [vmem:[#allocation2] sm:$0xe]
      %v1233 = vld [vmem:[#allocation2 + $0x4] sm:$0xf]
      %v1234 = vld [vmem:[#allocation2 + $0x8] sm:$0x1]
      %v1235 = vld [vmem:[#allocation2 + $0xc] sm:$0xe]
      %v1236 = vld [vmem:[#allocation2 + $0x10] sm:$0xf]
      %v1237 = vld [vmem:[#allocation2 + $0x14] sm:$0x1]
      %v1238 = vld [vmem:[#allocation2 + $0x18] sm:$0xe]
      %v1239 = vld [vmem:[#allocation2 + $0x1c] sm:$0xf]
      %v1240 = vld [vmem:[#allocation2 + $0x20] sm:$0x1]
      %v1241 = vld [vmem:[#allocation2 + $0x24] sm:$0xe]
      %v1242 = vld [vmem:[#allocation2 + $0x28] sm:$0xf]
      %v1243 = vld [vmem:[#allocation2 + $0x2c] sm:$0x1]
      %v1244 = vld [vmem:[#allocation2 + $0x30] sm:$0xe]
      %v1245 = vld [vmem:[#allocation2 + $0x34] sm:$0xf]
      %v1246 = vld [vmem:[#allocation2 + $0x38] sm:$0x1]
      %v1247 = vld [vmem:[#allocation2 + $0x3c] sm:$0xe]
      %v1248 = vld [vmem:[#allocation2 + $0x40] sm:$0xf]
      %v1249 = vld [vmem:[#allocation2 + $0x44] sm:$0x1]
      %v1250 = vld [vmem:[#allocation2 + $0x48] sm:$0xe]
      %v1251 = vld [vmem:[#allocation2 + $0x4c] sm:$0xf]
      %v1252 = vld [vmem:[#allocation2 + $0x50] sm:$0x1]
      %v1253 = vld [vmem:[#allocation2 + $0x54] sm:$0xe]
      %v1254 = vld [vmem:[#allocation2 + $0x58] sm:$0xf]
      %v1255 = vld [vmem:[#allocation2 + $0x5c] sm:$0x1]
      %v1256 = vld [vmem:[#allocation2 + $0x60] sm:$0xe]
      %v1257 = vld [vmem:[#allocation2 + $0x64] sm:$0xf]
      %v1258 = vld [vmem:[#allocation2 + $0x68] sm:$0x1]
      %v1259 = vld [vmem:[#allocation2 + $0x6c] sm:$0xe]
      %v1260 = vld [vmem:[#allocation2 + $0x70] sm:$0xf]
      %v1261 = vld [vmem:[#allocation2 + $0x74] sm:$0x1]
      %v1262 = vld [vmem:[#allocation2 + $0x78] sm:$0xe]
      %v1263 = vld [vmem:[#allocation2 + $0x7c] sm:$0xf]
      %v1264 = vld [vmem:[#allocation2 + $0x80] sm:$0x1]
      %v1265 = vld [vmem:[#allocation2 + $0x84] sm:$0xe]
      %v1266 = vld [vmem:[#allocation2 + $0x88] sm:$0xf]
      %v1267 = vld [vmem:[#allocation2 + $0x8c] sm:$0x1]
      %v1268 = vld [vmem:[#allocation2 + $0x90] sm:$0xe]
      %v1269 = vld [vmem:[#allocation2 + $0x94] sm:$0xf]
      %v1270 = vld [vmem:[#allocation2 + $0x98] sm:$0x1]
      %v1271 = vld [vmem:[#allocation2 + $0x9c] sm:$0xe]
      %v1272 = vld [vmem:[#allocation2 + $0xa0] sm:$0xf]
      %v1273 = vld [vmem:[#allocation2 + $0xa4] sm:$0x1]
      %v1274 = vld [vmem:[#allocation2 + $0xa8] sm:$0xe]
      %v1275 = vld [vmem:[#allocation2 + $0xac] sm:$0xf]
      %v1276 = vld [vmem:[#allocation2 + $0xb0] sm:$0x1]
      %v1277 = vld [vmem:[#allocation2 + $0xb4] sm:$0xe]
      %v1278 = vld [vmem:[#allocation2 + $0xb8] sm:$0xf]
      %v1279 = vld [vmem:[#allocation2 + $0xbc] sm:$0x1]
      %vm1328 = vcmask 1042432
      %vm1329 = vcmask 1046532
      %vm1330 = vmor %vm1328, %vm1329
      %v1331 = vrot.slane %v1232, 5
      %v1332 = vrot.slane %v1331, 4
      %v1333 = vrot.slane %v1233, 5
      %v1334 = vsel %vm1330, %v1332, %v1333
      %v1335 = vrot.slane %v1333, 4
      %v1336 = vrot.slane %v1234, 5
      %v1337 = vsel %vm1330, %v1335, %v1336
      %v1338 = vrot.slane %v1235, 5
      %v1339 = vrot.slane %v1338, 4
      %v1340 = vrot.slane %v1236, 5
      %v1341 = vsel %vm1330, %v1339, %v1340
      %v1342 = vrot.slane %v1340, 4
      %v1343 = vrot.slane %v1237, 5
      %v1344 = vsel %vm1330, %v1342, %v1343
      %v1345 = vrot.slane %v1238, 5
      %v1346 = vrot.slane %v1345, 4
      %v1347 = vrot.slane %v1239, 5
      %v1348 = vsel %vm1330, %v1346, %v1347
      %v1349 = vrot.slane %v1347, 4
      %v1350 = vrot.slane %v1240, 5
      %v1351 = vsel %vm1330, %v1349, %v1350
      %v1352 = vrot.slane %v1241, 5
      %v1353 = vrot.slane %v1352, 4
      %v1354 = vrot.slane %v1242, 5
      %v1355 = vsel %vm1330, %v1353, %v1354
      %v1356 = vrot.slane %v1354, 4
      %v1357 = vrot.slane %v1243, 5
      %v1358 = vsel %vm1330, %v1356, %v1357
      %v1359 = vrot.slane %v1244, 5
      %v1360 = vrot.slane %v1359, 4
      %v1361 = vrot.slane %v1245, 5
      %v1362 = vsel %vm1330, %v1360, %v1361
      %v1363 = vrot.slane %v1361, 4
      %v1364 = vrot.slane %v1246, 5
      %v1365 = vsel %vm1330, %v1363, %v1364
      %v1366 = vrot.slane %v1247, 5
      %v1367 = vrot.slane %v1366, 4
      %v1368 = vrot.slane %v1248, 5
      %v1369 = vsel %vm1330, %v1367, %v1368
      %v1370 = vrot.slane %v1368, 4
      %v1371 = vrot.slane %v1249, 5
      %v1372 = vsel %vm1330, %v1370, %v1371
      %v1373 = vrot.slane %v1250, 5
      %v1374 = vrot.slane %v1373, 4
      %v1375 = vrot.slane %v1251, 5
      %v1376 = vsel %vm1330, %v1374, %v1375
      %v1377 = vrot.slane %v1375, 4
      %v1378 = vrot.slane %v1252, 5
      %v1379 = vsel %vm1330, %v1377, %v1378
      %v1380 = vrot.slane %v1253, 5
      %v1381 = vrot.slane %v1380, 4
      %v1382 = vrot.slane %v1254, 5
      %v1383 = vsel %vm1330, %v1381, %v1382
      %v1384 = vrot.slane %v1382, 4
      %v1385 = vrot.slane %v1255, 5
      %v1386 = vsel %vm1330, %v1384, %v1385
      %v1387 = vrot.slane %v1256, 5
      %v1388 = vrot.slane %v1387, 4
      %v1389 = vrot.slane %v1257, 5
      %v1390 = vsel %vm1330, %v1388, %v1389
      %v1391 = vrot.slane %v1389, 4
      %v1392 = vrot.slane %v1258, 5
      %v1393 = vsel %vm1330, %v1391, %v1392
      %v1394 = vrot.slane %v1259, 5
      %v1395 = vrot.slane %v1394, 4
      %v1396 = vrot.slane %v1260, 5
      %v1397 = vsel %vm1330, %v1395, %v1396
      %v1398 = vrot.slane %v1396, 4
      %v1399 = vrot.slane %v1261, 5
      %v1400 = vsel %vm1330, %v1398, %v1399
      %v1401 = vrot.slane %v1262, 5
      %v1402 = vrot.slane %v1401, 4
      %v1403 = vrot.slane %v1263, 5
      %v1404 = vsel %vm1330, %v1402, %v1403
      %v1405 = vrot.slane %v1403, 4
      %v1406 = vrot.slane %v1264, 5
      %v1407 = vsel %vm1330, %v1405, %v1406
      %v1408 = vrot.slane %v1265, 5
      %v1409 = vrot.slane %v1408, 4
      %v1410 = vrot.slane %v1266, 5
      %v1411 = vsel %vm1330, %v1409, %v1410
      %v1412 = vrot.slane %v1410, 4
      %v1413 = vrot.slane %v1267, 5
      %v1414 = vsel %vm1330, %v1412, %v1413
      %v1415 = vrot.slane %v1268, 5
      %v1416 = vrot.slane %v1415, 4
      %v1417 = vrot.slane %v1269, 5
      %v1418 = vsel %vm1330, %v1416, %v1417
      %v1419 = vrot.slane %v1417, 4
      %v1420 = vrot.slane %v1270, 5
      %v1421 = vsel %vm1330, %v1419, %v1420
      %v1422 = vrot.slane %v1271, 5
      %v1423 = vrot.slane %v1422, 4
      %v1424 = vrot.slane %v1272, 5
      %v1425 = vsel %vm1330, %v1423, %v1424
      %v1426 = vrot.slane %v1424, 4
      %v1427 = vrot.slane %v1273, 5
      %v1428 = vsel %vm1330, %v1426, %v1427
      %v1429 = vrot.slane %v1274, 5
      %v1430 = vrot.slane %v1429, 4
      %v1431 = vrot.slane %v1275, 5
      %v1432 = vsel %vm1330, %v1430, %v1431
      %v1433 = vrot.slane %v1431, 4
      %v1434 = vrot.slane %v1276, 5
      %v1435 = vsel %vm1330, %v1433, %v1434
      %v1436 = vrot.slane %v1277, 5
      %v1437 = vrot.slane %v1436, 4
      %v1438 = vrot.slane %v1278, 5
      %v1439 = vsel %vm1330, %v1437, %v1438
      %v1440 = vrot.slane %v1438, 4
      %v1441 = vrot.slane %v1279, 5
      %v1442 = vsel %vm1330, %v1440, %v1441
      %1475 = vst [vmem:[#allocation3 + $0x8] sm:$0xf] %v1334
      %1476 = vst [vmem:[#allocation3 + $0x14] sm:$0xf] %v1337
      %1477 = vst [vmem:[#allocation3 + $0x20] sm:$0xf] %v1341
      %1478 = vst [vmem:[#allocation3 + $0x2c] sm:$0xf] %v1344
      %1479 = vst [vmem:[#allocation3 + $0x38] sm:$0xf] %v1348
      %1480 = vst [vmem:[#allocation3 + $0x44] sm:$0xf] %v1351
      %1481 = vst [vmem:[#allocation3 + $0x50] sm:$0xf] %v1355
      %1482 = vst [vmem:[#allocation3 + $0x5c] sm:$0xf] %v1358
      %1483 = vst [vmem:[#allocation3 + $0x68] sm:$0xf] %v1362
      %1484 = vst [vmem:[#allocation3 + $0x74] sm:$0xf] %v1365
      %1485 = vst [vmem:[#allocation3 + $0x80] sm:$0xf] %v1369
      %1486 = vst [vmem:[#allocation3 + $0x8c] sm:$0xf] %v1372
      %1487 = vst [vmem:[#allocation3 + $0x98] sm:$0xf] %v1376
      %1488 = vst [vmem:[#allocation3 + $0xa4] sm:$0xf] %v1379
      %1489 = vst [vmem:[#allocation3 + $0xb0] sm:$0xf] %v1383
      %1490 = vst [vmem:[#allocation3 + $0xbc] sm:$0xf] %v1386
      %1491 = vst [vmem:[#allocation3 + $0xc8] sm:$0xf] %v1390
      %1492 = vst [vmem:[#allocation3 + $0xd4] sm:$0xf] %v1393
      %1493 = vst [vmem:[#allocation3 + $0xe0] sm:$0xf] %v1397
      %1494 = vst [vmem:[#allocation3 + $0xec] sm:$0xf] %v1400
      %1495 = vst [vmem:[#allocation3 + $0xf8] sm:$0xf] %v1404
      %1496 = vst [vmem:[#allocation3 + $0x104] sm:$0xf] %v1407
      %1497 = vst [vmem:[#allocation3 + $0x110] sm:$0xf] %v1411
      %1498 = vst [vmem:[#allocation3 + $0x11c] sm:$0xf] %v1414
      %1499 = vst [vmem:[#allocation3 + $0x128] sm:$0xf] %v1418
      %1500 = vst [vmem:[#allocation3 + $0x134] sm:$0xf] %v1421
      %1501 = vst [vmem:[#allocation3 + $0x140] sm:$0xf] %v1425
      %1502 = vst [vmem:[#allocation3 + $0x14c] sm:$0xf] %v1428
      %1503 = vst [vmem:[#allocation3 + $0x158] sm:$0xf] %v1432
      %1504 = vst [vmem:[#allocation3 + $0x164] sm:$0xf] %v1435
      %1505 = vst [vmem:[#allocation3 + $0x170] sm:$0xf] %v1439
      %1506 = vst [vmem:[#allocation3 + $0x17c] sm:$0xf] %v1442
      %v1507 = vld [vmem:[#allocation3] sm:$0xff]
      %v1508 = vld [vmem:[#allocation3 + $0x8] sm:$0xf]
      %v1509 = vld [vmem:[#allocation3 + $0xc] sm:$0xff]
      %v1510 = vld [vmem:[#allocation3 + $0x14] sm:$0xf]
      %v1511 = vld [vmem:[#allocation3 + $0x18] sm:$0xff]
      %v1512 = vld [vmem:[#allocation3 + $0x20] sm:$0xf]
      %v1513 = vld [vmem:[#allocation3 + $0x24] sm:$0xff]
      %v1514 = vld [vmem:[#allocation3 + $0x2c] sm:$0xf]
      %v1515 = vld [vmem:[#allocation3 + $0x30] sm:$0xff]
      %v1516 = vld [vmem:[#allocation3 + $0x38] sm:$0xf]
      %v1517 = vld [vmem:[#allocation3 + $0x3c] sm:$0xff]
      %v1518 = vld [vmem:[#allocation3 + $0x44] sm:$0xf]
      %v1519 = vld [vmem:[#allocation3 + $0x48] sm:$0xff]
      %v1520 = vld [vmem:[#allocation3 + $0x50] sm:$0xf]
      %v1521 = vld [vmem:[#allocation3 + $0x54] sm:$0xff]
      %v1522 = vld [vmem:[#allocation3 + $0x5c] sm:$0xf]
      %v1523 = vld [vmem:[#allocation3 + $0x60] sm:$0xff]
      %v1524 = vld [vmem:[#allocation3 + $0x68] sm:$0xf]
      %v1525 = vld [vmem:[#allocation3 + $0x6c] sm:$0xff]
      %v1526 = vld [vmem:[#allocation3 + $0x74] sm:$0xf]
      %v1527 = vld [vmem:[#allocation3 + $0x78] sm:$0xff]
      %v1528 = vld [vmem:[#allocation3 + $0x80] sm:$0xf]
      %v1529 = vld [vmem:[#allocation3 + $0x84] sm:$0xff]
      %v1530 = vld [vmem:[#allocation3 + $0x8c] sm:$0xf]
      %v1531 = vld [vmem:[#allocation3 + $0x90] sm:$0xff]
      %v1532 = vld [vmem:[#allocation3 + $0x98] sm:$0xf]
      %v1533 = vld [vmem:[#allocation3 + $0x9c] sm:$0xff]
      %v1534 = vld [vmem:[#allocation3 + $0xa4] sm:$0xf]
      %v1535 = vld [vmem:[#allocation3 + $0xa8] sm:$0xff]
      %v1536 = vld [vmem:[#allocation3 + $0xb0] sm:$0xf]
      %v1537 = vld [vmem:[#allocation3 + $0xb4] sm:$0xff]
      %v1538 = vld [vmem:[#allocation3 + $0xbc] sm:$0xf]
      %v1539 = vld [vmem:[#allocation3 + $0xc0] sm:$0xff]
      %v1540 = vld [vmem:[#allocation3 + $0xc8] sm:$0xf]
      %v1541 = vld [vmem:[#allocation3 + $0xcc] sm:$0xff]
      %v1542 = vld [vmem:[#allocation3 + $0xd4] sm:$0xf]
      %v1543 = vld [vmem:[#allocation3 + $0xd8] sm:$0xff]
      %v1544 = vld [vmem:[#allocation3 + $0xe0] sm:$0xf]
      %v1545 = vld [vmem:[#allocation3 + $0xe4] sm:$0xff]
      %v1546 = vld [vmem:[#allocation3 + $0xec] sm:$0xf]
      %v1547 = vld [vmem:[#allocation3 + $0xf0] sm:$0xff]
      %v1548 = vld [vmem:[#allocation3 + $0xf8] sm:$0xf]
      %v1549 = vld [vmem:[#allocation3 + $0xfc] sm:$0xff]
      %v1550 = vld [vmem:[#allocation3 + $0x104] sm:$0xf]
      %v1551 = vld [vmem:[#allocation3 + $0x108] sm:$0xff]
      %v1552 = vld [vmem:[#allocation3 + $0x110] sm:$0xf]
      %v1553 = vld [vmem:[#allocation3 + $0x114] sm:$0xff]
      %v1554 = vld [vmem:[#allocation3 + $0x11c] sm:$0xf]
      %v1555 = vld [vmem:[#allocation3 + $0x120] sm:$0xff]
      %v1556 = vld [vmem:[#allocation3 + $0x128] sm:$0xf]
      %v1557 = vld [vmem:[#allocation3 + $0x12c] sm:$0xff]
      %v1558 = vld [vmem:[#allocation3 + $0x134] sm:$0xf]
      %v1559 = vld [vmem:[#allocation3 + $0x138] sm:$0xff]
      %v1560 = vld [vmem:[#allocation3 + $0x140] sm:$0xf]
      %v1561 = vld [vmem:[#allocation3 + $0x144] sm:$0xff]
      %v1562 = vld [vmem:[#allocation3 + $0x14c] sm:$0xf]
      %v1563 = vld [vmem:[#allocation3 + $0x150] sm:$0xff]
      %v1564 = vld [vmem:[#allocation3 + $0x158] sm:$0xf]
      %v1565 = vld [vmem:[#allocation3 + $0x15c] sm:$0xff]
      %v1566 = vld [vmem:[#allocation3 + $0x164] sm:$0xf]
      %v1567 = vld [vmem:[#allocation3 + $0x168] sm:$0xff]
      %v1568 = vld [vmem:[#allocation3 + $0x170] sm:$0xf]
      %v1569 = vld [vmem:[#allocation3 + $0x174] sm:$0xff]
      %v1570 = vld [vmem:[#allocation3 + $0x17c] sm:$0xf]
      %v1571 = vld [vmem:[%s1] sm:$0xf]
      %v1572 = vld [vmem:[%s1 + $0x4] sm:$0xf]
      %v1573 = vld [vmem:[%s1 + $0x8] sm:$0xf]
      %v1574 = vld [vmem:[%s1 + $0xc] sm:$0xf]
      %v1575 = vld [vmem:[%s1 + $0x10] sm:$0xf]
      %v1576 = vld [vmem:[%s1 + $0x14] sm:$0xf]
      %v1577 = vld [vmem:[%s1 + $0x18] sm:$0xf]
      %v1578 = vld [vmem:[%s1 + $0x1c] sm:$0xf]
      %v1579 = vld [vmem:[%s1 + $0x20] sm:$0xf]
      %v1580 = vld [vmem:[%s1 + $0x24] sm:$0xf]
      %v1581 = vld [vmem:[%s1 + $0x28] sm:$0xf]
      %v1582 = vld [vmem:[%s1 + $0x2c] sm:$0xf]
      %v1583 = vld [vmem:[%s1 + $0x30] sm:$0xf]
      %v1584 = vld [vmem:[%s1 + $0x34] sm:$0xf]
      %v1585 = vld [vmem:[%s1 + $0x38] sm:$0xf]
      %v1586 = vld [vmem:[%s1 + $0x3c] sm:$0xf]
      %v1587 = vld [vmem:[%s1 + $0x40] sm:$0xf]
      %v1588 = vld [vmem:[%s1 + $0x44] sm:$0xf]
      %v1589 = vld [vmem:[%s1 + $0x48] sm:$0xf]
      %v1590 = vld [vmem:[%s1 + $0x4c] sm:$0xf]
      %v1591 = vld [vmem:[%s1 + $0x50] sm:$0xf]
      %v1592 = vld [vmem:[%s1 + $0x54] sm:$0xf]
      %v1593 = vld [vmem:[%s1 + $0x58] sm:$0xf]
      %v1594 = vld [vmem:[%s1 + $0x5c] sm:$0xf]
      %v1595 = vld [vmem:[%s1 + $0x60] sm:$0xf]
      %v1596 = vld [vmem:[%s1 + $0x64] sm:$0xf]
      %v1597 = vld [vmem:[%s1 + $0x68] sm:$0xf]
      %v1598 = vld [vmem:[%s1 + $0x6c] sm:$0xf]
      %v1599 = vld [vmem:[%s1 + $0x70] sm:$0xf]
      %v1600 = vld [vmem:[%s1 + $0x74] sm:$0xf]
      %v1601 = vld [vmem:[%s1 + $0x78] sm:$0xf]
      %v1602 = vld [vmem:[%s1 + $0x7c] sm:$0xf]
      %v1603 = vld [vmem:[%s1 + $0x80] sm:$0xf]
      %v1604 = vld [vmem:[%s1 + $0x84] sm:$0xf]
      %v1605 = vld [vmem:[%s1 + $0x88] sm:$0xf]
      %v1606 = vld [vmem:[%s1 + $0x8c] sm:$0xf]
      %v1607 = vld [vmem:[%s1 + $0x90] sm:$0xf]
      %v1608 = vld [vmem:[%s1 + $0x94] sm:$0xf]
      %v1609 = vld [vmem:[%s1 + $0x98] sm:$0xf]
      %v1610 = vld [vmem:[%s1 + $0x9c] sm:$0xf]
      %v1611 = vld [vmem:[%s1 + $0xa0] sm:$0xf]
      %v1612 = vld [vmem:[%s1 + $0xa4] sm:$0xf]
      %v1613 = vld [vmem:[%s1 + $0xa8] sm:$0xf]
      %v1614 = vld [vmem:[%s1 + $0xac] sm:$0xf]
      %v1615 = vld [vmem:[%s1 + $0xb0] sm:$0xf]
      %v1616 = vld [vmem:[%s1 + $0xb4] sm:$0xf]
      %v1617 = vld [vmem:[%s1 + $0xb8] sm:$0xf]
      %v1618 = vld [vmem:[%s1 + $0xbc] sm:$0xf]
      %v1619 = vld [vmem:[%s620] sm:$0xf]
      %v1620 = vld [vmem:[%s620 + $0x4] sm:$0xf]
      %v1621 = vld [vmem:[%s620 + $0xc] sm:$0xf]
      %v1622 = vld [vmem:[%s620 + $0x10] sm:$0xf]
      %v1623 = vld [vmem:[%s620 + $0x18] sm:$0xf]
      %v1624 = vld [vmem:[%s620 + $0x1c] sm:$0xf]
      %v1625 = vld [vmem:[%s620 + $0x24] sm:$0xf]
      %v1626 = vld [vmem:[%s620 + $0x28] sm:$0xf]
      %v1627 = vld [vmem:[%s620 + $0x30] sm:$0xf]
      %v1628 = vld [vmem:[%s620 + $0x34] sm:$0xf]
      %v1629 = vld [vmem:[%s620 + $0x3c] sm:$0xf]
      %v1630 = vld [vmem:[%s620 + $0x40] sm:$0xf]
      %v1631 = vld [vmem:[%s620 + $0x48] sm:$0xf]
      %v1632 = vld [vmem:[%s620 + $0x4c] sm:$0xf]
      %v1633 = vld [vmem:[%s620 + $0x54] sm:$0xf]
      %v1634 = vld [vmem:[%s620 + $0x58] sm:$0xf]
      %v1635 = vld [vmem:[%s620 + $0x60] sm:$0xf]
      %v1636 = vld [vmem:[%s620 + $0x64] sm:$0xf]
      %v1637 = vld [vmem:[%s620 + $0x6c] sm:$0xf]
      %v1638 = vld [vmem:[%s620 + $0x70] sm:$0xf]
      %v1639 = vld [vmem:[%s620 + $0x78] sm:$0xf]
      %v1640 = vld [vmem:[%s620 + $0x7c] sm:$0xf]
      %v1641 = vld [vmem:[%s620 + $0x84] sm:$0xf]
      %v1642 = vld [vmem:[%s620 + $0x88] sm:$0xf]
      %v1643 = vld [vmem:[%s620 + $0x90] sm:$0xf]
      %v1644 = vld [vmem:[%s620 + $0x94] sm:$0xf]
      %v1645 = vld [vmem:[%s620 + $0x9c] sm:$0xf]
      %v1646 = vld [vmem:[%s620 + $0xa0] sm:$0xf]
      %v1647 = vld [vmem:[%s620 + $0xa8] sm:$0xf]
      %v1648 = vld [vmem:[%s620 + $0xac] sm:$0xf]
      %v1649 = vld [vmem:[%s620 + $0xb4] sm:$0xf]
      %v1650 = vld [vmem:[%s620 + $0xb8] sm:$0xf]
      %1651 = vst [vmem:[#allocation3] sm:$0xf] %v1619
      %1652 = vst [vmem:[#allocation3 + $0xc] sm:$0xf] %v1620
      %1653 = vst [vmem:[#allocation3 + $0x18] sm:$0xf] %v1621
      %1654 = vst [vmem:[#allocation3 + $0x24] sm:$0xf] %v1622
      %1655 = vst [vmem:[#allocation3 + $0x30] sm:$0xf] %v1623
      %1656 = vst [vmem:[#allocation3 + $0x3c] sm:$0xf] %v1624
      %1657 = vst [vmem:[#allocation3 + $0x48] sm:$0xf] %v1625
      %1658 = vst [vmem:[#allocation3 + $0x54] sm:$0xf] %v1626
      %1659 = vst [vmem:[#allocation3 + $0x60] sm:$0xf] %v1627
      %1660 = vst [vmem:[#allocation3 + $0x6c] sm:$0xf] %v1628
      %1661 = vst [vmem:[#allocation3 + $0x78] sm:$0xf] %v1629
      %1662 = vst [vmem:[#allocation3 + $0x84] sm:$0xf] %v1630
      %1663 = vst [vmem:[#allocation3 + $0x90] sm:$0xf] %v1631
      %1664 = vst [vmem:[#allocation3 + $0x9c] sm:$0xf] %v1632
      %1665 = vst [vmem:[#allocation3 + $0xa8] sm:$0xf] %v1633
      %1666 = vst [vmem:[#allocation3 + $0xb4] sm:$0xf] %v1634
      %1667 = vst [vmem:[#allocation3 + $0xc0] sm:$0xf] %v1635
      %1668 = vst [vmem:[#allocation3 + $0xcc] sm:$0xf] %v1636
      %1669 = vst [vmem:[#allocation3 + $0xd8] sm:$0xf] %v1637
      %1670 = vst [vmem:[#allocation3 + $0xe4] sm:$0xf] %v1638
      %1671 = vst [vmem:[#allocation3 + $0xf0] sm:$0xf] %v1639
      %1672 = vst [vmem:[#allocation3 + $0xfc] sm:$0xf] %v1640
      %1673 = vst [vmem:[#allocation3 + $0x108] sm:$0xf] %v1641
      %1674 = vst [vmem:[#allocation3 + $0x114] sm:$0xf] %v1642
      %1675 = vst [vmem:[#allocation3 + $0x120] sm:$0xf] %v1643
      %1676 = vst [vmem:[#allocation3 + $0x12c] sm:$0xf] %v1644
      %1677 = vst [vmem:[#allocation3 + $0x138] sm:$0xf] %v1645
      %1678 = vst [vmem:[#allocation3 + $0x144] sm:$0xf] %v1646
      %1679 = vst [vmem:[#allocation3 + $0x150] sm:$0xf] %v1647
      %1680 = vst [vmem:[#allocation3 + $0x15c] sm:$0xf] %v1648
      %1681 = vst [vmem:[#allocation3 + $0x168] sm:$0xf] %v1649
      %1682 = vst [vmem:[#allocation3 + $0x174] sm:$0xf] %v1650
      %v1683 = vld [vmem:[%s620] sm:$0xf]
      %v1684 = vld [vmem:[%s620 + $0x4] sm:$0xf]
      %v1685 = vld [vmem:[%s620 + $0x8] sm:$0x1]
      %v1686 = vld [vmem:[%s620 + $0xc] sm:$0xf]
      %v1687 = vld [vmem:[%s620 + $0x10] sm:$0xf]
      %v1688 = vld [vmem:[%s620 + $0x14] sm:$0x1]
      %v1689 = vld [vmem:[%s620 + $0x18] sm:$0xf]
      %v1690 = vld [vmem:[%s620 + $0x1c] sm:$0xf]
      %v1691 = vld [vmem:[%s620 + $0x20] sm:$0x1]
      %v1692 = vld [vmem:[%s620 + $0x24] sm:$0xf]
      %v1693 = vld [vmem:[%s620 + $0x28] sm:$0xf]
      %v1694 = vld [vmem:[%s620 + $0x2c] sm:$0x1]
      %v1695 = vld [vmem:[%s620 + $0x30] sm:$0xf]
      %v1696 = vld [vmem:[%s620 + $0x34] sm:$0xf]
      %v1697 = vld [vmem:[%s620 + $0x38] sm:$0x1]
      %v1698 = vld [vmem:[%s620 + $0x3c] sm:$0xf]
      %v1699 = vld [vmem:[%s620 + $0x40] sm:$0xf]
      %v1700 = vld [vmem:[%s620 + $0x44] sm:$0x1]
      %v1701 = vld [vmem:[%s620 + $0x48] sm:$0xf]
      %v1702 = vld [vmem:[%s620 + $0x4c] sm:$0xf]
      %v1703 = vld [vmem:[%s620 + $0x50] sm:$0x1]
      %v1704 = vld [vmem:[%s620 + $0x54] sm:$0xf]
      %v1705 = vld [vmem:[%s620 + $0x58] sm:$0xf]
      %v1706 = vld [vmem:[%s620 + $0x5c] sm:$0x1]
      %v1707 = vld [vmem:[%s620 + $0x60] sm:$0xf]
      %v1708 = vld [vmem:[%s620 + $0x64] sm:$0xf]
      %v1709 = vld [vmem:[%s620 + $0x68] sm:$0x1]
      %v1710 = vld [vmem:[%s620 + $0x6c] sm:$0xf]
      %v1711 = vld [vmem:[%s620 + $0x70] sm:$0xf]
      %v1712 = vld [vmem:[%s620 + $0x74] sm:$0x1]
      %v1713 = vld [vmem:[%s620 + $0x78] sm:$0xf]
      %v1714 = vld [vmem:[%s620 + $0x7c] sm:$0xf]
      %v1715 = vld [vmem:[%s620 + $0x80] sm:$0x1]
      %v1716 = vld [vmem:[%s620 + $0x84] sm:$0xf]
      %v1717 = vld [vmem:[%s620 + $0x88] sm:$0xf]
      %v1718 = vld [vmem:[%s620 + $0x8c] sm:$0x1]
      %v1719 = vld [vmem:[%s620 + $0x90] sm:$0xf]
      %v1720 = vld [vmem:[%s620 + $0x94] sm:$0xf]
      %v1721 = vld [vmem:[%s620 + $0x98] sm:$0x1]
      %v1722 = vld [vmem:[%s620 + $0x9c] sm:$0xf]
      %v1723 = vld [vmem:[%s620 + $0xa0] sm:$0xf]
      %v1724 = vld [vmem:[%s620 + $0xa4] sm:$0x1]
      %v1725 = vld [vmem:[%s620 + $0xa8] sm:$0xf]
      %v1726 = vld [vmem:[%s620 + $0xac] sm:$0xf]
      %v1727 = vld [vmem:[%s620 + $0xb0] sm:$0x1]
      %v1728 = vld [vmem:[%s620 + $0xb4] sm:$0xf]
      %v1729 = vld [vmem:[%s620 + $0xb8] sm:$0xf]
      %v1730 = vld [vmem:[%s620 + $0xbc] sm:$0x1]
      %v1732 = vshrl.u32 %v1683, 16
      %v1734 = vrot.slane %v1732, 4
      %v1735 = vshll.u32 %v1683, 16
      %v1737 = vrot.slane %v1735, 5
      %v1738 = vor.u32 %v1734, %v1737
      %v1739 = vrot.slane %v1738, 4
      %v1741 = vshll.u32 %v1684, 16
      %v1743 = vrot.slane %v1741, 5
      %v1744 = vsel %vm783, %v1739, %v1743
      %v1745 = vshrl.u32 %v1684, 16
      %v1747 = vrot.slane %v1745, 4
      %v1748 = vor.u32 %v1747, %v1743
      %v1749 = vrot.slane %v1748, 4
      %v1751 = vshll.u32 %v1685, 16
      %v1753 = vrot.slane %v1751, 5
      %v1754 = vsel %vm783, %v1749, %v1753
      %v1756 = vshrl.u32 %v1686, 16
      %v1758 = vrot.slane %v1756, 4
      %v1759 = vshll.u32 %v1686, 16
      %v1761 = vrot.slane %v1759, 5
      %v1762 = vor.u32 %v1758, %v1761
      %v1763 = vrot.slane %v1762, 4
      %v1765 = vshll.u32 %v1687, 16
      %v1767 = vrot.slane %v1765, 5
      %v1768 = vsel %vm783, %v1763, %v1767
      %v1769 = vshrl.u32 %v1687, 16
      %v1771 = vrot.slane %v1769, 4
      %v1772 = vor.u32 %v1771, %v1767
      %v1773 = vrot.slane %v1772, 4
      %v1775 = vshll.u32 %v1688, 16
      %v1777 = vrot.slane %v1775, 5
      %v1778 = vsel %vm783, %v1773, %v1777
      %v1780 = vshrl.u32 %v1689, 16
      %v1782 = vrot.slane %v1780, 4
      %v1783 = vshll.u32 %v1689, 16
      %v1785 = vrot.slane %v1783, 5
      %v1786 = vor.u32 %v1782, %v1785
      %v1787 = vrot.slane %v1786, 4
      %v1789 = vshll.u32 %v1690, 16
      %v1791 = vrot.slane %v1789, 5
      %v1792 = vsel %vm783, %v1787, %v1791
      %v1793 = vshrl.u32 %v1690, 16
      %v1795 = vrot.slane %v1793, 4
      %v1796 = vor.u32 %v1795, %v1791
      %v1797 = vrot.slane %v1796, 4
      %v1799 = vshll.u32 %v1691, 16
      %v1801 = vrot.slane %v1799, 5
      %v1802 = vsel %vm783, %v1797, %v1801
      %v1804 = vshrl.u32 %v1692, 16
      %v1806 = vrot.slane %v1804, 4
      %v1807 = vshll.u32 %v1692, 16
      %v1809 = vrot.slane %v1807, 5
      %v1810 = vor.u32 %v1806, %v1809
      %v1811 = vrot.slane %v1810, 4
      %v1813 = vshll.u32 %v1693, 16
      %v1815 = vrot.slane %v1813, 5
      %v1816 = vsel %vm783, %v1811, %v1815
      %v1817 = vshrl.u32 %v1693, 16
      %v1819 = vrot.slane %v1817, 4
      %v1820 = vor.u32 %v1819, %v1815
      %v1821 = vrot.slane %v1820, 4
      %v1823 = vshll.u32 %v1694, 16
      %v1825 = vrot.slane %v1823, 5
      %v1826 = vsel %vm783, %v1821, %v1825
      %v1828 = vshrl.u32 %v1695, 16
      %v1830 = vrot.slane %v1828, 4
      %v1831 = vshll.u32 %v1695, 16
      %v1833 = vrot.slane %v1831, 5
      %v1834 = vor.u32 %v1830, %v1833
      %v1835 = vrot.slane %v1834, 4
      %v1837 = vshll.u32 %v1696, 16
      %v1839 = vrot.slane %v1837, 5
      %v1840 = vsel %vm783, %v1835, %v1839
      %v1841 = vshrl.u32 %v1696, 16
      %v1843 = vrot.slane %v1841, 4
      %v1844 = vor.u32 %v1843, %v1839
      %v1845 = vrot.slane %v1844, 4
      %v1847 = vshll.u32 %v1697, 16
      %v1849 = vrot.slane %v1847, 5
      %v1850 = vsel %vm783, %v1845, %v1849
      %v1852 = vshrl.u32 %v1698, 16
      %v1854 = vrot.slane %v1852, 4
      %v1855 = vshll.u32 %v1698, 16
      %v1857 = vrot.slane %v1855, 5
      %v1858 = vor.u32 %v1854, %v1857
      %v1859 = vrot.slane %v1858, 4
      %v1861 = vshll.u32 %v1699, 16
      %v1863 = vrot.slane %v1861, 5
      %v1864 = vsel %vm783, %v1859, %v1863
      %v1865 = vshrl.u32 %v1699, 16
      %v1867 = vrot.slane %v1865, 4
      %v1868 = vor.u32 %v1867, %v1863
      %v1869 = vrot.slane %v1868, 4
      %v1871 = vshll.u32 %v1700, 16
      %v1873 = vrot.slane %v1871, 5
      %v1874 = vsel %vm783, %v1869, %v1873
      %v1876 = vshrl.u32 %v1701, 16
      %v1878 = vrot.slane %v1876, 4
      %v1879 = vshll.u32 %v1701, 16
      %v1881 = vrot.slane %v1879, 5
      %v1882 = vor.u32 %v1878, %v1881
      %v1883 = vrot.slane %v1882, 4
      %v1885 = vshll.u32 %v1702, 16
      %v1887 = vrot.slane %v1885, 5
      %v1888 = vsel %vm783, %v1883, %v1887
      %v1889 = vshrl.u32 %v1702, 16
      %v1891 = vrot.slane %v1889, 4
      %v1892 = vor.u32 %v1891, %v1887
      %v1893 = vrot.slane %v1892, 4
      %v1895 = vshll.u32 %v1703, 16
      %v1897 = vrot.slane %v1895, 5
      %v1898 = vsel %vm783, %v1893, %v1897
      %v1900 = vshrl.u32 %v1704, 16
      %v1902 = vrot.slane %v1900, 4
      %v1903 = vshll.u32 %v1704, 16
      %v1905 = vrot.slane %v1903, 5
      %v1906 = vor.u32 %v1902, %v1905
      %v1907 = vrot.slane %v1906, 4
      %v1909 = vshll.u32 %v1705, 16
      %v1911 = vrot.slane %v1909, 5
      %v1912 = vsel %vm783, %v1907, %v1911
      %v1913 = vshrl.u32 %v1705, 16
      %v1915 = vrot.slane %v1913, 4
      %v1916 = vor.u32 %v1915, %v1911
      %v1917 = vrot.slane %v1916, 4
      %v1919 = vshll.u32 %v1706, 16
      %v1921 = vrot.slane %v1919, 5
      %v1922 = vsel %vm783, %v1917, %v1921
      %v1924 = vshrl.u32 %v1707, 16
      %v1926 = vrot.slane %v1924, 4
      %v1927 = vshll.u32 %v1707, 16
      %v1929 = vrot.slane %v1927, 5
      %v1930 = vor.u32 %v1926, %v1929
      %v1931 = vrot.slane %v1930, 4
      %v1933 = vshll.u32 %v1708, 16
      %v1935 = vrot.slane %v1933, 5
      %v1936 = vsel %vm783, %v1931, %v1935
      %v1937 = vshrl.u32 %v1708, 16
      %v1939 = vrot.slane %v1937, 4
      %v1940 = vor.u32 %v1939, %v1935
      %v1941 = vrot.slane %v1940, 4
      %v1943 = vshll.u32 %v1709, 16
      %v1945 = vrot.slane %v1943, 5
      %v1946 = vsel %vm783, %v1941, %v1945
      %v1948 = vshrl.u32 %v1710, 16
      %v1950 = vrot.slane %v1948, 4
      %v1951 = vshll.u32 %v1710, 16
      %v1953 = vrot.slane %v1951, 5
      %v1954 = vor.u32 %v1950, %v1953
      %v1955 = vrot.slane %v1954, 4
      %v1957 = vshll.u32 %v1711, 16
      %v1959 = vrot.slane %v1957, 5
      %v1960 = vsel %vm783, %v1955, %v1959
      %v1961 = vshrl.u32 %v1711, 16
      %v1963 = vrot.slane %v1961, 4
      %v1964 = vor.u32 %v1963, %v1959
      %v1965 = vrot.slane %v1964, 4
      %v1967 = vshll.u32 %v1712, 16
      %v1969 = vrot.slane %v1967, 5
      %v1970 = vsel %vm783, %v1965, %v1969
      %v1972 = vshrl.u32 %v1713, 16
      %v1974 = vrot.slane %v1972, 4
      %v1975 = vshll.u32 %v1713, 16
      %v1977 = vrot.slane %v1975, 5
      %v1978 = vor.u32 %v1974, %v1977
      %v1979 = vrot.slane %v1978, 4
      %v1981 = vshll.u32 %v1714, 16
      %v1983 = vrot.slane %v1981, 5
      %v1984 = vsel %vm783, %v1979, %v1983
      %v1985 = vshrl.u32 %v1714, 16
      %v1987 = vrot.slane %v1985, 4
      %v1988 = vor.u32 %v1987, %v1983
      %v1989 = vrot.slane %v1988, 4
      %v1991 = vshll.u32 %v1715, 16
      %v1993 = vrot.slane %v1991, 5
      %v1994 = vsel %vm783, %v1989, %v1993
      %v1996 = vshrl.u32 %v1716, 16
      %v1998 = vrot.slane %v1996, 4
      %v1999 = vshll.u32 %v1716, 16
      %v2001 = vrot.slane %v1999, 5
      %v2002 = vor.u32 %v1998, %v2001
      %v2003 = vrot.slane %v2002, 4
      %v2005 = vshll.u32 %v1717, 16
      %v2007 = vrot.slane %v2005, 5
      %v2008 = vsel %vm783, %v2003, %v2007
      %v2009 = vshrl.u32 %v1717, 16
      %v2011 = vrot.slane %v2009, 4
      %v2012 = vor.u32 %v2011, %v2007
      %v2013 = vrot.slane %v2012, 4
      %v2015 = vshll.u32 %v1718, 16
      %v2017 = vrot.slane %v2015, 5
      %v2018 = vsel %vm783, %v2013, %v2017
      %v2020 = vshrl.u32 %v1719, 16
      %v2022 = vrot.slane %v2020, 4
      %v2023 = vshll.u32 %v1719, 16
      %v2025 = vrot.slane %v2023, 5
      %v2026 = vor.u32 %v2022, %v2025
      %v2027 = vrot.slane %v2026, 4
      %v2029 = vshll.u32 %v1720, 16
      %v2031 = vrot.slane %v2029, 5
      %v2032 = vsel %vm783, %v2027, %v2031
      %v2033 = vshrl.u32 %v1720, 16
      %v2035 = vrot.slane %v2033, 4
      %v2036 = vor.u32 %v2035, %v2031
      %v2037 = vrot.slane %v2036, 4
      %v2039 = vshll.u32 %v1721, 16
      %v2041 = vrot.slane %v2039, 5
      %v2042 = vsel %vm783, %v2037, %v2041
      %v2044 = vshrl.u32 %v1722, 16
      %v2046 = vrot.slane %v2044, 4
      %v2047 = vshll.u32 %v1722, 16
      %v2049 = vrot.slane %v2047, 5
      %v2050 = vor.u32 %v2046, %v2049
      %v2051 = vrot.slane %v2050, 4
      %v2053 = vshll.u32 %v1723, 16
      %v2055 = vrot.slane %v2053, 5
      %v2056 = vsel %vm783, %v2051, %v2055
      %v2057 = vshrl.u32 %v1723, 16
      %v2059 = vrot.slane %v2057, 4
      %v2060 = vor.u32 %v2059, %v2055
      %v2061 = vrot.slane %v2060, 4
      %v2063 = vshll.u32 %v1724, 16
      %v2065 = vrot.slane %v2063, 5
      %v2066 = vsel %vm783, %v2061, %v2065
      %v2068 = vshrl.u32 %v1725, 16
      %v2070 = vrot.slane %v2068, 4
      %v2071 = vshll.u32 %v1725, 16
      %v2073 = vrot.slane %v2071, 5
      %v2074 = vor.u32 %v2070, %v2073
      %v2075 = vrot.slane %v2074, 4
      %v2077 = vshll.u32 %v1726, 16
      %v2079 = vrot.slane %v2077, 5
      %v2080 = vsel %vm783, %v2075, %v2079
      %v2081 = vshrl.u32 %v1726, 16
      %v2083 = vrot.slane %v2081, 4
      %v2084 = vor.u32 %v2083, %v2079
      %v2085 = vrot.slane %v2084, 4
      %v2087 = vshll.u32 %v1727, 16
      %v2089 = vrot.slane %v2087, 5
      %v2090 = vsel %vm783, %v2085, %v2089
      %v2092 = vshrl.u32 %v1728, 16
      %v2094 = vrot.slane %v2092, 4
      %v2095 = vshll.u32 %v1728, 16
      %v2097 = vrot.slane %v2095, 5
      %v2098 = vor.u32 %v2094, %v2097
      %v2099 = vrot.slane %v2098, 4
      %v2101 = vshll.u32 %v1729, 16
      %v2103 = vrot.slane %v2101, 5
      %v2104 = vsel %vm783, %v2099, %v2103
      %v2105 = vshrl.u32 %v1729, 16
      %v2107 = vrot.slane %v2105, 4
      %v2108 = vor.u32 %v2107, %v2103
      %v2109 = vrot.slane %v2108, 4
      %v2111 = vshll.u32 %v1730, 16
      %v2113 = vrot.slane %v2111, 5
      %v2114 = vsel %vm783, %v2109, %v2113
      %2147 = vst [vmem:[#allocation3 + $0x4] sm:$0xf] %v1744
      %2148 = vst [vmem:[#allocation3 + $0x10] sm:$0xf] %v1754
      %2149 = vst [vmem:[#allocation3 + $0x1c] sm:$0xf] %v1768
      %2150 = vst [vmem:[#allocation3 + $0x28] sm:$0xf] %v1778
      %2151 = vst [vmem:[#allocation3 + $0x34] sm:$0xf] %v1792
      %2152 = vst [vmem:[#allocation3 + $0x40] sm:$0xf] %v1802
      %2153 = vst [vmem:[#allocation3 + $0x4c] sm:$0xf] %v1816
      %2154 = vst [vmem:[#allocation3 + $0x58] sm:$0xf] %v1826
      %2155 = vst [vmem:[#allocation3 + $0x64] sm:$0xf] %v1840
      %2156 = vst [vmem:[#allocation3 + $0x70] sm:$0xf] %v1850
      %2157 = vst [vmem:[#allocation3 + $0x7c] sm:$0xf] %v1864
      %2158 = vst [vmem:[#allocation3 + $0x88] sm:$0xf] %v1874
      %2159 = vst [vmem:[#allocation3 + $0x94] sm:$0xf] %v1888
      %2160 = vst [vmem:[#allocation3 + $0xa0] sm:$0xf] %v1898
      %2161 = vst [vmem:[#allocation3 + $0xac] sm:$0xf] %v1912
      %2162 = vst [vmem:[#allocation3 + $0xb8] sm:$0xf] %v1922
      %2163 = vst [vmem:[#allocation3 + $0xc4] sm:$0xf] %v1936
      %2164 = vst [vmem:[#allocation3 + $0xd0] sm:$0xf] %v1946
      %2165 = vst [vmem:[#allocation3 + $0xdc] sm:$0xf] %v1960
      %2166 = vst [vmem:[#allocation3 + $0xe8] sm:$0xf] %v1970
      %2167 = vst [vmem:[#allocation3 + $0xf4] sm:$0xf] %v1984
      %2168 = vst [vmem:[#allocation3 + $0x100] sm:$0xf] %v1994
      %2169 = vst [vmem:[#allocation3 + $0x10c] sm:$0xf] %v2008
      %2170 = vst [vmem:[#allocation3 + $0x118] sm:$0xf] %v2018
      %2171 = vst [vmem:[#allocation3 + $0x124] sm:$0xf] %v2032
      %2172 = vst [vmem:[#allocation3 + $0x130] sm:$0xf] %v2042
      %2173 = vst [vmem:[#allocation3 + $0x13c] sm:$0xf] %v2056
      %2174 = vst [vmem:[#allocation3 + $0x148] sm:$0xf] %v2066
      %2175 = vst [vmem:[#allocation3 + $0x154] sm:$0xf] %v2080
      %2176 = vst [vmem:[#allocation3 + $0x160] sm:$0xf] %v2090
      %2177 = vst [vmem:[#allocation3 + $0x16c] sm:$0xf] %v2104
      %2178 = vst [vmem:[#allocation3 + $0x178] sm:$0xf] %v2114
      %v2179 = vld [vmem:[%s620] sm:$0xe]
      %v2180 = vld [vmem:[%s620 + $0x4] sm:$0xf]
      %v2181 = vld [vmem:[%s620 + $0x8] sm:$0x1]
      %v2182 = vld [vmem:[%s620 + $0xc] sm:$0xe]
      %v2183 = vld [vmem:[%s620 + $0x10] sm:$0xf]
      %v2184 = vld [vmem:[%s620 + $0x14] sm:$0x1]
      %v2185 = vld [vmem:[%s620 + $0x18] sm:$0xe]
      %v2186 = vld [vmem:[%s620 + $0x1c] sm:$0xf]
      %v2187 = vld [vmem:[%s620 + $0x20] sm:$0x1]
      %v2188 = vld [vmem:[%s620 + $0x24] sm:$0xe]
      %v2189 = vld [vmem:[%s620 + $0x28] sm:$0xf]
      %v2190 = vld [vmem:[%s620 + $0x2c] sm:$0x1]
      %v2191 = vld [vmem:[%s620 + $0x30] sm:$0xe]
      %v2192 = vld [vmem:[%s620 + $0x34] sm:$0xf]
      %v2193 = vld [vmem:[%s620 + $0x38] sm:$0x1]
      %v2194 = vld [vmem:[%s620 + $0x3c] sm:$0xe]
      %v2195 = vld [vmem:[%s620 + $0x40] sm:$0xf]
      %v2196 = vld [vmem:[%s620 + $0x44] sm:$0x1]
      %v2197 = vld [vmem:[%s620 + $0x48] sm:$0xe]
      %v2198 = vld [vmem:[%s620 + $0x4c] sm:$0xf]
      %v2199 = vld [vmem:[%s620 + $0x50] sm:$0x1]
      %v2200 = vld [vmem:[%s620 + $0x54] sm:$0xe]
      %v2201 = vld [vmem:[%s620 + $0x58] sm:$0xf]
      %v2202 = vld [vmem:[%s620 + $0x5c] sm:$0x1]
      %v2203 = vld [vmem:[%s620 + $0x60] sm:$0xe]
      %v2204 = vld [vmem:[%s620 + $0x64] sm:$0xf]
      %v2205 = vld [vmem:[%s620 + $0x68] sm:$0x1]
      %v2206 = vld [vmem:[%s620 + $0x6c] sm:$0xe]
      %v2207 = vld [vmem:[%s620 + $0x70] sm:$0xf]
      %v2208 = vld [vmem:[%s620 + $0x74] sm:$0x1]
      %v2209 = vld [vmem:[%s620 + $0x78] sm:$0xe]
      %v2210 = vld [vmem:[%s620 + $0x7c] sm:$0xf]
      %v2211 = vld [vmem:[%s620 + $0x80] sm:$0x1]
      %v2212 = vld [vmem:[%s620 + $0x84] sm:$0xe]
      %v2213 = vld [vmem:[%s620 + $0x88] sm:$0xf]
      %v2214 = vld [vmem:[%s620 + $0x8c] sm:$0x1]
      %v2215 = vld [vmem:[%s620 + $0x90] sm:$0xe]
      %v2216 = vld [vmem:[%s620 + $0x94] sm:$0xf]
      %v2217 = vld [vmem:[%s620 + $0x98] sm:$0x1]
      %v2218 = vld [vmem:[%s620 + $0x9c] sm:$0xe]
      %v2219 = vld [vmem:[%s620 + $0xa0] sm:$0xf]
      %v2220 = vld [vmem:[%s620 + $0xa4] sm:$0x1]
      %v2221 = vld [vmem:[%s620 + $0xa8] sm:$0xe]
      %v2222 = vld [vmem:[%s620 + $0xac] sm:$0xf]
      %v2223 = vld [vmem:[%s620 + $0xb0] sm:$0x1]
      %v2224 = vld [vmem:[%s620 + $0xb4] sm:$0xe]
      %v2225 = vld [vmem:[%s620 + $0xb8] sm:$0xf]
      %v2226 = vld [vmem:[%s620 + $0xbc] sm:$0x1]
      %v2275 = vrot.slane %v2179, 5
      %v2276 = vrot.slane %v2275, 4
      %v2277 = vrot.slane %v2180, 5
      %v2278 = vsel %vm1330, %v2276, %v2277
      %v2279 = vrot.slane %v2277, 4
      %v2280 = vrot.slane %v2181, 5
      %v2281 = vsel %vm1330, %v2279, %v2280
      %v2282 = vrot.slane %v2182, 5
      %v2283 = vrot.slane %v2282, 4
      %v2284 = vrot.slane %v2183, 5
      %v2285 = vsel %vm1330, %v2283, %v2284
      %v2286 = vrot.slane %v2284, 4
      %v2287 = vrot.slane %v2184, 5
      %v2288 = vsel %vm1330, %v2286, %v2287
      %v2289 = vrot.slane %v2185, 5
      %v2290 = vrot.slane %v2289, 4
      %v2291 = vrot.slane %v2186, 5
      %v2292 = vsel %vm1330, %v2290, %v2291
      %v2293 = vrot.slane %v2291, 4
      %v2294 = vrot.slane %v2187, 5
      %v2295 = vsel %vm1330, %v2293, %v2294
      %v2296 = vrot.slane %v2188, 5
      %v2297 = vrot.slane %v2296, 4
      %v2298 = vrot.slane %v2189, 5
      %v2299 = vsel %vm1330, %v2297, %v2298
      %v2300 = vrot.slane %v2298, 4
      %v2301 = vrot.slane %v2190, 5
      %v2302 = vsel %vm1330, %v2300, %v2301
      %v2303 = vrot.slane %v2191, 5
      %v2304 = vrot.slane %v2303, 4
      %v2305 = vrot.slane %v2192, 5
      %v2306 = vsel %vm1330, %v2304, %v2305
      %v2307 = vrot.slane %v2305, 4
      %v2308 = vrot.slane %v2193, 5
      %v2309 = vsel %vm1330, %v2307, %v2308
      %v2310 = vrot.slane %v2194, 5
      %v2311 = vrot.slane %v2310, 4
      %v2312 = vrot.slane %v2195, 5
      %v2313 = vsel %vm1330, %v2311, %v2312
      %v2314 = vrot.slane %v2312, 4
      %v2315 = vrot.slane %v2196, 5
      %v2316 = vsel %vm1330, %v2314, %v2315
      %v2317 = vrot.slane %v2197, 5
      %v2318 = vrot.slane %v2317, 4
      %v2319 = vrot.slane %v2198, 5
      %v2320 = vsel %vm1330, %v2318, %v2319
      %v2321 = vrot.slane %v2319, 4
      %v2322 = vrot.slane %v2199, 5
      %v2323 = vsel %vm1330, %v2321, %v2322
      %v2324 = vrot.slane %v2200, 5
      %v2325 = vrot.slane %v2324, 4
      %v2326 = vrot.slane %v2201, 5
      %v2327 = vsel %vm1330, %v2325, %v2326
      %v2328 = vrot.slane %v2326, 4
      %v2329 = vrot.slane %v2202, 5
      %v2330 = vsel %vm1330, %v2328, %v2329
      %v2331 = vrot.slane %v2203, 5
      %v2332 = vrot.slane %v2331, 4
      %v2333 = vrot.slane %v2204, 5
      %v2334 = vsel %vm1330, %v2332, %v2333
      %v2335 = vrot.slane %v2333, 4
      %v2336 = vrot.slane %v2205, 5
      %v2337 = vsel %vm1330, %v2335, %v2336
      %v2338 = vrot.slane %v2206, 5
      %v2339 = vrot.slane %v2338, 4
      %v2340 = vrot.slane %v2207, 5
      %v2341 = vsel %vm1330, %v2339, %v2340
      %v2342 = vrot.slane %v2340, 4
      %v2343 = vrot.slane %v2208, 5
      %v2344 = vsel %vm1330, %v2342, %v2343
      %v2345 = vrot.slane %v2209, 5
      %v2346 = vrot.slane %v2345, 4
      %v2347 = vrot.slane %v2210, 5
      %v2348 = vsel %vm1330, %v2346, %v2347
      %v2349 = vrot.slane %v2347, 4
      %v2350 = vrot.slane %v2211, 5
      %v2351 = vsel %vm1330, %v2349, %v2350
      %v2352 = vrot.slane %v2212, 5
      %v2353 = vrot.slane %v2352, 4
      %v2354 = vrot.slane %v2213, 5
      %v2355 = vsel %vm1330, %v2353, %v2354
      %v2356 = vrot.slane %v2354, 4
      %v2357 = vrot.slane %v2214, 5
      %v2358 = vsel %vm1330, %v2356, %v2357
      %v2359 = vrot.slane %v2215, 5
      %v2360 = vrot.slane %v2359, 4
      %v2361 = vrot.slane %v2216, 5
      %v2362 = vsel %vm1330, %v2360, %v2361
      %v2363 = vrot.slane %v2361, 4
      %v2364 = vrot.slane %v2217, 5
      %v2365 = vsel %vm1330, %v2363, %v2364
      %v2366 = vrot.slane %v2218, 5
      %v2367 = vrot.slane %v2366, 4
      %v2368 = vrot.slane %v2219, 5
      %v2369 = vsel %vm1330, %v2367, %v2368
      %v2370 = vrot.slane %v2368, 4
      %v2371 = vrot.slane %v2220, 5
      %v2372 = vsel %vm1330, %v2370, %v2371
      %v2373 = vrot.slane %v2221, 5
      %v2374 = vrot.slane %v2373, 4
      %v2375 = vrot.slane %v2222, 5
      %v2376 = vsel %vm1330, %v2374, %v2375
      %v2377 = vrot.slane %v2375, 4
      %v2378 = vrot.slane %v2223, 5
      %v2379 = vsel %vm1330, %v2377, %v2378
      %v2380 = vrot.slane %v2224, 5
      %v2381 = vrot.slane %v2380, 4
      %v2382 = vrot.slane %v2225, 5
      %v2383 = vsel %vm1330, %v2381, %v2382
      %v2384 = vrot.slane %v2382, 4
      %v2385 = vrot.slane %v2226, 5
      %v2386 = vsel %vm1330, %v2384, %v2385
      %2419 = vst [vmem:[#allocation3 + $0x8] sm:$0xf] %v2278
      %2420 = vst [vmem:[#allocation3 + $0x14] sm:$0xf] %v2281
      %2421 = vst [vmem:[#allocation3 + $0x20] sm:$0xf] %v2285
      %2422 = vst [vmem:[#allocation3 + $0x2c] sm:$0xf] %v2288
      %2423 = vst [vmem:[#allocation3 + $0x38] sm:$0xf] %v2292
      %2424 = vst [vmem:[#allocation3 + $0x44] sm:$0xf] %v2295
      %2425 = vst [vmem:[#allocation3 + $0x50] sm:$0xf] %v2299
      %2426 = vst [vmem:[#allocation3 + $0x5c] sm:$0xf] %v2302
      %2427 = vst [vmem:[#allocation3 + $0x68] sm:$0xf] %v2306
      %2428 = vst [vmem:[#allocation3 + $0x74] sm:$0xf] %v2309
      %2429 = vst [vmem:[#allocation3 + $0x80] sm:$0xf] %v2313
      %2430 = vst [vmem:[#allocation3 + $0x8c] sm:$0xf] %v2316
      %2431 = vst [vmem:[#allocation3 + $0x98] sm:$0xf] %v2320
      %2432 = vst [vmem:[#allocation3 + $0xa4] sm:$0xf] %v2323
      %2433 = vst [vmem:[#allocation3 + $0xb0] sm:$0xf] %v2327
      %2434 = vst [vmem:[#allocation3 + $0xbc] sm:$0xf] %v2330
      %2435 = vst [vmem:[#allocation3 + $0xc8] sm:$0xf] %v2334
      %2436 = vst [vmem:[#allocation3 + $0xd4] sm:$0xf] %v2337
      %2437 = vst [vmem:[#allocation3 + $0xe0] sm:$0xf] %v2341
      %2438 = vst [vmem:[#allocation3 + $0xec] sm:$0xf] %v2344
      %2439 = vst [vmem:[#allocation3 + $0xf8] sm:$0xf] %v2348
      %2440 = vst [vmem:[#allocation3 + $0x104] sm:$0xf] %v2351
      %2441 = vst [vmem:[#allocation3 + $0x110] sm:$0xf] %v2355
      %2442 = vst [vmem:[#allocation3 + $0x11c] sm:$0xf] %v2358
      %2443 = vst [vmem:[#allocation3 + $0x128] sm:$0xf] %v2362
      %2444 = vst [vmem:[#allocation3 + $0x134] sm:$0xf] %v2365
      %2445 = vst [vmem:[#allocation3 + $0x140] sm:$0xf] %v2369
      %2446 = vst [vmem:[#allocation3 + $0x14c] sm:$0xf] %v2372
      %2447 = vst [vmem:[#allocation3 + $0x158] sm:$0xf] %v2376
      %2448 = vst [vmem:[#allocation3 + $0x164] sm:$0xf] %v2379
      %2449 = vst [vmem:[#allocation3 + $0x170] sm:$0xf] %v2383
      %2450 = vst [vmem:[#allocation3 + $0x17c] sm:$0xf] %v2386
      %v2451 = vld [vmem:[#allocation3] sm:$0xff]
      %v2452 = vld [vmem:[#allocation3 + $0x8] sm:$0xf]
      %v2453 = vld [vmem:[#allocation3 + $0xc] sm:$0xff]
      %v2454 = vld [vmem:[#allocation3 + $0x14] sm:$0xf]
      %v2455 = vld [vmem:[#allocation3 + $0x18] sm:$0xff]
      %v2456 = vld [vmem:[#allocation3 + $0x20] sm:$0xf]
      %v2457 = vld [vmem:[#allocation3 + $0x24] sm:$0xff]
      %v2458 = vld [vmem:[#allocation3 + $0x2c] sm:$0xf]
      %v2459 = vld [vmem:[#allocation3 + $0x30] sm:$0xff]
      %v2460 = vld [vmem:[#allocation3 + $0x38] sm:$0xf]
      %v2461 = vld [vmem:[#allocation3 + $0x3c] sm:$0xff]
      %v2462 = vld [vmem:[#allocation3 + $0x44] sm:$0xf]
      %v2463 = vld [vmem:[#allocation3 + $0x48] sm:$0xff]
      %v2464 = vld [vmem:[#allocation3 + $0x50] sm:$0xf]
      %v2465 = vld [vmem:[#allocation3 + $0x54] sm:$0xff]
      %v2466 = vld [vmem:[#allocation3 + $0x5c] sm:$0xf]
      %v2467 = vld [vmem:[#allocation3 + $0x60] sm:$0xff]
      %v2468 = vld [vmem:[#allocation3 + $0x68] sm:$0xf]
      %v2469 = vld [vmem:[#allocation3 + $0x6c] sm:$0xff]
      %v2470 = vld [vmem:[#allocation3 + $0x74] sm:$0xf]
      %v2471 = vld [vmem:[#allocation3 + $0x78] sm:$0xff]
      %v2472 = vld [vmem:[#allocation3 + $0x80] sm:$0xf]
      %v2473 = vld [vmem:[#allocation3 + $0x84] sm:$0xff]
      %v2474 = vld [vmem:[#allocation3 + $0x8c] sm:$0xf]
      %v2475 = vld [vmem:[#allocation3 + $0x90] sm:$0xff]
      %v2476 = vld [vmem:[#allocation3 + $0x98] sm:$0xf]
      %v2477 = vld [vmem:[#allocation3 + $0x9c] sm:$0xff]
      %v2478 = vld [vmem:[#allocation3 + $0xa4] sm:$0xf]
      %v2479 = vld [vmem:[#allocation3 + $0xa8] sm:$0xff]
      %v2480 = vld [vmem:[#allocation3 + $0xb0] sm:$0xf]
      %v2481 = vld [vmem:[#allocation3 + $0xb4] sm:$0xff]
      %v2482 = vld [vmem:[#allocation3 + $0xbc] sm:$0xf]
      %v2483 = vld [vmem:[#allocation3 + $0xc0] sm:$0xff]
      %v2484 = vld [vmem:[#allocation3 + $0xc8] sm:$0xf]
      %v2485 = vld [vmem:[#allocation3 + $0xcc] sm:$0xff]
      %v2486 = vld [vmem:[#allocation3 + $0xd4] sm:$0xf]
      %v2487 = vld [vmem:[#allocation3 + $0xd8] sm:$0xff]
      %v2488 = vld [vmem:[#allocation3 + $0xe0] sm:$0xf]
      %v2489 = vld [vmem:[#allocation3 + $0xe4] sm:$0xff]
      %v2490 = vld [vmem:[#allocation3 + $0xec] sm:$0xf]
      %v2491 = vld [vmem:[#allocation3 + $0xf0] sm:$0xff]
      %v2492 = vld [vmem:[#allocation3 + $0xf8] sm:$0xf]
      %v2493 = vld [vmem:[#allocation3 + $0xfc] sm:$0xff]
      %v2494 = vld [vmem:[#allocation3 + $0x104] sm:$0xf]
      %v2495 = vld [vmem:[#allocation3 + $0x108] sm:$0xff]
      %v2496 = vld [vmem:[#allocation3 + $0x110] sm:$0xf]
      %v2497 = vld [vmem:[#allocation3 + $0x114] sm:$0xff]
      %v2498 = vld [vmem:[#allocation3 + $0x11c] sm:$0xf]
      %v2499 = vld [vmem:[#allocation3 + $0x120] sm:$0xff]
      %v2500 = vld [vmem:[#allocation3 + $0x128] sm:$0xf]
      %v2501 = vld [vmem:[#allocation3 + $0x12c] sm:$0xff]
      %v2502 = vld [vmem:[#allocation3 + $0x134] sm:$0xf]
      %v2503 = vld [vmem:[#allocation3 + $0x138] sm:$0xff]
      %v2504 = vld [vmem:[#allocation3 + $0x140] sm:$0xf]
      %v2505 = vld [vmem:[#allocation3 + $0x144] sm:$0xff]
      %v2506 = vld [vmem:[#allocation3 + $0x14c] sm:$0xf]
      %v2507 = vld [vmem:[#allocation3 + $0x150] sm:$0xff]
      %v2508 = vld [vmem:[#allocation3 + $0x158] sm:$0xf]
      %v2509 = vld [vmem:[#allocation3 + $0x15c] sm:$0xff]
      %v2510 = vld [vmem:[#allocation3 + $0x164] sm:$0xf]
      %v2511 = vld [vmem:[#allocation3 + $0x168] sm:$0xff]
      %v2512 = vld [vmem:[#allocation3 + $0x170] sm:$0xf]
      %v2513 = vld [vmem:[#allocation3 + $0x174] sm:$0xff]
      %v2514 = vld [vmem:[#allocation3 + $0x17c] sm:$0xf]
      %s2515 = scalar_lea.vmem %s1, 192
      %v2516 = vld [vmem:[%s2515] sm:$0xf]
      %v2517 = vld [vmem:[%s2515 + $0x4] sm:$0xf]
      %v2518 = vld [vmem:[%s2515 + $0x8] sm:$0xf]
      %v2519 = vld [vmem:[%s2515 + $0xc] sm:$0xf]
      %v2520 = vld [vmem:[%s2515 + $0x10] sm:$0xf]
      %v2521 = vld [vmem:[%s2515 + $0x14] sm:$0xf]
      %v2522 = vld [vmem:[%s2515 + $0x18] sm:$0xf]
      %v2523 = vld [vmem:[%s2515 + $0x1c] sm:$0xf]
      %v2524 = vld [vmem:[%s2515 + $0x20] sm:$0xf]
      %v2525 = vld [vmem:[%s2515 + $0x24] sm:$0xf]
      %v2526 = vld [vmem:[%s2515 + $0x28] sm:$0xf]
      %v2527 = vld [vmem:[%s2515 + $0x2c] sm:$0xf]
      %v2528 = vld [vmem:[%s2515 + $0x30] sm:$0xf]
      %v2529 = vld [vmem:[%s2515 + $0x34] sm:$0xf]
      %v2530 = vld [vmem:[%s2515 + $0x38] sm:$0xf]
      %v2531 = vld [vmem:[%s2515 + $0x3c] sm:$0xf]
      %v2532 = vld [vmem:[%s2515 + $0x40] sm:$0xf]
      %v2533 = vld [vmem:[%s2515 + $0x44] sm:$0xf]
      %v2534 = vld [vmem:[%s2515 + $0x48] sm:$0xf]
      %v2535 = vld [vmem:[%s2515 + $0x4c] sm:$0xf]
      %v2536 = vld [vmem:[%s2515 + $0x50] sm:$0xf]
      %v2537 = vld [vmem:[%s2515 + $0x54] sm:$0xf]
      %v2538 = vld [vmem:[%s2515 + $0x58] sm:$0xf]
      %v2539 = vld [vmem:[%s2515 + $0x5c] sm:$0xf]
      %v2540 = vld [vmem:[%s2515 + $0x60] sm:$0xf]
      %v2541 = vld [vmem:[%s2515 + $0x64] sm:$0xf]
      %v2542 = vld [vmem:[%s2515 + $0x68] sm:$0xf]
      %v2543 = vld [vmem:[%s2515 + $0x6c] sm:$0xf]
      %v2544 = vld [vmem:[%s2515 + $0x70] sm:$0xf]
      %v2545 = vld [vmem:[%s2515 + $0x74] sm:$0xf]
      %v2546 = vld [vmem:[%s2515 + $0x78] sm:$0xf]
      %v2547 = vld [vmem:[%s2515 + $0x7c] sm:$0xf]
      %v2548 = vld [vmem:[%s2515 + $0x80] sm:$0xf]
      %v2549 = vld [vmem:[%s2515 + $0x84] sm:$0xf]
      %v2550 = vld [vmem:[%s2515 + $0x88] sm:$0xf]
      %v2551 = vld [vmem:[%s2515 + $0x8c] sm:$0xf]
      %v2552 = vld [vmem:[%s2515 + $0x90] sm:$0xf]
      %v2553 = vld [vmem:[%s2515 + $0x94] sm:$0xf]
      %v2554 = vld [vmem:[%s2515 + $0x98] sm:$0xf]
      %v2555 = vld [vmem:[%s2515 + $0x9c] sm:$0xf]
      %v2556 = vld [vmem:[%s2515 + $0xa0] sm:$0xf]
      %v2557 = vld [vmem:[%s2515 + $0xa4] sm:$0xf]
      %v2558 = vld [vmem:[%s2515 + $0xa8] sm:$0xf]
      %v2559 = vld [vmem:[%s2515 + $0xac] sm:$0xf]
      %v2560 = vld [vmem:[%s2515 + $0xb0] sm:$0xf]
      %v2561 = vld [vmem:[%s2515 + $0xb4] sm:$0xf]
      %v2562 = vld [vmem:[%s2515 + $0xb8] sm:$0xf]
      %v2563 = vld [vmem:[%s2515 + $0xbc] sm:$0xf]
      %v2628 = vunpack.c.l.b16 %v2451
      %v2629 = vunpack.c.h.b16 %v2451
      %v2630 = vunpack.c.l.b16 %v2452
      %v2631 = vunpack.c.l.b16 %v2453
      %v2632 = vunpack.c.h.b16 %v2453
      %v2633 = vunpack.c.l.b16 %v2454
      %v2634 = vunpack.c.l.b16 %v2455
      %v2635 = vunpack.c.h.b16 %v2455
      %v2636 = vunpack.c.l.b16 %v2456
      %v2637 = vunpack.c.l.b16 %v2457
      %v2638 = vunpack.c.h.b16 %v2457
      %v2639 = vunpack.c.l.b16 %v2458
      %v2640 = vunpack.c.l.b16 %v2459
      %v2641 = vunpack.c.h.b16 %v2459
      %v2642 = vunpack.c.l.b16 %v2460
      %v2643 = vunpack.c.l.b16 %v2461
      %v2644 = vunpack.c.h.b16 %v2461
      %v2645 = vunpack.c.l.b16 %v2462
      %v2646 = vunpack.c.l.b16 %v2463
      %v2647 = vunpack.c.h.b16 %v2463
      %v2648 = vunpack.c.l.b16 %v2464
      %v2649 = vunpack.c.l.b16 %v2465
      %v2650 = vunpack.c.h.b16 %v2465
      %v2651 = vunpack.c.l.b16 %v2466
      %v2652 = vunpack.c.l.b16 %v2467
      %v2653 = vunpack.c.h.b16 %v2467
      %v2654 = vunpack.c.l.b16 %v2468
      %v2655 = vunpack.c.l.b16 %v2469
      %v2656 = vunpack.c.h.b16 %v2469
      %v2657 = vunpack.c.l.b16 %v2470
      %v2658 = vunpack.c.l.b16 %v2471
      %v2659 = vunpack.c.h.b16 %v2471
      %v2660 = vunpack.c.l.b16 %v2472
      %v2661 = vunpack.c.l.b16 %v2473
      %v2662 = vunpack.c.h.b16 %v2473
      %v2663 = vunpack.c.l.b16 %v2474
      %v2664 = vunpack.c.l.b16 %v2475
      %v2665 = vunpack.c.h.b16 %v2475
      %v2666 = vunpack.c.l.b16 %v2476
      %v2667 = vunpack.c.l.b16 %v2477
      %v2668 = vunpack.c.h.b16 %v2477
      %v2669 = vunpack.c.l.b16 %v2478
      %v2670 = vunpack.c.l.b16 %v2479
      %v2671 = vunpack.c.h.b16 %v2479
      %v2672 = vunpack.c.l.b16 %v2480
      %v2673 = vunpack.c.l.b16 %v2481
      %v2674 = vunpack.c.h.b16 %v2481
      %v2675 = vunpack.c.l.b16 %v2482
      %v2676 = vunpack.c.l.b16 %v2483
      %v2677 = vunpack.c.h.b16 %v2483
      %v2678 = vunpack.c.l.b16 %v2484
      %v2679 = vunpack.c.l.b16 %v2485
      %v2680 = vunpack.c.h.b16 %v2485
      %v2681 = vunpack.c.l.b16 %v2486
      %v2682 = vunpack.c.l.b16 %v2487
      %v2683 = vunpack.c.h.b16 %v2487
      %v2684 = vunpack.c.l.b16 %v2488
      %v2685 = vunpack.c.l.b16 %v2489
      %v2686 = vunpack.c.h.b16 %v2489
      %v2687 = vunpack.c.l.b16 %v2490
      %v2688 = vunpack.c.l.b16 %v2491
      %v2689 = vunpack.c.h.b16 %v2491
      %v2690 = vunpack.c.l.b16 %v2492
      %v2691 = vunpack.c.l.b16 %v2493
      %v2692 = vunpack.c.h.b16 %v2493
      %v2693 = vunpack.c.l.b16 %v2494
      %v2694 = vunpack.c.l.b16 %v2495
      %v2695 = vunpack.c.h.b16 %v2495
      %v2696 = vunpack.c.l.b16 %v2496
      %v2697 = vunpack.c.l.b16 %v2497
      %v2698 = vunpack.c.h.b16 %v2497
      %v2699 = vunpack.c.l.b16 %v2498
      %v2700 = vunpack.c.l.b16 %v2499
      %v2701 = vunpack.c.h.b16 %v2499
      %v2702 = vunpack.c.l.b16 %v2500
      %v2703 = vunpack.c.l.b16 %v2501
      %v2704 = vunpack.c.h.b16 %v2501
      %v2705 = vunpack.c.l.b16 %v2502
      %v2706 = vunpack.c.l.b16 %v2503
      %v2707 = vunpack.c.h.b16 %v2503
      %v2708 = vunpack.c.l.b16 %v2504
      %v2709 = vunpack.c.l.b16 %v2505
      %v2710 = vunpack.c.h.b16 %v2505
      %v2711 = vunpack.c.l.b16 %v2506
      %v2712 = vunpack.c.l.b16 %v2507
      %v2713 = vunpack.c.h.b16 %v2507
      %v2714 = vunpack.c.l.b16 %v2508
      %v2715 = vunpack.c.l.b16 %v2509
      %v2716 = vunpack.c.h.b16 %v2509
      %v2717 = vunpack.c.l.b16 %v2510
      %v2718 = vunpack.c.l.b16 %v2511
      %v2719 = vunpack.c.h.b16 %v2511
      %v2720 = vunpack.c.l.b16 %v2512
      %v2721 = vunpack.c.l.b16 %v2513
      %v2722 = vunpack.c.h.b16 %v2513
      %v2723 = vunpack.c.l.b16 %v2514
      %v2724 = vpack.c.b16 %v2631, %v2628
      %v2725 = vpack.c.b16 %v2632, %v2629
      %v2726 = vpack.c.b16 %v2633, %v2630
      %v2727 = vpack.c.b16 %v2637, %v2634
      %v2728 = vpack.c.b16 %v2638, %v2635
      %v2729 = vpack.c.b16 %v2639, %v2636
      %v2730 = vpack.c.b16 %v2643, %v2640
      %v2731 = vpack.c.b16 %v2644, %v2641
      %v2732 = vpack.c.b16 %v2645, %v2642
      %v2733 = vpack.c.b16 %v2649, %v2646
      %v2734 = vpack.c.b16 %v2650, %v2647
      %v2735 = vpack.c.b16 %v2651, %v2648
      %v2736 = vpack.c.b16 %v2655, %v2652
      %v2737 = vpack.c.b16 %v2656, %v2653
      %v2738 = vpack.c.b16 %v2657, %v2654
      %v2739 = vpack.c.b16 %v2661, %v2658
      %v2740 = vpack.c.b16 %v2662, %v2659
      %v2741 = vpack.c.b16 %v2663, %v2660
      %v2742 = vpack.c.b16 %v2667, %v2664
      %v2743 = vpack.c.b16 %v2668, %v2665
      %v2744 = vpack.c.b16 %v2669, %v2666
      %v2745 = vpack.c.b16 %v2673, %v2670
      %v2746 = vpack.c.b16 %v2674, %v2671
      %v2747 = vpack.c.b16 %v2675, %v2672
      %v2748 = vpack.c.b16 %v2679, %v2676
      %v2749 = vpack.c.b16 %v2680, %v2677
      %v2750 = vpack.c.b16 %v2681, %v2678
      %v2751 = vpack.c.b16 %v2685, %v2682
      %v2752 = vpack.c.b16 %v2686, %v2683
      %v2753 = vpack.c.b16 %v2687, %v2684
      %v2754 = vpack.c.b16 %v2691, %v2688
      %v2755 = vpack.c.b16 %v2692, %v2689
      %v2756 = vpack.c.b16 %v2693, %v2690
      %v2757 = vpack.c.b16 %v2697, %v2694
      %v2758 = vpack.c.b16 %v2698, %v2695
      %v2759 = vpack.c.b16 %v2699, %v2696
      %v2760 = vpack.c.b16 %v2703, %v2700
      %v2761 = vpack.c.b16 %v2704, %v2701
      %v2762 = vpack.c.b16 %v2705, %v2702
      %v2763 = vpack.c.b16 %v2709, %v2706
      %v2764 = vpack.c.b16 %v2710, %v2707
      %v2765 = vpack.c.b16 %v2711, %v2708
      %v2766 = vpack.c.b16 %v2715, %v2712
      %v2767 = vpack.c.b16 %v2716, %v2713
      %v2768 = vpack.c.b16 %v2717, %v2714
      %v2769 = vpack.c.b16 %v2721, %v2718
      %v2770 = vpack.c.b16 %v2722, %v2719
      %v2771 = vpack.c.b16 %v2723, %v2720
      %v2868 = vunpack.c.l.b16 %v2516
      %v2869 = vunpack.c.l.b16 %v2517
      %v2870 = vunpack.c.l.b16 %v2518
      %v2871 = vunpack.c.l.b16 %v2519
      %v2872 = vunpack.c.l.b16 %v2520
      %v2873 = vunpack.c.l.b16 %v2521
      %v2874 = vunpack.c.l.b16 %v2522
      %v2875 = vunpack.c.l.b16 %v2523
      %v2876 = vunpack.c.l.b16 %v2524
      %v2877 = vunpack.c.l.b16 %v2525
      %v2878 = vunpack.c.l.b16 %v2526
      %v2879 = vunpack.c.l.b16 %v2527
      %v2880 = vunpack.c.l.b16 %v2528
      %v2881 = vunpack.c.l.b16 %v2529
      %v2882 = vunpack.c.l.b16 %v2530
      %v2883 = vunpack.c.l.b16 %v2531
      %v2884 = vunpack.c.l.b16 %v2532
      %v2885 = vunpack.c.l.b16 %v2533
      %v2886 = vunpack.c.l.b16 %v2534
      %v2887 = vunpack.c.l.b16 %v2535
      %v2888 = vunpack.c.l.b16 %v2536
      %v2889 = vunpack.c.l.b16 %v2537
      %v2890 = vunpack.c.l.b16 %v2538
      %v2891 = vunpack.c.l.b16 %v2539
      %v2892 = vunpack.c.l.b16 %v2540
      %v2893 = vunpack.c.l.b16 %v2541
      %v2894 = vunpack.c.l.b16 %v2542
      %v2895 = vunpack.c.l.b16 %v2543
      %v2896 = vunpack.c.l.b16 %v2544
      %v2897 = vunpack.c.l.b16 %v2545
      %v2898 = vunpack.c.l.b16 %v2546
      %v2899 = vunpack.c.l.b16 %v2547
      %v2900 = vunpack.c.l.b16 %v2548
      %v2901 = vunpack.c.l.b16 %v2549
      %v2902 = vunpack.c.l.b16 %v2550
      %v2903 = vunpack.c.l.b16 %v2551
      %v2904 = vunpack.c.l.b16 %v2552
      %v2905 = vunpack.c.l.b16 %v2553
      %v2906 = vunpack.c.l.b16 %v2554
      %v2907 = vunpack.c.l.b16 %v2555
      %v2908 = vunpack.c.l.b16 %v2556
      %v2909 = vunpack.c.l.b16 %v2557
      %v2910 = vunpack.c.l.b16 %v2558
      %v2911 = vunpack.c.l.b16 %v2559
      %v2912 = vunpack.c.l.b16 %v2560
      %v2913 = vunpack.c.l.b16 %v2561
      %v2914 = vunpack.c.l.b16 %v2562
      %v2915 = vunpack.c.l.b16 %v2563
      %v2916 = vpack.c.b16 %v2869, %v2868
      %v2917 = vpack.c.b16 %v2871, %v2870
      %v2918 = vpack.c.b16 %v2873, %v2872
      %v2919 = vpack.c.b16 %v2875, %v2874
      %v2920 = vpack.c.b16 %v2877, %v2876
      %v2921 = vpack.c.b16 %v2879, %v2878
      %v2922 = vpack.c.b16 %v2881, %v2880
      %v2923 = vpack.c.b16 %v2883, %v2882
      %v2924 = vpack.c.b16 %v2885, %v2884
      %v2925 = vpack.c.b16 %v2887, %v2886
      %v2926 = vpack.c.b16 %v2889, %v2888
      %v2927 = vpack.c.b16 %v2891, %v2890
      %v2928 = vpack.c.b16 %v2893, %v2892
      %v2929 = vpack.c.b16 %v2895, %v2894
      %v2930 = vpack.c.b16 %v2897, %v2896
      %v2931 = vpack.c.b16 %v2899, %v2898
      %v2932 = vpack.c.b16 %v2901, %v2900
      %v2933 = vpack.c.b16 %v2903, %v2902
      %v2934 = vpack.c.b16 %v2905, %v2904
      %v2935 = vpack.c.b16 %v2907, %v2906
      %v2936 = vpack.c.b16 %v2909, %v2908
      %v2937 = vpack.c.b16 %v2911, %v2910
      %v2938 = vpack.c.b16 %v2913, %v2912
      %v2939 = vpack.c.b16 %v2915, %v2914
      %2964 = vmatprep.subr.bf16.mxu0 0
      %2965 = vmatpush1.bf16.msra.mxu0 %v2923
      %2966 = vmatprep.subr.bf16.mxu0 0
      %2967 = vmatpush1.bf16.msra.mxu0 %v2922
      %2968 = vmatprep.subr.bf16.mxu0 0
      %2969 = vmatpush1.bf16.msra.mxu0 %v2921
      %2970 = vmatprep.subr.bf16.mxu0 0
      %2971 = vmatpush1.bf16.msra.mxu0 %v2920
      %2972 = vmatprep.subr.bf16.mxu0 0
      %2973 = vmatpush1.bf16.msra.mxu0 %v2919
      %2974 = vmatprep.subr.bf16.mxu0 0
      %2975 = vmatpush1.bf16.msra.mxu0 %v2918
      %2976 = vmatprep.subr.bf16.mxu0 0
      %2977 = vmatpush1.bf16.msra.mxu0 %v2917
      %2978 = vmatprep.subr.bf16.mxu0 0
      %2979 = vmatpush1.bf16.msra.mxu0 %v2916
      %2980 = vmatprep.subr.bf16.mxu0 0
      %2981 = vmatpush2.bf16.msra.mxu0 %v2931
      %2982 = vmatprep.subr.bf16.mxu0 0
      %2983 = vmatpush2.bf16.msra.mxu0 %v2930
      %2984 = vmatprep.subr.bf16.mxu0 0
      %2985 = vmatpush2.bf16.msra.mxu0 %v2929
      %2986 = vmatprep.subr.bf16.mxu0 0
      %2987 = vmatpush2.bf16.msra.mxu0 %v2928
      %2988 = vmatprep.subr.bf16.mxu0 0
      %2989 = vmatpush2.bf16.msra.mxu0 %v2927
      %2990 = vmatprep.subr.bf16.mxu0 0
      %2991 = vmatpush2.bf16.msra.mxu0 %v2926
      %2992 = vmatprep.subr.bf16.mxu0 0
      %2993 = vmatpush2.bf16.msra.mxu0 %v2925
      %2994 = vmatprep.subr.bf16.mxu0 0
      %2995 = vmatpush2.bf16.msra.mxu0 %v2924
      %2996 = vmatprep.mubr.bf16.mxu0 %v2725
      %2997 = vmatmul.mubr.bf16.gmra.mxu0 %v2724
      %v2998 = vpop.f32.mrf.mxu0
      %v2999 = vadd.f32 0.0, %v2998
      %v3000 = vpop.f32.mrf.mxu0
      %v3001 = vpop.f32.mrf.mxu0
      %v3002 = vadd.f32 0.0, %v3001
      %v3003 = vpop.f32.mrf.mxu0
      %3004 = vmatprep.mubr.bf16.mxu0 %v2728
      %3005 = vmatmul.mubr.bf16.gmra.mxu0 %v2727
      %v3006 = vpop.f32.mrf.mxu0
      %v3007 = vadd.f32 0.0, %v3006
      %v3008 = vpop.f32.mrf.mxu0
      %v3009 = vpop.f32.mrf.mxu0
      %v3010 = vadd.f32 0.0, %v3009
      %v3011 = vpop.f32.mrf.mxu0
      %3012 = vmatprep.mubr.bf16.mxu0 %v2731
      %3013 = vmatmul.mubr.bf16.gmra.mxu0 %v2730
      %v3014 = vpop.f32.mrf.mxu0
      %v3015 = vadd.f32 0.0, %v3014
      %v3016 = vpop.f32.mrf.mxu0
      %v3017 = vpop.f32.mrf.mxu0
      %v3018 = vadd.f32 0.0, %v3017
      %v3019 = vpop.f32.mrf.mxu0
      %3020 = vmatprep.mubr.bf16.mxu0 %v2734
      %3021 = vmatmul.mubr.bf16.gmra.mxu0 %v2733
      %v3022 = vpop.f32.mrf.mxu0
      %v3023 = vadd.f32 0.0, %v3022
      %v3024 = vpop.f32.mrf.mxu0
      %v3025 = vpop.f32.mrf.mxu0
      %v3026 = vadd.f32 0.0, %v3025
      %v3027 = vpop.f32.mrf.mxu0
      %3028 = vmatprep.mubr.bf16.mxu0 %v2737
      %3029 = vmatmul.mubr.bf16.gmra.mxu0 %v2736
      %v3030 = vpop.f32.mrf.mxu0
      %v3031 = vadd.f32 0.0, %v3030
      %v3032 = vpop.f32.mrf.mxu0
      %v3033 = vpop.f32.mrf.mxu0
      %v3034 = vadd.f32 0.0, %v3033
      %v3035 = vpop.f32.mrf.mxu0
      %3036 = vmatprep.mubr.bf16.mxu0 %v2740
      %3037 = vmatmul.mubr.bf16.gmra.mxu0 %v2739
      %v3038 = vpop.f32.mrf.mxu0
      %v3039 = vadd.f32 0.0, %v3038
      %v3040 = vpop.f32.mrf.mxu0
      %v3041 = vpop.f32.mrf.mxu0
      %v3042 = vadd.f32 0.0, %v3041
      %v3043 = vpop.f32.mrf.mxu0
      %3044 = vmatprep.mubr.bf16.mxu0 %v2743
      %3045 = vmatmul.mubr.bf16.gmra.mxu0 %v2742
      %v3046 = vpop.f32.mrf.mxu0
      %v3047 = vadd.f32 0.0, %v3046
      %v3048 = vpop.f32.mrf.mxu0
      %v3049 = vpop.f32.mrf.mxu0
      %v3050 = vadd.f32 0.0, %v3049
      %v3051 = vpop.f32.mrf.mxu0
      %3052 = vmatprep.mubr.bf16.mxu0 %v2746
      %3053 = vmatmul.mubr.bf16.gmra.mxu0 %v2745
      %v3054 = vpop.f32.mrf.mxu0
      %v3055 = vadd.f32 0.0, %v3054
      %v3056 = vpop.f32.mrf.mxu0
      %v3057 = vpop.f32.mrf.mxu0
      %v3058 = vadd.f32 0.0, %v3057
      %v3059 = vpop.f32.mrf.mxu0
      %3060 = vmatprep.mubr.bf16.mxu0 %v2749
      %3061 = vmatmul.mubr.bf16.gmra.mxu0 %v2748
      %v3062 = vpop.f32.mrf.mxu0
      %v3063 = vadd.f32 0.0, %v3062
      %v3064 = vpop.f32.mrf.mxu0
      %v3065 = vpop.f32.mrf.mxu0
      %v3066 = vadd.f32 0.0, %v3065
      %v3067 = vpop.f32.mrf.mxu0
      %3068 = vmatprep.mubr.bf16.mxu0 %v2752
      %3069 = vmatmul.mubr.bf16.gmra.mxu0 %v2751
      %v3070 = vpop.f32.mrf.mxu0
      %v3071 = vadd.f32 0.0, %v3070
      %v3072 = vpop.f32.mrf.mxu0
      %v3073 = vpop.f32.mrf.mxu0
      %v3074 = vadd.f32 0.0, %v3073
      %v3075 = vpop.f32.mrf.mxu0
      %3076 = vmatprep.mubr.bf16.mxu0 %v2755
      %3077 = vmatmul.mubr.bf16.gmra.mxu0 %v2754
      %v3078 = vpop.f32.mrf.mxu0
      %v3079 = vadd.f32 0.0, %v3078
      %v3080 = vpop.f32.mrf.mxu0
      %v3081 = vpop.f32.mrf.mxu0
      %v3082 = vadd.f32 0.0, %v3081
      %v3083 = vpop.f32.mrf.mxu0
      %3084 = vmatprep.mubr.bf16.mxu0 %v2758
      %3085 = vmatmul.mubr.bf16.gmra.mxu0 %v2757
      %v3086 = vpop.f32.mrf.mxu0
      %v3087 = vadd.f32 0.0, %v3086
      %v3088 = vpop.f32.mrf.mxu0
      %v3089 = vpop.f32.mrf.mxu0
      %v3090 = vadd.f32 0.0, %v3089
      %v3091 = vpop.f32.mrf.mxu0
      %3092 = vmatprep.mubr.bf16.mxu0 %v2761
      %3093 = vmatmul.mubr.bf16.gmra.mxu0 %v2760
      %v3094 = vpop.f32.mrf.mxu0
      %v3095 = vadd.f32 0.0, %v3094
      %v3096 = vpop.f32.mrf.mxu0
      %v3097 = vpop.f32.mrf.mxu0
      %v3098 = vadd.f32 0.0, %v3097
      %v3099 = vpop.f32.mrf.mxu0
      %3100 = vmatprep.mubr.bf16.mxu0 %v2764
      %3101 = vmatmul.mubr.bf16.gmra.mxu0 %v2763
      %v3102 = vpop.f32.mrf.mxu0
      %v3103 = vadd.f32 0.0, %v3102
      %v3104 = vpop.f32.mrf.mxu0
      %v3105 = vpop.f32.mrf.mxu0
      %v3106 = vadd.f32 0.0, %v3105
      %v3107 = vpop.f32.mrf.mxu0
      %3108 = vmatprep.mubr.bf16.mxu0 %v2767
      %3109 = vmatmul.mubr.bf16.gmra.mxu0 %v2766
      %v3110 = vpop.f32.mrf.mxu0
      %v3111 = vadd.f32 0.0, %v3110
      %v3112 = vpop.f32.mrf.mxu0
      %v3113 = vpop.f32.mrf.mxu0
      %v3114 = vadd.f32 0.0, %v3113
      %v3115 = vpop.f32.mrf.mxu0
      %3116 = vmatprep.mubr.bf16.mxu0 %v2770
      %3117 = vmatmul.mubr.bf16.gmra.mxu0 %v2769
      %v3118 = vpop.f32.mrf.mxu0
      %v3119 = vadd.f32 0.0, %v3118
      %v3120 = vpop.f32.mrf.mxu0
      %v3121 = vpop.f32.mrf.mxu0
      %v3122 = vadd.f32 0.0, %v3121
      %v3123 = vpop.f32.mrf.mxu0
      %3124 = vdwg.mxu0
      %3125 = vmatprep.subr.bf16.mxu0 0
      %3126 = vmatpush1.bf16.msra.mxu0 %v2939
      %3127 = vmatprep.subr.bf16.mxu0 0
      %3128 = vmatpush1.bf16.msra.mxu0 %v2938
      %3129 = vmatprep.subr.bf16.mxu0 0
      %3130 = vmatpush1.bf16.msra.mxu0 %v2937
      %3131 = vmatprep.subr.bf16.mxu0 0
      %3132 = vmatpush1.bf16.msra.mxu0 %v2936
      %3133 = vmatprep.subr.bf16.mxu0 0
      %3134 = vmatpush1.bf16.msra.mxu0 %v2935
      %3135 = vmatprep.subr.bf16.mxu0 0
      %3136 = vmatpush1.bf16.msra.mxu0 %v2934
      %3137 = vmatprep.subr.bf16.mxu0 0
      %3138 = vmatpush1.bf16.msra.mxu0 %v2933
      %3139 = vmatprep.subr.bf16.mxu0 0
      %3140 = vmatpush1.bf16.msra.mxu0 %v2932
      %3141 = vmatprep.subr.bf16.mxu0 0
      %3142 = vmatpush2.bf16.msra.mxu0 0
      %3143 = vmatprep.subr.bf16.mxu0 0
      %3144 = vmatpush2.bf16.msra.mxu0 0
      %3145 = vmatprep.subr.bf16.mxu0 0
      %3146 = vmatpush2.bf16.msra.mxu0 0
      %3147 = vmatprep.subr.bf16.mxu0 0
      %3148 = vmatpush2.bf16.msra.mxu0 0
      %3149 = vmatprep.subr.bf16.mxu0 0
      %3150 = vmatpush2.bf16.msra.mxu0 0
      %3151 = vmatprep.subr.bf16.mxu0 0
      %3152 = vmatpush2.bf16.msra.mxu0 0
      %3153 = vmatprep.subr.bf16.mxu0 0
      %3154 = vmatpush2.bf16.msra.mxu0 0
      %3155 = vmatprep.subr.bf16.mxu0 0
      %3156 = vmatpush2.bf16.msra.mxu0 0
      %3157 = vmatprep.mubr.bf16.mxu0 0
      %3158 = vmatmul.mubr.bf16.gmra.mxu0 %v2726
      %v3159 = vpop.f32.mrf.mxu0
      %v3160 = vadd.f32 %v2999, %v3159
      %v3161 = vpop.f32.mrf.mxu0
      %v3162 = vpop.f32.mrf.mxu0
      %v3163 = vadd.f32 %v3002, %v3162
      %v3164 = vpop.f32.mrf.mxu0
      %3165 = vmatprep.mubr.bf16.mxu0 0
      %3166 = vmatmul.mubr.bf16.gmra.mxu0 %v2729
      %v3167 = vpop.f32.mrf.mxu0
      %v3168 = vadd.f32 %v3007, %v3167
      %v3169 = vpop.f32.mrf.mxu0
      %v3170 = vpop.f32.mrf.mxu0
      %v3171 = vadd.f32 %v3010, %v3170
      %v3172 = vpop.f32.mrf.mxu0
      %3173 = vmatprep.mubr.bf16.mxu0 0
      %3174 = vmatmul.mubr.bf16.gmra.mxu0 %v2732
      %v3175 = vpop.f32.mrf.mxu0
      %v3176 = vadd.f32 %v3015, %v3175
      %v3177 = vpop.f32.mrf.mxu0
      %v3178 = vpop.f32.mrf.mxu0
      %v3179 = vadd.f32 %v3018, %v3178
      %v3180 = vpop.f32.mrf.mxu0
      %3181 = vmatprep.mubr.bf16.mxu0 0
      %3182 = vmatmul.mubr.bf16.gmra.mxu0 %v2735
      %v3183 = vpop.f32.mrf.mxu0
      %v3184 = vadd.f32 %v3023, %v3183
      %v3185 = vpop.f32.mrf.mxu0
      %v3186 = vpop.f32.mrf.mxu0
      %v3187 = vadd.f32 %v3026, %v3186
      %v3188 = vpop.f32.mrf.mxu0
      %3189 = vmatprep.mubr.bf16.mxu0 0
      %3190 = vmatmul.mubr.bf16.gmra.mxu0 %v2738
      %v3191 = vpop.f32.mrf.mxu0
      %v3192 = vadd.f32 %v3031, %v3191
      %v3193 = vpop.f32.mrf.mxu0
      %v3194 = vpop.f32.mrf.mxu0
      %v3195 = vadd.f32 %v3034, %v3194
      %v3196 = vpop.f32.mrf.mxu0
      %3197 = vmatprep.mubr.bf16.mxu0 0
      %3198 = vmatmul.mubr.bf16.gmra.mxu0 %v2741
      %v3199 = vpop.f32.mrf.mxu0
      %v3200 = vadd.f32 %v3039, %v3199
      %v3201 = vpop.f32.mrf.mxu0
      %v3202 = vpop.f32.mrf.mxu0
      %v3203 = vadd.f32 %v3042, %v3202
      %v3204 = vpop.f32.mrf.mxu0
      %3205 = vmatprep.mubr.bf16.mxu0 0
      %3206 = vmatmul.mubr.bf16.gmra.mxu0 %v2744
      %v3207 = vpop.f32.mrf.mxu0
      %v3208 = vadd.f32 %v3047, %v3207
      %v3209 = vpop.f32.mrf.mxu0
      %v3210 = vpop.f32.mrf.mxu0
      %v3211 = vadd.f32 %v3050, %v3210
      %v3212 = vpop.f32.mrf.mxu0
      %3213 = vmatprep.mubr.bf16.mxu0 0
      %3214 = vmatmul.mubr.bf16.gmra.mxu0 %v2747
      %v3215 = vpop.f32.mrf.mxu0
      %v3216 = vadd.f32 %v3055, %v3215
      %v3217 = vpop.f32.mrf.mxu0
      %v3218 = vpop.f32.mrf.mxu0
      %v3219 = vadd.f32 %v3058, %v3218
      %v3220 = vpop.f32.mrf.mxu0
      %3221 = vmatprep.mubr.bf16.mxu0 0
      %3222 = vmatmul.mubr.bf16.gmra.mxu0 %v2750
      %v3223 = vpop.f32.mrf.mxu0
      %v3224 = vadd.f32 %v3063, %v3223
      %v3225 = vpop.f32.mrf.mxu0
      %v3226 = vpop.f32.mrf.mxu0
      %v3227 = vadd.f32 %v3066, %v3226
      %v3228 = vpop.f32.mrf.mxu0
      %3229 = vmatprep.mubr.bf16.mxu0 0
      %3230 = vmatmul.mubr.bf16.gmra.mxu0 %v2753
      %v3231 = vpop.f32.mrf.mxu0
      %v3232 = vadd.f32 %v3071, %v3231
      %v3233 = vpop.f32.mrf.mxu0
      %v3234 = vpop.f32.mrf.mxu0
      %v3235 = vadd.f32 %v3074, %v3234
      %v3236 = vpop.f32.mrf.mxu0
      %3237 = vmatprep.mubr.bf16.mxu0 0
      %3238 = vmatmul.mubr.bf16.gmra.mxu0 %v2756
      %v3239 = vpop.f32.mrf.mxu0
      %v3240 = vadd.f32 %v3079, %v3239
      %v3241 = vpop.f32.mrf.mxu0
      %v3242 = vpop.f32.mrf.mxu0
      %v3243 = vadd.f32 %v3082, %v3242
      %v3244 = vpop.f32.mrf.mxu0
      %3245 = vmatprep.mubr.bf16.mxu0 0
      %3246 = vmatmul.mubr.bf16.gmra.mxu0 %v2759
      %v3247 = vpop.f32.mrf.mxu0
      %v3248 = vadd.f32 %v3087, %v3247
      %v3249 = vpop.f32.mrf.mxu0
      %v3250 = vpop.f32.mrf.mxu0
      %v3251 = vadd.f32 %v3090, %v3250
      %v3252 = vpop.f32.mrf.mxu0
      %3253 = vmatprep.mubr.bf16.mxu0 0
      %3254 = vmatmul.mubr.bf16.gmra.mxu0 %v2762
      %v3255 = vpop.f32.mrf.mxu0
      %v3256 = vadd.f32 %v3095, %v3255
      %v3257 = vpop.f32.mrf.mxu0
      %v3258 = vpop.f32.mrf.mxu0
      %v3259 = vadd.f32 %v3098, %v3258
      %v3260 = vpop.f32.mrf.mxu0
      %3261 = vmatprep.mubr.bf16.mxu0 0
      %3262 = vmatmul.mubr.bf16.gmra.mxu0 %v2765
      %v3263 = vpop.f32.mrf.mxu0
      %v3264 = vadd.f32 %v3103, %v3263
      %v3265 = vpop.f32.mrf.mxu0
      %v3266 = vpop.f32.mrf.mxu0
      %v3267 = vadd.f32 %v3106, %v3266
      %v3268 = vpop.f32.mrf.mxu0
      %3269 = vmatprep.mubr.bf16.mxu0 0
      %3270 = vmatmul.mubr.bf16.gmra.mxu0 %v2768
      %v3271 = vpop.f32.mrf.mxu0
      %v3272 = vadd.f32 %v3111, %v3271
      %v3273 = vpop.f32.mrf.mxu0
      %v3274 = vpop.f32.mrf.mxu0
      %v3275 = vadd.f32 %v3114, %v3274
      %v3276 = vpop.f32.mrf.mxu0
      %3277 = vmatprep.mubr.bf16.mxu0 0
      %3278 = vmatmul.mubr.bf16.gmra.mxu0 %v2771
      %v3279 = vpop.f32.mrf.mxu0
      %v3280 = vadd.f32 %v3119, %v3279
      %v3281 = vpop.f32.mrf.mxu0
      %v3282 = vpop.f32.mrf.mxu0
      %v3283 = vadd.f32 %v3122, %v3282
      %v3284 = vpop.f32.mrf.mxu0
      %3285 = vdwg.mxu0
      %v3350 = vunpack.c.l.b16 %v1507
      %v3351 = vunpack.c.h.b16 %v1507
      %v3352 = vunpack.c.l.b16 %v1508
      %v3353 = vunpack.c.l.b16 %v1509
      %v3354 = vunpack.c.h.b16 %v1509
      %v3355 = vunpack.c.l.b16 %v1510
      %v3356 = vunpack.c.l.b16 %v1511
      %v3357 = vunpack.c.h.b16 %v1511
      %v3358 = vunpack.c.l.b16 %v1512
      %v3359 = vunpack.c.l.b16 %v1513
      %v3360 = vunpack.c.h.b16 %v1513
      %v3361 = vunpack.c.l.b16 %v1514
      %v3362 = vunpack.c.l.b16 %v1515
      %v3363 = vunpack.c.h.b16 %v1515
      %v3364 = vunpack.c.l.b16 %v1516
      %v3365 = vunpack.c.l.b16 %v1517
      %v3366 = vunpack.c.h.b16 %v1517
      %v3367 = vunpack.c.l.b16 %v1518
      %v3368 = vunpack.c.l.b16 %v1519
      %v3369 = vunpack.c.h.b16 %v1519
      %v3370 = vunpack.c.l.b16 %v1520
      %v3371 = vunpack.c.l.b16 %v1521
      %v3372 = vunpack.c.h.b16 %v1521
      %v3373 = vunpack.c.l.b16 %v1522
      %v3374 = vunpack.c.l.b16 %v1523
      %v3375 = vunpack.c.h.b16 %v1523
      %v3376 = vunpack.c.l.b16 %v1524
      %v3377 = vunpack.c.l.b16 %v1525
      %v3378 = vunpack.c.h.b16 %v1525
      %v3379 = vunpack.c.l.b16 %v1526
      %v3380 = vunpack.c.l.b16 %v1527
      %v3381 = vunpack.c.h.b16 %v1527
      %v3382 = vunpack.c.l.b16 %v1528
      %v3383 = vunpack.c.l.b16 %v1529
      %v3384 = vunpack.c.h.b16 %v1529
      %v3385 = vunpack.c.l.b16 %v1530
      %v3386 = vunpack.c.l.b16 %v1531
      %v3387 = vunpack.c.h.b16 %v1531
      %v3388 = vunpack.c.l.b16 %v1532
      %v3389 = vunpack.c.l.b16 %v1533
      %v3390 = vunpack.c.h.b16 %v1533
      %v3391 = vunpack.c.l.b16 %v1534
      %v3392 = vunpack.c.l.b16 %v1535
      %v3393 = vunpack.c.h.b16 %v1535
      %v3394 = vunpack.c.l.b16 %v1536
      %v3395 = vunpack.c.l.b16 %v1537
      %v3396 = vunpack.c.h.b16 %v1537
      %v3397 = vunpack.c.l.b16 %v1538
      %v3398 = vunpack.c.l.b16 %v1539
      %v3399 = vunpack.c.h.b16 %v1539
      %v3400 = vunpack.c.l.b16 %v1540
      %v3401 = vunpack.c.l.b16 %v1541
      %v3402 = vunpack.c.h.b16 %v1541
      %v3403 = vunpack.c.l.b16 %v1542
      %v3404 = vunpack.c.l.b16 %v1543
      %v3405 = vunpack.c.h.b16 %v1543
      %v3406 = vunpack.c.l.b16 %v1544
      %v3407 = vunpack.c.l.b16 %v1545
      %v3408 = vunpack.c.h.b16 %v1545
      %v3409 = vunpack.c.l.b16 %v1546
      %v3410 = vunpack.c.l.b16 %v1547
      %v3411 = vunpack.c.h.b16 %v1547
      %v3412 = vunpack.c.l.b16 %v1548
      %v3413 = vunpack.c.l.b16 %v1549
      %v3414 = vunpack.c.h.b16 %v1549
      %v3415 = vunpack.c.l.b16 %v1550
      %v3416 = vunpack.c.l.b16 %v1551
      %v3417 = vunpack.c.h.b16 %v1551
      %v3418 = vunpack.c.l.b16 %v1552
      %v3419 = vunpack.c.l.b16 %v1553
      %v3420 = vunpack.c.h.b16 %v1553
      %v3421 = vunpack.c.l.b16 %v1554
      %v3422 = vunpack.c.l.b16 %v1555
      %v3423 = vunpack.c.h.b16 %v1555
      %v3424 = vunpack.c.l.b16 %v1556
      %v3425 = vunpack.c.l.b16 %v1557
      %v3426 = vunpack.c.h.b16 %v1557
      %v3427 = vunpack.c.l.b16 %v1558
      %v3428 = vunpack.c.l.b16 %v1559
      %v3429 = vunpack.c.h.b16 %v1559
      %v3430 = vunpack.c.l.b16 %v1560
      %v3431 = vunpack.c.l.b16 %v1561
      %v3432 = vunpack.c.h.b16 %v1561
      %v3433 = vunpack.c.l.b16 %v1562
      %v3434 = vunpack.c.l.b16 %v1563
      %v3435 = vunpack.c.h.b16 %v1563
      %v3436 = vunpack.c.l.b16 %v1564
      %v3437 = vunpack.c.l.b16 %v1565
      %v3438 = vunpack.c.h.b16 %v1565
      %v3439 = vunpack.c.l.b16 %v1566
      %v3440 = vunpack.c.l.b16 %v1567
      %v3441 = vunpack.c.h.b16 %v1567
      %v3442 = vunpack.c.l.b16 %v1568
      %v3443 = vunpack.c.l.b16 %v1569
      %v3444 = vunpack.c.h.b16 %v1569
      %v3445 = vunpack.c.l.b16 %v1570
      %v3446 = vpack.c.b16 %v3353, %v3350
      %v3447 = vpack.c.b16 %v3354, %v3351
      %v3448 = vpack.c.b16 %v3355, %v3352
      %v3449 = vpack.c.b16 %v3359, %v3356
      %v3450 = vpack.c.b16 %v3360, %v3357
      %v3451 = vpack.c.b16 %v3361, %v3358
      %v3452 = vpack.c.b16 %v3365, %v3362
      %v3453 = vpack.c.b16 %v3366, %v3363
      %v3454 = vpack.c.b16 %v3367, %v3364
      %v3455 = vpack.c.b16 %v3371, %v3368
      %v3456 = vpack.c.b16 %v3372, %v3369
      %v3457 = vpack.c.b16 %v3373, %v3370
      %v3458 = vpack.c.b16 %v3377, %v3374
      %v3459 = vpack.c.b16 %v3378, %v3375
      %v3460 = vpack.c.b16 %v3379, %v3376
      %v3461 = vpack.c.b16 %v3383, %v3380
      %v3462 = vpack.c.b16 %v3384, %v3381
      %v3463 = vpack.c.b16 %v3385, %v3382
      %v3464 = vpack.c.b16 %v3389, %v3386
      %v3465 = vpack.c.b16 %v3390, %v3387
      %v3466 = vpack.c.b16 %v3391, %v3388
      %v3467 = vpack.c.b16 %v3395, %v3392
      %v3468 = vpack.c.b16 %v3396, %v3393
      %v3469 = vpack.c.b16 %v3397, %v3394
      %v3470 = vpack.c.b16 %v3401, %v3398
      %v3471 = vpack.c.b16 %v3402, %v3399
      %v3472 = vpack.c.b16 %v3403, %v3400
      %v3473 = vpack.c.b16 %v3407, %v3404
      %v3474 = vpack.c.b16 %v3408, %v3405
      %v3475 = vpack.c.b16 %v3409, %v3406
      %v3476 = vpack.c.b16 %v3413, %v3410
      %v3477 = vpack.c.b16 %v3414, %v3411
      %v3478 = vpack.c.b16 %v3415, %v3412
      %v3479 = vpack.c.b16 %v3419, %v3416
      %v3480 = vpack.c.b16 %v3420, %v3417
      %v3481 = vpack.c.b16 %v3421, %v3418
      %v3482 = vpack.c.b16 %v3425, %v3422
      %v3483 = vpack.c.b16 %v3426, %v3423
      %v3484 = vpack.c.b16 %v3427, %v3424
      %v3485 = vpack.c.b16 %v3431, %v3428
      %v3486 = vpack.c.b16 %v3432, %v3429
      %v3487 = vpack.c.b16 %v3433, %v3430
      %v3488 = vpack.c.b16 %v3437, %v3434
      %v3489 = vpack.c.b16 %v3438, %v3435
      %v3490 = vpack.c.b16 %v3439, %v3436
      %v3491 = vpack.c.b16 %v3443, %v3440
      %v3492 = vpack.c.b16 %v3444, %v3441
      %v3493 = vpack.c.b16 %v3445, %v3442
      %v3590 = vunpack.c.l.b16 %v1571
      %v3591 = vunpack.c.l.b16 %v1572
      %v3592 = vunpack.c.l.b16 %v1573
      %v3593 = vunpack.c.l.b16 %v1574
      %v3594 = vunpack.c.l.b16 %v1575
      %v3595 = vunpack.c.l.b16 %v1576
      %v3596 = vunpack.c.l.b16 %v1577
      %v3597 = vunpack.c.l.b16 %v1578
      %v3598 = vunpack.c.l.b16 %v1579
      %v3599 = vunpack.c.l.b16 %v1580
      %v3600 = vunpack.c.l.b16 %v1581
      %v3601 = vunpack.c.l.b16 %v1582
      %v3602 = vunpack.c.l.b16 %v1583
      %v3603 = vunpack.c.l.b16 %v1584
      %v3604 = vunpack.c.l.b16 %v1585
      %v3605 = vunpack.c.l.b16 %v1586
      %v3606 = vunpack.c.l.b16 %v1587
      %v3607 = vunpack.c.l.b16 %v1588
      %v3608 = vunpack.c.l.b16 %v1589
      %v3609 = vunpack.c.l.b16 %v1590
      %v3610 = vunpack.c.l.b16 %v1591
      %v3611 = vunpack.c.l.b16 %v1592
      %v3612 = vunpack.c.l.b16 %v1593
      %v3613 = vunpack.c.l.b16 %v1594
      %v3614 = vunpack.c.l.b16 %v1595
      %v3615 = vunpack.c.l.b16 %v1596
      %v3616 = vunpack.c.l.b16 %v1597
      %v3617 = vunpack.c.l.b16 %v1598
      %v3618 = vunpack.c.l.b16 %v1599
      %v3619 = vunpack.c.l.b16 %v1600
      %v3620 = vunpack.c.l.b16 %v1601
      %v3621 = vunpack.c.l.b16 %v1602
      %v3622 = vunpack.c.l.b16 %v1603
      %v3623 = vunpack.c.l.b16 %v1604
      %v3624 = vunpack.c.l.b16 %v1605
      %v3625 = vunpack.c.l.b16 %v1606
      %v3626 = vunpack.c.l.b16 %v1607
      %v3627 = vunpack.c.l.b16 %v1608
      %v3628 = vunpack.c.l.b16 %v1609
      %v3629 = vunpack.c.l.b16 %v1610
      %v3630 = vunpack.c.l.b16 %v1611
      %v3631 = vunpack.c.l.b16 %v1612
      %v3632 = vunpack.c.l.b16 %v1613
      %v3633 = vunpack.c.l.b16 %v1614
      %v3634 = vunpack.c.l.b16 %v1615
      %v3635 = vunpack.c.l.b16 %v1616
      %v3636 = vunpack.c.l.b16 %v1617
      %v3637 = vunpack.c.l.b16 %v1618
      %v3638 = vpack.c.b16 %v3591, %v3590
      %v3639 = vpack.c.b16 %v3593, %v3592
      %v3640 = vpack.c.b16 %v3595, %v3594
      %v3641 = vpack.c.b16 %v3597, %v3596
      %v3642 = vpack.c.b16 %v3599, %v3598
      %v3643 = vpack.c.b16 %v3601, %v3600
      %v3644 = vpack.c.b16 %v3603, %v3602
      %v3645 = vpack.c.b16 %v3605, %v3604
      %v3646 = vpack.c.b16 %v3607, %v3606
      %v3647 = vpack.c.b16 %v3609, %v3608
      %v3648 = vpack.c.b16 %v3611, %v3610
      %v3649 = vpack.c.b16 %v3613, %v3612
      %v3650 = vpack.c.b16 %v3615, %v3614
      %v3651 = vpack.c.b16 %v3617, %v3616
      %v3652 = vpack.c.b16 %v3619, %v3618
      %v3653 = vpack.c.b16 %v3621, %v3620
      %v3654 = vpack.c.b16 %v3623, %v3622
      %v3655 = vpack.c.b16 %v3625, %v3624
      %v3656 = vpack.c.b16 %v3627, %v3626
      %v3657 = vpack.c.b16 %v3629, %v3628
      %v3658 = vpack.c.b16 %v3631, %v3630
      %v3659 = vpack.c.b16 %v3633, %v3632
      %v3660 = vpack.c.b16 %v3635, %v3634
      %v3661 = vpack.c.b16 %v3637, %v3636
      %3686 = vmatprep.subr.bf16.mxu0 0
      %3687 = vmatpush1.bf16.msra.mxu0 %v3645
      %3688 = vmatprep.subr.bf16.mxu0 0
      %3689 = vmatpush1.bf16.msra.mxu0 %v3644
      %3690 = vmatprep.subr.bf16.mxu0 0
      %3691 = vmatpush1.bf16.msra.mxu0 %v3643
      %3692 = vmatprep.subr.bf16.mxu0 0
      %3693 = vmatpush1.bf16.msra.mxu0 %v3642
      %3694 = vmatprep.subr.bf16.mxu0 0
      %3695 = vmatpush1.bf16.msra.mxu0 %v3641
      %3696 = vmatprep.subr.bf16.mxu0 0
      %3697 = vmatpush1.bf16.msra.mxu0 %v3640
      %3698 = vmatprep.subr.bf16.mxu0 0
      %3699 = vmatpush1.bf16.msra.mxu0 %v3639
      %3700 = vmatprep.subr.bf16.mxu0 0
      %3701 = vmatpush1.bf16.msra.mxu0 %v3638
      %3702 = vmatprep.subr.bf16.mxu0 0
      %3703 = vmatpush2.bf16.msra.mxu0 %v3653
      %3704 = vmatprep.subr.bf16.mxu0 0
      %3705 = vmatpush2.bf16.msra.mxu0 %v3652
      %3706 = vmatprep.subr.bf16.mxu0 0
      %3707 = vmatpush2.bf16.msra.mxu0 %v3651
      %3708 = vmatprep.subr.bf16.mxu0 0
      %3709 = vmatpush2.bf16.msra.mxu0 %v3650
      %3710 = vmatprep.subr.bf16.mxu0 0
      %3711 = vmatpush2.bf16.msra.mxu0 %v3649
      %3712 = vmatprep.subr.bf16.mxu0 0
      %3713 = vmatpush2.bf16.msra.mxu0 %v3648
      %3714 = vmatprep.subr.bf16.mxu0 0
      %3715 = vmatpush2.bf16.msra.mxu0 %v3647
      %3716 = vmatprep.subr.bf16.mxu0 0
      %3717 = vmatpush2.bf16.msra.mxu0 %v3646
      %3718 = vmatprep.mubr.bf16.mxu0 %v3447
      %3719 = vmatmul.mubr.bf16.gmra.mxu0 %v3446
      %v3720 = vpop.f32.mrf.mxu0
      %v3721 = vadd.f32 %v3160, %v3720
      %v3722 = vpop.f32.mrf.mxu0
      %v3723 = vpop.f32.mrf.mxu0
      %v3724 = vadd.f32 %v3163, %v3723
      %v3725 = vpop.f32.mrf.mxu0
      %3726 = vmatprep.mubr.bf16.mxu0 %v3450
      %3727 = vmatmul.mubr.bf16.gmra.mxu0 %v3449
      %v3728 = vpop.f32.mrf.mxu0
      %v3729 = vadd.f32 %v3168, %v3728
      %v3730 = vpop.f32.mrf.mxu0
      %v3731 = vpop.f32.mrf.mxu0
      %v3732 = vadd.f32 %v3171, %v3731
      %v3733 = vpop.f32.mrf.mxu0
      %3734 = vmatprep.mubr.bf16.mxu0 %v3453
      %3735 = vmatmul.mubr.bf16.gmra.mxu0 %v3452
      %v3736 = vpop.f32.mrf.mxu0
      %v3737 = vadd.f32 %v3176, %v3736
      %v3738 = vpop.f32.mrf.mxu0
      %v3739 = vpop.f32.mrf.mxu0
      %v3740 = vadd.f32 %v3179, %v3739
      %v3741 = vpop.f32.mrf.mxu0
      %3742 = vmatprep.mubr.bf16.mxu0 %v3456
      %3743 = vmatmul.mubr.bf16.gmra.mxu0 %v3455
      %v3744 = vpop.f32.mrf.mxu0
      %v3745 = vadd.f32 %v3184, %v3744
      %v3746 = vpop.f32.mrf.mxu0
      %v3747 = vpop.f32.mrf.mxu0
      %v3748 = vadd.f32 %v3187, %v3747
      %v3749 = vpop.f32.mrf.mxu0
      %3750 = vmatprep.mubr.bf16.mxu0 %v3459
      %3751 = vmatmul.mubr.bf16.gmra.mxu0 %v3458
      %v3752 = vpop.f32.mrf.mxu0
      %v3753 = vadd.f32 %v3192, %v3752
      %v3754 = vpop.f32.mrf.mxu0
      %v3755 = vpop.f32.mrf.mxu0
      %v3756 = vadd.f32 %v3195, %v3755
      %v3757 = vpop.f32.mrf.mxu0
      %3758 = vmatprep.mubr.bf16.mxu0 %v3462
      %3759 = vmatmul.mubr.bf16.gmra.mxu0 %v3461
      %v3760 = vpop.f32.mrf.mxu0
      %v3761 = vadd.f32 %v3200, %v3760
      %v3762 = vpop.f32.mrf.mxu0
      %v3763 = vpop.f32.mrf.mxu0
      %v3764 = vadd.f32 %v3203, %v3763
      %v3765 = vpop.f32.mrf.mxu0
      %3766 = vmatprep.mubr.bf16.mxu0 %v3465
      %3767 = vmatmul.mubr.bf16.gmra.mxu0 %v3464
      %v3768 = vpop.f32.mrf.mxu0
      %v3769 = vadd.f32 %v3208, %v3768
      %v3770 = vpop.f32.mrf.mxu0
      %v3771 = vpop.f32.mrf.mxu0
      %v3772 = vadd.f32 %v3211, %v3771
      %v3773 = vpop.f32.mrf.mxu0
      %3774 = vmatprep.mubr.bf16.mxu0 %v3468
      %3775 = vmatmul.mubr.bf16.gmra.mxu0 %v3467
      %v3776 = vpop.f32.mrf.mxu0
      %v3777 = vadd.f32 %v3216, %v3776
      %v3778 = vpop.f32.mrf.mxu0
      %v3779 = vpop.f32.mrf.mxu0
      %v3780 = vadd.f32 %v3219, %v3779
      %v3781 = vpop.f32.mrf.mxu0
      %3782 = vmatprep.mubr.bf16.mxu0 %v3471
      %3783 = vmatmul.mubr.bf16.gmra.mxu0 %v3470
      %v3784 = vpop.f32.mrf.mxu0
      %v3785 = vadd.f32 %v3224, %v3784
      %v3786 = vpop.f32.mrf.mxu0
      %v3787 = vpop.f32.mrf.mxu0
      %v3788 = vadd.f32 %v3227, %v3787
      %v3789 = vpop.f32.mrf.mxu0
      %3790 = vmatprep.mubr.bf16.mxu0 %v3474
      %3791 = vmatmul.mubr.bf16.gmra.mxu0 %v3473
      %v3792 = vpop.f32.mrf.mxu0
      %v3793 = vadd.f32 %v3232, %v3792
      %v3794 = vpop.f32.mrf.mxu0
      %v3795 = vpop.f32.mrf.mxu0
      %v3796 = vadd.f32 %v3235, %v3795
      %v3797 = vpop.f32.mrf.mxu0
      %3798 = vmatprep.mubr.bf16.mxu0 %v3477
      %3799 = vmatmul.mubr.bf16.gmra.mxu0 %v3476
      %v3800 = vpop.f32.mrf.mxu0
      %v3801 = vadd.f32 %v3240, %v3800
      %v3802 = vpop.f32.mrf.mxu0
      %v3803 = vpop.f32.mrf.mxu0
      %v3804 = vadd.f32 %v3243, %v3803
      %v3805 = vpop.f32.mrf.mxu0
      %3806 = vmatprep.mubr.bf16.mxu0 %v3480
      %3807 = vmatmul.mubr.bf16.gmra.mxu0 %v3479
      %v3808 = vpop.f32.mrf.mxu0
      %v3809 = vadd.f32 %v3248, %v3808
      %v3810 = vpop.f32.mrf.mxu0
      %v3811 = vpop.f32.mrf.mxu0
      %v3812 = vadd.f32 %v3251, %v3811
      %v3813 = vpop.f32.mrf.mxu0
      %3814 = vmatprep.mubr.bf16.mxu0 %v3483
      %3815 = vmatmul.mubr.bf16.gmra.mxu0 %v3482
      %v3816 = vpop.f32.mrf.mxu0
      %v3817 = vadd.f32 %v3256, %v3816
      %v3818 = vpop.f32.mrf.mxu0
      %v3819 = vpop.f32.mrf.mxu0
      %v3820 = vadd.f32 %v3259, %v3819
      %v3821 = vpop.f32.mrf.mxu0
      %3822 = vmatprep.mubr.bf16.mxu0 %v3486
      %3823 = vmatmul.mubr.bf16.gmra.mxu0 %v3485
      %v3824 = vpop.f32.mrf.mxu0
      %v3825 = vadd.f32 %v3264, %v3824
      %v3826 = vpop.f32.mrf.mxu0
      %v3827 = vpop.f32.mrf.mxu0
      %v3828 = vadd.f32 %v3267, %v3827
      %v3829 = vpop.f32.mrf.mxu0
      %3830 = vmatprep.mubr.bf16.mxu0 %v3489
      %3831 = vmatmul.mubr.bf16.gmra.mxu0 %v3488
      %v3832 = vpop.f32.mrf.mxu0
      %v3833 = vadd.f32 %v3272, %v3832
      %v3834 = vpop.f32.mrf.mxu0
      %v3835 = vpop.f32.mrf.mxu0
      %v3836 = vadd.f32 %v3275, %v3835
      %v3837 = vpop.f32.mrf.mxu0
      %3838 = vmatprep.mubr.bf16.mxu0 %v3492
      %3839 = vmatmul.mubr.bf16.gmra.mxu0 %v3491
      %v3840 = vpop.f32.mrf.mxu0
      %v3841 = vadd.f32 %v3280, %v3840
      %v3842 = vpop.f32.mrf.mxu0
      %v3843 = vpop.f32.mrf.mxu0
      %v3844 = vadd.f32 %v3283, %v3843
      %v3845 = vpop.f32.mrf.mxu0
      %3846 = vdwg.mxu0
      %3847 = vmatprep.subr.bf16.mxu0 0
      %3848 = vmatpush1.bf16.msra.mxu0 %v3661
      %3849 = vmatprep.subr.bf16.mxu0 0
      %3850 = vmatpush1.bf16.msra.mxu0 %v3660
      %3851 = vmatprep.subr.bf16.mxu0 0
      %3852 = vmatpush1.bf16.msra.mxu0 %v3659
      %3853 = vmatprep.subr.bf16.mxu0 0
      %3854 = vmatpush1.bf16.msra.mxu0 %v3658
      %3855 = vmatprep.subr.bf16.mxu0 0
      %3856 = vmatpush1.bf16.msra.mxu0 %v3657
      %3857 = vmatprep.subr.bf16.mxu0 0
      %3858 = vmatpush1.bf16.msra.mxu0 %v3656
      %3859 = vmatprep.subr.bf16.mxu0 0
      %3860 = vmatpush1.bf16.msra.mxu0 %v3655
      %3861 = vmatprep.subr.bf16.mxu0 0
      %3862 = vmatpush1.bf16.msra.mxu0 %v3654
      %3863 = vmatprep.subr.bf16.mxu0 0
      %3864 = vmatpush2.bf16.msra.mxu0 0
      %3865 = vmatprep.subr.bf16.mxu0 0
      %3866 = vmatpush2.bf16.msra.mxu0 0
      %3867 = vmatprep.subr.bf16.mxu0 0
      %3868 = vmatpush2.bf16.msra.mxu0 0
      %3869 = vmatprep.subr.bf16.mxu0 0
      %3870 = vmatpush2.bf16.msra.mxu0 0
      %3871 = vmatprep.subr.bf16.mxu0 0
      %3872 = vmatpush2.bf16.msra.mxu0 0
      %3873 = vmatprep.subr.bf16.mxu0 0
      %3874 = vmatpush2.bf16.msra.mxu0 0
      %3875 = vmatprep.subr.bf16.mxu0 0
      %3876 = vmatpush2.bf16.msra.mxu0 0
      %3877 = vmatprep.subr.bf16.mxu0 0
      %3878 = vmatpush2.bf16.msra.mxu0 0
      %3879 = vmatprep.mubr.bf16.mxu0 0
      %3880 = vmatmul.mubr.bf16.gmra.mxu0 %v3448
      %v3881 = vpop.f32.mrf.mxu0
      %v3882 = vadd.f32 %v3721, %v3881
      %v3883 = vpop.f32.mrf.mxu0
      %v3884 = vpop.f32.mrf.mxu0
      %v3885 = vadd.f32 %v3724, %v3884
      %v3886 = vpop.f32.mrf.mxu0
      %3887 = vmatprep.mubr.bf16.mxu0 0
      %3888 = vmatmul.mubr.bf16.gmra.mxu0 %v3451
      %v3889 = vpop.f32.mrf.mxu0
      %v3890 = vadd.f32 %v3729, %v3889
      %v3891 = vpop.f32.mrf.mxu0
      %v3892 = vpop.f32.mrf.mxu0
      %v3893 = vadd.f32 %v3732, %v3892
      %v3894 = vpop.f32.mrf.mxu0
      %3895 = vmatprep.mubr.bf16.mxu0 0
      %3896 = vmatmul.mubr.bf16.gmra.mxu0 %v3454
      %v3897 = vpop.f32.mrf.mxu0
      %v3898 = vadd.f32 %v3737, %v3897
      %v3899 = vpop.f32.mrf.mxu0
      %v3900 = vpop.f32.mrf.mxu0
      %v3901 = vadd.f32 %v3740, %v3900
      %v3902 = vpop.f32.mrf.mxu0
      %3903 = vmatprep.mubr.bf16.mxu0 0
      %3904 = vmatmul.mubr.bf16.gmra.mxu0 %v3457
      %v3905 = vpop.f32.mrf.mxu0
      %v3906 = vadd.f32 %v3745, %v3905
      %v3907 = vpop.f32.mrf.mxu0
      %v3908 = vpop.f32.mrf.mxu0
      %v3909 = vadd.f32 %v3748, %v3908
      %v3910 = vpop.f32.mrf.mxu0
      %3911 = vmatprep.mubr.bf16.mxu0 0
      %3912 = vmatmul.mubr.bf16.gmra.mxu0 %v3460
      %v3913 = vpop.f32.mrf.mxu0
      %v3914 = vadd.f32 %v3753, %v3913
      %v3915 = vpop.f32.mrf.mxu0
      %v3916 = vpop.f32.mrf.mxu0
      %v3917 = vadd.f32 %v3756, %v3916
      %v3918 = vpop.f32.mrf.mxu0
      %3919 = vmatprep.mubr.bf16.mxu0 0
      %3920 = vmatmul.mubr.bf16.gmra.mxu0 %v3463
      %v3921 = vpop.f32.mrf.mxu0
      %v3922 = vadd.f32 %v3761, %v3921
      %v3923 = vpop.f32.mrf.mxu0
      %v3924 = vpop.f32.mrf.mxu0
      %v3925 = vadd.f32 %v3764, %v3924
      %v3926 = vpop.f32.mrf.mxu0
      %3927 = vmatprep.mubr.bf16.mxu0 0
      %3928 = vmatmul.mubr.bf16.gmra.mxu0 %v3466
      %v3929 = vpop.f32.mrf.mxu0
      %v3930 = vadd.f32 %v3769, %v3929
      %v3931 = vpop.f32.mrf.mxu0
      %v3932 = vpop.f32.mrf.mxu0
      %v3933 = vadd.f32 %v3772, %v3932
      %v3934 = vpop.f32.mrf.mxu0
      %3935 = vmatprep.mubr.bf16.mxu0 0
      %3936 = vmatmul.mubr.bf16.gmra.mxu0 %v3469
      %v3937 = vpop.f32.mrf.mxu0
      %v3938 = vadd.f32 %v3777, %v3937
      %v3939 = vpop.f32.mrf.mxu0
      %v3940 = vpop.f32.mrf.mxu0
      %v3941 = vadd.f32 %v3780, %v3940
      %v3942 = vpop.f32.mrf.mxu0
      %3943 = vmatprep.mubr.bf16.mxu0 0
      %3944 = vmatmul.mubr.bf16.gmra.mxu0 %v3472
      %v3945 = vpop.f32.mrf.mxu0
      %v3946 = vadd.f32 %v3785, %v3945
      %v3947 = vpop.f32.mrf.mxu0
      %v3948 = vpop.f32.mrf.mxu0
      %v3949 = vadd.f32 %v3788, %v3948
      %v3950 = vpop.f32.mrf.mxu0
      %3951 = vmatprep.mubr.bf16.mxu0 0
      %3952 = vmatmul.mubr.bf16.gmra.mxu0 %v3475
      %v3953 = vpop.f32.mrf.mxu0
      %v3954 = vadd.f32 %v3793, %v3953
      %v3955 = vpop.f32.mrf.mxu0
      %v3956 = vpop.f32.mrf.mxu0
      %v3957 = vadd.f32 %v3796, %v3956
      %v3958 = vpop.f32.mrf.mxu0
      %3959 = vmatprep.mubr.bf16.mxu0 0
      %3960 = vmatmul.mubr.bf16.gmra.mxu0 %v3478
      %v3961 = vpop.f32.mrf.mxu0
      %v3962 = vadd.f32 %v3801, %v3961
      %v3963 = vpop.f32.mrf.mxu0
      %v3964 = vpop.f32.mrf.mxu0
      %v3965 = vadd.f32 %v3804, %v3964
      %v3966 = vpop.f32.mrf.mxu0
      %3967 = vmatprep.mubr.bf16.mxu0 0
      %3968 = vmatmul.mubr.bf16.gmra.mxu0 %v3481
      %v3969 = vpop.f32.mrf.mxu0
      %v3970 = vadd.f32 %v3809, %v3969
      %v3971 = vpop.f32.mrf.mxu0
      %v3972 = vpop.f32.mrf.mxu0
      %v3973 = vadd.f32 %v3812, %v3972
      %v3974 = vpop.f32.mrf.mxu0
      %3975 = vmatprep.mubr.bf16.mxu0 0
      %3976 = vmatmul.mubr.bf16.gmra.mxu0 %v3484
      %v3977 = vpop.f32.mrf.mxu0
      %v3978 = vadd.f32 %v3817, %v3977
      %v3979 = vpop.f32.mrf.mxu0
      %v3980 = vpop.f32.mrf.mxu0
      %v3981 = vadd.f32 %v3820, %v3980
      %v3982 = vpop.f32.mrf.mxu0
      %3983 = vmatprep.mubr.bf16.mxu0 0
      %3984 = vmatmul.mubr.bf16.gmra.mxu0 %v3487
      %v3985 = vpop.f32.mrf.mxu0
      %v3986 = vadd.f32 %v3825, %v3985
      %v3987 = vpop.f32.mrf.mxu0
      %v3988 = vpop.f32.mrf.mxu0
      %v3989 = vadd.f32 %v3828, %v3988
      %v3990 = vpop.f32.mrf.mxu0
      %3991 = vmatprep.mubr.bf16.mxu0 0
      %3992 = vmatmul.mubr.bf16.gmra.mxu0 %v3490
      %v3993 = vpop.f32.mrf.mxu0
      %v3994 = vadd.f32 %v3833, %v3993
      %v3995 = vpop.f32.mrf.mxu0
      %v3996 = vpop.f32.mrf.mxu0
      %v3997 = vadd.f32 %v3836, %v3996
      %v3998 = vpop.f32.mrf.mxu0
      %3999 = vmatprep.mubr.bf16.mxu0 0
      %4000 = vmatmul.mubr.bf16.gmra.mxu0 %v3493
      %v4001 = vpop.f32.mrf.mxu0
      %v4002 = vadd.f32 %v3841, %v4001
      %v4003 = vpop.f32.mrf.mxu0
      %v4004 = vpop.f32.mrf.mxu0
      %v4005 = vadd.f32 %v3844, %v4004
      %v4006 = vpop.f32.mrf.mxu0
      %4007 = vdwg.mxu0
      %s4008 = scalar_lea.vmem [#allocation2], 24
      %v4009 = vld [vmem:[%s4008] sm:$0xf]
      %v4010 = vld [vmem:[%s4008 + $0x4] sm:$0xf]
      %v4011 = vld [vmem:[%s4008 + $0xc] sm:$0xf]
      %v4012 = vld [vmem:[%s4008 + $0x10] sm:$0xf]
      %v4013 = vld [vmem:[%s4008 + $0x18] sm:$0xf]
      %v4014 = vld [vmem:[%s4008 + $0x1c] sm:$0xf]
      %v4015 = vld [vmem:[%s4008 + $0x24] sm:$0xf]
      %v4016 = vld [vmem:[%s4008 + $0x28] sm:$0xf]
      %v4017 = vld [vmem:[%s4008 + $0x30] sm:$0xf]
      %v4018 = vld [vmem:[%s4008 + $0x34] sm:$0xf]
      %v4019 = vld [vmem:[%s4008 + $0x3c] sm:$0xf]
      %v4020 = vld [vmem:[%s4008 + $0x40] sm:$0xf]
      %v4021 = vld [vmem:[%s4008 + $0x48] sm:$0xf]
      %v4022 = vld [vmem:[%s4008 + $0x4c] sm:$0xf]
      %v4023 = vld [vmem:[%s4008 + $0x54] sm:$0xf]
      %v4024 = vld [vmem:[%s4008 + $0x58] sm:$0xf]
      %v4025 = vld [vmem:[%s4008 + $0x60] sm:$0xf]
      %v4026 = vld [vmem:[%s4008 + $0x64] sm:$0xf]
      %v4027 = vld [vmem:[%s4008 + $0x6c] sm:$0xf]
      %v4028 = vld [vmem:[%s4008 + $0x70] sm:$0xf]
      %v4029 = vld [vmem:[%s4008 + $0x78] sm:$0xf]
      %v4030 = vld [vmem:[%s4008 + $0x7c] sm:$0xf]
      %v4031 = vld [vmem:[%s4008 + $0x84] sm:$0xf]
      %v4032 = vld [vmem:[%s4008 + $0x88] sm:$0xf]
      %v4033 = vld [vmem:[%s4008 + $0x90] sm:$0xf]
      %v4034 = vld [vmem:[%s4008 + $0x94] sm:$0xf]
      %v4035 = vld [vmem:[%s4008 + $0x9c] sm:$0xf]
      %v4036 = vld [vmem:[%s4008 + $0xa0] sm:$0xf]
      %v4037 = vld [vmem:[%s4008 + $0xa8] sm:$0xf]
      %v4038 = vld [vmem:[%s4008 + $0xac] sm:$0xf]
      %v4039 = vld [vmem:[%s4008 + $0xb4] sm:$0xf]
      %v4040 = vld [vmem:[%s4008 + $0xb8] sm:$0xf]
      %4041 = vst [vmem:[#allocation3] sm:$0xf] %v4009
      %4042 = vst [vmem:[#allocation3 + $0xc] sm:$0xf] %v4010
      %4043 = vst [vmem:[#allocation3 + $0x18] sm:$0xf] %v4011
      %4044 = vst [vmem:[#allocation3 + $0x24] sm:$0xf] %v4012
      %4045 = vst [vmem:[#allocation3 + $0x30] sm:$0xf] %v4013
      %4046 = vst [vmem:[#allocation3 + $0x3c] sm:$0xf] %v4014
      %4047 = vst [vmem:[#allocation3 + $0x48] sm:$0xf] %v4015
      %4048 = vst [vmem:[#allocation3 + $0x54] sm:$0xf] %v4016
      %4049 = vst [vmem:[#allocation3 + $0x60] sm:$0xf] %v4017
      %4050 = vst [vmem:[#allocation3 + $0x6c] sm:$0xf] %v4018
      %4051 = vst [vmem:[#allocation3 + $0x78] sm:$0xf] %v4019
      %4052 = vst [vmem:[#allocation3 + $0x84] sm:$0xf] %v4020
      %4053 = vst [vmem:[#allocation3 + $0x90] sm:$0xf] %v4021
      %4054 = vst [vmem:[#allocation3 + $0x9c] sm:$0xf] %v4022
      %4055 = vst [vmem:[#allocation3 + $0xa8] sm:$0xf] %v4023
      %4056 = vst [vmem:[#allocation3 + $0xb4] sm:$0xf] %v4024
      %4057 = vst [vmem:[#allocation3 + $0xc0] sm:$0xf] %v4025
      %4058 = vst [vmem:[#allocation3 + $0xcc] sm:$0xf] %v4026
      %4059 = vst [vmem:[#allocation3 + $0xd8] sm:$0xf] %v4027
      %4060 = vst [vmem:[#allocation3 + $0xe4] sm:$0xf] %v4028
      %4061 = vst [vmem:[#allocation3 + $0xf0] sm:$0xf] %v4029
      %4062 = vst [vmem:[#allocation3 + $0xfc] sm:$0xf] %v4030
      %4063 = vst [vmem:[#allocation3 + $0x108] sm:$0xf] %v4031
      %4064 = vst [vmem:[#allocation3 + $0x114] sm:$0xf] %v4032
      %4065 = vst [vmem:[#allocation3 + $0x120] sm:$0xf] %v4033
      %4066 = vst [vmem:[#allocation3 + $0x12c] sm:$0xf] %v4034
      %4067 = vst [vmem:[#allocation3 + $0x138] sm:$0xf] %v4035
      %4068 = vst [vmem:[#allocation3 + $0x144] sm:$0xf] %v4036
      %4069 = vst [vmem:[#allocation3 + $0x150] sm:$0xf] %v4037
      %4070 = vst [vmem:[#allocation3 + $0x15c] sm:$0xf] %v4038
      %4071 = vst [vmem:[#allocation3 + $0x168] sm:$0xf] %v4039
      %4072 = vst [vmem:[#allocation3 + $0x174] sm:$0xf] %v4040
      %v4073 = vld [vmem:[%s4008] sm:$0xf]
      %v4074 = vld [vmem:[%s4008 + $0x4] sm:$0xf]
      %v4075 = vld [vmem:[%s4008 + $0x8] sm:$0x1]
      %v4076 = vld [vmem:[%s4008 + $0xc] sm:$0xf]
      %v4077 = vld [vmem:[%s4008 + $0x10] sm:$0xf]
      %v4078 = vld [vmem:[%s4008 + $0x14] sm:$0x1]
      %v4079 = vld [vmem:[%s4008 + $0x18] sm:$0xf]
      %v4080 = vld [vmem:[%s4008 + $0x1c] sm:$0xf]
      %v4081 = vld [vmem:[%s4008 + $0x20] sm:$0x1]
      %v4082 = vld [vmem:[%s4008 + $0x24] sm:$0xf]
      %v4083 = vld [vmem:[%s4008 + $0x28] sm:$0xf]
      %v4084 = vld [vmem:[%s4008 + $0x2c] sm:$0x1]
      %v4085 = vld [vmem:[%s4008 + $0x30] sm:$0xf]
      %v4086 = vld [vmem:[%s4008 + $0x34] sm:$0xf]
      %v4087 = vld [vmem:[%s4008 + $0x38] sm:$0x1]
      %v4088 = vld [vmem:[%s4008 + $0x3c] sm:$0xf]
      %v4089 = vld [vmem:[%s4008 + $0x40] sm:$0xf]
      %v4090 = vld [vmem:[%s4008 + $0x44] sm:$0x1]
      %v4091 = vld [vmem:[%s4008 + $0x48] sm:$0xf]
      %v4092 = vld [vmem:[%s4008 + $0x4c] sm:$0xf]
      %v4093 = vld [vmem:[%s4008 + $0x50] sm:$0x1]
      %v4094 = vld [vmem:[%s4008 + $0x54] sm:$0xf]
      %v4095 = vld [vmem:[%s4008 + $0x58] sm:$0xf]
      %v4096 = vld [vmem:[%s4008 + $0x5c] sm:$0x1]
      %v4097 = vld [vmem:[%s4008 + $0x60] sm:$0xf]
      %v4098 = vld [vmem:[%s4008 + $0x64] sm:$0xf]
      %v4099 = vld [vmem:[%s4008 + $0x68] sm:$0x1]
      %v4100 = vld [vmem:[%s4008 + $0x6c] sm:$0xf]
      %v4101 = vld [vmem:[%s4008 + $0x70] sm:$0xf]
      %v4102 = vld [vmem:[%s4008 + $0x74] sm:$0x1]
      %v4103 = vld [vmem:[%s4008 + $0x78] sm:$0xf]
      %v4104 = vld [vmem:[%s4008 + $0x7c] sm:$0xf]
      %v4105 = vld [vmem:[%s4008 + $0x80] sm:$0x1]
      %v4106 = vld [vmem:[%s4008 + $0x84] sm:$0xf]
      %v4107 = vld [vmem:[%s4008 + $0x88] sm:$0xf]
      %v4108 = vld [vmem:[%s4008 + $0x8c] sm:$0x1]
      %v4109 = vld [vmem:[%s4008 + $0x90] sm:$0xf]
      %v4110 = vld [vmem:[%s4008 + $0x94] sm:$0xf]
      %v4111 = vld [vmem:[%s4008 + $0x98] sm:$0x1]
      %v4112 = vld [vmem:[%s4008 + $0x9c] sm:$0xf]
      %v4113 = vld [vmem:[%s4008 + $0xa0] sm:$0xf]
      %v4114 = vld [vmem:[%s4008 + $0xa4] sm:$0x1]
      %v4115 = vld [vmem:[%s4008 + $0xa8] sm:$0xf]
      %v4116 = vld [vmem:[%s4008 + $0xac] sm:$0xf]
      %v4117 = vld [vmem:[%s4008 + $0xb0] sm:$0x1]
      %v4118 = vld [vmem:[%s4008 + $0xb4] sm:$0xf]
      %v4119 = vld [vmem:[%s4008 + $0xb8] sm:$0xf]
      %v4120 = vld [vmem:[%s4008 + $0xbc] sm:$0x1]
      %v4122 = vshrl.u32 %v4073, 16
      %v4124 = vrot.slane %v4122, 4
      %v4125 = vshll.u32 %v4073, 16
      %v4127 = vrot.slane %v4125, 5
      %v4128 = vor.u32 %v4124, %v4127
      %v4129 = vrot.slane %v4128, 4
      %v4131 = vshll.u32 %v4074, 16
      %v4133 = vrot.slane %v4131, 5
      %v4134 = vsel %vm783, %v4129, %v4133
      %v4135 = vshrl.u32 %v4074, 16
      %v4137 = vrot.slane %v4135, 4
      %v4138 = vor.u32 %v4137, %v4133
      %v4139 = vrot.slane %v4138, 4
      %v4141 = vshll.u32 %v4075, 16
      %v4143 = vrot.slane %v4141, 5
      %v4144 = vsel %vm783, %v4139, %v4143
      %v4146 = vshrl.u32 %v4076, 16
      %v4148 = vrot.slane %v4146, 4
      %v4149 = vshll.u32 %v4076, 16
      %v4151 = vrot.slane %v4149, 5
      %v4152 = vor.u32 %v4148, %v4151
      %v4153 = vrot.slane %v4152, 4
      %v4155 = vshll.u32 %v4077, 16
      %v4157 = vrot.slane %v4155, 5
      %v4158 = vsel %vm783, %v4153, %v4157
      %v4159 = vshrl.u32 %v4077, 16
      %v4161 = vrot.slane %v4159, 4
      %v4162 = vor.u32 %v4161, %v4157
      %v4163 = vrot.slane %v4162, 4
      %v4165 = vshll.u32 %v4078, 16
      %v4167 = vrot.slane %v4165, 5
      %v4168 = vsel %vm783, %v4163, %v4167
      %v4170 = vshrl.u32 %v4079, 16
      %v4172 = vrot.slane %v4170, 4
      %v4173 = vshll.u32 %v4079, 16
      %v4175 = vrot.slane %v4173, 5
      %v4176 = vor.u32 %v4172, %v4175
      %v4177 = vrot.slane %v4176, 4
      %v4179 = vshll.u32 %v4080, 16
      %v4181 = vrot.slane %v4179, 5
      %v4182 = vsel %vm783, %v4177, %v4181
      %v4183 = vshrl.u32 %v4080, 16
      %v4185 = vrot.slane %v4183, 4
      %v4186 = vor.u32 %v4185, %v4181
      %v4187 = vrot.slane %v4186, 4
      %v4189 = vshll.u32 %v4081, 16
      %v4191 = vrot.slane %v4189, 5
      %v4192 = vsel %vm783, %v4187, %v4191
      %v4194 = vshrl.u32 %v4082, 16
      %v4196 = vrot.slane %v4194, 4
      %v4197 = vshll.u32 %v4082, 16
      %v4199 = vrot.slane %v4197, 5
      %v4200 = vor.u32 %v4196, %v4199
      %v4201 = vrot.slane %v4200, 4
      %v4203 = vshll.u32 %v4083, 16
      %v4205 = vrot.slane %v4203, 5
      %v4206 = vsel %vm783, %v4201, %v4205
      %v4207 = vshrl.u32 %v4083, 16
      %v4209 = vrot.slane %v4207, 4
      %v4210 = vor.u32 %v4209, %v4205
      %v4211 = vrot.slane %v4210, 4
      %v4213 = vshll.u32 %v4084, 16
      %v4215 = vrot.slane %v4213, 5
      %v4216 = vsel %vm783, %v4211, %v4215
      %v4218 = vshrl.u32 %v4085, 16
      %v4220 = vrot.slane %v4218, 4
      %v4221 = vshll.u32 %v4085, 16
      %v4223 = vrot.slane %v4221, 5
      %v4224 = vor.u32 %v4220, %v4223
      %v4225 = vrot.slane %v4224, 4
      %v4227 = vshll.u32 %v4086, 16
      %v4229 = vrot.slane %v4227, 5
      %v4230 = vsel %vm783, %v4225, %v4229
      %v4231 = vshrl.u32 %v4086, 16
      %v4233 = vrot.slane %v4231, 4
      %v4234 = vor.u32 %v4233, %v4229
      %v4235 = vrot.slane %v4234, 4
      %v4237 = vshll.u32 %v4087, 16
      %v4239 = vrot.slane %v4237, 5
      %v4240 = vsel %vm783, %v4235, %v4239
      %v4242 = vshrl.u32 %v4088, 16
      %v4244 = vrot.slane %v4242, 4
      %v4245 = vshll.u32 %v4088, 16
      %v4247 = vrot.slane %v4245, 5
      %v4248 = vor.u32 %v4244, %v4247
      %v4249 = vrot.slane %v4248, 4
      %v4251 = vshll.u32 %v4089, 16
      %v4253 = vrot.slane %v4251, 5
      %v4254 = vsel %vm783, %v4249, %v4253
      %v4255 = vshrl.u32 %v4089, 16
      %v4257 = vrot.slane %v4255, 4
      %v4258 = vor.u32 %v4257, %v4253
      %v4259 = vrot.slane %v4258, 4
      %v4261 = vshll.u32 %v4090, 16
      %v4263 = vrot.slane %v4261, 5
      %v4264 = vsel %vm783, %v4259, %v4263
      %v4266 = vshrl.u32 %v4091, 16
      %v4268 = vrot.slane %v4266, 4
      %v4269 = vshll.u32 %v4091, 16
      %v4271 = vrot.slane %v4269, 5
      %v4272 = vor.u32 %v4268, %v4271
      %v4273 = vrot.slane %v4272, 4
      %v4275 = vshll.u32 %v4092, 16
      %v4277 = vrot.slane %v4275, 5
      %v4278 = vsel %vm783, %v4273, %v4277
      %v4279 = vshrl.u32 %v4092, 16
      %v4281 = vrot.slane %v4279, 4
      %v4282 = vor.u32 %v4281, %v4277
      %v4283 = vrot.slane %v4282, 4
      %v4285 = vshll.u32 %v4093, 16
      %v4287 = vrot.slane %v4285, 5
      %v4288 = vsel %vm783, %v4283, %v4287
      %v4290 = vshrl.u32 %v4094, 16
      %v4292 = vrot.slane %v4290, 4
      %v4293 = vshll.u32 %v4094, 16
      %v4295 = vrot.slane %v4293, 5
      %v4296 = vor.u32 %v4292, %v4295
      %v4297 = vrot.slane %v4296, 4
      %v4299 = vshll.u32 %v4095, 16
      %v4301 = vrot.slane %v4299, 5
      %v4302 = vsel %vm783, %v4297, %v4301
      %v4303 = vshrl.u32 %v4095, 16
      %v4305 = vrot.slane %v4303, 4
      %v4306 = vor.u32 %v4305, %v4301
      %v4307 = vrot.slane %v4306, 4
      %v4309 = vshll.u32 %v4096, 16
      %v4311 = vrot.slane %v4309, 5
      %v4312 = vsel %vm783, %v4307, %v4311
      %v4314 = vshrl.u32 %v4097, 16
      %v4316 = vrot.slane %v4314, 4
      %v4317 = vshll.u32 %v4097, 16
      %v4319 = vrot.slane %v4317, 5
      %v4320 = vor.u32 %v4316, %v4319
      %v4321 = vrot.slane %v4320, 4
      %v4323 = vshll.u32 %v4098, 16
      %v4325 = vrot.slane %v4323, 5
      %v4326 = vsel %vm783, %v4321, %v4325
      %v4327 = vshrl.u32 %v4098, 16
      %v4329 = vrot.slane %v4327, 4
      %v4330 = vor.u32 %v4329, %v4325
      %v4331 = vrot.slane %v4330, 4
      %v4333 = vshll.u32 %v4099, 16
      %v4335 = vrot.slane %v4333, 5
      %v4336 = vsel %vm783, %v4331, %v4335
      %v4338 = vshrl.u32 %v4100, 16
      %v4340 = vrot.slane %v4338, 4
      %v4341 = vshll.u32 %v4100, 16
      %v4343 = vrot.slane %v4341, 5
      %v4344 = vor.u32 %v4340, %v4343
      %v4345 = vrot.slane %v4344, 4
      %v4347 = vshll.u32 %v4101, 16
      %v4349 = vrot.slane %v4347, 5
      %v4350 = vsel %vm783, %v4345, %v4349
      %v4351 = vshrl.u32 %v4101, 16
      %v4353 = vrot.slane %v4351, 4
      %v4354 = vor.u32 %v4353, %v4349
      %v4355 = vrot.slane %v4354, 4
      %v4357 = vshll.u32 %v4102, 16
      %v4359 = vrot.slane %v4357, 5
      %v4360 = vsel %vm783, %v4355, %v4359
      %v4362 = vshrl.u32 %v4103, 16
      %v4364 = vrot.slane %v4362, 4
      %v4365 = vshll.u32 %v4103, 16
      %v4367 = vrot.slane %v4365, 5
      %v4368 = vor.u32 %v4364, %v4367
      %v4369 = vrot.slane %v4368, 4
      %v4371 = vshll.u32 %v4104, 16
      %v4373 = vrot.slane %v4371, 5
      %v4374 = vsel %vm783, %v4369, %v4373
      %v4375 = vshrl.u32 %v4104, 16
      %v4377 = vrot.slane %v4375, 4
      %v4378 = vor.u32 %v4377, %v4373
      %v4379 = vrot.slane %v4378, 4
      %v4381 = vshll.u32 %v4105, 16
      %v4383 = vrot.slane %v4381, 5
      %v4384 = vsel %vm783, %v4379, %v4383
      %v4386 = vshrl.u32 %v4106, 16
      %v4388 = vrot.slane %v4386, 4
      %v4389 = vshll.u32 %v4106, 16
      %v4391 = vrot.slane %v4389, 5
      %v4392 = vor.u32 %v4388, %v4391
      %v4393 = vrot.slane %v4392, 4
      %v4395 = vshll.u32 %v4107, 16
      %v4397 = vrot.slane %v4395, 5
      %v4398 = vsel %vm783, %v4393, %v4397
      %v4399 = vshrl.u32 %v4107, 16
      %v4401 = vrot.slane %v4399, 4
      %v4402 = vor.u32 %v4401, %v4397
      %v4403 = vrot.slane %v4402, 4
      %v4405 = vshll.u32 %v4108, 16
      %v4407 = vrot.slane %v4405, 5
      %v4408 = vsel %vm783, %v4403, %v4407
      %v4410 = vshrl.u32 %v4109, 16
      %v4412 = vrot.slane %v4410, 4
      %v4413 = vshll.u32 %v4109, 16
      %v4415 = vrot.slane %v4413, 5
      %v4416 = vor.u32 %v4412, %v4415
      %v4417 = vrot.slane %v4416, 4
      %v4419 = vshll.u32 %v4110, 16
      %v4421 = vrot.slane %v4419, 5
      %v4422 = vsel %vm783, %v4417, %v4421
      %v4423 = vshrl.u32 %v4110, 16
      %v4425 = vrot.slane %v4423, 4
      %v4426 = vor.u32 %v4425, %v4421
      %v4427 = vrot.slane %v4426, 4
      %v4429 = vshll.u32 %v4111, 16
      %v4431 = vrot.slane %v4429, 5
      %v4432 = vsel %vm783, %v4427, %v4431
      %v4434 = vshrl.u32 %v4112, 16
      %v4436 = vrot.slane %v4434, 4
      %v4437 = vshll.u32 %v4112, 16
      %v4439 = vrot.slane %v4437, 5
      %v4440 = vor.u32 %v4436, %v4439
      %v4441 = vrot.slane %v4440, 4
      %v4443 = vshll.u32 %v4113, 16
      %v4445 = vrot.slane %v4443, 5
      %v4446 = vsel %vm783, %v4441, %v4445
      %v4447 = vshrl.u32 %v4113, 16
      %v4449 = vrot.slane %v4447, 4
      %v4450 = vor.u32 %v4449, %v4445
      %v4451 = vrot.slane %v4450, 4
      %v4453 = vshll.u32 %v4114, 16
      %v4455 = vrot.slane %v4453, 5
      %v4456 = vsel %vm783, %v4451, %v4455
      %v4458 = vshrl.u32 %v4115, 16
      %v4460 = vrot.slane %v4458, 4
      %v4461 = vshll.u32 %v4115, 16
      %v4463 = vrot.slane %v4461, 5
      %v4464 = vor.u32 %v4460, %v4463
      %v4465 = vrot.slane %v4464, 4
      %v4467 = vshll.u32 %v4116, 16
      %v4469 = vrot.slane %v4467, 5
      %v4470 = vsel %vm783, %v4465, %v4469
      %v4471 = vshrl.u32 %v4116, 16
      %v4473 = vrot.slane %v4471, 4
      %v4474 = vor.u32 %v4473, %v4469
      %v4475 = vrot.slane %v4474, 4
      %v4477 = vshll.u32 %v4117, 16
      %v4479 = vrot.slane %v4477, 5
      %v4480 = vsel %vm783, %v4475, %v4479
      %v4482 = vshrl.u32 %v4118, 16
      %v4484 = vrot.slane %v4482, 4
      %v4485 = vshll.u32 %v4118, 16
      %v4487 = vrot.slane %v4485, 5
      %v4488 = vor.u32 %v4484, %v4487
      %v4489 = vrot.slane %v4488, 4
      %v4491 = vshll.u32 %v4119, 16
      %v4493 = vrot.slane %v4491, 5
      %v4494 = vsel %vm783, %v4489, %v4493
      %v4495 = vshrl.u32 %v4119, 16
      %v4497 = vrot.slane %v4495, 4
      %v4498 = vor.u32 %v4497, %v4493
      %v4499 = vrot.slane %v4498, 4
      %v4501 = vshll.u32 %v4120, 16
      %v4503 = vrot.slane %v4501, 5
      %v4504 = vsel %vm783, %v4499, %v4503
      %4537 = vst [vmem:[#allocation3 + $0x4] sm:$0xf] %v4134
      %4538 = vst [vmem:[#allocation3 + $0x10] sm:$0xf] %v4144
      %4539 = vst [vmem:[#allocation3 + $0x1c] sm:$0xf] %v4158
      %4540 = vst [vmem:[#allocation3 + $0x28] sm:$0xf] %v4168
      %4541 = vst [vmem:[#allocation3 + $0x34] sm:$0xf] %v4182
      %4542 = vst [vmem:[#allocation3 + $0x40] sm:$0xf] %v4192
      %4543 = vst [vmem:[#allocation3 + $0x4c] sm:$0xf] %v4206
      %4544 = vst [vmem:[#allocation3 + $0x58] sm:$0xf] %v4216
      %4545 = vst [vmem:[#allocation3 + $0x64] sm:$0xf] %v4230
      %4546 = vst [vmem:[#allocation3 + $0x70] sm:$0xf] %v4240
      %4547 = vst [vmem:[#allocation3 + $0x7c] sm:$0xf] %v4254
      %4548 = vst [vmem:[#allocation3 + $0x88] sm:$0xf] %v4264
      %4549 = vst [vmem:[#allocation3 + $0x94] sm:$0xf] %v4278
      %4550 = vst [vmem:[#allocation3 + $0xa0] sm:$0xf] %v4288
      %4551 = vst [vmem:[#allocation3 + $0xac] sm:$0xf] %v4302
      %4552 = vst [vmem:[#allocation3 + $0xb8] sm:$0xf] %v4312
      %4553 = vst [vmem:[#allocation3 + $0xc4] sm:$0xf] %v4326
      %4554 = vst [vmem:[#allocation3 + $0xd0] sm:$0xf] %v4336
      %4555 = vst [vmem:[#allocation3 + $0xdc] sm:$0xf] %v4350
      %4556 = vst [vmem:[#allocation3 + $0xe8] sm:$0xf] %v4360
      %4557 = vst [vmem:[#allocation3 + $0xf4] sm:$0xf] %v4374
      %4558 = vst [vmem:[#allocation3 + $0x100] sm:$0xf] %v4384
      %4559 = vst [vmem:[#allocation3 + $0x10c] sm:$0xf] %v4398
      %4560 = vst [vmem:[#allocation3 + $0x118] sm:$0xf] %v4408
      %4561 = vst [vmem:[#allocation3 + $0x124] sm:$0xf] %v4422
      %4562 = vst [vmem:[#allocation3 + $0x130] sm:$0xf] %v4432
      %4563 = vst [vmem:[#allocation3 + $0x13c] sm:$0xf] %v4446
      %4564 = vst [vmem:[#allocation3 + $0x148] sm:$0xf] %v4456
      %4565 = vst [vmem:[#allocation3 + $0x154] sm:$0xf] %v4470
      %4566 = vst [vmem:[#allocation3 + $0x160] sm:$0xf] %v4480
      %4567 = vst [vmem:[#allocation3 + $0x16c] sm:$0xf] %v4494
      %4568 = vst [vmem:[#allocation3 + $0x178] sm:$0xf] %v4504
      %v4569 = vld [vmem:[%s4008] sm:$0xe]
      %v4570 = vld [vmem:[%s4008 + $0x4] sm:$0xf]
      %v4571 = vld [vmem:[%s4008 + $0x8] sm:$0x1]
      %v4572 = vld [vmem:[%s4008 + $0xc] sm:$0xe]
      %v4573 = vld [vmem:[%s4008 + $0x10] sm:$0xf]
      %v4574 = vld [vmem:[%s4008 + $0x14] sm:$0x1]
      %v4575 = vld [vmem:[%s4008 + $0x18] sm:$0xe]
      %v4576 = vld [vmem:[%s4008 + $0x1c] sm:$0xf]
      %v4577 = vld [vmem:[%s4008 + $0x20] sm:$0x1]
      %v4578 = vld [vmem:[%s4008 + $0x24] sm:$0xe]
      %v4579 = vld [vmem:[%s4008 + $0x28] sm:$0xf]
      %v4580 = vld [vmem:[%s4008 + $0x2c] sm:$0x1]
      %v4581 = vld [vmem:[%s4008 + $0x30] sm:$0xe]
      %v4582 = vld [vmem:[%s4008 + $0x34] sm:$0xf]
      %v4583 = vld [vmem:[%s4008 + $0x38] sm:$0x1]
      %v4584 = vld [vmem:[%s4008 + $0x3c] sm:$0xe]
      %v4585 = vld [vmem:[%s4008 + $0x40] sm:$0xf]
      %v4586 = vld [vmem:[%s4008 + $0x44] sm:$0x1]
      %v4587 = vld [vmem:[%s4008 + $0x48] sm:$0xe]
      %v4588 = vld [vmem:[%s4008 + $0x4c] sm:$0xf]
      %v4589 = vld [vmem:[%s4008 + $0x50] sm:$0x1]
      %v4590 = vld [vmem:[%s4008 + $0x54] sm:$0xe]
      %v4591 = vld [vmem:[%s4008 + $0x58] sm:$0xf]
      %v4592 = vld [vmem:[%s4008 + $0x5c] sm:$0x1]
      %v4593 = vld [vmem:[%s4008 + $0x60] sm:$0xe]
      %v4594 = vld [vmem:[%s4008 + $0x64] sm:$0xf]
      %v4595 = vld [vmem:[%s4008 + $0x68] sm:$0x1]
      %v4596 = vld [vmem:[%s4008 + $0x6c] sm:$0xe]
      %v4597 = vld [vmem:[%s4008 + $0x70] sm:$0xf]
      %v4598 = vld [vmem:[%s4008 + $0x74] sm:$0x1]
      %v4599 = vld [vmem:[%s4008 + $0x78] sm:$0xe]
      %v4600 = vld [vmem:[%s4008 + $0x7c] sm:$0xf]
      %v4601 = vld [vmem:[%s4008 + $0x80] sm:$0x1]
      %v4602 = vld [vmem:[%s4008 + $0x84] sm:$0xe]
      %v4603 = vld [vmem:[%s4008 + $0x88] sm:$0xf]
      %v4604 = vld [vmem:[%s4008 + $0x8c] sm:$0x1]
      %v4605 = vld [vmem:[%s4008 + $0x90] sm:$0xe]
      %v4606 = vld [vmem:[%s4008 + $0x94] sm:$0xf]
      %v4607 = vld [vmem:[%s4008 + $0x98] sm:$0x1]
      %v4608 = vld [vmem:[%s4008 + $0x9c] sm:$0xe]
      %v4609 = vld [vmem:[%s4008 + $0xa0] sm:$0xf]
      %v4610 = vld [vmem:[%s4008 + $0xa4] sm:$0x1]
      %v4611 = vld [vmem:[%s4008 + $0xa8] sm:$0xe]
      %v4612 = vld [vmem:[%s4008 + $0xac] sm:$0xf]
      %v4613 = vld [vmem:[%s4008 + $0xb0] sm:$0x1]
      %v4614 = vld [vmem:[%s4008 + $0xb4] sm:$0xe]
      %v4615 = vld [vmem:[%s4008 + $0xb8] sm:$0xf]
      %v4616 = vld [vmem:[%s4008 + $0xbc] sm:$0x1]
      %v4665 = vrot.slane %v4569, 5
      %v4666 = vrot.slane %v4665, 4
      %v4667 = vrot.slane %v4570, 5
      %v4668 = vsel %vm1330, %v4666, %v4667
      %v4669 = vrot.slane %v4667, 4
      %v4670 = vrot.slane %v4571, 5
      %v4671 = vsel %vm1330, %v4669, %v4670
      %v4672 = vrot.slane %v4572, 5
      %v4673 = vrot.slane %v4672, 4
      %v4674 = vrot.slane %v4573, 5
      %v4675 = vsel %vm1330, %v4673, %v4674
      %v4676 = vrot.slane %v4674, 4
      %v4677 = vrot.slane %v4574, 5
      %v4678 = vsel %vm1330, %v4676, %v4677
      %v4679 = vrot.slane %v4575, 5
      %v4680 = vrot.slane %v4679, 4
      %v4681 = vrot.slane %v4576, 5
      %v4682 = vsel %vm1330, %v4680, %v4681
      %v4683 = vrot.slane %v4681, 4
      %v4684 = vrot.slane %v4577, 5
      %v4685 = vsel %vm1330, %v4683, %v4684
      %v4686 = vrot.slane %v4578, 5
      %v4687 = vrot.slane %v4686, 4
      %v4688 = vrot.slane %v4579, 5
      %v4689 = vsel %vm1330, %v4687, %v4688
      %v4690 = vrot.slane %v4688, 4
      %v4691 = vrot.slane %v4580, 5
      %v4692 = vsel %vm1330, %v4690, %v4691
      %v4693 = vrot.slane %v4581, 5
      %v4694 = vrot.slane %v4693, 4
      %v4695 = vrot.slane %v4582, 5
      %v4696 = vsel %vm1330, %v4694, %v4695
      %v4697 = vrot.slane %v4695, 4
      %v4698 = vrot.slane %v4583, 5
      %v4699 = vsel %vm1330, %v4697, %v4698
      %v4700 = vrot.slane %v4584, 5
      %v4701 = vrot.slane %v4700, 4
      %v4702 = vrot.slane %v4585, 5
      %v4703 = vsel %vm1330, %v4701, %v4702
      %v4704 = vrot.slane %v4702, 4
      %v4705 = vrot.slane %v4586, 5
      %v4706 = vsel %vm1330, %v4704, %v4705
      %v4707 = vrot.slane %v4587, 5
      %v4708 = vrot.slane %v4707, 4
      %v4709 = vrot.slane %v4588, 5
      %v4710 = vsel %vm1330, %v4708, %v4709
      %v4711 = vrot.slane %v4709, 4
      %v4712 = vrot.slane %v4589, 5
      %v4713 = vsel %vm1330, %v4711, %v4712
      %v4714 = vrot.slane %v4590, 5
      %v4715 = vrot.slane %v4714, 4
      %v4716 = vrot.slane %v4591, 5
      %v4717 = vsel %vm1330, %v4715, %v4716
      %v4718 = vrot.slane %v4716, 4
      %v4719 = vrot.slane %v4592, 5
      %v4720 = vsel %vm1330, %v4718, %v4719
      %v4721 = vrot.slane %v4593, 5
      %v4722 = vrot.slane %v4721, 4
      %v4723 = vrot.slane %v4594, 5
      %v4724 = vsel %vm1330, %v4722, %v4723
      %v4725 = vrot.slane %v4723, 4
      %v4726 = vrot.slane %v4595, 5
      %v4727 = vsel %vm1330, %v4725, %v4726
      %v4728 = vrot.slane %v4596, 5
      %v4729 = vrot.slane %v4728, 4
      %v4730 = vrot.slane %v4597, 5
      %v4731 = vsel %vm1330, %v4729, %v4730
      %v4732 = vrot.slane %v4730, 4
      %v4733 = vrot.slane %v4598, 5
      %v4734 = vsel %vm1330, %v4732, %v4733
      %v4735 = vrot.slane %v4599, 5
      %v4736 = vrot.slane %v4735, 4
      %v4737 = vrot.slane %v4600, 5
      %v4738 = vsel %vm1330, %v4736, %v4737
      %v4739 = vrot.slane %v4737, 4
      %v4740 = vrot.slane %v4601, 5
      %v4741 = vsel %vm1330, %v4739, %v4740
      %v4742 = vrot.slane %v4602, 5
      %v4743 = vrot.slane %v4742, 4
      %v4744 = vrot.slane %v4603, 5
      %v4745 = vsel %vm1330, %v4743, %v4744
      %v4746 = vrot.slane %v4744, 4
      %v4747 = vrot.slane %v4604, 5
      %v4748 = vsel %vm1330, %v4746, %v4747
      %v4749 = vrot.slane %v4605, 5
      %v4750 = vrot.slane %v4749, 4
      %v4751 = vrot.slane %v4606, 5
      %v4752 = vsel %vm1330, %v4750, %v4751
      %v4753 = vrot.slane %v4751, 4
      %v4754 = vrot.slane %v4607, 5
      %v4755 = vsel %vm1330, %v4753, %v4754
      %v4756 = vrot.slane %v4608, 5
      %v4757 = vrot.slane %v4756, 4
      %v4758 = vrot.slane %v4609, 5
      %v4759 = vsel %vm1330, %v4757, %v4758
      %v4760 = vrot.slane %v4758, 4
      %v4761 = vrot.slane %v4610, 5
      %v4762 = vsel %vm1330, %v4760, %v4761
      %v4763 = vrot.slane %v4611, 5
      %v4764 = vrot.slane %v4763, 4
      %v4765 = vrot.slane %v4612, 5
      %v4766 = vsel %vm1330, %v4764, %v4765
      %v4767 = vrot.slane %v4765, 4
      %v4768 = vrot.slane %v4613, 5
      %v4769 = vsel %vm1330, %v4767, %v4768
      %v4770 = vrot.slane %v4614, 5
      %v4771 = vrot.slane %v4770, 4
      %v4772 = vrot.slane %v4615, 5
      %v4773 = vsel %vm1330, %v4771, %v4772
      %v4774 = vrot.slane %v4772, 4
      %v4775 = vrot.slane %v4616, 5
      %v4776 = vsel %vm1330, %v4774, %v4775
      %4809 = vst [vmem:[#allocation3 + $0x8] sm:$0xf] %v4668
      %4810 = vst [vmem:[#allocation3 + $0x14] sm:$0xf] %v4671
      %4811 = vst [vmem:[#allocation3 + $0x20] sm:$0xf] %v4675
      %4812 = vst [vmem:[#allocation3 + $0x2c] sm:$0xf] %v4678
      %4813 = vst [vmem:[#allocation3 + $0x38] sm:$0xf] %v4682
      %4814 = vst [vmem:[#allocation3 + $0x44] sm:$0xf] %v4685
      %4815 = vst [vmem:[#allocation3 + $0x50] sm:$0xf] %v4689
      %4816 = vst [vmem:[#allocation3 + $0x5c] sm:$0xf] %v4692
      %4817 = vst [vmem:[#allocation3 + $0x68] sm:$0xf] %v4696
      %4818 = vst [vmem:[#allocation3 + $0x74] sm:$0xf] %v4699
      %4819 = vst [vmem:[#allocation3 + $0x80] sm:$0xf] %v4703
      %4820 = vst [vmem:[#allocation3 + $0x8c] sm:$0xf] %v4706
      %4821 = vst [vmem:[#allocation3 + $0x98] sm:$0xf] %v4710
      %4822 = vst [vmem:[#allocation3 + $0xa4] sm:$0xf] %v4713
      %4823 = vst [vmem:[#allocation3 + $0xb0] sm:$0xf] %v4717
      %4824 = vst [vmem:[#allocation3 + $0xbc] sm:$0xf] %v4720
      %4825 = vst [vmem:[#allocation3 + $0xc8] sm:$0xf] %v4724
      %4826 = vst [vmem:[#allocation3 + $0xd4] sm:$0xf] %v4727
      %4827 = vst [vmem:[#allocation3 + $0xe0] sm:$0xf] %v4731
      %4828 = vst [vmem:[#allocation3 + $0xec] sm:$0xf] %v4734
      %4829 = vst [vmem:[#allocation3 + $0xf8] sm:$0xf] %v4738
      %4830 = vst [vmem:[#allocation3 + $0x104] sm:$0xf] %v4741
      %4831 = vst [vmem:[#allocation3 + $0x110] sm:$0xf] %v4745
      %4832 = vst [vmem:[#allocation3 + $0x11c] sm:$0xf] %v4748
      %4833 = vst [vmem:[#allocation3 + $0x128] sm:$0xf] %v4752
      %4834 = vst [vmem:[#allocation3 + $0x134] sm:$0xf] %v4755
      %4835 = vst [vmem:[#allocation3 + $0x140] sm:$0xf] %v4759
      %4836 = vst [vmem:[#allocation3 + $0x14c] sm:$0xf] %v4762
      %4837 = vst [vmem:[#allocation3 + $0x158] sm:$0xf] %v4766
      %4838 = vst [vmem:[#allocation3 + $0x164] sm:$0xf] %v4769
      %4839 = vst [vmem:[#allocation3 + $0x170] sm:$0xf] %v4773
      %4840 = vst [vmem:[#allocation3 + $0x17c] sm:$0xf] %v4776
      %v4841 = vld [vmem:[#allocation3] sm:$0xff]
      %v4842 = vld [vmem:[#allocation3 + $0x8] sm:$0xf]
      %v4843 = vld [vmem:[#allocation3 + $0xc] sm:$0xff]
      %v4844 = vld [vmem:[#allocation3 + $0x14] sm:$0xf]
      %v4845 = vld [vmem:[#allocation3 + $0x18] sm:$0xff]
      %v4846 = vld [vmem:[#allocation3 + $0x20] sm:$0xf]
      %v4847 = vld [vmem:[#allocation3 + $0x24] sm:$0xff]
      %v4848 = vld [vmem:[#allocation3 + $0x2c] sm:$0xf]
      %v4849 = vld [vmem:[#allocation3 + $0x30] sm:$0xff]
      %v4850 = vld [vmem:[#allocation3 + $0x38] sm:$0xf]
      %v4851 = vld [vmem:[#allocation3 + $0x3c] sm:$0xff]
      %v4852 = vld [vmem:[#allocation3 + $0x44] sm:$0xf]
      %v4853 = vld [vmem:[#allocation3 + $0x48] sm:$0xff]
      %v4854 = vld [vmem:[#allocation3 + $0x50] sm:$0xf]
      %v4855 = vld [vmem:[#allocation3 + $0x54] sm:$0xff]
      %v4856 = vld [vmem:[#allocation3 + $0x5c] sm:$0xf]
      %v4857 = vld [vmem:[#allocation3 + $0x60] sm:$0xff]
      %v4858 = vld [vmem:[#allocation3 + $0x68] sm:$0xf]
      %v4859 = vld [vmem:[#allocation3 + $0x6c] sm:$0xff]
      %v4860 = vld [vmem:[#allocation3 + $0x74] sm:$0xf]
      %v4861 = vld [vmem:[#allocation3 + $0x78] sm:$0xff]
      %v4862 = vld [vmem:[#allocation3 + $0x80] sm:$0xf]
      %v4863 = vld [vmem:[#allocation3 + $0x84] sm:$0xff]
      %v4864 = vld [vmem:[#allocation3 + $0x8c] sm:$0xf]
      %v4865 = vld [vmem:[#allocation3 + $0x90] sm:$0xff]
      %v4866 = vld [vmem:[#allocation3 + $0x98] sm:$0xf]
      %v4867 = vld [vmem:[#allocation3 + $0x9c] sm:$0xff]
      %v4868 = vld [vmem:[#allocation3 + $0xa4] sm:$0xf]
      %v4869 = vld [vmem:[#allocation3 + $0xa8] sm:$0xff]
      %v4870 = vld [vmem:[#allocation3 + $0xb0] sm:$0xf]
      %v4871 = vld [vmem:[#allocation3 + $0xb4] sm:$0xff]
      %v4872 = vld [vmem:[#allocation3 + $0xbc] sm:$0xf]
      %v4873 = vld [vmem:[#allocation3 + $0xc0] sm:$0xff]
      %v4874 = vld [vmem:[#allocation3 + $0xc8] sm:$0xf]
      %v4875 = vld [vmem:[#allocation3 + $0xcc] sm:$0xff]
      %v4876 = vld [vmem:[#allocation3 + $0xd4] sm:$0xf]
      %v4877 = vld [vmem:[#allocation3 + $0xd8] sm:$0xff]
      %v4878 = vld [vmem:[#allocation3 + $0xe0] sm:$0xf]
      %v4879 = vld [vmem:[#allocation3 + $0xe4] sm:$0xff]
      %v4880 = vld [vmem:[#allocation3 + $0xec] sm:$0xf]
      %v4881 = vld [vmem:[#allocation3 + $0xf0] sm:$0xff]
      %v4882 = vld [vmem:[#allocation3 + $0xf8] sm:$0xf]
      %v4883 = vld [vmem:[#allocation3 + $0xfc] sm:$0xff]
      %v4884 = vld [vmem:[#allocation3 + $0x104] sm:$0xf]
      %v4885 = vld [vmem:[#allocation3 + $0x108] sm:$0xff]
      %v4886 = vld [vmem:[#allocation3 + $0x110] sm:$0xf]
      %v4887 = vld [vmem:[#allocation3 + $0x114] sm:$0xff]
      %v4888 = vld [vmem:[#allocation3 + $0x11c] sm:$0xf]
      %v4889 = vld [vmem:[#allocation3 + $0x120] sm:$0xff]
      %v4890 = vld [vmem:[#allocation3 + $0x128] sm:$0xf]
      %v4891 = vld [vmem:[#allocation3 + $0x12c] sm:$0xff]
      %v4892 = vld [vmem:[#allocation3 + $0x134] sm:$0xf]
      %v4893 = vld [vmem:[#allocation3 + $0x138] sm:$0xff]
      %v4894 = vld [vmem:[#allocation3 + $0x140] sm:$0xf]
      %v4895 = vld [vmem:[#allocation3 + $0x144] sm:$0xff]
      %v4896 = vld [vmem:[#allocation3 + $0x14c] sm:$0xf]
      %v4897 = vld [vmem:[#allocation3 + $0x150] sm:$0xff]
      %v4898 = vld [vmem:[#allocation3 + $0x158] sm:$0xf]
      %v4899 = vld [vmem:[#allocation3 + $0x15c] sm:$0xff]
      %v4900 = vld [vmem:[#allocation3 + $0x164] sm:$0xf]
      %v4901 = vld [vmem:[#allocation3 + $0x168] sm:$0xff]
      %v4902 = vld [vmem:[#allocation3 + $0x170] sm:$0xf]
      %v4903 = vld [vmem:[#allocation3 + $0x174] sm:$0xff]
      %v4904 = vld [vmem:[#allocation3 + $0x17c] sm:$0xf]
      %s4905 = scalar_lea.vmem %s1, 384
      %v4906 = vld [vmem:[%s4905] sm:$0xf]
      %v4907 = vld [vmem:[%s4905 + $0x4] sm:$0xf]
      %v4908 = vld [vmem:[%s4905 + $0x8] sm:$0xf]
      %v4909 = vld [vmem:[%s4905 + $0xc] sm:$0xf]
      %v4910 = vld [vmem:[%s4905 + $0x10] sm:$0xf]
      %v4911 = vld [vmem:[%s4905 + $0x14] sm:$0xf]
      %v4912 = vld [vmem:[%s4905 + $0x18] sm:$0xf]
      %v4913 = vld [vmem:[%s4905 + $0x1c] sm:$0xf]
      %v4914 = vld [vmem:[%s4905 + $0x20] sm:$0xf]
      %v4915 = vld [vmem:[%s4905 + $0x24] sm:$0xf]
      %v4916 = vld [vmem:[%s4905 + $0x28] sm:$0xf]
      %v4917 = vld [vmem:[%s4905 + $0x2c] sm:$0xf]
      %v4918 = vld [vmem:[%s4905 + $0x30] sm:$0xf]
      %v4919 = vld [vmem:[%s4905 + $0x34] sm:$0xf]
      %v4920 = vld [vmem:[%s4905 + $0x38] sm:$0xf]
      %v4921 = vld [vmem:[%s4905 + $0x3c] sm:$0xf]
      %v4922 = vld [vmem:[%s4905 + $0x40] sm:$0xf]
      %v4923 = vld [vmem:[%s4905 + $0x44] sm:$0xf]
      %v4924 = vld [vmem:[%s4905 + $0x48] sm:$0xf]
      %v4925 = vld [vmem:[%s4905 + $0x4c] sm:$0xf]
      %v4926 = vld [vmem:[%s4905 + $0x50] sm:$0xf]
      %v4927 = vld [vmem:[%s4905 + $0x54] sm:$0xf]
      %v4928 = vld [vmem:[%s4905 + $0x58] sm:$0xf]
      %v4929 = vld [vmem:[%s4905 + $0x5c] sm:$0xf]
      %v4930 = vld [vmem:[%s4905 + $0x60] sm:$0xf]
      %v4931 = vld [vmem:[%s4905 + $0x64] sm:$0xf]
      %v4932 = vld [vmem:[%s4905 + $0x68] sm:$0xf]
      %v4933 = vld [vmem:[%s4905 + $0x6c] sm:$0xf]
      %v4934 = vld [vmem:[%s4905 + $0x70] sm:$0xf]
      %v4935 = vld [vmem:[%s4905 + $0x74] sm:$0xf]
      %v4936 = vld [vmem:[%s4905 + $0x78] sm:$0xf]
      %v4937 = vld [vmem:[%s4905 + $0x7c] sm:$0xf]
      %v4938 = vld [vmem:[%s4905 + $0x80] sm:$0xf]
      %v4939 = vld [vmem:[%s4905 + $0x84] sm:$0xf]
      %v4940 = vld [vmem:[%s4905 + $0x88] sm:$0xf]
      %v4941 = vld [vmem:[%s4905 + $0x8c] sm:$0xf]
      %v4942 = vld [vmem:[%s4905 + $0x90] sm:$0xf]
      %v4943 = vld [vmem:[%s4905 + $0x94] sm:$0xf]
      %v4944 = vld [vmem:[%s4905 + $0x98] sm:$0xf]
      %v4945 = vld [vmem:[%s4905 + $0x9c] sm:$0xf]
      %v4946 = vld [vmem:[%s4905 + $0xa0] sm:$0xf]
      %v4947 = vld [vmem:[%s4905 + $0xa4] sm:$0xf]
      %v4948 = vld [vmem:[%s4905 + $0xa8] sm:$0xf]
      %v4949 = vld [vmem:[%s4905 + $0xac] sm:$0xf]
      %v4950 = vld [vmem:[%s4905 + $0xb0] sm:$0xf]
      %v4951 = vld [vmem:[%s4905 + $0xb4] sm:$0xf]
      %v4952 = vld [vmem:[%s4905 + $0xb8] sm:$0xf]
      %v4953 = vld [vmem:[%s4905 + $0xbc] sm:$0xf]
      %v5018 = vunpack.c.l.b16 %v4841
      %v5019 = vunpack.c.h.b16 %v4841
      %v5020 = vunpack.c.l.b16 %v4842
      %v5021 = vunpack.c.l.b16 %v4843
      %v5022 = vunpack.c.h.b16 %v4843
      %v5023 = vunpack.c.l.b16 %v4844
      %v5024 = vunpack.c.l.b16 %v4845
      %v5025 = vunpack.c.h.b16 %v4845
      %v5026 = vunpack.c.l.b16 %v4846
      %v5027 = vunpack.c.l.b16 %v4847
      %v5028 = vunpack.c.h.b16 %v4847
      %v5029 = vunpack.c.l.b16 %v4848
      %v5030 = vunpack.c.l.b16 %v4849
      %v5031 = vunpack.c.h.b16 %v4849
      %v5032 = vunpack.c.l.b16 %v4850
      %v5033 = vunpack.c.l.b16 %v4851
      %v5034 = vunpack.c.h.b16 %v4851
      %v5035 = vunpack.c.l.b16 %v4852
      %v5036 = vunpack.c.l.b16 %v4853
      %v5037 = vunpack.c.h.b16 %v4853
      %v5038 = vunpack.c.l.b16 %v4854
      %v5039 = vunpack.c.l.b16 %v4855
      %v5040 = vunpack.c.h.b16 %v4855
      %v5041 = vunpack.c.l.b16 %v4856
      %v5042 = vunpack.c.l.b16 %v4857
      %v5043 = vunpack.c.h.b16 %v4857
      %v5044 = vunpack.c.l.b16 %v4858
      %v5045 = vunpack.c.l.b16 %v4859
      %v5046 = vunpack.c.h.b16 %v4859
      %v5047 = vunpack.c.l.b16 %v4860
      %v5048 = vunpack.c.l.b16 %v4861
      %v5049 = vunpack.c.h.b16 %v4861
      %v5050 = vunpack.c.l.b16 %v4862
      %v5051 = vunpack.c.l.b16 %v4863
      %v5052 = vunpack.c.h.b16 %v4863
      %v5053 = vunpack.c.l.b16 %v4864
      %v5054 = vunpack.c.l.b16 %v4865
      %v5055 = vunpack.c.h.b16 %v4865
      %v5056 = vunpack.c.l.b16 %v4866
      %v5057 = vunpack.c.l.b16 %v4867
      %v5058 = vunpack.c.h.b16 %v4867
      %v5059 = vunpack.c.l.b16 %v4868
      %v5060 = vunpack.c.l.b16 %v4869
      %v5061 = vunpack.c.h.b16 %v4869
      %v5062 = vunpack.c.l.b16 %v4870
      %v5063 = vunpack.c.l.b16 %v4871
      %v5064 = vunpack.c.h.b16 %v4871
      %v5065 = vunpack.c.l.b16 %v4872
      %v5066 = vunpack.c.l.b16 %v4873
      %v5067 = vunpack.c.h.b16 %v4873
      %v5068 = vunpack.c.l.b16 %v4874
      %v5069 = vunpack.c.l.b16 %v4875
      %v5070 = vunpack.c.h.b16 %v4875
      %v5071 = vunpack.c.l.b16 %v4876
      %v5072 = vunpack.c.l.b16 %v4877
      %v5073 = vunpack.c.h.b16 %v4877
      %v5074 = vunpack.c.l.b16 %v4878
      %v5075 = vunpack.c.l.b16 %v4879
      %v5076 = vunpack.c.h.b16 %v4879
      %v5077 = vunpack.c.l.b16 %v4880
      %v5078 = vunpack.c.l.b16 %v4881
      %v5079 = vunpack.c.h.b16 %v4881
      %v5080 = vunpack.c.l.b16 %v4882
      %v5081 = vunpack.c.l.b16 %v4883
      %v5082 = vunpack.c.h.b16 %v4883
      %v5083 = vunpack.c.l.b16 %v4884
      %v5084 = vunpack.c.l.b16 %v4885
      %v5085 = vunpack.c.h.b16 %v4885
      %v5086 = vunpack.c.l.b16 %v4886
      %v5087 = vunpack.c.l.b16 %v4887
      %v5088 = vunpack.c.h.b16 %v4887
      %v5089 = vunpack.c.l.b16 %v4888
      %v5090 = vunpack.c.l.b16 %v4889
      %v5091 = vunpack.c.h.b16 %v4889
      %v5092 = vunpack.c.l.b16 %v4890
      %v5093 = vunpack.c.l.b16 %v4891
      %v5094 = vunpack.c.h.b16 %v4891
      %v5095 = vunpack.c.l.b16 %v4892
      %v5096 = vunpack.c.l.b16 %v4893
      %v5097 = vunpack.c.h.b16 %v4893
      %v5098 = vunpack.c.l.b16 %v4894
      %v5099 = vunpack.c.l.b16 %v4895
      %v5100 = vunpack.c.h.b16 %v4895
      %v5101 = vunpack.c.l.b16 %v4896
      %v5102 = vunpack.c.l.b16 %v4897
      %v5103 = vunpack.c.h.b16 %v4897
      %v5104 = vunpack.c.l.b16 %v4898
      %v5105 = vunpack.c.l.b16 %v4899
      %v5106 = vunpack.c.h.b16 %v4899
      %v5107 = vunpack.c.l.b16 %v4900
      %v5108 = vunpack.c.l.b16 %v4901
      %v5109 = vunpack.c.h.b16 %v4901
      %v5110 = vunpack.c.l.b16 %v4902
      %v5111 = vunpack.c.l.b16 %v4903
      %v5112 = vunpack.c.h.b16 %v4903
      %v5113 = vunpack.c.l.b16 %v4904
      %v5114 = vpack.c.b16 %v5021, %v5018
      %v5115 = vpack.c.b16 %v5022, %v5019
      %v5116 = vpack.c.b16 %v5023, %v5020
      %v5117 = vpack.c.b16 %v5027, %v5024
      %v5118 = vpack.c.b16 %v5028, %v5025
      %v5119 = vpack.c.b16 %v5029, %v5026
      %v5120 = vpack.c.b16 %v5033, %v5030
      %v5121 = vpack.c.b16 %v5034, %v5031
      %v5122 = vpack.c.b16 %v5035, %v5032
      %v5123 = vpack.c.b16 %v5039, %v5036
      %v5124 = vpack.c.b16 %v5040, %v5037
      %v5125 = vpack.c.b16 %v5041, %v5038
      %v5126 = vpack.c.b16 %v5045, %v5042
      %v5127 = vpack.c.b16 %v5046, %v5043
      %v5128 = vpack.c.b16 %v5047, %v5044
      %v5129 = vpack.c.b16 %v5051, %v5048
      %v5130 = vpack.c.b16 %v5052, %v5049
      %v5131 = vpack.c.b16 %v5053, %v5050
      %v5132 = vpack.c.b16 %v5057, %v5054
      %v5133 = vpack.c.b16 %v5058, %v5055
      %v5134 = vpack.c.b16 %v5059, %v5056
      %v5135 = vpack.c.b16 %v5063, %v5060
      %v5136 = vpack.c.b16 %v5064, %v5061
      %v5137 = vpack.c.b16 %v5065, %v5062
      %v5138 = vpack.c.b16 %v5069, %v5066
      %v5139 = vpack.c.b16 %v5070, %v5067
      %v5140 = vpack.c.b16 %v5071, %v5068
      %v5141 = vpack.c.b16 %v5075, %v5072
      %v5142 = vpack.c.b16 %v5076, %v5073
      %v5143 = vpack.c.b16 %v5077, %v5074
      %v5144 = vpack.c.b16 %v5081, %v5078
      %v5145 = vpack.c.b16 %v5082, %v5079
      %v5146 = vpack.c.b16 %v5083, %v5080
      %v5147 = vpack.c.b16 %v5087, %v5084
      %v5148 = vpack.c.b16 %v5088, %v5085
      %v5149 = vpack.c.b16 %v5089, %v5086
      %v5150 = vpack.c.b16 %v5093, %v5090
      %v5151 = vpack.c.b16 %v5094, %v5091
      %v5152 = vpack.c.b16 %v5095, %v5092
      %v5153 = vpack.c.b16 %v5099, %v5096
      %v5154 = vpack.c.b16 %v5100, %v5097
      %v5155 = vpack.c.b16 %v5101, %v5098
      %v5156 = vpack.c.b16 %v5105, %v5102
      %v5157 = vpack.c.b16 %v5106, %v5103
      %v5158 = vpack.c.b16 %v5107, %v5104
      %v5159 = vpack.c.b16 %v5111, %v5108
      %v5160 = vpack.c.b16 %v5112, %v5109
      %v5161 = vpack.c.b16 %v5113, %v5110
      %v5258 = vunpack.c.l.b16 %v4906
      %v5259 = vunpack.c.l.b16 %v4907
      %v5260 = vunpack.c.l.b16 %v4908
      %v5261 = vunpack.c.l.b16 %v4909
      %v5262 = vunpack.c.l.b16 %v4910
      %v5263 = vunpack.c.l.b16 %v4911
      %v5264 = vunpack.c.l.b16 %v4912
      %v5265 = vunpack.c.l.b16 %v4913
      %v5266 = vunpack.c.l.b16 %v4914
      %v5267 = vunpack.c.l.b16 %v4915
      %v5268 = vunpack.c.l.b16 %v4916
      %v5269 = vunpack.c.l.b16 %v4917
      %v5270 = vunpack.c.l.b16 %v4918
      %v5271 = vunpack.c.l.b16 %v4919
      %v5272 = vunpack.c.l.b16 %v4920
      %v5273 = vunpack.c.l.b16 %v4921
      %v5274 = vunpack.c.l.b16 %v4922
      %v5275 = vunpack.c.l.b16 %v4923
      %v5276 = vunpack.c.l.b16 %v4924
      %v5277 = vunpack.c.l.b16 %v4925
      %v5278 = vunpack.c.l.b16 %v4926
      %v5279 = vunpack.c.l.b16 %v4927
      %v5280 = vunpack.c.l.b16 %v4928
      %v5281 = vunpack.c.l.b16 %v4929
      %v5282 = vunpack.c.l.b16 %v4930
      %v5283 = vunpack.c.l.b16 %v4931
      %v5284 = vunpack.c.l.b16 %v4932
      %v5285 = vunpack.c.l.b16 %v4933
      %v5286 = vunpack.c.l.b16 %v4934
      %v5287 = vunpack.c.l.b16 %v4935
      %v5288 = vunpack.c.l.b16 %v4936
      %v5289 = vunpack.c.l.b16 %v4937
      %v5290 = vunpack.c.l.b16 %v4938
      %v5291 = vunpack.c.l.b16 %v4939
      %v5292 = vunpack.c.l.b16 %v4940
      %v5293 = vunpack.c.l.b16 %v4941
      %v5294 = vunpack.c.l.b16 %v4942
      %v5295 = vunpack.c.l.b16 %v4943
      %v5296 = vunpack.c.l.b16 %v4944
      %v5297 = vunpack.c.l.b16 %v4945
      %v5298 = vunpack.c.l.b16 %v4946
      %v5299 = vunpack.c.l.b16 %v4947
      %v5300 = vunpack.c.l.b16 %v4948
      %v5301 = vunpack.c.l.b16 %v4949
      %v5302 = vunpack.c.l.b16 %v4950
      %v5303 = vunpack.c.l.b16 %v4951
      %v5304 = vunpack.c.l.b16 %v4952
      %v5305 = vunpack.c.l.b16 %v4953
      %v5306 = vpack.c.b16 %v5259, %v5258
      %v5307 = vpack.c.b16 %v5261, %v5260
      %v5308 = vpack.c.b16 %v5263, %v5262
      %v5309 = vpack.c.b16 %v5265, %v5264
      %v5310 = vpack.c.b16 %v5267, %v5266
      %v5311 = vpack.c.b16 %v5269, %v5268
      %v5312 = vpack.c.b16 %v5271, %v5270
      %v5313 = vpack.c.b16 %v5273, %v5272
      %v5314 = vpack.c.b16 %v5275, %v5274
      %v5315 = vpack.c.b16 %v5277, %v5276
      %v5316 = vpack.c.b16 %v5279, %v5278
      %v5317 = vpack.c.b16 %v5281, %v5280
      %v5318 = vpack.c.b16 %v5283, %v5282
      %v5319 = vpack.c.b16 %v5285, %v5284
      %v5320 = vpack.c.b16 %v5287, %v5286
      %v5321 = vpack.c.b16 %v5289, %v5288
      %v5322 = vpack.c.b16 %v5291, %v5290
      %v5323 = vpack.c.b16 %v5293, %v5292
      %v5324 = vpack.c.b16 %v5295, %v5294
      %v5325 = vpack.c.b16 %v5297, %v5296
      %v5326 = vpack.c.b16 %v5299, %v5298
      %v5327 = vpack.c.b16 %v5301, %v5300
      %v5328 = vpack.c.b16 %v5303, %v5302
      %v5329 = vpack.c.b16 %v5305, %v5304
      %5354 = vmatprep.subr.bf16.mxu0 0
      %5355 = vmatpush1.bf16.msra.mxu0 %v5313
      %5356 = vmatprep.subr.bf16.mxu0 0
      %5357 = vmatpush1.bf16.msra.mxu0 %v5312
      %5358 = vmatprep.subr.bf16.mxu0 0
      %5359 = vmatpush1.bf16.msra.mxu0 %v5311
      %5360 = vmatprep.subr.bf16.mxu0 0
      %5361 = vmatpush1.bf16.msra.mxu0 %v5310
      %5362 = vmatprep.subr.bf16.mxu0 0
      %5363 = vmatpush1.bf16.msra.mxu0 %v5309
      %5364 = vmatprep.subr.bf16.mxu0 0
      %5365 = vmatpush1.bf16.msra.mxu0 %v5308
      %5366 = vmatprep.subr.bf16.mxu0 0
      %5367 = vmatpush1.bf16.msra.mxu0 %v5307
      %5368 = vmatprep.subr.bf16.mxu0 0
      %5369 = vmatpush1.bf16.msra.mxu0 %v5306
      %5370 = vmatprep.subr.bf16.mxu0 0
      %5371 = vmatpush2.bf16.msra.mxu0 %v5321
      %5372 = vmatprep.subr.bf16.mxu0 0
      %5373 = vmatpush2.bf16.msra.mxu0 %v5320
      %5374 = vmatprep.subr.bf16.mxu0 0
      %5375 = vmatpush2.bf16.msra.mxu0 %v5319
      %5376 = vmatprep.subr.bf16.mxu0 0
      %5377 = vmatpush2.bf16.msra.mxu0 %v5318
      %5378 = vmatprep.subr.bf16.mxu0 0
      %5379 = vmatpush2.bf16.msra.mxu0 %v5317
      %5380 = vmatprep.subr.bf16.mxu0 0
      %5381 = vmatpush2.bf16.msra.mxu0 %v5316
      %5382 = vmatprep.subr.bf16.mxu0 0
      %5383 = vmatpush2.bf16.msra.mxu0 %v5315
      %5384 = vmatprep.subr.bf16.mxu0 0
      %5385 = vmatpush2.bf16.msra.mxu0 %v5314
      %5386 = vmatprep.mubr.bf16.mxu0 %v5115
      %5387 = vmatmul.mubr.bf16.gmra.mxu0 %v5114
      %v5388 = vpop.f32.mrf.mxu0
      %v5389 = vadd.f32 0.0, %v5388
      %v5390 = vpop.f32.mrf.mxu0
      %v5391 = vpop.f32.mrf.mxu0
      %v5392 = vadd.f32 0.0, %v5391
      %v5393 = vpop.f32.mrf.mxu0
      %5394 = vmatprep.mubr.bf16.mxu0 %v5118
      %5395 = vmatmul.mubr.bf16.gmra.mxu0 %v5117
      %v5396 = vpop.f32.mrf.mxu0
      %v5397 = vadd.f32 0.0, %v5396
      %v5398 = vpop.f32.mrf.mxu0
      %v5399 = vpop.f32.mrf.mxu0
      %v5400 = vadd.f32 0.0, %v5399
      %v5401 = vpop.f32.mrf.mxu0
      %5402 = vmatprep.mubr.bf16.mxu0 %v5121
      %5403 = vmatmul.mubr.bf16.gmra.mxu0 %v5120
      %v5404 = vpop.f32.mrf.mxu0
      %v5405 = vadd.f32 0.0, %v5404
      %v5406 = vpop.f32.mrf.mxu0
      %v5407 = vpop.f32.mrf.mxu0
      %v5408 = vadd.f32 0.0, %v5407
      %v5409 = vpop.f32.mrf.mxu0
      %5410 = vmatprep.mubr.bf16.mxu0 %v5124
      %5411 = vmatmul.mubr.bf16.gmra.mxu0 %v5123
      %v5412 = vpop.f32.mrf.mxu0
      %v5413 = vadd.f32 0.0, %v5412
      %v5414 = vpop.f32.mrf.mxu0
      %v5415 = vpop.f32.mrf.mxu0
      %v5416 = vadd.f32 0.0, %v5415
      %v5417 = vpop.f32.mrf.mxu0
      %5418 = vmatprep.mubr.bf16.mxu0 %v5127
      %5419 = vmatmul.mubr.bf16.gmra.mxu0 %v5126
      %v5420 = vpop.f32.mrf.mxu0
      %v5421 = vadd.f32 0.0, %v5420
      %v5422 = vpop.f32.mrf.mxu0
      %v5423 = vpop.f32.mrf.mxu0
      %v5424 = vadd.f32 0.0, %v5423
      %v5425 = vpop.f32.mrf.mxu0
      %5426 = vmatprep.mubr.bf16.mxu0 %v5130
      %5427 = vmatmul.mubr.bf16.gmra.mxu0 %v5129
      %v5428 = vpop.f32.mrf.mxu0
      %v5429 = vadd.f32 0.0, %v5428
      %v5430 = vpop.f32.mrf.mxu0
      %v5431 = vpop.f32.mrf.mxu0
      %v5432 = vadd.f32 0.0, %v5431
      %v5433 = vpop.f32.mrf.mxu0
      %5434 = vmatprep.mubr.bf16.mxu0 %v5133
      %5435 = vmatmul.mubr.bf16.gmra.mxu0 %v5132
      %v5436 = vpop.f32.mrf.mxu0
      %v5437 = vadd.f32 0.0, %v5436
      %v5438 = vpop.f32.mrf.mxu0
      %v5439 = vpop.f32.mrf.mxu0
      %v5440 = vadd.f32 0.0, %v5439
      %v5441 = vpop.f32.mrf.mxu0
      %5442 = vmatprep.mubr.bf16.mxu0 %v5136
      %5443 = vmatmul.mubr.bf16.gmra.mxu0 %v5135
      %v5444 = vpop.f32.mrf.mxu0
      %v5445 = vadd.f32 0.0, %v5444
      %v5446 = vpop.f32.mrf.mxu0
      %v5447 = vpop.f32.mrf.mxu0
      %v5448 = vadd.f32 0.0, %v5447
      %v5449 = vpop.f32.mrf.mxu0
      %5450 = vmatprep.mubr.bf16.mxu0 %v5139
      %5451 = vmatmul.mubr.bf16.gmra.mxu0 %v5138
      %v5452 = vpop.f32.mrf.mxu0
      %v5453 = vadd.f32 0.0, %v5452
      %v5454 = vpop.f32.mrf.mxu0
      %v5455 = vpop.f32.mrf.mxu0
      %v5456 = vadd.f32 0.0, %v5455
      %v5457 = vpop.f32.mrf.mxu0
      %5458 = vmatprep.mubr.bf16.mxu0 %v5142
      %5459 = vmatmul.mubr.bf16.gmra.mxu0 %v5141
      %v5460 = vpop.f32.mrf.mxu0
      %v5461 = vadd.f32 0.0, %v5460
      %v5462 = vpop.f32.mrf.mxu0
      %v5463 = vpop.f32.mrf.mxu0
      %v5464 = vadd.f32 0.0, %v5463
      %v5465 = vpop.f32.mrf.mxu0
      %5466 = vmatprep.mubr.bf16.mxu0 %v5145
      %5467 = vmatmul.mubr.bf16.gmra.mxu0 %v5144
      %v5468 = vpop.f32.mrf.mxu0
      %v5469 = vadd.f32 0.0, %v5468
      %v5470 = vpop.f32.mrf.mxu0
      %v5471 = vpop.f32.mrf.mxu0
      %v5472 = vadd.f32 0.0, %v5471
      %v5473 = vpop.f32.mrf.mxu0
      %5474 = vmatprep.mubr.bf16.mxu0 %v5148
      %5475 = vmatmul.mubr.bf16.gmra.mxu0 %v5147
      %v5476 = vpop.f32.mrf.mxu0
      %v5477 = vadd.f32 0.0, %v5476
      %v5478 = vpop.f32.mrf.mxu0
      %v5479 = vpop.f32.mrf.mxu0
      %v5480 = vadd.f32 0.0, %v5479
      %v5481 = vpop.f32.mrf.mxu0
      %5482 = vmatprep.mubr.bf16.mxu0 %v5151
      %5483 = vmatmul.mubr.bf16.gmra.mxu0 %v5150
      %v5484 = vpop.f32.mrf.mxu0
      %v5485 = vadd.f32 0.0, %v5484
      %v5486 = vpop.f32.mrf.mxu0
      %v5487 = vpop.f32.mrf.mxu0
      %v5488 = vadd.f32 0.0, %v5487
      %v5489 = vpop.f32.mrf.mxu0
      %5490 = vmatprep.mubr.bf16.mxu0 %v5154
      %5491 = vmatmul.mubr.bf16.gmra.mxu0 %v5153
      %v5492 = vpop.f32.mrf.mxu0
      %v5493 = vadd.f32 0.0, %v5492
      %v5494 = vpop.f32.mrf.mxu0
      %v5495 = vpop.f32.mrf.mxu0
      %v5496 = vadd.f32 0.0, %v5495
      %v5497 = vpop.f32.mrf.mxu0
      %5498 = vmatprep.mubr.bf16.mxu0 %v5157
      %5499 = vmatmul.mubr.bf16.gmra.mxu0 %v5156
      %v5500 = vpop.f32.mrf.mxu0
      %v5501 = vadd.f32 0.0, %v5500
      %v5502 = vpop.f32.mrf.mxu0
      %v5503 = vpop.f32.mrf.mxu0
      %v5504 = vadd.f32 0.0, %v5503
      %v5505 = vpop.f32.mrf.mxu0
      %5506 = vmatprep.mubr.bf16.mxu0 %v5160
      %5507 = vmatmul.mubr.bf16.gmra.mxu0 %v5159
      %v5508 = vpop.f32.mrf.mxu0
      %v5509 = vadd.f32 0.0, %v5508
      %v5510 = vpop.f32.mrf.mxu0
      %v5511 = vpop.f32.mrf.mxu0
      %v5512 = vadd.f32 0.0, %v5511
      %v5513 = vpop.f32.mrf.mxu0
      %5514 = vdwg.mxu0
      %5515 = vmatprep.subr.bf16.mxu0 0
      %5516 = vmatpush1.bf16.msra.mxu0 %v5329
      %5517 = vmatprep.subr.bf16.mxu0 0
      %5518 = vmatpush1.bf16.msra.mxu0 %v5328
      %5519 = vmatprep.subr.bf16.mxu0 0
      %5520 = vmatpush1.bf16.msra.mxu0 %v5327
      %5521 = vmatprep.subr.bf16.mxu0 0
      %5522 = vmatpush1.bf16.msra.mxu0 %v5326
      %5523 = vmatprep.subr.bf16.mxu0 0
      %5524 = vmatpush1.bf16.msra.mxu0 %v5325
      %5525 = vmatprep.subr.bf16.mxu0 0
      %5526 = vmatpush1.bf16.msra.mxu0 %v5324
      %5527 = vmatprep.subr.bf16.mxu0 0
      %5528 = vmatpush1.bf16.msra.mxu0 %v5323
      %5529 = vmatprep.subr.bf16.mxu0 0
      %5530 = vmatpush1.bf16.msra.mxu0 %v5322
      %5531 = vmatprep.subr.bf16.mxu0 0
      %5532 = vmatpush2.bf16.msra.mxu0 0
      %5533 = vmatprep.subr.bf16.mxu0 0
      %5534 = vmatpush2.bf16.msra.mxu0 0
      %5535 = vmatprep.subr.bf16.mxu0 0
      %5536 = vmatpush2.bf16.msra.mxu0 0
      %5537 = vmatprep.subr.bf16.mxu0 0
      %5538 = vmatpush2.bf16.msra.mxu0 0
      %5539 = vmatprep.subr.bf16.mxu0 0
      %5540 = vmatpush2.bf16.msra.mxu0 0
      %5541 = vmatprep.subr.bf16.mxu0 0
      %5542 = vmatpush2.bf16.msra.mxu0 0
      %5543 = vmatprep.subr.bf16.mxu0 0
      %5544 = vmatpush2.bf16.msra.mxu0 0
      %5545 = vmatprep.subr.bf16.mxu0 0
      %5546 = vmatpush2.bf16.msra.mxu0 0
      %5547 = vmatprep.mubr.bf16.mxu0 0
      %5548 = vmatmul.mubr.bf16.gmra.mxu0 %v5116
      %v5549 = vpop.f32.mrf.mxu0
      %v5550 = vadd.f32 %v5389, %v5549
      %v5551 = vpop.f32.mrf.mxu0
      %v5552 = vpop.f32.mrf.mxu0
      %v5553 = vadd.f32 %v5392, %v5552
      %v5554 = vpop.f32.mrf.mxu0
      %5555 = vmatprep.mubr.bf16.mxu0 0
      %5556 = vmatmul.mubr.bf16.gmra.mxu0 %v5119
      %v5557 = vpop.f32.mrf.mxu0
      %v5558 = vadd.f32 %v5397, %v5557
      %v5559 = vpop.f32.mrf.mxu0
      %v5560 = vpop.f32.mrf.mxu0
      %v5561 = vadd.f32 %v5400, %v5560
      %v5562 = vpop.f32.mrf.mxu0
      %5563 = vmatprep.mubr.bf16.mxu0 0
      %5564 = vmatmul.mubr.bf16.gmra.mxu0 %v5122
      %v5565 = vpop.f32.mrf.mxu0
      %v5566 = vadd.f32 %v5405, %v5565
      %v5567 = vpop.f32.mrf.mxu0
      %v5568 = vpop.f32.mrf.mxu0
      %v5569 = vadd.f32 %v5408, %v5568
      %v5570 = vpop.f32.mrf.mxu0
      %5571 = vmatprep.mubr.bf16.mxu0 0
      %5572 = vmatmul.mubr.bf16.gmra.mxu0 %v5125
      %v5573 = vpop.f32.mrf.mxu0
      %v5574 = vadd.f32 %v5413, %v5573
      %v5575 = vpop.f32.mrf.mxu0
      %v5576 = vpop.f32.mrf.mxu0
      %v5577 = vadd.f32 %v5416, %v5576
      %v5578 = vpop.f32.mrf.mxu0
      %5579 = vmatprep.mubr.bf16.mxu0 0
      %5580 = vmatmul.mubr.bf16.gmra.mxu0 %v5128
      %v5581 = vpop.f32.mrf.mxu0
      %v5582 = vadd.f32 %v5421, %v5581
      %v5583 = vpop.f32.mrf.mxu0
      %v5584 = vpop.f32.mrf.mxu0
      %v5585 = vadd.f32 %v5424, %v5584
      %v5586 = vpop.f32.mrf.mxu0
      %5587 = vmatprep.mubr.bf16.mxu0 0
      %5588 = vmatmul.mubr.bf16.gmra.mxu0 %v5131
      %v5589 = vpop.f32.mrf.mxu0
      %v5590 = vadd.f32 %v5429, %v5589
      %v5591 = vpop.f32.mrf.mxu0
      %v5592 = vpop.f32.mrf.mxu0
      %v5593 = vadd.f32 %v5432, %v5592
      %v5594 = vpop.f32.mrf.mxu0
      %5595 = vmatprep.mubr.bf16.mxu0 0
      %5596 = vmatmul.mubr.bf16.gmra.mxu0 %v5134
      %v5597 = vpop.f32.mrf.mxu0
      %v5598 = vadd.f32 %v5437, %v5597
      %v5599 = vpop.f32.mrf.mxu0
      %v5600 = vpop.f32.mrf.mxu0
      %v5601 = vadd.f32 %v5440, %v5600
      %v5602 = vpop.f32.mrf.mxu0
      %5603 = vmatprep.mubr.bf16.mxu0 0
      %5604 = vmatmul.mubr.bf16.gmra.mxu0 %v5137
      %v5605 = vpop.f32.mrf.mxu0
      %v5606 = vadd.f32 %v5445, %v5605
      %v5607 = vpop.f32.mrf.mxu0
      %v5608 = vpop.f32.mrf.mxu0
      %v5609 = vadd.f32 %v5448, %v5608
      %v5610 = vpop.f32.mrf.mxu0
      %5611 = vmatprep.mubr.bf16.mxu0 0
      %5612 = vmatmul.mubr.bf16.gmra.mxu0 %v5140
      %v5613 = vpop.f32.mrf.mxu0
      %v5614 = vadd.f32 %v5453, %v5613
      %v5615 = vpop.f32.mrf.mxu0
      %v5616 = vpop.f32.mrf.mxu0
      %v5617 = vadd.f32 %v5456, %v5616
      %v5618 = vpop.f32.mrf.mxu0
      %5619 = vmatprep.mubr.bf16.mxu0 0
      %5620 = vmatmul.mubr.bf16.gmra.mxu0 %v5143
      %v5621 = vpop.f32.mrf.mxu0
      %v5622 = vadd.f32 %v5461, %v5621
      %v5623 = vpop.f32.mrf.mxu0
      %v5624 = vpop.f32.mrf.mxu0
      %v5625 = vadd.f32 %v5464, %v5624
      %v5626 = vpop.f32.mrf.mxu0
      %5627 = vmatprep.mubr.bf16.mxu0 0
      %5628 = vmatmul.mubr.bf16.gmra.mxu0 %v5146
      %v5629 = vpop.f32.mrf.mxu0
      %v5630 = vadd.f32 %v5469, %v5629
      %v5631 = vpop.f32.mrf.mxu0
      %v5632 = vpop.f32.mrf.mxu0
      %v5633 = vadd.f32 %v5472, %v5632
      %v5634 = vpop.f32.mrf.mxu0
      %5635 = vmatprep.mubr.bf16.mxu0 0
      %5636 = vmatmul.mubr.bf16.gmra.mxu0 %v5149
      %v5637 = vpop.f32.mrf.mxu0
      %v5638 = vadd.f32 %v5477, %v5637
      %v5639 = vpop.f32.mrf.mxu0
      %v5640 = vpop.f32.mrf.mxu0
      %v5641 = vadd.f32 %v5480, %v5640
      %v5642 = vpop.f32.mrf.mxu0
      %5643 = vmatprep.mubr.bf16.mxu0 0
      %5644 = vmatmul.mubr.bf16.gmra.mxu0 %v5152
      %v5645 = vpop.f32.mrf.mxu0
      %v5646 = vadd.f32 %v5485, %v5645
      %v5647 = vpop.f32.mrf.mxu0
      %v5648 = vpop.f32.mrf.mxu0
      %v5649 = vadd.f32 %v5488, %v5648
      %v5650 = vpop.f32.mrf.mxu0
      %5651 = vmatprep.mubr.bf16.mxu0 0
      %5652 = vmatmul.mubr.bf16.gmra.mxu0 %v5155
      %v5653 = vpop.f32.mrf.mxu0
      %v5654 = vadd.f32 %v5493, %v5653
      %v5655 = vpop.f32.mrf.mxu0
      %v5656 = vpop.f32.mrf.mxu0
      %v5657 = vadd.f32 %v5496, %v5656
      %v5658 = vpop.f32.mrf.mxu0
      %5659 = vmatprep.mubr.bf16.mxu0 0
      %5660 = vmatmul.mubr.bf16.gmra.mxu0 %v5158
      %v5661 = vpop.f32.mrf.mxu0
      %v5662 = vadd.f32 %v5501, %v5661
      %v5663 = vpop.f32.mrf.mxu0
      %v5664 = vpop.f32.mrf.mxu0
      %v5665 = vadd.f32 %v5504, %v5664
      %v5666 = vpop.f32.mrf.mxu0
      %5667 = vmatprep.mubr.bf16.mxu0 0
      %5668 = vmatmul.mubr.bf16.gmra.mxu0 %v5161
      %v5669 = vpop.f32.mrf.mxu0
      %v5670 = vadd.f32 %v5509, %v5669
      %v5671 = vpop.f32.mrf.mxu0
      %v5672 = vpop.f32.mrf.mxu0
      %v5673 = vadd.f32 %v5512, %v5672
      %v5674 = vpop.f32.mrf.mxu0
      %5675 = vdwg.mxu0
      %v5676 = vadd.f32 %v3882, %v5550
      %v5677 = vadd.f32 %v3885, %v5553
      %v5678 = vadd.f32 %v3890, %v5558
      %v5679 = vadd.f32 %v3893, %v5561
      %v5680 = vadd.f32 %v3898, %v5566
      %v5681 = vadd.f32 %v3901, %v5569
      %v5682 = vadd.f32 %v3906, %v5574
      %v5683 = vadd.f32 %v3909, %v5577
      %v5684 = vadd.f32 %v3914, %v5582
      %v5685 = vadd.f32 %v3917, %v5585
      %v5686 = vadd.f32 %v3922, %v5590
      %v5687 = vadd.f32 %v3925, %v5593
      %v5688 = vadd.f32 %v3930, %v5598
      %v5689 = vadd.f32 %v3933, %v5601
      %v5690 = vadd.f32 %v3938, %v5606
      %v5691 = vadd.f32 %v3941, %v5609
      %v5692 = vadd.f32 %v3946, %v5614
      %v5693 = vadd.f32 %v3949, %v5617
      %v5694 = vadd.f32 %v3954, %v5622
      %v5695 = vadd.f32 %v3957, %v5625
      %v5696 = vadd.f32 %v3962, %v5630
      %v5697 = vadd.f32 %v3965, %v5633
      %v5698 = vadd.f32 %v3970, %v5638
      %v5699 = vadd.f32 %v3973, %v5641
      %v5700 = vadd.f32 %v3978, %v5646
      %v5701 = vadd.f32 %v3981, %v5649
      %v5702 = vadd.f32 %v3986, %v5654
      %v5703 = vadd.f32 %v3989, %v5657
      %v5704 = vadd.f32 %v3994, %v5662
      %v5705 = vadd.f32 %v3997, %v5665
      %v5706 = vadd.f32 %v4002, %v5670
      %v5707 = vadd.f32 %v4005, %v5673
      %v5708 = vld [vmem:[%s2] sm:$0x1]
      %v5710 = vlaneseq
      %v5711 = vshrl.u32 %v5710, 7
      %v5712 = vsub.s32 0, %v5711
      %v5713 = vrot.slane %v5708, %v5712
      %v5715 = vadd.f32 %v5676, %v5713
      %v5716 = vadd.f32 %v5677, %v5713
      %v5717 = vadd.f32 %v5678, %v5713
      %v5718 = vadd.f32 %v5679, %v5713
      %v5719 = vadd.f32 %v5680, %v5713
      %v5720 = vadd.f32 %v5681, %v5713
      %v5721 = vadd.f32 %v5682, %v5713
      %v5722 = vadd.f32 %v5683, %v5713
      %v5723 = vadd.f32 %v5684, %v5713
      %v5724 = vadd.f32 %v5685, %v5713
      %v5725 = vadd.f32 %v5686, %v5713
      %v5726 = vadd.f32 %v5687, %v5713
      %v5727 = vadd.f32 %v5688, %v5713
      %v5728 = vadd.f32 %v5689, %v5713
      %v5729 = vadd.f32 %v5690, %v5713
      %v5730 = vadd.f32 %v5691, %v5713
      %v5731 = vadd.f32 %v5692, %v5713
      %v5732 = vadd.f32 %v5693, %v5713
      %v5733 = vadd.f32 %v5694, %v5713
      %v5734 = vadd.f32 %v5695, %v5713
      %v5735 = vadd.f32 %v5696, %v5713
      %v5736 = vadd.f32 %v5697, %v5713
      %v5737 = vadd.f32 %v5698, %v5713
      %v5738 = vadd.f32 %v5699, %v5713
      %v5739 = vadd.f32 %v5700, %v5713
      %v5740 = vadd.f32 %v5701, %v5713
      %v5741 = vadd.f32 %v5702, %v5713
      %v5742 = vadd.f32 %v5703, %v5713
      %v5743 = vadd.f32 %v5704, %v5713
      %v5744 = vadd.f32 %v5705, %v5713
      %v5745 = vadd.f32 %v5706, %v5713
      %v5746 = vadd.f32 %v5707, %v5713
      %v5747 = vadd.f32 %v5715, %v5716
      %v5748 = vadd.f32 %v5747, %v5717
      %v5749 = vadd.f32 %v5748, %v5718
      %v5750 = vadd.f32 %v5749, %v5719
      %v5751 = vadd.f32 %v5750, %v5720
      %v5752 = vadd.f32 %v5751, %v5721
      %v5753 = vadd.f32 %v5752, %v5722
      %v5754 = vadd.f32 %v5753, %v5723
      %v5755 = vadd.f32 %v5754, %v5724
      %v5756 = vadd.f32 %v5755, %v5725
      %v5757 = vadd.f32 %v5756, %v5726
      %v5758 = vadd.f32 %v5757, %v5727
      %v5759 = vadd.f32 %v5758, %v5728
      %v5760 = vadd.f32 %v5759, %v5729
      %v5761 = vadd.f32 %v5760, %v5730
      %v5762 = vadd.f32 %v5761, %v5731
      %v5763 = vadd.f32 %v5762, %v5732
      %v5764 = vadd.f32 %v5763, %v5733
      %v5765 = vadd.f32 %v5764, %v5734
      %v5766 = vadd.f32 %v5765, %v5735
      %v5767 = vadd.f32 %v5766, %v5736
      %v5768 = vadd.f32 %v5767, %v5737
      %v5769 = vadd.f32 %v5768, %v5738
      %v5770 = vadd.f32 %v5769, %v5739
      %v5771 = vadd.f32 %v5770, %v5740
      %v5772 = vadd.f32 %v5771, %v5741
      %v5773 = vadd.f32 %v5772, %v5742
      %v5774 = vadd.f32 %v5773, %v5743
      %v5775 = vadd.f32 %v5774, %v5744
      %v5776 = vadd.f32 %v5775, %v5745
      %v5777 = vadd.f32 %v5776, %v5746
      %v5778 = vrot.slane %v5777, 4
      %v5779 = vadd.f32 %v5777, %v5778
      %v5780 = vrot.slane %v5779, 2
      %v5781 = vadd.f32 %v5779, %v5780
      %v5782 = vrot.slane %v5781, 1
      %v5783 = vadd.f32 %v5781, %v5782
      %v5784 = vmul.f32 %v5715, %v5715
      %v5785 = vmul.f32 %v5716, %v5716
      %v5786 = vmul.f32 %v5717, %v5717
      %v5787 = vmul.f32 %v5718, %v5718
      %v5788 = vmul.f32 %v5719, %v5719
      %v5789 = vmul.f32 %v5720, %v5720
      %v5790 = vmul.f32 %v5721, %v5721
      %v5791 = vmul.f32 %v5722, %v5722
      %v5792 = vmul.f32 %v5723, %v5723
      %v5793 = vmul.f32 %v5724, %v5724
      %v5794 = vmul.f32 %v5725, %v5725
      %v5795 = vmul.f32 %v5726, %v5726
      %v5796 = vmul.f32 %v5727, %v5727
      %v5797 = vmul.f32 %v5728, %v5728
      %v5798 = vmul.f32 %v5729, %v5729
      %v5799 = vmul.f32 %v5730, %v5730
      %v5800 = vmul.f32 %v5731, %v5731
      %v5801 = vmul.f32 %v5732, %v5732
      %v5802 = vmul.f32 %v5733, %v5733
      %v5803 = vmul.f32 %v5734, %v5734
      %v5804 = vmul.f32 %v5735, %v5735
      %v5805 = vmul.f32 %v5736, %v5736
      %v5806 = vmul.f32 %v5737, %v5737
      %v5807 = vmul.f32 %v5738, %v5738
      %v5808 = vmul.f32 %v5739, %v5739
      %v5809 = vmul.f32 %v5740, %v5740
      %v5810 = vmul.f32 %v5741, %v5741
      %v5811 = vmul.f32 %v5742, %v5742
      %v5812 = vmul.f32 %v5743, %v5743
      %v5813 = vmul.f32 %v5744, %v5744
      %v5814 = vmul.f32 %v5745, %v5745
      %v5815 = vmul.f32 %v5746, %v5746
      %v5816 = vadd.f32 %v5784, %v5785
      %v5817 = vadd.f32 %v5816, %v5786
      %v5818 = vadd.f32 %v5817, %v5787
      %v5819 = vadd.f32 %v5818, %v5788
      %v5820 = vadd.f32 %v5819, %v5789
      %v5821 = vadd.f32 %v5820, %v5790
      %v5822 = vadd.f32 %v5821, %v5791
      %v5823 = vadd.f32 %v5822, %v5792
      %v5824 = vadd.f32 %v5823, %v5793
      %v5825 = vadd.f32 %v5824, %v5794
      %v5826 = vadd.f32 %v5825, %v5795
      %v5827 = vadd.f32 %v5826, %v5796
      %v5828 = vadd.f32 %v5827, %v5797
      %v5829 = vadd.f32 %v5828, %v5798
      %v5830 = vadd.f32 %v5829, %v5799
      %v5831 = vadd.f32 %v5830, %v5800
      %v5832 = vadd.f32 %v5831, %v5801
      %v5833 = vadd.f32 %v5832, %v5802
      %v5834 = vadd.f32 %v5833, %v5803
      %v5835 = vadd.f32 %v5834, %v5804
      %v5836 = vadd.f32 %v5835, %v5805
      %v5837 = vadd.f32 %v5836, %v5806
      %v5838 = vadd.f32 %v5837, %v5807
      %v5839 = vadd.f32 %v5838, %v5808
      %v5840 = vadd.f32 %v5839, %v5809
      %v5841 = vadd.f32 %v5840, %v5810
      %v5842 = vadd.f32 %v5841, %v5811
      %v5843 = vadd.f32 %v5842, %v5812
      %v5844 = vadd.f32 %v5843, %v5813
      %v5845 = vadd.f32 %v5844, %v5814
      %v5846 = vadd.f32 %v5845, %v5815
      %v5847 = vrot.slane %v5846, 4
      %v5848 = vadd.f32 %v5846, %v5847
      %v5849 = vrot.slane %v5848, 2
      %v5850 = vadd.f32 %v5848, %v5849
      %v5851 = vrot.slane %v5850, 1
      %v5852 = vadd.f32 %v5850, %v5851
      %vm5853 = vcmask 1040384
      %v5854 = vsel %vm5853, %v5783, %v5852
      %5855 = vst [vmem:[%s208] sm:$0x3] %v5854
      %v5856 = vpack.c.bf16 %v5716, %v5715
      %v5857 = vpack.c.bf16 %v5718, %v5717
      %v5858 = vpack.c.bf16 %v5720, %v5719
      %v5859 = vpack.c.bf16 %v5722, %v5721
      %v5860 = vpack.c.bf16 %v5724, %v5723
      %v5861 = vpack.c.bf16 %v5726, %v5725
      %v5862 = vpack.c.bf16 %v5728, %v5727
      %v5863 = vpack.c.bf16 %v5730, %v5729
      %v5864 = vpack.c.bf16 %v5732, %v5731
      %v5865 = vpack.c.bf16 %v5734, %v5733
      %v5866 = vpack.c.bf16 %v5736, %v5735
      %v5867 = vpack.c.bf16 %v5738, %v5737
      %v5868 = vpack.c.bf16 %v5740, %v5739
      %v5869 = vpack.c.bf16 %v5742, %v5741
      %v5870 = vpack.c.bf16 %v5744, %v5743
      %v5871 = vpack.c.bf16 %v5746, %v5745
      %v5888 = vunpack.c.l.b16 %v5856
      %v5889 = vunpack.c.h.b16 %v5856
      %v5890 = vunpack.c.l.b16 %v5857
      %v5891 = vunpack.c.h.b16 %v5857
      %v5892 = vunpack.c.l.b16 %v5858
      %v5893 = vunpack.c.h.b16 %v5858
      %v5894 = vunpack.c.l.b16 %v5859
      %v5895 = vunpack.c.h.b16 %v5859
      %v5896 = vunpack.c.l.b16 %v5860
      %v5897 = vunpack.c.h.b16 %v5860
      %v5898 = vunpack.c.l.b16 %v5861
      %v5899 = vunpack.c.h.b16 %v5861
      %v5900 = vunpack.c.l.b16 %v5862
      %v5901 = vunpack.c.h.b16 %v5862
      %v5902 = vunpack.c.l.b16 %v5863
      %v5903 = vunpack.c.h.b16 %v5863
      %v5904 = vunpack.c.l.b16 %v5864
      %v5905 = vunpack.c.h.b16 %v5864
      %v5906 = vunpack.c.l.b16 %v5865
      %v5907 = vunpack.c.h.b16 %v5865
      %v5908 = vunpack.c.l.b16 %v5866
      %v5909 = vunpack.c.h.b16 %v5866
      %v5910 = vunpack.c.l.b16 %v5867
      %v5911 = vunpack.c.h.b16 %v5867
      %v5912 = vunpack.c.l.b16 %v5868
      %v5913 = vunpack.c.h.b16 %v5868
      %v5914 = vunpack.c.l.b16 %v5869
      %v5915 = vunpack.c.h.b16 %v5869
      %v5916 = vunpack.c.l.b16 %v5870
      %v5917 = vunpack.c.h.b16 %v5870
      %v5918 = vunpack.c.l.b16 %v5871
      %v5919 = vunpack.c.h.b16 %v5871
      %v5920 = vpack.c.b16 %v5888, %v5888
      %v5921 = vpack.c.b16 %v5889, %v5889
      %v5922 = vpack.c.b16 %v5890, %v5890
      %v5923 = vpack.c.b16 %v5891, %v5891
      %v5924 = vpack.c.b16 %v5892, %v5892
      %v5925 = vpack.c.b16 %v5893, %v5893
      %v5926 = vpack.c.b16 %v5894, %v5894
      %v5927 = vpack.c.b16 %v5895, %v5895
      %v5928 = vpack.c.b16 %v5896, %v5896
      %v5929 = vpack.c.b16 %v5897, %v5897
      %v5930 = vpack.c.b16 %v5898, %v5898
      %v5931 = vpack.c.b16 %v5899, %v5899
      %v5932 = vpack.c.b16 %v5900, %v5900
      %v5933 = vpack.c.b16 %v5901, %v5901
      %v5934 = vpack.c.b16 %v5902, %v5902
      %v5935 = vpack.c.b16 %v5903, %v5903
      %v5936 = vpack.c.b16 %v5904, %v5904
      %v5937 = vpack.c.b16 %v5905, %v5905
      %v5938 = vpack.c.b16 %v5906, %v5906
      %v5939 = vpack.c.b16 %v5907, %v5907
      %v5940 = vpack.c.b16 %v5908, %v5908
      %v5941 = vpack.c.b16 %v5909, %v5909
      %v5942 = vpack.c.b16 %v5910, %v5910
      %v5943 = vpack.c.b16 %v5911, %v5911
      %v5944 = vpack.c.b16 %v5912, %v5912
      %v5945 = vpack.c.b16 %v5913, %v5913
      %v5946 = vpack.c.b16 %v5914, %v5914
      %v5947 = vpack.c.b16 %v5915, %v5915
      %v5948 = vpack.c.b16 %v5916, %v5916
      %v5949 = vpack.c.b16 %v5917, %v5917
      %v5950 = vpack.c.b16 %v5918, %v5918
      %v5951 = vpack.c.b16 %v5919, %v5919
      %5984 = vst [vmem:[%s204] sm:$0xf] %v5920
      %5985 = vst [vmem:[%s204 + $0x4] sm:$0xf] %v5921
      %5986 = vst [vmem:[%s204 + $0x8] sm:$0xf] %v5922
      %5987 = vst [vmem:[%s204 + $0xc] sm:$0xf] %v5923
      %5988 = vst [vmem:[%s204 + $0x10] sm:$0xf] %v5924
      %5989 = vst [vmem:[%s204 + $0x14] sm:$0xf] %v5925
      %5990 = vst [vmem:[%s204 + $0x18] sm:$0xf] %v5926
      %5991 = vst [vmem:[%s204 + $0x1c] sm:$0xf] %v5927
      %5992 = vst [vmem:[%s204 + $0x20] sm:$0xf] %v5928
      %5993 = vst [vmem:[%s204 + $0x24] sm:$0xf] %v5929
      %5994 = vst [vmem:[%s204 + $0x28] sm:$0xf] %v5930
      %5995 = vst [vmem:[%s204 + $0x2c] sm:$0xf] %v5931
      %5996 = vst [vmem:[%s204 + $0x30] sm:$0xf] %v5932
      %5997 = vst [vmem:[%s204 + $0x34] sm:$0xf] %v5933
      %5998 = vst [vmem:[%s204 + $0x38] sm:$0xf] %v5934
      %5999 = vst [vmem:[%s204 + $0x3c] sm:$0xf] %v5935
      %6000 = vst [vmem:[%s204 + $0x40] sm:$0xf] %v5936
      %6001 = vst [vmem:[%s204 + $0x44] sm:$0xf] %v5937
      %6002 = vst [vmem:[%s204 + $0x48] sm:$0xf] %v5938
      %6003 = vst [vmem:[%s204 + $0x4c] sm:$0xf] %v5939
      %6004 = vst [vmem:[%s204 + $0x50] sm:$0xf] %v5940
      %6005 = vst [vmem:[%s204 + $0x54] sm:$0xf] %v5941
      %6006 = vst [vmem:[%s204 + $0x58] sm:$0xf] %v5942
      %6007 = vst [vmem:[%s204 + $0x5c] sm:$0xf] %v5943
      %6008 = vst [vmem:[%s204 + $0x60] sm:$0xf] %v5944
      %6009 = vst [vmem:[%s204 + $0x64] sm:$0xf] %v5945
      %6010 = vst [vmem:[%s204 + $0x68] sm:$0xf] %v5946
      %6011 = vst [vmem:[%s204 + $0x6c] sm:$0xf] %v5947
      %6012 = vst [vmem:[%s204 + $0x70] sm:$0xf] %v5948
      %6013 = vst [vmem:[%s204 + $0x74] sm:$0xf] %v5949
      %6014 = vst [vmem:[%s204 + $0x78] sm:$0xf] %v5950
      %6015 = vst [vmem:[%s204 + $0x7c] sm:$0xf] %v5951
      %p6016 = scmp.lt.s32.totalorder %s16, 1
      %s6017 = scalar_select %p6016, %s16, 1
      %s6018 = smul.addr %s6017, 32
      %s6019 = smul.addr %s6018, 4
      %s6020 = scalar_lea.vmem %s3, %s6019
      %p6021 = scmp.lt.s32.totalorder %s16, 1
      %s6022 = scalar_select %p6021, %s16, 1
      %s6023 = smul.addr %s6022, 2
      %s6024 = scalar_lea.vmem %s4, %s6023
      // Predicated region
      $region33: #{residual_block.3} parent=31 // pred_check
        %p6025 = pneg %p102
      $region34: #{residual_block.3} parent=31 // pred_check_branch
        %6027 = sbr.rel (%p6025) target = $region36
      $region35: #{residual_block.3} parent=31 // pred_region
        _
      $region36: #{residual_block.3} parent=31 // pred_fallthru
        _
      // Predicated region
      $region37: #{residual_block.3} parent=31 // pred_check
        %p6028 = pneg %p128
      $region38: #{residual_block.3} parent=31 // pred_check_branch
        %6030 = sbr.rel (%p6028) target = $region40
      $region39: #{residual_block.3} parent=31 // pred_region
        _
      $region40: #{residual_block.3} parent=31 // pred_fallthru
        _
    $region32: #{residual_block.3} parent=5 // pred_fallthru
      _
    %p6031 = scmp.le.s32.totalorder 2, %s11
    // Predicated region
    $region41: #{residual_block.3} parent=5 // pred_check
      %p6032 = pneg %p6031
    $region42: #{residual_block.3} parent=5 // pred_check_branch
      %6034 = sbr.rel (%p6032) target = $region44
    $region43: #{residual_block.3} parent=5 // pred_region
      %s6035 = ssub.s32 %s11, 2
      // Predicated region
      $region45: #{residual_block.3} parent=43 // pred_check
        %p6036 = pneg %p108
      $region46: #{residual_block.3} parent=43 // pred_check_branch
        %6038 = sbr.rel (%p6036) target = $region48
      $region47: #{residual_block.3} parent=43 // pred_region
        %p6039 = scmp.lt.s32.totalorder %s17, 1
        %s6040 = scalar_select %p6039, %s17, 1
        %s6041 = smul.addr %s6040, 32
        %s6042 = smul.addr %s6041, 4
        %s6043 = scalar_lea.vmem %s3, %s6042
      $region48: #{residual_block.3} parent=43 // pred_fallthru
        _
      // Predicated region
      $region49: #{residual_block.3} parent=43 // pred_check
        %p6044 = pneg %p134
      $region50: #{residual_block.3} parent=43 // pred_check_branch
        %6046 = sbr.rel (%p6044) target = $region52
      $region51: #{residual_block.3} parent=43 // pred_region
        %p6047 = scmp.lt.s32.totalorder %s17, 1
        %s6048 = scalar_select %p6047, %s17, 1
        %s6049 = smul.addr %s6048, 2
        %s6050 = scalar_lea.vmem %s4, %s6049
      $region52: #{residual_block.3} parent=43 // pred_fallthru
        _
    $region44: #{residual_block.3} parent=5 // pred_fallthru
      _
  $region6: #{residual_block.3} parent=0 // loop_footer
    %s15 = sadd.s32 1, %s11
  $region7: #{residual_block.3} parent=0 // loop_footer_branch
    %10 = sbr.rel target = $region3
  $region8: #{residual_block.3} parent=0 // loop_exit
    _

// kernel: residual_block.4
$region0: #{residual_block.4}
  #allocation0 [shape = 'u32[]', space=smem, size = 0x4, offset = 0x4, fixed_abs, tag = 'smem constant byte address 0x4 - core index']
  #allocation1 [shape = 'u32[144,128]{1,0:T(1,128)}', space=vmem, size = 0x12000, scoped, tag = 'internal scratch']
  #allocation2 [shape = 'bf16[18,18,128]{2,1,0:T(8,128)(2,1)}', space=vmem, size = 0x1b000, scoped, tag = 'scratch operand']
  #allocation3 [shape = 'bf16[256,384]{1,0:T(8,128)(2,1)}', space=vmem, size = 0x30000, scoped, tag = 'scratch operand']
  #allocation4 [shape = 'f32[1,1]{1,0:T(1,128)S(6)}', space=smem, size = 0x200, scoped, tag = 'scoped memory for residual_block.4']
  %s0 = inlined_call_operand.vmem [shape: bf16[2,16,16,128], index: 0, kind: input, shape index: {}]
  %s1 = inlined_call_operand.vmem [shape: f32[1,128], index: 1, kind: input, shape index: {}]
  %s2 = inlined_call_operand.vmem [shape: f32[1,128], index: 2, kind: input, shape index: {}]
  %s3 = inlined_call_operand.<no memory space> [shape: f32[1,1], index: 3, kind: input, shape index: {}]
  %s4 = inlined_call_operand.vmem [shape: bf16[3,384,128], index: 4, kind: input, shape index: {}]
  %s5 = inlined_call_operand.vmem [shape: f32[1,128], index: 5, kind: input, shape index: {}]
  %s6 = inlined_call_operand.vmem [shape: bf16[2,16,16,128], index: 6, kind: output, shape index: {0}]
  %s7 = inlined_call_operand.vmem [shape: f32[2,2,128], index: 7, kind: output, shape index: {1}]
  %8 = xla_tuple %s6, %s7
  %s9 = sld [smem:[#allocation0]]
  $region65: #{residual_block.4} parent=0
    _
  %s11 = ssub.s32 1, %s9
  %s12 = scalar_select 0, %s11, %s9
  %13 = sst [smem:[#allocation4]] %s3
  loop: start=0, step=1, limit=4
  $region2: #{residual_block.4} parent=0 // loop_pre_header
    _
  $region3: #{residual_block.4} parent=0 // loop_header
    %s15 = sphi 0, %s19
    %p16 = scmp.ge.s32.totalorder %s15, 4
    %s25 = sphi 0, %s27
    %s28 = sphi 0, %s25
    %s29 = sphi 0, %s28
    %s45 = sphi 0, %s29
    %s49 = sphi 0, %s49
    %s51 = sphi 0, %s49
    %s52 = sphi 0, %s51
    %s66 = sphi 0, %s52
    %s70 = sphi 0, %s70
    %s72 = sphi 0, %s70
    %s73 = sphi 0, %s72
    %s87 = sphi 0, %s73
    %s91 = sphi 0, %s91
    %s93 = sphi 0, %s91
    %s94 = sphi 0, %s93
    %s108 = sphi 0, %s94
    %s112 = sphi 0, %s112
    %s114 = sphi 0, %s112
    %s115 = sphi 0, %s114
    %s129 = sphi 0, %s115
    %s133 = sphi 0, %s133
    %s135 = sphi 0, %s133
    %s136 = sphi 0, %s135
    %s150 = sphi 0, %s136
    %s156 = sphi 0, %s158
    %s159 = sphi 0, %s156
    %s160 = sphi 0, %s159
    %s176 = sphi 0, %s160
    %s182 = sphi 0, %s184
    %s185 = sphi 0, %s182
    %s186 = sphi 0, %s185
    %s202 = sphi 0, %s186
  $region4: #{residual_block.4} parent=0 // loop_header_branch
    %18 = sbr.rel (%p16) target = $region8
  $region5: #{residual_block.4} parent=0 // loop_body
    %s20 = ssub.s32 %s15, 1
    %s21 = ssub.s32 %s15, 2
    %s22 = sadd.s32 %s15, 1
    %s23 = ssub.s32 %s15, %s22
    %p24 = scmp.eq.s32.totalorder %s23, 0
    %s26 = sadd.s32 %s25, 1
    %s27 = scalar_select %p24, %s25, %s26
    %p30 = pneg %p24
    %p31 = scmp.eq.s32.totalorder %s15, 1
    %p32 = por %p30, %p31
    %p33 = scmp.ne.s32.totalorder %s25, %s28
    %p34 = scmp.eq.s32.totalorder %s15, 0
    %p35 = por %p33, %p34
    %p36 = scmp.ne.s32.totalorder %s25, %s28
    %p37 = scmp.eq.s32.totalorder %s20, 1
    %p38 = por %p36, %p37
    %p39 = scmp.ne.s32.totalorder %s28, %s29
    %p40 = scmp.eq.s32.totalorder %s20, 0
    %p41 = por %p39, %p40
    %p42 = scmp.ne.s32.totalorder %s28, %s29
    %p43 = scmp.eq.s32.totalorder %s21, 1
    %p44 = por %p42, %p43
    %p46 = scmp.ne.s32.totalorder %s29, %s45
    %p47 = scmp.eq.s32.totalorder %s21, 0
    %p48 = por %p46, %p47
    %s50 = sadd.s32 %s49, 1
    %p53 = scmp.eq.s32.totalorder %s15, 1
    %p54 = scmp.ne.s32.totalorder %s49, %s51
    %p55 = scmp.eq.s32.totalorder %s15, 0
    %p56 = por %p54, %p55
    %p57 = scmp.ne.s32.totalorder %s49, %s51
    %p58 = scmp.eq.s32.totalorder %s20, 1
    %p59 = por %p57, %p58
    %p60 = scmp.ne.s32.totalorder %s51, %s52
    %p61 = scmp.eq.s32.totalorder %s20, 0
    %p62 = por %p60, %p61
    %p63 = scmp.ne.s32.totalorder %s51, %s52
    %p64 = scmp.eq.s32.totalorder %s21, 1
    %p65 = por %p63, %p64
    %p67 = scmp.ne.s32.totalorder %s52, %s66
    %p68 = scmp.eq.s32.totalorder %s21, 0
    %p69 = por %p67, %p68
    %s71 = sadd.s32 %s70, 1
    %p74 = scmp.eq.s32.totalorder %s15, 1
    %p75 = scmp.ne.s32.totalorder %s70, %s72
    %p76 = scmp.eq.s32.totalorder %s15, 0
    %p77 = por %p75, %p76
    %p78 = scmp.ne.s32.totalorder %s70, %s72
    %p79 = scmp.eq.s32.totalorder %s20, 1
    %p80 = por %p78, %p79
    %p81 = scmp.ne.s32.totalorder %s72, %s73
    %p82 = scmp.eq.s32.totalorder %s20, 0
    %p83 = por %p81, %p82
    %p84 = scmp.ne.s32.totalorder %s72, %s73
    %p85 = scmp.eq.s32.totalorder %s21, 1
    %p86 = por %p84, %p85
    %p88 = scmp.ne.s32.totalorder %s73, %s87
    %p89 = scmp.eq.s32.totalorder %s21, 0
    %p90 = por %p88, %p89
    %s92 = sadd.s32 %s91, 1
    %p95 = scmp.eq.s32.totalorder %s15, 1
    %p96 = scmp.ne.s32.totalorder %s91, %s93
    %p97 = scmp.eq.s32.totalorder %s15, 0
    %p98 = por %p96, %p97
    %p99 = scmp.ne.s32.totalorder %s91, %s93
    %p100 = scmp.eq.s32.totalorder %s20, 1
    %p101 = por %p99, %p100
    %p102 = scmp.ne.s32.totalorder %s93, %s94
    %p103 = scmp.eq.s32.totalorder %s20, 0
    %p104 = por %p102, %p103
    %p105 = scmp.ne.s32.totalorder %s93, %s94
    %p106 = scmp.eq.s32.totalorder %s21, 1
    %p107 = por %p105, %p106
    %p109 = scmp.ne.s32.totalorder %s94, %s108
    %p110 = scmp.eq.s32.totalorder %s21, 0
    %p111 = por %p109, %p110
    %s113 = sadd.s32 %s112, 1
    %p116 = scmp.eq.s32.totalorder %s15, 1
    %p117 = scmp.ne.s32.totalorder %s112, %s114
    %p118 = scmp.eq.s32.totalorder %s15, 0
    %p119 = por %p117, %p118
    %p120 = scmp.ne.s32.totalorder %s112, %s114
    %p121 = scmp.eq.s32.totalorder %s20, 1
    %p122 = por %p120, %p121
    %p123 = scmp.ne.s32.totalorder %s114, %s115
    %p124 = scmp.eq.s32.totalorder %s20, 0
    %p125 = por %p123, %p124
    %p126 = scmp.ne.s32.totalorder %s114, %s115
    %p127 = scmp.eq.s32.totalorder %s21, 1
    %p128 = por %p126, %p127
    %p130 = scmp.ne.s32.totalorder %s115, %s129
    %p131 = scmp.eq.s32.totalorder %s21, 0
    %p132 = por %p130, %p131
    %s134 = sadd.s32 %s133, 1
    %p137 = scmp.eq.s32.totalorder %s15, 1
    %p138 = scmp.ne.s32.totalorder %s133, %s135
    %p139 = scmp.eq.s32.totalorder %s15, 0
    %p140 = por %p138, %p139
    %p141 = scmp.ne.s32.totalorder %s133, %s135
    %p142 = scmp.eq.s32.totalorder %s20, 1
    %p143 = por %p141, %p142
    %p144 = scmp.ne.s32.totalorder %s135, %s136
    %p145 = scmp.eq.s32.totalorder %s20, 0
    %p146 = por %p144, %p145
    %p147 = scmp.ne.s32.totalorder %s135, %s136
    %p148 = scmp.eq.s32.totalorder %s21, 1
    %p149 = por %p147, %p148
    %p151 = scmp.ne.s32.totalorder %s136, %s150
    %p152 = scmp.eq.s32.totalorder %s21, 0
    %p153 = por %p151, %p152
    %s154 = ssub.s32 %s15, %s22
    %p155 = scmp.eq.s32.totalorder %s154, 0
    %s157 = sadd.s32 %s156, 1
    %s158 = scalar_select %p155, %s156, %s157
    %p161 = pneg %p155
    %p162 = scmp.eq.s32.totalorder %s15, 1
    %p163 = por %p161, %p162
    %p164 = scmp.ne.s32.totalorder %s156, %s159
    %p165 = scmp.eq.s32.totalorder %s15, 0
    %p166 = por %p164, %p165
    %p167 = scmp.ne.s32.totalorder %s156, %s159
    %p168 = scmp.eq.s32.totalorder %s20, 1
    %p169 = por %p167, %p168
    %p170 = scmp.ne.s32.totalorder %s159, %s160
    %p171 = scmp.eq.s32.totalorder %s20, 0
    %p172 = por %p170, %p171
    %p173 = scmp.ne.s32.totalorder %s159, %s160
    %p174 = scmp.eq.s32.totalorder %s21, 1
    %p175 = por %p173, %p174
    %p177 = scmp.ne.s32.totalorder %s160, %s176
    %p178 = scmp.eq.s32.totalorder %s21, 0
    %p179 = por %p177, %p178
    %s180 = ssub.s32 %s15, %s22
    %p181 = scmp.eq.s32.totalorder %s180, 0
    %s183 = sadd.s32 %s182, 1
    %s184 = scalar_select %p181, %s182, %s183
    %p187 = pneg %p181
    %p188 = scmp.eq.s32.totalorder %s15, 1
    %p189 = por %p187, %p188
    %p190 = scmp.ne.s32.totalorder %s182, %s185
    %p191 = scmp.eq.s32.totalorder %s15, 0
    %p192 = por %p190, %p191
    %p193 = scmp.ne.s32.totalorder %s182, %s185
    %p194 = scmp.eq.s32.totalorder %s20, 1
    %p195 = por %p193, %p194
    %p196 = scmp.ne.s32.totalorder %s185, %s186
    %p197 = scmp.eq.s32.totalorder %s20, 0
    %p198 = por %p196, %p197
    %p199 = scmp.ne.s32.totalorder %s185, %s186
    %p200 = scmp.eq.s32.totalorder %s21, 1
    %p201 = por %p199, %p200
    %p203 = scmp.ne.s32.totalorder %s186, %s202
    %p204 = scmp.eq.s32.totalorder %s21, 0
    %p205 = por %p203, %p204
    %p206 = scmp.le.s32.totalorder 1, %s15
    %p207 = scmp.lt.s32.totalorder %s15, 3
    %p208 = pnand %p206, %p207
    %p209 = pneg %p208
    // Predicated region
    $region9: #{residual_block.4} parent=5 // pred_check
      _
    $region10: #{residual_block.4} parent=5 // pred_check_branch
      %211 = sbr.rel (%p208) target = $region12
    $region11: #{residual_block.4} parent=5 // pred_region
      %s212 = ssub.s32 %s15, 1
      // Predicated region
      $region13: #{residual_block.4} parent=11 // pred_check
        %p213 = pneg %p62
      $region14: #{residual_block.4} parent=11 // pred_check_branch
        %215 = sbr.rel (%p213) target = $region16
      $region15: #{residual_block.4} parent=11 // pred_region
        _
      $region16: #{residual_block.4} parent=11 // pred_fallthru
        _
      // Predicated region
      $region17: #{residual_block.4} parent=11 // pred_check
        %p216 = pneg %p83
      $region18: #{residual_block.4} parent=11 // pred_check_branch
        %218 = sbr.rel (%p216) target = $region20
      $region19: #{residual_block.4} parent=11 // pred_region
        _
      $region20: #{residual_block.4} parent=11 // pred_fallthru
        _
      // Predicated region
      $region21: #{residual_block.4} parent=11 // pred_check
        %p219 = pneg %p104
      $region22: #{residual_block.4} parent=11 // pred_check_branch
        %221 = sbr.rel (%p219) target = $region24
      $region23: #{residual_block.4} parent=11 // pred_region
        _
      $region24: #{residual_block.4} parent=11 // pred_fallthru
        _
      // Predicated region
      $region25: #{residual_block.4} parent=11 // pred_check
        %p222 = pneg %p125
      $region26: #{residual_block.4} parent=11 // pred_check_branch
        %224 = sbr.rel (%p222) target = $region28
      $region27: #{residual_block.4} parent=11 // pred_region
        _
      $region28: #{residual_block.4} parent=11 // pred_fallthru
        _
      // Predicated region
      $region29: #{residual_block.4} parent=11 // pred_check
        %p225 = pneg %p146
      $region30: #{residual_block.4} parent=11 // pred_check_branch
        %227 = sbr.rel (%p225) target = $region32
      $region31: #{residual_block.4} parent=11 // pred_region
        _
      $region32: #{residual_block.4} parent=11 // pred_fallthru
        _
    $region12: #{residual_block.4} parent=5 // pred_fallthru
      _
    %p228 = scmp.lt.s32.totalorder %s15, 2
    // Predicated region
    $region33: #{residual_block.4} parent=5 // pred_check
      %p229 = pneg %p228
    $region34: #{residual_block.4} parent=5 // pred_check_branch
      %231 = sbr.rel (%p229) target = $region36
    $region35: #{residual_block.4} parent=5 // pred_region
      // Predicated region
      $region37: #{residual_block.4} parent=35 // pred_check
        %p232 = pneg %p35
      $region38: #{residual_block.4} parent=35 // pred_check_branch
        %234 = sbr.rel (%p232) target = $region40
      $region39: #{residual_block.4} parent=35 // pred_region
        %p235 = scmp.lt.s32.totalorder %s15, 1
        %s236 = scalar_select %p235, %s15, 1
        %s237 = smul.addr %s236, 32
        %s238 = smul.addr %s237, 4
        %s239 = scalar_lea.vmem %s0, %s238
      $region40: #{residual_block.4} parent=35 // pred_fallthru
        _
    $region36: #{residual_block.4} parent=5 // pred_fallthru
      _
    %p240 = scmp.le.s32.totalorder 1, %s15
    %p241 = scmp.lt.s32.totalorder %s15, 3
    %p242 = pnand %p240, %p241
    %p243 = pneg %p242
    // Predicated region
    $region41: #{residual_block.4} parent=5 // pred_check
      _
    $region42: #{residual_block.4} parent=5 // pred_check_branch
      %245 = sbr.rel (%p242) target = $region44
    $region43: #{residual_block.4} parent=5 // pred_region
      %s246 = ssub.s32 %s15, 1
      %p247 = scmp.lt.s32.totalorder %s20, 1
      %s248 = scalar_select %p247, %s20, 1
      %s249 = smul.addr %s248, 32
      %s250 = smul.addr %s249, 4
      %s251 = scalar_lea.vmem %s0, %s250
      %p252 = pneg %p41
      %p253 = pneg %p38
      %p254 = pneg %p62
      %p255 = pneg %p59
      %p256 = pneg %p83
      %p257 = pneg %p80
      %p258 = pneg %p104
      %p259 = pneg %p101
      %p260 = pneg %p125
      %p261 = pneg %p122
      %p262 = pneg %p146
      %p263 = pneg %p143
      %p264 = pneg %p172
      %p265 = pneg %p169
      %p266 = scmp.lt.s32.totalorder %s20, 1
      %s267 = scalar_select %p266, %s20, 1
      %s268 = smul.addr %s267, 32
      %s269 = smul.addr %s268, 4
      %s270 = scalar_lea.vmem %s6, %s269
      %p271 = pneg %p198
      %p272 = pneg %p195
      %p273 = scmp.lt.s32.totalorder %s20, 1
      %s274 = scalar_select %p273, %s20, 1
      %s275 = smul.addr %s274, 2
      %s276 = scalar_lea.vmem %s7, %s275
      %p277 = scmp.lt.s32.totalorder %s20, 1
      %s278 = scalar_select %p277, %s20, 1
      %s279 = smul.addr %s278, 32
      %s280 = smul.addr %s279, 4
      %s281 = scalar_lea.vmem %s0, %s280
      %p282 = scmp.lt.s32.totalorder %s20, 1
      %s283 = scalar_select %p282, %s20, 1
      %s284 = smul.addr %s283, 32
      %s285 = smul.addr %s284, 4
      %s286 = scalar_lea.vmem %s6, %s285
      %p287 = scmp.lt.s32.totalorder %s20, 1
      %s288 = scalar_select %p287, %s20, 1
      %s289 = smul.addr %s288, 2
      %s290 = scalar_lea.vmem %s7, %s289
      %s292 = sld [smem:[#allocation4]]
      %v293 = vld [vmem:[%s281] sm:$0xf]
      %v294 = vld [vmem:[%s281 + $0x4] sm:$0xf]
      %v295 = vld [vmem:[%s281 + $0x8] sm:$0xf]
      %v296 = vld [vmem:[%s281 + $0xc] sm:$0xf]
      %v297 = vld [vmem:[%s281 + $0x10] sm:$0xf]
      %v298 = vld [vmem:[%s281 + $0x14] sm:$0xf]
      %v299 = vld [vmem:[%s281 + $0x18] sm:$0xf]
      %v300 = vld [vmem:[%s281 + $0x1c] sm:$0xf]
      %v301 = vld [vmem:[%s281 + $0x20] sm:$0xf]
      %v302 = vld [vmem:[%s281 + $0x24] sm:$0xf]
      %v303 = vld [vmem:[%s281 + $0x28] sm:$0xf]
      %v304 = vld [vmem:[%s281 + $0x2c] sm:$0xf]
      %v305 = vld [vmem:[%s281 + $0x30] sm:$0xf]
      %v306 = vld [vmem:[%s281 + $0x34] sm:$0xf]
      %v307 = vld [vmem:[%s281 + $0x38] sm:$0xf]
      %v308 = vld [vmem:[%s281 + $0x3c] sm:$0xf]
      %v309 = vld [vmem:[%s281 + $0x40] sm:$0xf]
      %v310 = vld [vmem:[%s281 + $0x44] sm:$0xf]
      %v311 = vld [vmem:[%s281 + $0x48] sm:$0xf]
      %v312 = vld [vmem:[%s281 + $0x4c] sm:$0xf]
      %v313 = vld [vmem:[%s281 + $0x50] sm:$0xf]
      %v314 = vld [vmem:[%s281 + $0x54] sm:$0xf]
      %v315 = vld [vmem:[%s281 + $0x58] sm:$0xf]
      %v316 = vld [vmem:[%s281 + $0x5c] sm:$0xf]
      %v317 = vld [vmem:[%s281 + $0x60] sm:$0xf]
      %v318 = vld [vmem:[%s281 + $0x64] sm:$0xf]
      %v319 = vld [vmem:[%s281 + $0x68] sm:$0xf]
      %v320 = vld [vmem:[%s281 + $0x6c] sm:$0xf]
      %v321 = vld [vmem:[%s281 + $0x70] sm:$0xf]
      %v322 = vld [vmem:[%s281 + $0x74] sm:$0xf]
      %v323 = vld [vmem:[%s281 + $0x78] sm:$0xf]
      %v324 = vld [vmem:[%s281 + $0x7c] sm:$0xf]
      %v325 = vunpack.c.l.bf16 %v293
      %v326 = vunpack.c.l.bf16 %v294
      %v327 = vunpack.c.l.bf16 %v295
      %v328 = vunpack.c.l.bf16 %v296
      %v329 = vunpack.c.l.bf16 %v297
      %v330 = vunpack.c.l.bf16 %v298
      %v331 = vunpack.c.l.bf16 %v299
      %v332 = vunpack.c.l.bf16 %v300
      %v333 = vunpack.c.l.bf16 %v301
      %v334 = vunpack.c.l.bf16 %v302
      %v335 = vunpack.c.l.bf16 %v303
      %v336 = vunpack.c.l.bf16 %v304
      %v337 = vunpack.c.l.bf16 %v305
      %v338 = vunpack.c.l.bf16 %v306
      %v339 = vunpack.c.l.bf16 %v307
      %v340 = vunpack.c.l.bf16 %v308
      %v341 = vunpack.c.l.bf16 %v309
      %v342 = vunpack.c.l.bf16 %v310
      %v343 = vunpack.c.l.bf16 %v311
      %v344 = vunpack.c.l.bf16 %v312
      %v345 = vunpack.c.l.bf16 %v313
      %v346 = vunpack.c.l.bf16 %v314
      %v347 = vunpack.c.l.bf16 %v315
      %v348 = vunpack.c.l.bf16 %v316
      %v349 = vunpack.c.l.bf16 %v317
      %v350 = vunpack.c.l.bf16 %v318
      %v351 = vunpack.c.l.bf16 %v319
      %v352 = vunpack.c.l.bf16 %v320
      %v353 = vunpack.c.l.bf16 %v321
      %v354 = vunpack.c.l.bf16 %v322
      %v355 = vunpack.c.l.bf16 %v323
      %v356 = vunpack.c.l.bf16 %v324
      %v357 = vld [vmem:[%s1] sm:$0x1]
      %v359 = vlaneseq
      %v360 = vshrl.u32 %v359, 7
      %v361 = vsub.s32 0, %v360
      %v362 = vrot.slane %v357, %v361
      %v364 = vmul.f32 %v325, %v362
      %v365 = vmul.f32 %v326, %v362
      %v366 = vmul.f32 %v327, %v362
      %v367 = vmul.f32 %v328, %v362
      %v368 = vmul.f32 %v329, %v362
      %v369 = vmul.f32 %v330, %v362
      %v370 = vmul.f32 %v331, %v362
      %v371 = vmul.f32 %v332, %v362
      %v372 = vmul.f32 %v333, %v362
      %v373 = vmul.f32 %v334, %v362
      %v374 = vmul.f32 %v335, %v362
      %v375 = vmul.f32 %v336, %v362
      %v376 = vmul.f32 %v337, %v362
      %v377 = vmul.f32 %v338, %v362
      %v378 = vmul.f32 %v339, %v362
      %v379 = vmul.f32 %v340, %v362
      %v380 = vmul.f32 %v341, %v362
      %v381 = vmul.f32 %v342, %v362
      %v382 = vmul.f32 %v343, %v362
      %v383 = vmul.f32 %v344, %v362
      %v384 = vmul.f32 %v345, %v362
      %v385 = vmul.f32 %v346, %v362
      %v386 = vmul.f32 %v347, %v362
      %v387 = vmul.f32 %v348, %v362
      %v388 = vmul.f32 %v349, %v362
      %v389 = vmul.f32 %v350, %v362
      %v390 = vmul.f32 %v351, %v362
      %v391 = vmul.f32 %v352, %v362
      %v392 = vmul.f32 %v353, %v362
      %v393 = vmul.f32 %v354, %v362
      %v394 = vmul.f32 %v355, %v362
      %v395 = vmul.f32 %v356, %v362
      %v396 = vld [vmem:[%s2] sm:$0x1]
      %v398 = vlaneseq
      %v399 = vshrl.u32 %v398, 7
      %v400 = vsub.s32 0, %v399
      %v401 = vrot.slane %v396, %v400
      %v403 = vadd.f32 %v364, %v401
      %v404 = vadd.f32 %v365, %v401
      %v405 = vadd.f32 %v366, %v401
      %v406 = vadd.f32 %v367, %v401
      %v407 = vadd.f32 %v368, %v401
      %v408 = vadd.f32 %v369, %v401
      %v409 = vadd.f32 %v370, %v401
      %v410 = vadd.f32 %v371, %v401
      %v411 = vadd.f32 %v372, %v401
      %v412 = vadd.f32 %v373, %v401
      %v413 = vadd.f32 %v374, %v401
      %v414 = vadd.f32 %v375, %v401
      %v415 = vadd.f32 %v376, %v401
      %v416 = vadd.f32 %v377, %v401
      %v417 = vadd.f32 %v378, %v401
      %v418 = vadd.f32 %v379, %v401
      %v419 = vadd.f32 %v380, %v401
      %v420 = vadd.f32 %v381, %v401
      %v421 = vadd.f32 %v382, %v401
      %v422 = vadd.f32 %v383, %v401
      %v423 = vadd.f32 %v384, %v401
      %v424 = vadd.f32 %v385, %v401
      %v425 = vadd.f32 %v386, %v401
      %v426 = vadd.f32 %v387, %v401
      %v427 = vadd.f32 %v388, %v401
      %v428 = vadd.f32 %v389, %v401
      %v429 = vadd.f32 %v390, %v401
      %v430 = vadd.f32 %v391, %v401
      %v431 = vadd.f32 %v392, %v401
      %v432 = vadd.f32 %v393, %v401
      %v433 = vadd.f32 %v394, %v401
      %v434 = vadd.f32 %v395, %v401
      %vm435 = vcmp.gt.f32.partialorder %v403, 0.0
      %vm436 = vcmp.gt.f32.partialorder %v404, 0.0
      %vm437 = vcmp.gt.f32.partialorder %v405, 0.0
      %vm438 = vcmp.gt.f32.partialorder %v406, 0.0
      %vm439 = vcmp.gt.f32.partialorder %v407, 0.0
      %vm440 = vcmp.gt.f32.partialorder %v408, 0.0
      %vm441 = vcmp.gt.f32.partialorder %v409, 0.0
      %vm442 = vcmp.gt.f32.partialorder %v410, 0.0
      %vm443 = vcmp.gt.f32.partialorder %v411, 0.0
      %vm444 = vcmp.gt.f32.partialorder %v412, 0.0
      %vm445 = vcmp.gt.f32.partialorder %v413, 0.0
      %vm446 = vcmp.gt.f32.partialorder %v414, 0.0
      %vm447 = vcmp.gt.f32.partialorder %v415, 0.0
      %vm448 = vcmp.gt.f32.partialorder %v416, 0.0
      %vm449 = vcmp.gt.f32.partialorder %v417, 0.0
      %vm450 = vcmp.gt.f32.partialorder %v418, 0.0
      %vm451 = vcmp.gt.f32.partialorder %v419, 0.0
      %vm452 = vcmp.gt.f32.partialorder %v420, 0.0
      %vm453 = vcmp.gt.f32.partialorder %v421, 0.0
      %vm454 = vcmp.gt.f32.partialorder %v422, 0.0
      %vm455 = vcmp.gt.f32.partialorder %v423, 0.0
      %vm456 = vcmp.gt.f32.partialorder %v424, 0.0
      %vm457 = vcmp.gt.f32.partialorder %v425, 0.0
      %vm458 = vcmp.gt.f32.partialorder %v426, 0.0
      %vm459 = vcmp.gt.f32.partialorder %v427, 0.0
      %vm460 = vcmp.gt.f32.partialorder %v428, 0.0
      %vm461 = vcmp.gt.f32.partialorder %v429, 0.0
      %vm462 = vcmp.gt.f32.partialorder %v430, 0.0
      %vm463 = vcmp.gt.f32.partialorder %v431, 0.0
      %vm464 = vcmp.gt.f32.partialorder %v432, 0.0
      %vm465 = vcmp.gt.f32.partialorder %v433, 0.0
      %vm466 = vcmp.gt.f32.partialorder %v434, 0.0
      %v467 = vstv %s292
      %v468 = vmul.f32 %v467, %v403
      %v469 = vmul.f32 %v467, %v404
      %v470 = vmul.f32 %v467, %v405
      %v471 = vmul.f32 %v467, %v406
      %v472 = vmul.f32 %v467, %v407
      %v473 = vmul.f32 %v467, %v408
      %v474 = vmul.f32 %v467, %v409
      %v475 = vmul.f32 %v467, %v410
      %v476 = vmul.f32 %v467, %v411
      %v477 = vmul.f32 %v467, %v412
      %v478 = vmul.f32 %v467, %v413
      %v479 = vmul.f32 %v467, %v414
      %v480 = vmul.f32 %v467, %v415
      %v481 = vmul.f32 %v467, %v416
      %v482 = vmul.f32 %v467, %v417
      %v483 = vmul.f32 %v467, %v418
      %v484 = vmul.f32 %v467, %v419
      %v485 = vmul.f32 %v467, %v420
      %v486 = vmul.f32 %v467, %v421
      %v487 = vmul.f32 %v467, %v422
      %v488 = vmul.f32 %v467, %v423
      %v489 = vmul.f32 %v467, %v424
      %v490 = vmul.f32 %v467, %v425
      %v491 = vmul.f32 %v467, %v426
      %v492 = vmul.f32 %v467, %v427
      %v493 = vmul.f32 %v467, %v428
      %v494 = vmul.f32 %v467, %v429
      %v495 = vmul.f32 %v467, %v430
      %v496 = vmul.f32 %v467, %v431
      %v497 = vmul.f32 %v467, %v432
      %v498 = vmul.f32 %v467, %v433
      %v499 = vmul.f32 %v467, %v434
      %v500 = vsel %vm435, %v403, %v468
      %v501 = vsel %vm436, %v404, %v469
      %v502 = vsel %vm437, %v405, %v470
      %v503 = vsel %vm438, %v406, %v471
      %v504 = vsel %vm439, %v407, %v472
      %v505 = vsel %vm440, %v408, %v473
      %v506 = vsel %vm441, %v409, %v474
      %v507 = vsel %vm442, %v410, %v475
      %v508 = vsel %vm443, %v411, %v476
      %v509 = vsel %vm444, %v412, %v477
      %v510 = vsel %vm445, %v413, %v478
      %v511 = vsel %vm446, %v414, %v479
      %v512 = vsel %vm447, %v415, %v480
      %v513 = vsel %vm448, %v416, %v481
      %v514 = vsel %vm449, %v417, %v482
      %v515 = vsel %vm450, %v418, %v483
      %v516 = vsel %vm451, %v419, %v484
      %v517 = vsel %vm452, %v420, %v485
      %v518 = vsel %vm453, %v421, %v486
      %v519 = vsel %vm454, %v422, %v487
      %v520 = vsel %vm455, %v423, %v488
      %v521 = vsel %vm456, %v424, %v489
      %v522 = vsel %vm457, %v425, %v490
      %v523 = vsel %vm458, %v426, %v491
      %v524 = vsel %vm459, %v427, %v492
      %v525 = vsel %vm460, %v428, %v493
      %v526 = vsel %vm461, %v429, %v494
      %v527 = vsel %vm462, %v430, %v495
      %v528 = vsel %vm463, %v431, %v496
      %v529 = vsel %vm464, %v432, %v497
      %v530 = vsel %vm465, %v433, %v498
      %v531 = vsel %vm466, %v434, %v499
      %v532 = vpack.c.bf16 %v501, %v500
      %v533 = vpack.c.bf16 %v503, %v502
      %v534 = vpack.c.bf16 %v505, %v504
      %v535 = vpack.c.bf16 %v507, %v506
      %v536 = vpack.c.bf16 %v509, %v508
      %v537 = vpack.c.bf16 %v511, %v510
      %v538 = vpack.c.bf16 %v513, %v512
      %v539 = vpack.c.bf16 %v515, %v514
      %v540 = vpack.c.bf16 %v517, %v516
      %v541 = vpack.c.bf16 %v519, %v518
      %v542 = vpack.c.bf16 %v521, %v520
      %v543 = vpack.c.bf16 %v523, %v522
      %v544 = vpack.c.bf16 %v525, %v524
      %v545 = vpack.c.bf16 %v527, %v526
      %v546 = vpack.c.bf16 %v529, %v528
      %v547 = vpack.c.bf16 %v531, %v530
      %548 = vst [vmem:[#allocation2] sm:$0xf] 0
      %549 = vst [vmem:[#allocation2 + $0x4] sm:$0xf] 0
      %550 = vst [vmem:[#allocation2 + $0x8] sm:$0x1] 0
      %s551 = scalar_lea.vmem [#allocation2], 204
      %552 = vst [vmem:[%s551] sm:$0xf] 0
      %553 = vst [vmem:[%s551 + $0x4] sm:$0xf] 0
      %554 = vst [vmem:[%s551 + $0x8] sm:$0x1] 0
      %v556 = vshrl.u32 %v532, 16
      %v558 = vrot.slane %v556, 7
      %v559 = vshll.u32 %v532, 16
      %v561 = vor.u32 %v558, %v559
      %v563 = vshrl.u32 %v533, 16
      %v565 = vrot.slane %v563, 7
      %v566 = vshll.u32 %v533, 16
      %v568 = vor.u32 %v565, %v566
      %v570 = vshrl.u32 %v534, 16
      %v572 = vrot.slane %v570, 7
      %v573 = vshll.u32 %v534, 16
      %v575 = vor.u32 %v572, %v573
      %v577 = vshrl.u32 %v535, 16
      %v579 = vrot.slane %v577, 7
      %v580 = vshll.u32 %v535, 16
      %v582 = vor.u32 %v579, %v580
      %v584 = vshrl.u32 %v536, 16
      %v586 = vrot.slane %v584, 7
      %v587 = vshll.u32 %v536, 16
      %v589 = vor.u32 %v586, %v587
      %v591 = vshrl.u32 %v537, 16
      %v593 = vrot.slane %v591, 7
      %v594 = vshll.u32 %v537, 16
      %v596 = vor.u32 %v593, %v594
      %v598 = vshrl.u32 %v538, 16
      %v600 = vrot.slane %v598, 7
      %v601 = vshll.u32 %v538, 16
      %v603 = vor.u32 %v600, %v601
      %v605 = vshrl.u32 %v539, 16
      %v607 = vrot.slane %v605, 7
      %v608 = vshll.u32 %v539, 16
      %v610 = vor.u32 %v607, %v608
      %v612 = vshrl.u32 %v540, 16
      %v614 = vrot.slane %v612, 7
      %v615 = vshll.u32 %v540, 16
      %v617 = vor.u32 %v614, %v615
      %v619 = vshrl.u32 %v541, 16
      %v621 = vrot.slane %v619, 7
      %v622 = vshll.u32 %v541, 16
      %v624 = vor.u32 %v621, %v622
      %v626 = vshrl.u32 %v542, 16
      %v628 = vrot.slane %v626, 7
      %v629 = vshll.u32 %v542, 16
      %v631 = vor.u32 %v628, %v629
      %v633 = vshrl.u32 %v543, 16
      %v635 = vrot.slane %v633, 7
      %v636 = vshll.u32 %v543, 16
      %v638 = vor.u32 %v635, %v636
      %v640 = vshrl.u32 %v544, 16
      %v642 = vrot.slane %v640, 7
      %v643 = vshll.u32 %v544, 16
      %v645 = vor.u32 %v642, %v643
      %v647 = vshrl.u32 %v545, 16
      %v649 = vrot.slane %v647, 7
      %v650 = vshll.u32 %v545, 16
      %v652 = vor.u32 %v649, %v650
      %v654 = vshrl.u32 %v546, 16
      %v656 = vrot.slane %v654, 7
      %v657 = vshll.u32 %v546, 16
      %v659 = vor.u32 %v656, %v657
      %v661 = vshrl.u32 %v547, 16
      %v663 = vrot.slane %v661, 7
      %v664 = vshll.u32 %v547, 16
      %v666 = vor.u32 %v663, %v664
      %vm699 = vcmask 1040384
      %vm700 = vsmask.f32 256
      %vm701 = vmand %vm699, %vm700
      %v702 = vsel %vm701, 0, %v561
      %v703 = vsel %vm701, 0, %v568
      %v704 = vsel %vm701, 0, %v575
      %v705 = vsel %vm701, 0, %v582
      %v706 = vsel %vm701, 0, %v589
      %v707 = vsel %vm701, 0, %v596
      %v708 = vsel %vm701, 0, %v603
      %v709 = vsel %vm701, 0, %v610
      %v710 = vsel %vm701, 0, %v617
      %v711 = vsel %vm701, 0, %v624
      %v712 = vsel %vm701, 0, %v631
      %v713 = vsel %vm701, 0, %v638
      %v714 = vsel %vm701, 0, %v645
      %v715 = vsel %vm701, 0, %v652
      %v716 = vsel %vm701, 0, %v659
      %v717 = vsel %vm701, 0, %v666
      %v718 = vsel %vm701, %v558, 0
      %v719 = vsel %vm701, %v565, 0
      %v720 = vsel %vm701, %v572, 0
      %v721 = vsel %vm701, %v579, 0
      %v722 = vsel %vm701, %v586, 0
      %v723 = vsel %vm701, %v593, 0
      %v724 = vsel %vm701, %v600, 0
      %v725 = vsel %vm701, %v607, 0
      %v726 = vsel %vm701, %v614, 0
      %v727 = vsel %vm701, %v621, 0
      %v728 = vsel %vm701, %v628, 0
      %v729 = vsel %vm701, %v635, 0
      %v730 = vsel %vm701, %v642, 0
      %v731 = vsel %vm701, %v649, 0
      %v732 = vsel %vm701, %v656, 0
      %v733 = vsel %vm701, %v663, 0
      %v766 = vunpack.c.l.b16 %v702
      %v767 = vunpack.c.h.b16 %v702
      %v768 = vunpack.c.l.b16 %v718
      %v769 = vunpack.c.l.b16 %v703
      %v770 = vunpack.c.h.b16 %v703
      %v771 = vunpack.c.l.b16 %v719
      %v772 = vunpack.c.l.b16 %v704
      %v773 = vunpack.c.h.b16 %v704
      %v774 = vunpack.c.l.b16 %v720
      %v775 = vunpack.c.l.b16 %v705
      %v776 = vunpack.c.h.b16 %v705
      %v777 = vunpack.c.l.b16 %v721
      %v778 = vunpack.c.l.b16 %v706
      %v779 = vunpack.c.h.b16 %v706
      %v780 = vunpack.c.l.b16 %v722
      %v781 = vunpack.c.l.b16 %v707
      %v782 = vunpack.c.h.b16 %v707
      %v783 = vunpack.c.l.b16 %v723
      %v784 = vunpack.c.l.b16 %v708
      %v785 = vunpack.c.h.b16 %v708
      %v786 = vunpack.c.l.b16 %v724
      %v787 = vunpack.c.l.b16 %v709
      %v788 = vunpack.c.h.b16 %v709
      %v789 = vunpack.c.l.b16 %v725
      %v790 = vunpack.c.l.b16 %v710
      %v791 = vunpack.c.h.b16 %v710
      %v792 = vunpack.c.l.b16 %v726
      %v793 = vunpack.c.l.b16 %v711
      %v794 = vunpack.c.h.b16 %v711
      %v795 = vunpack.c.l.b16 %v727
      %v796 = vunpack.c.l.b16 %v712
      %v797 = vunpack.c.h.b16 %v712
      %v798 = vunpack.c.l.b16 %v728
      %v799 = vunpack.c.l.b16 %v713
      %v800 = vunpack.c.h.b16 %v713
      %v801 = vunpack.c.l.b16 %v729
      %v802 = vunpack.c.l.b16 %v714
      %v803 = vunpack.c.h.b16 %v714
      %v804 = vunpack.c.l.b16 %v730
      %v805 = vunpack.c.l.b16 %v715
      %v806 = vunpack.c.h.b16 %v715
      %v807 = vunpack.c.l.b16 %v731
      %v808 = vunpack.c.l.b16 %v716
      %v809 = vunpack.c.h.b16 %v716
      %v810 = vunpack.c.l.b16 %v732
      %v811 = vunpack.c.l.b16 %v717
      %v812 = vunpack.c.h.b16 %v717
      %v813 = vunpack.c.l.b16 %v733
      %v814 = vpack.c.b16 %v766, %v766
      %v815 = vpack.c.b16 %v767, %v767
      %v816 = vpack.c.b16 %v768, %v768
      %v817 = vpack.c.b16 %v769, %v769
      %v818 = vpack.c.b16 %v770, %v770
      %v819 = vpack.c.b16 %v771, %v771
      %v820 = vpack.c.b16 %v772, %v772
      %v821 = vpack.c.b16 %v773, %v773
      %v822 = vpack.c.b16 %v774, %v774
      %v823 = vpack.c.b16 %v775, %v775
      %v824 = vpack.c.b16 %v776, %v776
      %v825 = vpack.c.b16 %v777, %v777
      %v826 = vpack.c.b16 %v778, %v778
      %v827 = vpack.c.b16 %v779, %v779
      %v828 = vpack.c.b16 %v780, %v780
      %v829 = vpack.c.b16 %v781, %v781
      %v830 = vpack.c.b16 %v782, %v782
      %v831 = vpack.c.b16 %v783, %v783
      %v832 = vpack.c.b16 %v784, %v784
      %v833 = vpack.c.b16 %v785, %v785
      %v834 = vpack.c.b16 %v786, %v786
      %v835 = vpack.c.b16 %v787, %v787
      %v836 = vpack.c.b16 %v788, %v788
      %v837 = vpack.c.b16 %v789, %v789
      %v838 = vpack.c.b16 %v790, %v790
      %v839 = vpack.c.b16 %v791, %v791
      %v840 = vpack.c.b16 %v792, %v792
      %v841 = vpack.c.b16 %v793, %v793
      %v842 = vpack.c.b16 %v794, %v794
      %v843 = vpack.c.b16 %v795, %v795
      %v844 = vpack.c.b16 %v796, %v796
      %v845 = vpack.c.b16 %v797, %v797
      %v846 = vpack.c.b16 %v798, %v798
      %v847 = vpack.c.b16 %v799, %v799
      %v848 = vpack.c.b16 %v800, %v800
      %v849 = vpack.c.b16 %v801, %v801
      %v850 = vpack.c.b16 %v802, %v802
      %v851 = vpack.c.b16 %v803, %v803
      %v852 = vpack.c.b16 %v804, %v804
      %v853 = vpack.c.b16 %v805, %v805
      %v854 = vpack.c.b16 %v806, %v806
      %v855 = vpack.c.b16 %v807, %v807
      %v856 = vpack.c.b16 %v808, %v808
      %v857 = vpack.c.b16 %v809, %v809
      %v858 = vpack.c.b16 %v810, %v810
      %v859 = vpack.c.b16 %v811, %v811
      %v860 = vpack.c.b16 %v812, %v812
      %v861 = vpack.c.b16 %v813, %v813
      %s910 = scalar_lea.vmem [#allocation2], 12
      %911 = vst [vmem:[%s910] sm:$0xf] %v814
      %912 = vst [vmem:[%s910 + $0x4] sm:$0xf] %v815
      %913 = vst [vmem:[%s910 + $0x8] sm:$0x1] %v816
      %914 = vst [vmem:[%s910 + $0xc] sm:$0xf] %v817
      %915 = vst [vmem:[%s910 + $0x10] sm:$0xf] %v818
      %916 = vst [vmem:[%s910 + $0x14] sm:$0x1] %v819
      %917 = vst [vmem:[%s910 + $0x18] sm:$0xf] %v820
      %918 = vst [vmem:[%s910 + $0x1c] sm:$0xf] %v821
      %919 = vst [vmem:[%s910 + $0x20] sm:$0x1] %v822
      %920 = vst [vmem:[%s910 + $0x24] sm:$0xf] %v823
      %921 = vst [vmem:[%s910 + $0x28] sm:$0xf] %v824
      %922 = vst [vmem:[%s910 + $0x2c] sm:$0x1] %v825
      %923 = vst [vmem:[%s910 + $0x30] sm:$0xf] %v826
      %924 = vst [vmem:[%s910 + $0x34] sm:$0xf] %v827
      %925 = vst [vmem:[%s910 + $0x38] sm:$0x1] %v828
      %926 = vst [vmem:[%s910 + $0x3c] sm:$0xf] %v829
      %927 = vst [vmem:[%s910 + $0x40] sm:$0xf] %v830
      %928 = vst [vmem:[%s910 + $0x44] sm:$0x1] %v831
      %929 = vst [vmem:[%s910 + $0x48] sm:$0xf] %v832
      %930 = vst [vmem:[%s910 + $0x4c] sm:$0xf] %v833
      %931 = vst [vmem:[%s910 + $0x50] sm:$0x1] %v834
      %932 = vst [vmem:[%s910 + $0x54] sm:$0xf] %v835
      %933 = vst [vmem:[%s910 + $0x58] sm:$0xf] %v836
      %934 = vst [vmem:[%s910 + $0x5c] sm:$0x1] %v837
      %935 = vst [vmem:[%s910 + $0x60] sm:$0xf] %v838
      %936 = vst [vmem:[%s910 + $0x64] sm:$0xf] %v839
      %937 = vst [vmem:[%s910 + $0x68] sm:$0x1] %v840
      %938 = vst [vmem:[%s910 + $0x6c] sm:$0xf] %v841
      %939 = vst [vmem:[%s910 + $0x70] sm:$0xf] %v842
      %940 = vst [vmem:[%s910 + $0x74] sm:$0x1] %v843
      %941 = vst [vmem:[%s910 + $0x78] sm:$0xf] %v844
      %942 = vst [vmem:[%s910 + $0x7c] sm:$0xf] %v845
      %943 = vst [vmem:[%s910 + $0x80] sm:$0x1] %v846
      %944 = vst [vmem:[%s910 + $0x84] sm:$0xf] %v847
      %945 = vst [vmem:[%s910 + $0x88] sm:$0xf] %v848
      %946 = vst [vmem:[%s910 + $0x8c] sm:$0x1] %v849
      %947 = vst [vmem:[%s910 + $0x90] sm:$0xf] %v850
      %948 = vst [vmem:[%s910 + $0x94] sm:$0xf] %v851
      %949 = vst [vmem:[%s910 + $0x98] sm:$0x1] %v852
      %950 = vst [vmem:[%s910 + $0x9c] sm:$0xf] %v853
      %951 = vst [vmem:[%s910 + $0xa0] sm:$0xf] %v854
      %952 = vst [vmem:[%s910 + $0xa4] sm:$0x1] %v855
      %953 = vst [vmem:[%s910 + $0xa8] sm:$0xf] %v856
      %954 = vst [vmem:[%s910 + $0xac] sm:$0xf] %v857
      %955 = vst [vmem:[%s910 + $0xb0] sm:$0x1] %v858
      %956 = vst [vmem:[%s910 + $0xb4] sm:$0xf] %v859
      %957 = vst [vmem:[%s910 + $0xb8] sm:$0xf] %v860
      %958 = vst [vmem:[%s910 + $0xbc] sm:$0x1] %v861
      %v959 = vld [vmem:[#allocation2] sm:$0xf]
      %v960 = vld [vmem:[#allocation2 + $0x4] sm:$0xf]
      %v961 = vld [vmem:[#allocation2 + $0xc] sm:$0xf]
      %v962 = vld [vmem:[#allocation2 + $0x10] sm:$0xf]
      %v963 = vld [vmem:[#allocation2 + $0x18] sm:$0xf]
      %v964 = vld [vmem:[#allocation2 + $0x1c] sm:$0xf]
      %v965 = vld [vmem:[#allocation2 + $0x24] sm:$0xf]
      %v966 = vld [vmem:[#allocation2 + $0x28] sm:$0xf]
      %v967 = vld [vmem:[#allocation2 + $0x30] sm:$0xf]
      %v968 = vld [vmem:[#allocation2 + $0x34] sm:$0xf]
      %v969 = vld [vmem:[#allocation2 + $0x3c] sm:$0xf]
      %v970 = vld [vmem:[#allocation2 + $0x40] sm:$0xf]
      %v971 = vld [vmem:[#allocation2 + $0x48] sm:$0xf]
      %v972 = vld [vmem:[#allocation2 + $0x4c] sm:$0xf]
      %v973 = vld [vmem:[#allocation2 + $0x54] sm:$0xf]
      %v974 = vld [vmem:[#allocation2 + $0x58] sm:$0xf]
      %v975 = vld [vmem:[#allocation2 + $0x60] sm:$0xf]
      %v976 = vld [vmem:[#allocation2 + $0x64] sm:$0xf]
      %v977 = vld [vmem:[#allocation2 + $0x6c] sm:$0xf]
      %v978 = vld [vmem:[#allocation2 + $0x70] sm:$0xf]
      %v979 = vld [vmem:[#allocation2 + $0x78] sm:$0xf]
      %v980 = vld [vmem:[#allocation2 + $0x7c] sm:$0xf]
      %v981 = vld [vmem:[#allocation2 + $0x84] sm:$0xf]
      %v982 = vld [vmem:[#allocation2 + $0x88] sm:$0xf]
      %v983 = vld [vmem:[#allocation2 + $0x90] sm:$0xf]
      %v984 = vld [vmem:[#allocation2 + $0x94] sm:$0xf]
      %v985 = vld [vmem:[#allocation2 + $0x9c] sm:$0xf]
      %v986 = vld [vmem:[#allocation2 + $0xa0] sm:$0xf]
      %v987 = vld [vmem:[#allocation2 + $0xa8] sm:$0xf]
      %v988 = vld [vmem:[#allocation2 + $0xac] sm:$0xf]
      %v989 = vld [vmem:[#allocation2 + $0xb4] sm:$0xf]
      %v990 = vld [vmem:[#allocation2 + $0xb8] sm:$0xf]
      %991 = vst [vmem:[#allocation3] sm:$0xf] %v959
      %992 = vst [vmem:[#allocation3 + $0xc] sm:$0xf] %v960
      %993 = vst [vmem:[#allocation3 + $0x18] sm:$0xf] %v961
      %994 = vst [vmem:[#allocation3 + $0x24] sm:$0xf] %v962
      %995 = vst [vmem:[#allocation3 + $0x30] sm:$0xf] %v963
      %996 = vst [vmem:[#allocation3 + $0x3c] sm:$0xf] %v964
      %997 = vst [vmem:[#allocation3 + $0x48] sm:$0xf] %v965
      %998 = vst [vmem:[#allocation3 + $0x54] sm:$0xf] %v966
      %999 = vst [vmem:[#allocation3 + $0x60] sm:$0xf] %v967
      %1000 = vst [vmem:[#allocation3 + $0x6c] sm:$0xf] %v968
      %1001 = vst [vmem:[#allocation3 + $0x78] sm:$0xf] %v969
      %1002 = vst [vmem:[#allocation3 + $0x84] sm:$0xf] %v970
      %1003 = vst [vmem:[#allocation3 + $0x90] sm:$0xf] %v971
      %1004 = vst [vmem:[#allocation3 + $0x9c] sm:$0xf] %v972
      %1005 = vst [vmem:[#allocation3 + $0xa8] sm:$0xf] %v973
      %1006 = vst [vmem:[#allocation3 + $0xb4] sm:$0xf] %v974
      %1007 = vst [vmem:[#allocation3 + $0xc0] sm:$0xf] %v975
      %1008 = vst [vmem:[#allocation3 + $0xcc] sm:$0xf] %v976
      %1009 = vst [vmem:[#allocation3 + $0xd8] sm:$0xf] %v977
      %1010 = vst [vmem:[#allocation3 + $0xe4] sm:$0xf] %v978
      %1011 = vst [vmem:[#allocation3 + $0xf0] sm:$0xf] %v979
      %1012 = vst [vmem:[#allocation3 + $0xfc] sm:$0xf] %v980
      %1013 = vst [vmem:[#allocation3 + $0x108] sm:$0xf] %v981
      %1014 = vst [vmem:[#allocation3 + $0x114] sm:$0xf] %v982
      %1015 = vst [vmem:[#allocation3 + $0x120] sm:$0xf] %v983
      %1016 = vst [vmem:[#allocation3 + $0x12c] sm:$0xf] %v984
      %1017 = vst [vmem:[#allocation3 + $0x138] sm:$0xf] %v985
      %1018 = vst [vmem:[#allocation3 + $0x144] sm:$0xf] %v986
      %1019 = vst [vmem:[#allocation3 + $0x150] sm:$0xf] %v987
      %1020 = vst [vmem:[#allocation3 + $0x15c] sm:$0xf] %v988
      %1021 = vst [vmem:[#allocation3 + $0x168] sm:$0xf] %v989
      %1022 = vst [vmem:[#allocation3 + $0x174] sm:$0xf] %v990
      %v1023 = vld [vmem:[#allocation2] sm:$0xf]
      %v1024 = vld [vmem:[#allocation2 + $0x4] sm:$0xf]
      %v1025 = vld [vmem:[#allocation2 + $0x8] sm:$0x1]
      %v1026 = vld [vmem:[#allocation2 + $0xc] sm:$0xf]
      %v1027 = vld [vmem:[#allocation2 + $0x10] sm:$0xf]
      %v1028 = vld [vmem:[#allocation2 + $0x14] sm:$0x1]
      %v1029 = vld [vmem:[#allocation2 + $0x18] sm:$0xf]
      %v1030 = vld [vmem:[#allocation2 + $0x1c] sm:$0xf]
      %v1031 = vld [vmem:[#allocation2 + $0x20] sm:$0x1]
      %v1032 = vld [vmem:[#allocation2 + $0x24] sm:$0xf]
      %v1033 = vld [vmem:[#allocation2 + $0x28] sm:$0xf]
      %v1034 = vld [vmem:[#allocation2 + $0x2c] sm:$0x1]
      %v1035 = vld [vmem:[#allocation2 + $0x30] sm:$0xf]
      %v1036 = vld [vmem:[#allocation2 + $0x34] sm:$0xf]
      %v1037 = vld [vmem:[#allocation2 + $0x38] sm:$0x1]
      %v1038 = vld [vmem:[#allocation2 + $0x3c] sm:$0xf]
      %v1039 = vld [vmem:[#allocation2 + $0x40] sm:$0xf]
      %v1040 = vld [vmem:[#allocation2 + $0x44] sm:$0x1]
      %v1041 = vld [vmem:[#allocation2 + $0x48] sm:$0xf]
      %v1042 = vld [vmem:[#allocation2 + $0x4c] sm:$0xf]
      %v1043 = vld [vmem:[#allocation2 + $0x50] sm:$0x1]
      %v1044 = vld [vmem:[#allocation2 + $0x54] sm:$0xf]
      %v1045 = vld [vmem:[#allocation2 + $0x58] sm:$0xf]
      %v1046 = vld [vmem:[#allocation2 + $0x5c] sm:$0x1]
      %v1047 = vld [vmem:[#allocation2 + $0x60] sm:$0xf]
      %v1048 = vld [vmem:[#allocation2 + $0x64] sm:$0xf]
      %v1049 = vld [vmem:[#allocation2 + $0x68] sm:$0x1]
      %v1050 = vld [vmem:[#allocation2 + $0x6c] sm:$0xf]
      %v1051 = vld [vmem:[#allocation2 + $0x70] sm:$0xf]
      %v1052 = vld [vmem:[#allocation2 + $0x74] sm:$0x1]
      %v1053 = vld [vmem:[#allocation2 + $0x78] sm:$0xf]
      %v1054 = vld [vmem:[#allocation2 + $0x7c] sm:$0xf]
      %v1055 = vld [vmem:[#allocation2 + $0x80] sm:$0x1]
      %v1056 = vld [vmem:[#allocation2 + $0x84] sm:$0xf]
      %v1057 = vld [vmem:[#allocation2 + $0x88] sm:$0xf]
      %v1058 = vld [vmem:[#allocation2 + $0x8c] sm:$0x1]
      %v1059 = vld [vmem:[#allocation2 + $0x90] sm:$0xf]
      %v1060 = vld [vmem:[#allocation2 + $0x94] sm:$0xf]
      %v1061 = vld [vmem:[#allocation2 + $0x98] sm:$0x1]
      %v1062 = vld [vmem:[#allocation2 + $0x9c] sm:$0xf]
      %v1063 = vld [vmem:[#allocation2 + $0xa0] sm:$0xf]
      %v1064 = vld [vmem:[#allocation2 + $0xa4] sm:$0x1]
      %v1065 = vld [vmem:[#allocation2 + $0xa8] sm:$0xf]
      %v1066 = vld [vmem:[#allocation2 + $0xac] sm:$0xf]
      %v1067 = vld [vmem:[#allocation2 + $0xb0] sm:$0x1]
      %v1068 = vld [vmem:[#allocation2 + $0xb4] sm:$0xf]
      %v1069 = vld [vmem:[#allocation2 + $0xb8] sm:$0xf]
      %v1070 = vld [vmem:[#allocation2 + $0xbc] sm:$0x1]
      %vm1071 = vsmask.f32 3328
      %vm1072 = vsmask.f32 7440
      %vm1073 = vmor %vm1071, %vm1072
      %v1075 = vshrl.u32 %v1023, 16
      %v1077 = vrot.slane %v1075, 4
      %v1078 = vshll.u32 %v1023, 16
      %v1080 = vrot.slane %v1078, 5
      %v1081 = vor.u32 %v1077, %v1080
      %v1082 = vrot.slane %v1081, 4
      %v1084 = vshll.u32 %v1024, 16
      %v1086 = vrot.slane %v1084, 5
      %v1087 = vsel %vm1073, %v1082, %v1086
      %v1088 = vshrl.u32 %v1024, 16
      %v1090 = vrot.slane %v1088, 4
      %v1091 = vor.u32 %v1090, %v1086
      %v1092 = vrot.slane %v1091, 4
      %v1094 = vshll.u32 %v1025, 16
      %v1096 = vrot.slane %v1094, 5
      %v1097 = vsel %vm1073, %v1092, %v1096
      %v1099 = vshrl.u32 %v1026, 16
      %v1101 = vrot.slane %v1099, 4
      %v1102 = vshll.u32 %v1026, 16
      %v1104 = vrot.slane %v1102, 5
      %v1105 = vor.u32 %v1101, %v1104
      %v1106 = vrot.slane %v1105, 4
      %v1108 = vshll.u32 %v1027, 16
      %v1110 = vrot.slane %v1108, 5
      %v1111 = vsel %vm1073, %v1106, %v1110
      %v1112 = vshrl.u32 %v1027, 16
      %v1114 = vrot.slane %v1112, 4
      %v1115 = vor.u32 %v1114, %v1110
      %v1116 = vrot.slane %v1115, 4
      %v1118 = vshll.u32 %v1028, 16
      %v1120 = vrot.slane %v1118, 5
      %v1121 = vsel %vm1073, %v1116, %v1120
      %v1123 = vshrl.u32 %v1029, 16
      %v1125 = vrot.slane %v1123, 4
      %v1126 = vshll.u32 %v1029, 16
      %v1128 = vrot.slane %v1126, 5
      %v1129 = vor.u32 %v1125, %v1128
      %v1130 = vrot.slane %v1129, 4
      %v1132 = vshll.u32 %v1030, 16
      %v1134 = vrot.slane %v1132, 5
      %v1135 = vsel %vm1073, %v1130, %v1134
      %v1136 = vshrl.u32 %v1030, 16
      %v1138 = vrot.slane %v1136, 4
      %v1139 = vor.u32 %v1138, %v1134
      %v1140 = vrot.slane %v1139, 4
      %v1142 = vshll.u32 %v1031, 16
      %v1144 = vrot.slane %v1142, 5
      %v1145 = vsel %vm1073, %v1140, %v1144
      %v1147 = vshrl.u32 %v1032, 16
      %v1149 = vrot.slane %v1147, 4
      %v1150 = vshll.u32 %v1032, 16
      %v1152 = vrot.slane %v1150, 5
      %v1153 = vor.u32 %v1149, %v1152
      %v1154 = vrot.slane %v1153, 4
      %v1156 = vshll.u32 %v1033, 16
      %v1158 = vrot.slane %v1156, 5
      %v1159 = vsel %vm1073, %v1154, %v1158
      %v1160 = vshrl.u32 %v1033, 16
      %v1162 = vrot.slane %v1160, 4
      %v1163 = vor.u32 %v1162, %v1158
      %v1164 = vrot.slane %v1163, 4
      %v1166 = vshll.u32 %v1034, 16
      %v1168 = vrot.slane %v1166, 5
      %v1169 = vsel %vm1073, %v1164, %v1168
      %v1171 = vshrl.u32 %v1035, 16
      %v1173 = vrot.slane %v1171, 4
      %v1174 = vshll.u32 %v1035, 16
      %v1176 = vrot.slane %v1174, 5
      %v1177 = vor.u32 %v1173, %v1176
      %v1178 = vrot.slane %v1177, 4
      %v1180 = vshll.u32 %v1036, 16
      %v1182 = vrot.slane %v1180, 5
      %v1183 = vsel %vm1073, %v1178, %v1182
      %v1184 = vshrl.u32 %v1036, 16
      %v1186 = vrot.slane %v1184, 4
      %v1187 = vor.u32 %v1186, %v1182
      %v1188 = vrot.slane %v1187, 4
      %v1190 = vshll.u32 %v1037, 16
      %v1192 = vrot.slane %v1190, 5
      %v1193 = vsel %vm1073, %v1188, %v1192
      %v1195 = vshrl.u32 %v1038, 16
      %v1197 = vrot.slane %v1195, 4
      %v1198 = vshll.u32 %v1038, 16
      %v1200 = vrot.slane %v1198, 5
      %v1201 = vor.u32 %v1197, %v1200
      %v1202 = vrot.slane %v1201, 4
      %v1204 = vshll.u32 %v1039, 16
      %v1206 = vrot.slane %v1204, 5
      %v1207 = vsel %vm1073, %v1202, %v1206
      %v1208 = vshrl.u32 %v1039, 16
      %v1210 = vrot.slane %v1208, 4
      %v1211 = vor.u32 %v1210, %v1206
      %v1212 = vrot.slane %v1211, 4
      %v1214 = vshll.u32 %v1040, 16
      %v1216 = vrot.slane %v1214, 5
      %v1217 = vsel %vm1073, %v1212, %v1216
      %v1219 = vshrl.u32 %v1041, 16
      %v1221 = vrot.slane %v1219, 4
      %v1222 = vshll.u32 %v1041, 16
      %v1224 = vrot.slane %v1222, 5
      %v1225 = vor.u32 %v1221, %v1224
      %v1226 = vrot.slane %v1225, 4
      %v1228 = vshll.u32 %v1042, 16
      %v1230 = vrot.slane %v1228, 5
      %v1231 = vsel %vm1073, %v1226, %v1230
      %v1232 = vshrl.u32 %v1042, 16
      %v1234 = vrot.slane %v1232, 4
      %v1235 = vor.u32 %v1234, %v1230
      %v1236 = vrot.slane %v1235, 4
      %v1238 = vshll.u32 %v1043, 16
      %v1240 = vrot.slane %v1238, 5
      %v1241 = vsel %vm1073, %v1236, %v1240
      %v1243 = vshrl.u32 %v1044, 16
      %v1245 = vrot.slane %v1243, 4
      %v1246 = vshll.u32 %v1044, 16
      %v1248 = vrot.slane %v1246, 5
      %v1249 = vor.u32 %v1245, %v1248
      %v1250 = vrot.slane %v1249, 4
      %v1252 = vshll.u32 %v1045, 16
      %v1254 = vrot.slane %v1252, 5
      %v1255 = vsel %vm1073, %v1250, %v1254
      %v1256 = vshrl.u32 %v1045, 16
      %v1258 = vrot.slane %v1256, 4
      %v1259 = vor.u32 %v1258, %v1254
      %v1260 = vrot.slane %v1259, 4
      %v1262 = vshll.u32 %v1046, 16
      %v1264 = vrot.slane %v1262, 5
      %v1265 = vsel %vm1073, %v1260, %v1264
      %v1267 = vshrl.u32 %v1047, 16
      %v1269 = vrot.slane %v1267, 4
      %v1270 = vshll.u32 %v1047, 16
      %v1272 = vrot.slane %v1270, 5
      %v1273 = vor.u32 %v1269, %v1272
      %v1274 = vrot.slane %v1273, 4
      %v1276 = vshll.u32 %v1048, 16
      %v1278 = vrot.slane %v1276, 5
      %v1279 = vsel %vm1073, %v1274, %v1278
      %v1280 = vshrl.u32 %v1048, 16
      %v1282 = vrot.slane %v1280, 4
      %v1283 = vor.u32 %v1282, %v1278
      %v1284 = vrot.slane %v1283, 4
      %v1286 = vshll.u32 %v1049, 16
      %v1288 = vrot.slane %v1286, 5
      %v1289 = vsel %vm1073, %v1284, %v1288
      %v1291 = vshrl.u32 %v1050, 16
      %v1293 = vrot.slane %v1291, 4
      %v1294 = vshll.u32 %v1050, 16
      %v1296 = vrot.slane %v1294, 5
      %v1297 = vor.u32 %v1293, %v1296
      %v1298 = vrot.slane %v1297, 4
      %v1300 = vshll.u32 %v1051, 16
      %v1302 = vrot.slane %v1300, 5
      %v1303 = vsel %vm1073, %v1298, %v1302
      %v1304 = vshrl.u32 %v1051, 16
      %v1306 = vrot.slane %v1304, 4
      %v1307 = vor.u32 %v1306, %v1302
      %v1308 = vrot.slane %v1307, 4
      %v1310 = vshll.u32 %v1052, 16
      %v1312 = vrot.slane %v1310, 5
      %v1313 = vsel %vm1073, %v1308, %v1312
      %v1315 = vshrl.u32 %v1053, 16
      %v1317 = vrot.slane %v1315, 4
      %v1318 = vshll.u32 %v1053, 16
      %v1320 = vrot.slane %v1318, 5
      %v1321 = vor.u32 %v1317, %v1320
      %v1322 = vrot.slane %v1321, 4
      %v1324 = vshll.u32 %v1054, 16
      %v1326 = vrot.slane %v1324, 5
      %v1327 = vsel %vm1073, %v1322, %v1326
      %v1328 = vshrl.u32 %v1054, 16
      %v1330 = vrot.slane %v1328, 4
      %v1331 = vor.u32 %v1330, %v1326
      %v1332 = vrot.slane %v1331, 4
      %v1334 = vshll.u32 %v1055, 16
      %v1336 = vrot.slane %v1334, 5
      %v1337 = vsel %vm1073, %v1332, %v1336
      %v1339 = vshrl.u32 %v1056, 16
      %v1341 = vrot.slane %v1339, 4
      %v1342 = vshll.u32 %v1056, 16
      %v1344 = vrot.slane %v1342, 5
      %v1345 = vor.u32 %v1341, %v1344
      %v1346 = vrot.slane %v1345, 4
      %v1348 = vshll.u32 %v1057, 16
      %v1350 = vrot.slane %v1348, 5
      %v1351 = vsel %vm1073, %v1346, %v1350
      %v1352 = vshrl.u32 %v1057, 16
      %v1354 = vrot.slane %v1352, 4
      %v1355 = vor.u32 %v1354, %v1350
      %v1356 = vrot.slane %v1355, 4
      %v1358 = vshll.u32 %v1058, 16
      %v1360 = vrot.slane %v1358, 5
      %v1361 = vsel %vm1073, %v1356, %v1360
      %v1363 = vshrl.u32 %v1059, 16
      %v1365 = vrot.slane %v1363, 4
      %v1366 = vshll.u32 %v1059, 16
      %v1368 = vrot.slane %v1366, 5
      %v1369 = vor.u32 %v1365, %v1368
      %v1370 = vrot.slane %v1369, 4
      %v1372 = vshll.u32 %v1060, 16
      %v1374 = vrot.slane %v1372, 5
      %v1375 = vsel %vm1073, %v1370, %v1374
      %v1376 = vshrl.u32 %v1060, 16
      %v1378 = vrot.slane %v1376, 4
      %v1379 = vor.u32 %v1378, %v1374
      %v1380 = vrot.slane %v1379, 4
      %v1382 = vshll.u32 %v1061, 16
      %v1384 = vrot.slane %v1382, 5
      %v1385 = vsel %vm1073, %v1380, %v1384
      %v1387 = vshrl.u32 %v1062, 16
      %v1389 = vrot.slane %v1387, 4
      %v1390 = vshll.u32 %v1062, 16
      %v1392 = vrot.slane %v1390, 5
      %v1393 = vor.u32 %v1389, %v1392
      %v1394 = vrot.slane %v1393, 4
      %v1396 = vshll.u32 %v1063, 16
      %v1398 = vrot.slane %v1396, 5
      %v1399 = vsel %vm1073, %v1394, %v1398
      %v1400 = vshrl.u32 %v1063, 16
      %v1402 = vrot.slane %v1400, 4
      %v1403 = vor.u32 %v1402, %v1398
      %v1404 = vrot.slane %v1403, 4
      %v1406 = vshll.u32 %v1064, 16
      %v1408 = vrot.slane %v1406, 5
      %v1409 = vsel %vm1073, %v1404, %v1408
      %v1411 = vshrl.u32 %v1065, 16
      %v1413 = vrot.slane %v1411, 4
      %v1414 = vshll.u32 %v1065, 16
      %v1416 = vrot.slane %v1414, 5
      %v1417 = vor.u32 %v1413, %v1416
      %v1418 = vrot.slane %v1417, 4
      %v1420 = vshll.u32 %v1066, 16
      %v1422 = vrot.slane %v1420, 5
      %v1423 = vsel %vm1073, %v1418, %v1422
      %v1424 = vshrl.u32 %v1066, 16
      %v1426 = vrot.slane %v1424, 4
      %v1427 = vor.u32 %v1426, %v1422
      %v1428 = vrot.slane %v1427, 4
      %v1430 = vshll.u32 %v1067, 16
      %v1432 = vrot.slane %v1430, 5
      %v1433 = vsel %vm1073, %v1428, %v1432
      %v1435 = vshrl.u32 %v1068, 16
      %v1437 = vrot.slane %v1435, 4
      %v1438 = vshll.u32 %v1068, 16
      %v1440 = vrot.slane %v1438, 5
      %v1441 = vor.u32 %v1437, %v1440
      %v1442 = vrot.slane %v1441, 4
      %v1444 = vshll.u32 %v1069, 16
      %v1446 = vrot.slane %v1444, 5
      %v1447 = vsel %vm1073, %v1442, %v1446
      %v1448 = vshrl.u32 %v1069, 16
      %v1450 = vrot.slane %v1448, 4
      %v1451 = vor.u32 %v1450, %v1446
      %v1452 = vrot.slane %v1451, 4
      %v1454 = vshll.u32 %v1070, 16
      %v1456 = vrot.slane %v1454, 5
      %v1457 = vsel %vm1073, %v1452, %v1456
      %1490 = vst [vmem:[#allocation3 + $0x4] sm:$0xf] %v1087
      %1491 = vst [vmem:[#allocation3 + $0x10] sm:$0xf] %v1097
      %1492 = vst [vmem:[#allocation3 + $0x1c] sm:$0xf] %v1111
      %1493 = vst [vmem:[#allocation3 + $0x28] sm:$0xf] %v1121
      %1494 = vst [vmem:[#allocation3 + $0x34] sm:$0xf] %v1135
      %1495 = vst [vmem:[#allocation3 + $0x40] sm:$0xf] %v1145
      %1496 = vst [vmem:[#allocation3 + $0x4c] sm:$0xf] %v1159
      %1497 = vst [vmem:[#allocation3 + $0x58] sm:$0xf] %v1169
      %1498 = vst [vmem:[#allocation3 + $0x64] sm:$0xf] %v1183
      %1499 = vst [vmem:[#allocation3 + $0x70] sm:$0xf] %v1193
      %1500 = vst [vmem:[#allocation3 + $0x7c] sm:$0xf] %v1207
      %1501 = vst [vmem:[#allocation3 + $0x88] sm:$0xf] %v1217
      %1502 = vst [vmem:[#allocation3 + $0x94] sm:$0xf] %v1231
      %1503 = vst [vmem:[#allocation3 + $0xa0] sm:$0xf] %v1241
      %1504 = vst [vmem:[#allocation3 + $0xac] sm:$0xf] %v1255
      %1505 = vst [vmem:[#allocation3 + $0xb8] sm:$0xf] %v1265
      %1506 = vst [vmem:[#allocation3 + $0xc4] sm:$0xf] %v1279
      %1507 = vst [vmem:[#allocation3 + $0xd0] sm:$0xf] %v1289
      %1508 = vst [vmem:[#allocation3 + $0xdc] sm:$0xf] %v1303
      %1509 = vst [vmem:[#allocation3 + $0xe8] sm:$0xf] %v1313
      %1510 = vst [vmem:[#allocation3 + $0xf4] sm:$0xf] %v1327
      %1511 = vst [vmem:[#allocation3 + $0x100] sm:$0xf] %v1337
      %1512 = vst [vmem:[#allocation3 + $0x10c] sm:$0xf] %v1351
      %1513 = vst [vmem:[#allocation3 + $0x118] sm:$0xf] %v1361
      %1514 = vst [vmem:[#allocation3 + $0x124] sm:$0xf] %v1375
      %1515 = vst [vmem:[#allocation3 + $0x130] sm:$0xf] %v1385
      %1516 = vst [vmem:[#allocation3 + $0x13c] sm:$0xf] %v1399
      %1517 = vst [vmem:[#allocation3 + $0x148] sm:$0xf] %v1409
      %1518 = vst [vmem:[#allocation3 + $0x154] sm:$0xf] %v1423
      %1519 = vst [vmem:[#allocation3 + $0x160] sm:$0xf] %v1433
      %1520 = vst [vmem:[#allocation3 + $0x16c] sm:$0xf] %v1447
      %1521 = vst [vmem:[#allocation3 + $0x178] sm:$0xf] %v1457
      %v1522 = vld [vmem:[#allocation2] sm:$0xe]
      %v1523 = vld [vmem:[#allocation2 + $0x4] sm:$0xf]
      %v1524 = vld [vmem:[#allocation2 + $0x8] sm:$0x1]
      %v1525 = vld [vmem:[#allocation2 + $0xc] sm:$0xe]
      %v1526 = vld [vmem:[#allocation2 + $0x10] sm:$0xf]
      %v1527 = vld [vmem:[#allocation2 + $0x14] sm:$0x1]
      %v1528 = vld [vmem:[#allocation2 + $0x18] sm:$0xe]
      %v1529 = vld [vmem:[#allocation2 + $0x1c] sm:$0xf]
      %v1530 = vld [vmem:[#allocation2 + $0x20] sm:$0x1]
      %v1531 = vld [vmem:[#allocation2 + $0x24] sm:$0xe]
      %v1532 = vld [vmem:[#allocation2 + $0x28] sm:$0xf]
      %v1533 = vld [vmem:[#allocation2 + $0x2c] sm:$0x1]
      %v1534 = vld [vmem:[#allocation2 + $0x30] sm:$0xe]
      %v1535 = vld [vmem:[#allocation2 + $0x34] sm:$0xf]
      %v1536 = vld [vmem:[#allocation2 + $0x38] sm:$0x1]
      %v1537 = vld [vmem:[#allocation2 + $0x3c] sm:$0xe]
      %v1538 = vld [vmem:[#allocation2 + $0x40] sm:$0xf]
      %v1539 = vld [vmem:[#allocation2 + $0x44] sm:$0x1]
      %v1540 = vld [vmem:[#allocation2 + $0x48] sm:$0xe]
      %v1541 = vld [vmem:[#allocation2 + $0x4c] sm:$0xf]
      %v1542 = vld [vmem:[#allocation2 + $0x50] sm:$0x1]
      %v1543 = vld [vmem:[#allocation2 + $0x54] sm:$0xe]
      %v1544 = vld [vmem:[#allocation2 + $0x58] sm:$0xf]
      %v1545 = vld [vmem:[#allocation2 + $0x5c] sm:$0x1]
      %v1546 = vld [vmem:[#allocation2 + $0x60] sm:$0xe]
      %v1547 = vld [vmem:[#allocation2 + $0x64] sm:$0xf]
      %v1548 = vld [vmem:[#allocation2 + $0x68] sm:$0x1]
      %v1549 = vld [vmem:[#allocation2 + $0x6c] sm:$0xe]
      %v1550 = vld [vmem:[#allocation2 + $0x70] sm:$0xf]
      %v1551 = vld [vmem:[#allocation2 + $0x74] sm:$0x1]
      %v1552 = vld [vmem:[#allocation2 + $0x78] sm:$0xe]
      %v1553 = vld [vmem:[#allocation2 + $0x7c] sm:$0xf]
      %v1554 = vld [vmem:[#allocation2 + $0x80] sm:$0x1]
      %v1555 = vld [vmem:[#allocation2 + $0x84] sm:$0xe]
      %v1556 = vld [vmem:[#allocation2 + $0x88] sm:$0xf]
      %v1557 = vld [vmem:[#allocation2 + $0x8c] sm:$0x1]
      %v1558 = vld [vmem:[#allocation2 + $0x90] sm:$0xe]
      %v1559 = vld [vmem:[#allocation2 + $0x94] sm:$0xf]
      %v1560 = vld [vmem:[#allocation2 + $0x98] sm:$0x1]
      %v1561 = vld [vmem:[#allocation2 + $0x9c] sm:$0xe]
      %v1562 = vld [vmem:[#allocation2 + $0xa0] sm:$0xf]
      %v1563 = vld [vmem:[#allocation2 + $0xa4] sm:$0x1]
      %v1564 = vld [vmem:[#allocation2 + $0xa8] sm:$0xe]
      %v1565 = vld [vmem:[#allocation2 + $0xac] sm:$0xf]
      %v1566 = vld [vmem:[#allocation2 + $0xb0] sm:$0x1]
      %v1567 = vld [vmem:[#allocation2 + $0xb4] sm:$0xe]
      %v1568 = vld [vmem:[#allocation2 + $0xb8] sm:$0xf]
      %v1569 = vld [vmem:[#allocation2 + $0xbc] sm:$0x1]
      %vm1618 = vcmask 1042432
      %vm1619 = vcmask 1046532
      %vm1620 = vmor %vm1618, %vm1619
      %v1621 = vrot.slane %v1522, 5
      %v1622 = vrot.slane %v1621, 4
      %v1623 = vrot.slane %v1523, 5
      %v1624 = vsel %vm1620, %v1622, %v1623
      %v1625 = vrot.slane %v1623, 4
      %v1626 = vrot.slane %v1524, 5
      %v1627 = vsel %vm1620, %v1625, %v1626
      %v1628 = vrot.slane %v1525, 5
      %v1629 = vrot.slane %v1628, 4
      %v1630 = vrot.slane %v1526, 5
      %v1631 = vsel %vm1620, %v1629, %v1630
      %v1632 = vrot.slane %v1630, 4
      %v1633 = vrot.slane %v1527, 5
      %v1634 = vsel %vm1620, %v1632, %v1633
      %v1635 = vrot.slane %v1528, 5
      %v1636 = vrot.slane %v1635, 4
      %v1637 = vrot.slane %v1529, 5
      %v1638 = vsel %vm1620, %v1636, %v1637
      %v1639 = vrot.slane %v1637, 4
      %v1640 = vrot.slane %v1530, 5
      %v1641 = vsel %vm1620, %v1639, %v1640
      %v1642 = vrot.slane %v1531, 5
      %v1643 = vrot.slane %v1642, 4
      %v1644 = vrot.slane %v1532, 5
      %v1645 = vsel %vm1620, %v1643, %v1644
      %v1646 = vrot.slane %v1644, 4
      %v1647 = vrot.slane %v1533, 5
      %v1648 = vsel %vm1620, %v1646, %v1647
      %v1649 = vrot.slane %v1534, 5
      %v1650 = vrot.slane %v1649, 4
      %v1651 = vrot.slane %v1535, 5
      %v1652 = vsel %vm1620, %v1650, %v1651
      %v1653 = vrot.slane %v1651, 4
      %v1654 = vrot.slane %v1536, 5
      %v1655 = vsel %vm1620, %v1653, %v1654
      %v1656 = vrot.slane %v1537, 5
      %v1657 = vrot.slane %v1656, 4
      %v1658 = vrot.slane %v1538, 5
      %v1659 = vsel %vm1620, %v1657, %v1658
      %v1660 = vrot.slane %v1658, 4
      %v1661 = vrot.slane %v1539, 5
      %v1662 = vsel %vm1620, %v1660, %v1661
      %v1663 = vrot.slane %v1540, 5
      %v1664 = vrot.slane %v1663, 4
      %v1665 = vrot.slane %v1541, 5
      %v1666 = vsel %vm1620, %v1664, %v1665
      %v1667 = vrot.slane %v1665, 4
      %v1668 = vrot.slane %v1542, 5
      %v1669 = vsel %vm1620, %v1667, %v1668
      %v1670 = vrot.slane %v1543, 5
      %v1671 = vrot.slane %v1670, 4
      %v1672 = vrot.slane %v1544, 5
      %v1673 = vsel %vm1620, %v1671, %v1672
      %v1674 = vrot.slane %v1672, 4
      %v1675 = vrot.slane %v1545, 5
      %v1676 = vsel %vm1620, %v1674, %v1675
      %v1677 = vrot.slane %v1546, 5
      %v1678 = vrot.slane %v1677, 4
      %v1679 = vrot.slane %v1547, 5
      %v1680 = vsel %vm1620, %v1678, %v1679
      %v1681 = vrot.slane %v1679, 4
      %v1682 = vrot.slane %v1548, 5
      %v1683 = vsel %vm1620, %v1681, %v1682
      %v1684 = vrot.slane %v1549, 5
      %v1685 = vrot.slane %v1684, 4
      %v1686 = vrot.slane %v1550, 5
      %v1687 = vsel %vm1620, %v1685, %v1686
      %v1688 = vrot.slane %v1686, 4
      %v1689 = vrot.slane %v1551, 5
      %v1690 = vsel %vm1620, %v1688, %v1689
      %v1691 = vrot.slane %v1552, 5
      %v1692 = vrot.slane %v1691, 4
      %v1693 = vrot.slane %v1553, 5
      %v1694 = vsel %vm1620, %v1692, %v1693
      %v1695 = vrot.slane %v1693, 4
      %v1696 = vrot.slane %v1554, 5
      %v1697 = vsel %vm1620, %v1695, %v1696
      %v1698 = vrot.slane %v1555, 5
      %v1699 = vrot.slane %v1698, 4
      %v1700 = vrot.slane %v1556, 5
      %v1701 = vsel %vm1620, %v1699, %v1700
      %v1702 = vrot.slane %v1700, 4
      %v1703 = vrot.slane %v1557, 5
      %v1704 = vsel %vm1620, %v1702, %v1703
      %v1705 = vrot.slane %v1558, 5
      %v1706 = vrot.slane %v1705, 4
      %v1707 = vrot.slane %v1559, 5
      %v1708 = vsel %vm1620, %v1706, %v1707
      %v1709 = vrot.slane %v1707, 4
      %v1710 = vrot.slane %v1560, 5
      %v1711 = vsel %vm1620, %v1709, %v1710
      %v1712 = vrot.slane %v1561, 5
      %v1713 = vrot.slane %v1712, 4
      %v1714 = vrot.slane %v1562, 5
      %v1715 = vsel %vm1620, %v1713, %v1714
      %v1716 = vrot.slane %v1714, 4
      %v1717 = vrot.slane %v1563, 5
      %v1718 = vsel %vm1620, %v1716, %v1717
      %v1719 = vrot.slane %v1564, 5
      %v1720 = vrot.slane %v1719, 4
      %v1721 = vrot.slane %v1565, 5
      %v1722 = vsel %vm1620, %v1720, %v1721
      %v1723 = vrot.slane %v1721, 4
      %v1724 = vrot.slane %v1566, 5
      %v1725 = vsel %vm1620, %v1723, %v1724
      %v1726 = vrot.slane %v1567, 5
      %v1727 = vrot.slane %v1726, 4
      %v1728 = vrot.slane %v1568, 5
      %v1729 = vsel %vm1620, %v1727, %v1728
      %v1730 = vrot.slane %v1728, 4
      %v1731 = vrot.slane %v1569, 5
      %v1732 = vsel %vm1620, %v1730, %v1731
      %1765 = vst [vmem:[#allocation3 + $0x8] sm:$0xf] %v1624
      %1766 = vst [vmem:[#allocation3 + $0x14] sm:$0xf] %v1627
      %1767 = vst [vmem:[#allocation3 + $0x20] sm:$0xf] %v1631
      %1768 = vst [vmem:[#allocation3 + $0x2c] sm:$0xf] %v1634
      %1769 = vst [vmem:[#allocation3 + $0x38] sm:$0xf] %v1638
      %1770 = vst [vmem:[#allocation3 + $0x44] sm:$0xf] %v1641
      %1771 = vst [vmem:[#allocation3 + $0x50] sm:$0xf] %v1645
      %1772 = vst [vmem:[#allocation3 + $0x5c] sm:$0xf] %v1648
      %1773 = vst [vmem:[#allocation3 + $0x68] sm:$0xf] %v1652
      %1774 = vst [vmem:[#allocation3 + $0x74] sm:$0xf] %v1655
      %1775 = vst [vmem:[#allocation3 + $0x80] sm:$0xf] %v1659
      %1776 = vst [vmem:[#allocation3 + $0x8c] sm:$0xf] %v1662
      %1777 = vst [vmem:[#allocation3 + $0x98] sm:$0xf] %v1666
      %1778 = vst [vmem:[#allocation3 + $0xa4] sm:$0xf] %v1669
      %1779 = vst [vmem:[#allocation3 + $0xb0] sm:$0xf] %v1673
      %1780 = vst [vmem:[#allocation3 + $0xbc] sm:$0xf] %v1676
      %1781 = vst [vmem:[#allocation3 + $0xc8] sm:$0xf] %v1680
      %1782 = vst [vmem:[#allocation3 + $0xd4] sm:$0xf] %v1683
      %1783 = vst [vmem:[#allocation3 + $0xe0] sm:$0xf] %v1687
      %1784 = vst [vmem:[#allocation3 + $0xec] sm:$0xf] %v1690
      %1785 = vst [vmem:[#allocation3 + $0xf8] sm:$0xf] %v1694
      %1786 = vst [vmem:[#allocation3 + $0x104] sm:$0xf] %v1697
      %1787 = vst [vmem:[#allocation3 + $0x110] sm:$0xf] %v1701
      %1788 = vst [vmem:[#allocation3 + $0x11c] sm:$0xf] %v1704
      %1789 = vst [vmem:[#allocation3 + $0x128] sm:$0xf] %v1708
      %1790 = vst [vmem:[#allocation3 + $0x134] sm:$0xf] %v1711
      %1791 = vst [vmem:[#allocation3 + $0x140] sm:$0xf] %v1715
      %1792 = vst [vmem:[#allocation3 + $0x14c] sm:$0xf] %v1718
      %1793 = vst [vmem:[#allocation3 + $0x158] sm:$0xf] %v1722
      %1794 = vst [vmem:[#allocation3 + $0x164] sm:$0xf] %v1725
      %1795 = vst [vmem:[#allocation3 + $0x170] sm:$0xf] %v1729
      %1796 = vst [vmem:[#allocation3 + $0x17c] sm:$0xf] %v1732
      %v1797 = vld [vmem:[#allocation3] sm:$0xff]
      %v1798 = vld [vmem:[#allocation3 + $0x8] sm:$0xf]
      %v1799 = vld [vmem:[#allocation3 + $0xc] sm:$0xff]
      %v1800 = vld [vmem:[#allocation3 + $0x14] sm:$0xf]
      %v1801 = vld [vmem:[#allocation3 + $0x18] sm:$0xff]
      %v1802 = vld [vmem:[#allocation3 + $0x20] sm:$0xf]
      %v1803 = vld [vmem:[#allocation3 + $0x24] sm:$0xff]
      %v1804 = vld [vmem:[#allocation3 + $0x2c] sm:$0xf]
      %v1805 = vld [vmem:[#allocation3 + $0x30] sm:$0xff]
      %v1806 = vld [vmem:[#allocation3 + $0x38] sm:$0xf]
      %v1807 = vld [vmem:[#allocation3 + $0x3c] sm:$0xff]
      %v1808 = vld [vmem:[#allocation3 + $0x44] sm:$0xf]
      %v1809 = vld [vmem:[#allocation3 + $0x48] sm:$0xff]
      %v1810 = vld [vmem:[#allocation3 + $0x50] sm:$0xf]
      %v1811 = vld [vmem:[#allocation3 + $0x54] sm:$0xff]
      %v1812 = vld [vmem:[#allocation3 + $0x5c] sm:$0xf]
      %v1813 = vld [vmem:[#allocation3 + $0x60] sm:$0xff]
      %v1814 = vld [vmem:[#allocation3 + $0x68] sm:$0xf]
      %v1815 = vld [vmem:[#allocation3 + $0x6c] sm:$0xff]
      %v1816 = vld [vmem:[#allocation3 + $0x74] sm:$0xf]
      %v1817 = vld [vmem:[#allocation3 + $0x78] sm:$0xff]
      %v1818 = vld [vmem:[#allocation3 + $0x80] sm:$0xf]
      %v1819 = vld [vmem:[#allocation3 + $0x84] sm:$0xff]
      %v1820 = vld [vmem:[#allocation3 + $0x8c] sm:$0xf]
      %v1821 = vld [vmem:[#allocation3 + $0x90] sm:$0xff]
      %v1822 = vld [vmem:[#allocation3 + $0x98] sm:$0xf]
      %v1823 = vld [vmem:[#allocation3 + $0x9c] sm:$0xff]
      %v1824 = vld [vmem:[#allocation3 + $0xa4] sm:$0xf]
      %v1825 = vld [vmem:[#allocation3 + $0xa8] sm:$0xff]
      %v1826 = vld [vmem:[#allocation3 + $0xb0] sm:$0xf]
      %v1827 = vld [vmem:[#allocation3 + $0xb4] sm:$0xff]
      %v1828 = vld [vmem:[#allocation3 + $0xbc] sm:$0xf]
      %v1829 = vld [vmem:[#allocation3 + $0xc0] sm:$0xff]
      %v1830 = vld [vmem:[#allocation3 + $0xc8] sm:$0xf]
      %v1831 = vld [vmem:[#allocation3 + $0xcc] sm:$0xff]
      %v1832 = vld [vmem:[#allocation3 + $0xd4] sm:$0xf]
      %v1833 = vld [vmem:[#allocation3 + $0xd8] sm:$0xff]
      %v1834 = vld [vmem:[#allocation3 + $0xe0] sm:$0xf]
      %v1835 = vld [vmem:[#allocation3 + $0xe4] sm:$0xff]
      %v1836 = vld [vmem:[#allocation3 + $0xec] sm:$0xf]
      %v1837 = vld [vmem:[#allocation3 + $0xf0] sm:$0xff]
      %v1838 = vld [vmem:[#allocation3 + $0xf8] sm:$0xf]
      %v1839 = vld [vmem:[#allocation3 + $0xfc] sm:$0xff]
      %v1840 = vld [vmem:[#allocation3 + $0x104] sm:$0xf]
      %v1841 = vld [vmem:[#allocation3 + $0x108] sm:$0xff]
      %v1842 = vld [vmem:[#allocation3 + $0x110] sm:$0xf]
      %v1843 = vld [vmem:[#allocation3 + $0x114] sm:$0xff]
      %v1844 = vld [vmem:[#allocation3 + $0x11c] sm:$0xf]
      %v1845 = vld [vmem:[#allocation3 + $0x120] sm:$0xff]
      %v1846 = vld [vmem:[#allocation3 + $0x128] sm:$0xf]
      %v1847 = vld [vmem:[#allocation3 + $0x12c] sm:$0xff]
      %v1848 = vld [vmem:[#allocation3 + $0x134] sm:$0xf]
      %v1849 = vld [vmem:[#allocation3 + $0x138] sm:$0xff]
      %v1850 = vld [vmem:[#allocation3 + $0x140] sm:$0xf]
      %v1851 = vld [vmem:[#allocation3 + $0x144] sm:$0xff]
      %v1852 = vld [vmem:[#allocation3 + $0x14c] sm:$0xf]
      %v1853 = vld [vmem:[#allocation3 + $0x150] sm:$0xff]
      %v1854 = vld [vmem:[#allocation3 + $0x158] sm:$0xf]
      %v1855 = vld [vmem:[#allocation3 + $0x15c] sm:$0xff]
      %v1856 = vld [vmem:[#allocation3 + $0x164] sm:$0xf]
      %v1857 = vld [vmem:[#allocation3 + $0x168] sm:$0xff]
      %v1858 = vld [vmem:[#allocation3 + $0x170] sm:$0xf]
      %v1859 = vld [vmem:[#allocation3 + $0x174] sm:$0xff]
      %v1860 = vld [vmem:[#allocation3 + $0x17c] sm:$0xf]
      %v1861 = vld [vmem:[%s4] sm:$0xf]
      %v1862 = vld [vmem:[%s4 + $0x4] sm:$0xf]
      %v1863 = vld [vmem:[%s4 + $0x8] sm:$0xf]
      %v1864 = vld [vmem:[%s4 + $0xc] sm:$0xf]
      %v1865 = vld [vmem:[%s4 + $0x10] sm:$0xf]
      %v1866 = vld [vmem:[%s4 + $0x14] sm:$0xf]
      %v1867 = vld [vmem:[%s4 + $0x18] sm:$0xf]
      %v1868 = vld [vmem:[%s4 + $0x1c] sm:$0xf]
      %v1869 = vld [vmem:[%s4 + $0x20] sm:$0xf]
      %v1870 = vld [vmem:[%s4 + $0x24] sm:$0xf]
      %v1871 = vld [vmem:[%s4 + $0x28] sm:$0xf]
      %v1872 = vld [vmem:[%s4 + $0x2c] sm:$0xf]
      %v1873 = vld [vmem:[%s4 + $0x30] sm:$0xf]
      %v1874 = vld [vmem:[%s4 + $0x34] sm:$0xf]
      %v1875 = vld [vmem:[%s4 + $0x38] sm:$0xf]
      %v1876 = vld [vmem:[%s4 + $0x3c] sm:$0xf]
      %v1877 = vld [vmem:[%s4 + $0x40] sm:$0xf]
      %v1878 = vld [vmem:[%s4 + $0x44] sm:$0xf]
      %v1879 = vld [vmem:[%s4 + $0x48] sm:$0xf]
      %v1880 = vld [vmem:[%s4 + $0x4c] sm:$0xf]
      %v1881 = vld [vmem:[%s4 + $0x50] sm:$0xf]
      %v1882 = vld [vmem:[%s4 + $0x54] sm:$0xf]
      %v1883 = vld [vmem:[%s4 + $0x58] sm:$0xf]
      %v1884 = vld [vmem:[%s4 + $0x5c] sm:$0xf]
      %v1885 = vld [vmem:[%s4 + $0x60] sm:$0xf]
      %v1886 = vld [vmem:[%s4 + $0x64] sm:$0xf]
      %v1887 = vld [vmem:[%s4 + $0x68] sm:$0xf]
      %v1888 = vld [vmem:[%s4 + $0x6c] sm:$0xf]
      %v1889 = vld [vmem:[%s4 + $0x70] sm:$0xf]
      %v1890 = vld [vmem:[%s4 + $0x74] sm:$0xf]
      %v1891 = vld [vmem:[%s4 + $0x78] sm:$0xf]
      %v1892 = vld [vmem:[%s4 + $0x7c] sm:$0xf]
      %v1893 = vld [vmem:[%s4 + $0x80] sm:$0xf]
      %v1894 = vld [vmem:[%s4 + $0x84] sm:$0xf]
      %v1895 = vld [vmem:[%s4 + $0x88] sm:$0xf]
      %v1896 = vld [vmem:[%s4 + $0x8c] sm:$0xf]
      %v1897 = vld [vmem:[%s4 + $0x90] sm:$0xf]
      %v1898 = vld [vmem:[%s4 + $0x94] sm:$0xf]
      %v1899 = vld [vmem:[%s4 + $0x98] sm:$0xf]
      %v1900 = vld [vmem:[%s4 + $0x9c] sm:$0xf]
      %v1901 = vld [vmem:[%s4 + $0xa0] sm:$0xf]
      %v1902 = vld [vmem:[%s4 + $0xa4] sm:$0xf]
      %v1903 = vld [vmem:[%s4 + $0xa8] sm:$0xf]
      %v1904 = vld [vmem:[%s4 + $0xac] sm:$0xf]
      %v1905 = vld [vmem:[%s4 + $0xb0] sm:$0xf]
      %v1906 = vld [vmem:[%s4 + $0xb4] sm:$0xf]
      %v1907 = vld [vmem:[%s4 + $0xb8] sm:$0xf]
      %v1908 = vld [vmem:[%s4 + $0xbc] sm:$0xf]
      %v1909 = vld [vmem:[%s910] sm:$0xf]
      %v1910 = vld [vmem:[%s910 + $0x4] sm:$0xf]
      %v1911 = vld [vmem:[%s910 + $0xc] sm:$0xf]
      %v1912 = vld [vmem:[%s910 + $0x10] sm:$0xf]
      %v1913 = vld [vmem:[%s910 + $0x18] sm:$0xf]
      %v1914 = vld [vmem:[%s910 + $0x1c] sm:$0xf]
      %v1915 = vld [vmem:[%s910 + $0x24] sm:$0xf]
      %v1916 = vld [vmem:[%s910 + $0x28] sm:$0xf]
      %v1917 = vld [vmem:[%s910 + $0x30] sm:$0xf]
      %v1918 = vld [vmem:[%s910 + $0x34] sm:$0xf]
      %v1919 = vld [vmem:[%s910 + $0x3c] sm:$0xf]
      %v1920 = vld [vmem:[%s910 + $0x40] sm:$0xf]
      %v1921 = vld [vmem:[%s910 + $0x48] sm:$0xf]
      %v1922 = vld [vmem:[%s910 + $0x4c] sm:$0xf]
      %v1923 = vld [vmem:[%s910 + $0x54] sm:$0xf]
      %v1924 = vld [vmem:[%s910 + $0x58] sm:$0xf]
      %v1925 = vld [vmem:[%s910 + $0x60] sm:$0xf]
      %v1926 = vld [vmem:[%s910 + $0x64] sm:$0xf]
      %v1927 = vld [vmem:[%s910 + $0x6c] sm:$0xf]
      %v1928 = vld [vmem:[%s910 + $0x70] sm:$0xf]
      %v1929 = vld [vmem:[%s910 + $0x78] sm:$0xf]
      %v1930 = vld [vmem:[%s910 + $0x7c] sm:$0xf]
      %v1931 = vld [vmem:[%s910 + $0x84] sm:$0xf]
      %v1932 = vld [vmem:[%s910 + $0x88] sm:$0xf]
      %v1933 = vld [vmem:[%s910 + $0x90] sm:$0xf]
      %v1934 = vld [vmem:[%s910 + $0x94] sm:$0xf]
      %v1935 = vld [vmem:[%s910 + $0x9c] sm:$0xf]
      %v1936 = vld [vmem:[%s910 + $0xa0] sm:$0xf]
      %v1937 = vld [vmem:[%s910 + $0xa8] sm:$0xf]
      %v1938 = vld [vmem:[%s910 + $0xac] sm:$0xf]
      %v1939 = vld [vmem:[%s910 + $0xb4] sm:$0xf]
      %v1940 = vld [vmem:[%s910 + $0xb8] sm:$0xf]
      %1941 = vst [vmem:[#allocation3] sm:$0xf] %v1909
      %1942 = vst [vmem:[#allocation3 + $0xc] sm:$0xf] %v1910
      %1943 = vst [vmem:[#allocation3 + $0x18] sm:$0xf] %v1911
      %1944 = vst [vmem:[#allocation3 + $0x24] sm:$0xf] %v1912
      %1945 = vst [vmem:[#allocation3 + $0x30] sm:$0xf] %v1913
      %1946 = vst [vmem:[#allocation3 + $0x3c] sm:$0xf] %v1914
      %1947 = vst [vmem:[#allocation3 + $0x48] sm:$0xf] %v1915
      %1948 = vst [vmem:[#allocation3 + $0x54] sm:$0xf] %v1916
      %1949 = vst [vmem:[#allocation3 + $0x60] sm:$0xf] %v1917
      %1950 = vst [vmem:[#allocation3 + $0x6c] sm:$0xf] %v1918
      %1951 = vst [vmem:[#allocation3 + $0x78] sm:$0xf] %v1919
      %1952 = vst [vmem:[#allocation3 + $0x84] sm:$0xf] %v1920
      %1953 = vst [vmem:[#allocation3 + $0x90] sm:$0xf] %v1921
      %1954 = vst [vmem:[#allocation3 + $0x9c] sm:$0xf] %v1922
      %1955 = vst [vmem:[#allocation3 + $0xa8] sm:$0xf] %v1923
      %1956 = vst [vmem:[#allocation3 + $0xb4] sm:$0xf] %v1924
      %1957 = vst [vmem:[#allocation3 + $0xc0] sm:$0xf] %v1925
      %1958 = vst [vmem:[#allocation3 + $0xcc] sm:$0xf] %v1926
      %1959 = vst [vmem:[#allocation3 + $0xd8] sm:$0xf] %v1927
      %1960 = vst [vmem:[#allocation3 + $0xe4] sm:$0xf] %v1928
      %1961 = vst [vmem:[#allocation3 + $0xf0] sm:$0xf] %v1929
      %1962 = vst [vmem:[#allocation3 + $0xfc] sm:$0xf] %v1930
      %1963 = vst [vmem:[#allocation3 + $0x108] sm:$0xf] %v1931
      %1964 = vst [vmem:[#allocation3 + $0x114] sm:$0xf] %v1932
      %1965 = vst [vmem:[#allocation3 + $0x120] sm:$0xf] %v1933
      %1966 = vst [vmem:[#allocation3 + $0x12c] sm:$0xf] %v1934
      %1967 = vst [vmem:[#allocation3 + $0x138] sm:$0xf] %v1935
      %1968 = vst [vmem:[#allocation3 + $0x144] sm:$0xf] %v1936
      %1969 = vst [vmem:[#allocation3 + $0x150] sm:$0xf] %v1937
      %1970 = vst [vmem:[#allocation3 + $0x15c] sm:$0xf] %v1938
      %1971 = vst [vmem:[#allocation3 + $0x168] sm:$0xf] %v1939
      %1972 = vst [vmem:[#allocation3 + $0x174] sm:$0xf] %v1940
      %v1973 = vld [vmem:[%s910] sm:$0xf]
      %v1974 = vld [vmem:[%s910 + $0x4] sm:$0xf]
      %v1975 = vld [vmem:[%s910 + $0x8] sm:$0x1]
      %v1976 = vld [vmem:[%s910 + $0xc] sm:$0xf]
      %v1977 = vld [vmem:[%s910 + $0x10] sm:$0xf]
      %v1978 = vld [vmem:[%s910 + $0x14] sm:$0x1]
      %v1979 = vld [vmem:[%s910 + $0x18] sm:$0xf]
      %v1980 = vld [vmem:[%s910 + $0x1c] sm:$0xf]
      %v1981 = vld [vmem:[%s910 + $0x20] sm:$0x1]
      %v1982 = vld [vmem:[%s910 + $0x24] sm:$0xf]
      %v1983 = vld [vmem:[%s910 + $0x28] sm:$0xf]
      %v1984 = vld [vmem:[%s910 + $0x2c] sm:$0x1]
      %v1985 = vld [vmem:[%s910 + $0x30] sm:$0xf]
      %v1986 = vld [vmem:[%s910 + $0x34] sm:$0xf]
      %v1987 = vld [vmem:[%s910 + $0x38] sm:$0x1]
      %v1988 = vld [vmem:[%s910 + $0x3c] sm:$0xf]
      %v1989 = vld [vmem:[%s910 + $0x40] sm:$0xf]
      %v1990 = vld [vmem:[%s910 + $0x44] sm:$0x1]
      %v1991 = vld [vmem:[%s910 + $0x48] sm:$0xf]
      %v1992 = vld [vmem:[%s910 + $0x4c] sm:$0xf]
      %v1993 = vld [vmem:[%s910 + $0x50] sm:$0x1]
      %v1994 = vld [vmem:[%s910 + $0x54] sm:$0xf]
      %v1995 = vld [vmem:[%s910 + $0x58] sm:$0xf]
      %v1996 = vld [vmem:[%s910 + $0x5c] sm:$0x1]
      %v1997 = vld [vmem:[%s910 + $0x60] sm:$0xf]
      %v1998 = vld [vmem:[%s910 + $0x64] sm:$0xf]
      %v1999 = vld [vmem:[%s910 + $0x68] sm:$0x1]
      %v2000 = vld [vmem:[%s910 + $0x6c] sm:$0xf]
      %v2001 = vld [vmem:[%s910 + $0x70] sm:$0xf]
      %v2002 = vld [vmem:[%s910 + $0x74] sm:$0x1]
      %v2003 = vld [vmem:[%s910 + $0x78] sm:$0xf]
      %v2004 = vld [vmem:[%s910 + $0x7c] sm:$0xf]
      %v2005 = vld [vmem:[%s910 + $0x80] sm:$0x1]
      %v2006 = vld [vmem:[%s910 + $0x84] sm:$0xf]
      %v2007 = vld [vmem:[%s910 + $0x88] sm:$0xf]
      %v2008 = vld [vmem:[%s910 + $0x8c] sm:$0x1]
      %v2009 = vld [vmem:[%s910 + $0x90] sm:$0xf]
      %v2010 = vld [vmem:[%s910 + $0x94] sm:$0xf]
      %v2011 = vld [vmem:[%s910 + $0x98] sm:$0x1]
      %v2012 = vld [vmem:[%s910 + $0x9c] sm:$0xf]
      %v2013 = vld [vmem:[%s910 + $0xa0] sm:$0xf]
      %v2014 = vld [vmem:[%s910 + $0xa4] sm:$0x1]
      %v2015 = vld [vmem:[%s910 + $0xa8] sm:$0xf]
      %v2016 = vld [vmem:[%s910 + $0xac] sm:$0xf]
      %v2017 = vld [vmem:[%s910 + $0xb0] sm:$0x1]
      %v2018 = vld [vmem:[%s910 + $0xb4] sm:$0xf]
      %v2019 = vld [vmem:[%s910 + $0xb8] sm:$0xf]
      %v2020 = vld [vmem:[%s910 + $0xbc] sm:$0x1]
      %v2022 = vshrl.u32 %v1973, 16
      %v2024 = vrot.slane %v2022, 4
      %v2025 = vshll.u32 %v1973, 16
      %v2027 = vrot.slane %v2025, 5
      %v2028 = vor.u32 %v2024, %v2027
      %v2029 = vrot.slane %v2028, 4
      %v2031 = vshll.u32 %v1974, 16
      %v2033 = vrot.slane %v2031, 5
      %v2034 = vsel %vm1073, %v2029, %v2033
      %v2035 = vshrl.u32 %v1974, 16
      %v2037 = vrot.slane %v2035, 4
      %v2038 = vor.u32 %v2037, %v2033
      %v2039 = vrot.slane %v2038, 4
      %v2041 = vshll.u32 %v1975, 16
      %v2043 = vrot.slane %v2041, 5
      %v2044 = vsel %vm1073, %v2039, %v2043
      %v2046 = vshrl.u32 %v1976, 16
      %v2048 = vrot.slane %v2046, 4
      %v2049 = vshll.u32 %v1976, 16
      %v2051 = vrot.slane %v2049, 5
      %v2052 = vor.u32 %v2048, %v2051
      %v2053 = vrot.slane %v2052, 4
      %v2055 = vshll.u32 %v1977, 16
      %v2057 = vrot.slane %v2055, 5
      %v2058 = vsel %vm1073, %v2053, %v2057
      %v2059 = vshrl.u32 %v1977, 16
      %v2061 = vrot.slane %v2059, 4
      %v2062 = vor.u32 %v2061, %v2057
      %v2063 = vrot.slane %v2062, 4
      %v2065 = vshll.u32 %v1978, 16
      %v2067 = vrot.slane %v2065, 5
      %v2068 = vsel %vm1073, %v2063, %v2067
      %v2070 = vshrl.u32 %v1979, 16
      %v2072 = vrot.slane %v2070, 4
      %v2073 = vshll.u32 %v1979, 16
      %v2075 = vrot.slane %v2073, 5
      %v2076 = vor.u32 %v2072, %v2075
      %v2077 = vrot.slane %v2076, 4
      %v2079 = vshll.u32 %v1980, 16
      %v2081 = vrot.slane %v2079, 5
      %v2082 = vsel %vm1073, %v2077, %v2081
      %v2083 = vshrl.u32 %v1980, 16
      %v2085 = vrot.slane %v2083, 4
      %v2086 = vor.u32 %v2085, %v2081
      %v2087 = vrot.slane %v2086, 4
      %v2089 = vshll.u32 %v1981, 16
      %v2091 = vrot.slane %v2089, 5
      %v2092 = vsel %vm1073, %v2087, %v2091
      %v2094 = vshrl.u32 %v1982, 16
      %v2096 = vrot.slane %v2094, 4
      %v2097 = vshll.u32 %v1982, 16
      %v2099 = vrot.slane %v2097, 5
      %v2100 = vor.u32 %v2096, %v2099
      %v2101 = vrot.slane %v2100, 4
      %v2103 = vshll.u32 %v1983, 16
      %v2105 = vrot.slane %v2103, 5
      %v2106 = vsel %vm1073, %v2101, %v2105
      %v2107 = vshrl.u32 %v1983, 16
      %v2109 = vrot.slane %v2107, 4
      %v2110 = vor.u32 %v2109, %v2105
      %v2111 = vrot.slane %v2110, 4
      %v2113 = vshll.u32 %v1984, 16
      %v2115 = vrot.slane %v2113, 5
      %v2116 = vsel %vm1073, %v2111, %v2115
      %v2118 = vshrl.u32 %v1985, 16
      %v2120 = vrot.slane %v2118, 4
      %v2121 = vshll.u32 %v1985, 16
      %v2123 = vrot.slane %v2121, 5
      %v2124 = vor.u32 %v2120, %v2123
      %v2125 = vrot.slane %v2124, 4
      %v2127 = vshll.u32 %v1986, 16
      %v2129 = vrot.slane %v2127, 5
      %v2130 = vsel %vm1073, %v2125, %v2129
      %v2131 = vshrl.u32 %v1986, 16
      %v2133 = vrot.slane %v2131, 4
      %v2134 = vor.u32 %v2133, %v2129
      %v2135 = vrot.slane %v2134, 4
      %v2137 = vshll.u32 %v1987, 16
      %v2139 = vrot.slane %v2137, 5
      %v2140 = vsel %vm1073, %v2135, %v2139
      %v2142 = vshrl.u32 %v1988, 16
      %v2144 = vrot.slane %v2142, 4
      %v2145 = vshll.u32 %v1988, 16
      %v2147 = vrot.slane %v2145, 5
      %v2148 = vor.u32 %v2144, %v2147
      %v2149 = vrot.slane %v2148, 4
      %v2151 = vshll.u32 %v1989, 16
      %v2153 = vrot.slane %v2151, 5
      %v2154 = vsel %vm1073, %v2149, %v2153
      %v2155 = vshrl.u32 %v1989, 16
      %v2157 = vrot.slane %v2155, 4
      %v2158 = vor.u32 %v2157, %v2153
      %v2159 = vrot.slane %v2158, 4
      %v2161 = vshll.u32 %v1990, 16
      %v2163 = vrot.slane %v2161, 5
      %v2164 = vsel %vm1073, %v2159, %v2163
      %v2166 = vshrl.u32 %v1991, 16
      %v2168 = vrot.slane %v2166, 4
      %v2169 = vshll.u32 %v1991, 16
      %v2171 = vrot.slane %v2169, 5
      %v2172 = vor.u32 %v2168, %v2171
      %v2173 = vrot.slane %v2172, 4
      %v2175 = vshll.u32 %v1992, 16
      %v2177 = vrot.slane %v2175, 5
      %v2178 = vsel %vm1073, %v2173, %v2177
      %v2179 = vshrl.u32 %v1992, 16
      %v2181 = vrot.slane %v2179, 4
      %v2182 = vor.u32 %v2181, %v2177
      %v2183 = vrot.slane %v2182, 4
      %v2185 = vshll.u32 %v1993, 16
      %v2187 = vrot.slane %v2185, 5
      %v2188 = vsel %vm1073, %v2183, %v2187
      %v2190 = vshrl.u32 %v1994, 16
      %v2192 = vrot.slane %v2190, 4
      %v2193 = vshll.u32 %v1994, 16
      %v2195 = vrot.slane %v2193, 5
      %v2196 = vor.u32 %v2192, %v2195
      %v2197 = vrot.slane %v2196, 4
      %v2199 = vshll.u32 %v1995, 16
      %v2201 = vrot.slane %v2199, 5
      %v2202 = vsel %vm1073, %v2197, %v2201
      %v2203 = vshrl.u32 %v1995, 16
      %v2205 = vrot.slane %v2203, 4
      %v2206 = vor.u32 %v2205, %v2201
      %v2207 = vrot.slane %v2206, 4
      %v2209 = vshll.u32 %v1996, 16
      %v2211 = vrot.slane %v2209, 5
      %v2212 = vsel %vm1073, %v2207, %v2211
      %v2214 = vshrl.u32 %v1997, 16
      %v2216 = vrot.slane %v2214, 4
      %v2217 = vshll.u32 %v1997, 16
      %v2219 = vrot.slane %v2217, 5
      %v2220 = vor.u32 %v2216, %v2219
      %v2221 = vrot.slane %v2220, 4
      %v2223 = vshll.u32 %v1998, 16
      %v2225 = vrot.slane %v2223, 5
      %v2226 = vsel %vm1073, %v2221, %v2225
      %v2227 = vshrl.u32 %v1998, 16
      %v2229 = vrot.slane %v2227, 4
      %v2230 = vor.u32 %v2229, %v2225
      %v2231 = vrot.slane %v2230, 4
      %v2233 = vshll.u32 %v1999, 16
      %v2235 = vrot.slane %v2233, 5
      %v2236 = vsel %vm1073, %v2231, %v2235
      %v2238 = vshrl.u32 %v2000, 16
      %v2240 = vrot.slane %v2238, 4
      %v2241 = vshll.u32 %v2000, 16
      %v2243 = vrot.slane %v2241, 5
      %v2244 = vor.u32 %v2240, %v2243
      %v2245 = vrot.slane %v2244, 4
      %v2247 = vshll.u32 %v2001, 16
      %v2249 = vrot.slane %v2247, 5
      %v2250 = vsel %vm1073, %v2245, %v2249
      %v2251 = vshrl.u32 %v2001, 16
      %v2253 = vrot.slane %v2251, 4
      %v2254 = vor.u32 %v2253, %v2249
      %v2255 = vrot.slane %v2254, 4
      %v2257 = vshll.u32 %v2002, 16
      %v2259 = vrot.slane %v2257, 5
      %v2260 = vsel %vm1073, %v2255, %v2259
      %v2262 = vshrl.u32 %v2003, 16
      %v2264 = vrot.slane %v2262, 4
      %v2265 = vshll.u32 %v2003, 16
      %v2267 = vrot.slane %v2265, 5
      %v2268 = vor.u32 %v2264, %v2267
      %v2269 = vrot.slane %v2268, 4
      %v2271 = vshll.u32 %v2004, 16
      %v2273 = vrot.slane %v2271, 5
      %v2274 = vsel %vm1073, %v2269, %v2273
      %v2275 = vshrl.u32 %v2004, 16
      %v2277 = vrot.slane %v2275, 4
      %v2278 = vor.u32 %v2277, %v2273
      %v2279 = vrot.slane %v2278, 4
      %v2281 = vshll.u32 %v2005, 16
      %v2283 = vrot.slane %v2281, 5
      %v2284 = vsel %vm1073, %v2279, %v2283
      %v2286 = vshrl.u32 %v2006, 16
      %v2288 = vrot.slane %v2286, 4
      %v2289 = vshll.u32 %v2006, 16
      %v2291 = vrot.slane %v2289, 5
      %v2292 = vor.u32 %v2288, %v2291
      %v2293 = vrot.slane %v2292, 4
      %v2295 = vshll.u32 %v2007, 16
      %v2297 = vrot.slane %v2295, 5
      %v2298 = vsel %vm1073, %v2293, %v2297
      %v2299 = vshrl.u32 %v2007, 16
      %v2301 = vrot.slane %v2299, 4
      %v2302 = vor.u32 %v2301, %v2297
      %v2303 = vrot.slane %v2302, 4
      %v2305 = vshll.u32 %v2008, 16
      %v2307 = vrot.slane %v2305, 5
      %v2308 = vsel %vm1073, %v2303, %v2307
      %v2310 = vshrl.u32 %v2009, 16
      %v2312 = vrot.slane %v2310, 4
      %v2313 = vshll.u32 %v2009, 16
      %v2315 = vrot.slane %v2313, 5
      %v2316 = vor.u32 %v2312, %v2315
      %v2317 = vrot.slane %v2316, 4
      %v2319 = vshll.u32 %v2010, 16
      %v2321 = vrot.slane %v2319, 5
      %v2322 = vsel %vm1073, %v2317, %v2321
      %v2323 = vshrl.u32 %v2010, 16
      %v2325 = vrot.slane %v2323, 4
      %v2326 = vor.u32 %v2325, %v2321
      %v2327 = vrot.slane %v2326, 4
      %v2329 = vshll.u32 %v2011, 16
      %v2331 = vrot.slane %v2329, 5
      %v2332 = vsel %vm1073, %v2327, %v2331
      %v2334 = vshrl.u32 %v2012, 16
      %v2336 = vrot.slane %v2334, 4
      %v2337 = vshll.u32 %v2012, 16
      %v2339 = vrot.slane %v2337, 5
      %v2340 = vor.u32 %v2336, %v2339
      %v2341 = vrot.slane %v2340, 4
      %v2343 = vshll.u32 %v2013, 16
      %v2345 = vrot.slane %v2343, 5
      %v2346 = vsel %vm1073, %v2341, %v2345
      %v2347 = vshrl.u32 %v2013, 16
      %v2349 = vrot.slane %v2347, 4
      %v2350 = vor.u32 %v2349, %v2345
      %v2351 = vrot.slane %v2350, 4
      %v2353 = vshll.u32 %v2014, 16
      %v2355 = vrot.slane %v2353, 5
      %v2356 = vsel %vm1073, %v2351, %v2355
      %v2358 = vshrl.u32 %v2015, 16
      %v2360 = vrot.slane %v2358, 4
      %v2361 = vshll.u32 %v2015, 16
      %v2363 = vrot.slane %v2361, 5
      %v2364 = vor.u32 %v2360, %v2363
      %v2365 = vrot.slane %v2364, 4
      %v2367 = vshll.u32 %v2016, 16
      %v2369 = vrot.slane %v2367, 5
      %v2370 = vsel %vm1073, %v2365, %v2369
      %v2371 = vshrl.u32 %v2016, 16
      %v2373 = vrot.slane %v2371, 4
      %v2374 = vor.u32 %v2373, %v2369
      %v2375 = vrot.slane %v2374, 4
      %v2377 = vshll.u32 %v2017, 16
      %v2379 = vrot.slane %v2377, 5
      %v2380 = vsel %vm1073, %v2375, %v2379
      %v2382 = vshrl.u32 %v2018, 16
      %v2384 = vrot.slane %v2382, 4
      %v2385 = vshll.u32 %v2018, 16
      %v2387 = vrot.slane %v2385, 5
      %v2388 = vor.u32 %v2384, %v2387
      %v2389 = vrot.slane %v2388, 4
      %v2391 = vshll.u32 %v2019, 16
      %v2393 = vrot.slane %v2391, 5
      %v2394 = vsel %vm1073, %v2389, %v2393
      %v2395 = vshrl.u32 %v2019, 16
      %v2397 = vrot.slane %v2395, 4
      %v2398 = vor.u32 %v2397, %v2393
      %v2399 = vrot.slane %v2398, 4
      %v2401 = vshll.u32 %v2020, 16
      %v2403 = vrot.slane %v2401, 5
      %v2404 = vsel %vm1073, %v2399, %v2403
      %2437 = vst [vmem:[#allocation3 + $0x4] sm:$0xf] %v2034
      %2438 = vst [vmem:[#allocation3 + $0x10] sm:$0xf] %v2044
      %2439 = vst [vmem:[#allocation3 + $0x1c] sm:$0xf] %v2058
      %2440 = vst [vmem:[#allocation3 + $0x28] sm:$0xf] %v2068
      %2441 = vst [vmem:[#allocation3 + $0x34] sm:$0xf] %v2082
      %2442 = vst [vmem:[#allocation3 + $0x40] sm:$0xf] %v2092
      %2443 = vst [vmem:[#allocation3 + $0x4c] sm:$0xf] %v2106
      %2444 = vst [vmem:[#allocation3 + $0x58] sm:$0xf] %v2116
      %2445 = vst [vmem:[#allocation3 + $0x64] sm:$0xf] %v2130
      %2446 = vst [vmem:[#allocation3 + $0x70] sm:$0xf] %v2140
      %2447 = vst [vmem:[#allocation3 + $0x7c] sm:$0xf] %v2154
      %2448 = vst [vmem:[#allocation3 + $0x88] sm:$0xf] %v2164
      %2449 = vst [vmem:[#allocation3 + $0x94] sm:$0xf] %v2178
      %2450 = vst [vmem:[#allocation3 + $0xa0] sm:$0xf] %v2188
      %2451 = vst [vmem:[#allocation3 + $0xac] sm:$0xf] %v2202
      %2452 = vst [vmem:[#allocation3 + $0xb8] sm:$0xf] %v2212
      %2453 = vst [vmem:[#allocation3 + $0xc4] sm:$0xf] %v2226
      %2454 = vst [vmem:[#allocation3 + $0xd0] sm:$0xf] %v2236
      %2455 = vst [vmem:[#allocation3 + $0xdc] sm:$0xf] %v2250
      %2456 = vst [vmem:[#allocation3 + $0xe8] sm:$0xf] %v2260
      %2457 = vst [vmem:[#allocation3 + $0xf4] sm:$0xf] %v2274
      %2458 = vst [vmem:[#allocation3 + $0x100] sm:$0xf] %v2284
      %2459 = vst [vmem:[#allocation3 + $0x10c] sm:$0xf] %v2298
      %2460 = vst [vmem:[#allocation3 + $0x118] sm:$0xf] %v2308
      %2461 = vst [vmem:[#allocation3 + $0x124] sm:$0xf] %v2322
      %2462 = vst [vmem:[#allocation3 + $0x130] sm:$0xf] %v2332
      %2463 = vst [vmem:[#allocation3 + $0x13c] sm:$0xf] %v2346
      %2464 = vst [vmem:[#allocation3 + $0x148] sm:$0xf] %v2356
      %2465 = vst [vmem:[#allocation3 + $0x154] sm:$0xf] %v2370
      %2466 = vst [vmem:[#allocation3 + $0x160] sm:$0xf] %v2380
      %2467 = vst [vmem:[#allocation3 + $0x16c] sm:$0xf] %v2394
      %2468 = vst [vmem:[#allocation3 + $0x178] sm:$0xf] %v2404
      %v2469 = vld [vmem:[%s910] sm:$0xe]
      %v2470 = vld [vmem:[%s910 + $0x4] sm:$0xf]
      %v2471 = vld [vmem:[%s910 + $0x8] sm:$0x1]
      %v2472 = vld [vmem:[%s910 + $0xc] sm:$0xe]
      %v2473 = vld [vmem:[%s910 + $0x10] sm:$0xf]
      %v2474 = vld [vmem:[%s910 + $0x14] sm:$0x1]
      %v2475 = vld [vmem:[%s910 + $0x18] sm:$0xe]
      %v2476 = vld [vmem:[%s910 + $0x1c] sm:$0xf]
      %v2477 = vld [vmem:[%s910 + $0x20] sm:$0x1]
      %v2478 = vld [vmem:[%s910 + $0x24] sm:$0xe]
      %v2479 = vld [vmem:[%s910 + $0x28] sm:$0xf]
      %v2480 = vld [vmem:[%s910 + $0x2c] sm:$0x1]
      %v2481 = vld [vmem:[%s910 + $0x30] sm:$0xe]
      %v2482 = vld [vmem:[%s910 + $0x34] sm:$0xf]
      %v2483 = vld [vmem:[%s910 + $0x38] sm:$0x1]
      %v2484 = vld [vmem:[%s910 + $0x3c] sm:$0xe]
      %v2485 = vld [vmem:[%s910 + $0x40] sm:$0xf]
      %v2486 = vld [vmem:[%s910 + $0x44] sm:$0x1]
      %v2487 = vld [vmem:[%s910 + $0x48] sm:$0xe]
      %v2488 = vld [vmem:[%s910 + $0x4c] sm:$0xf]
      %v2489 = vld [vmem:[%s910 + $0x50] sm:$0x1]
      %v2490 = vld [vmem:[%s910 + $0x54] sm:$0xe]
      %v2491 = vld [vmem:[%s910 + $0x58] sm:$0xf]
      %v2492 = vld [vmem:[%s910 + $0x5c] sm:$0x1]
      %v2493 = vld [vmem:[%s910 + $0x60] sm:$0xe]
      %v2494 = vld [vmem:[%s910 + $0x64] sm:$0xf]
      %v2495 = vld [vmem:[%s910 + $0x68] sm:$0x1]
      %v2496 = vld [vmem:[%s910 + $0x6c] sm:$0xe]
      %v2497 = vld [vmem:[%s910 + $0x70] sm:$0xf]
      %v2498 = vld [vmem:[%s910 + $0x74] sm:$0x1]
      %v2499 = vld [vmem:[%s910 + $0x78] sm:$0xe]
      %v2500 = vld [vmem:[%s910 + $0x7c] sm:$0xf]
      %v2501 = vld [vmem:[%s910 + $0x80] sm:$0x1]
      %v2502 = vld [vmem:[%s910 + $0x84] sm:$0xe]
      %v2503 = vld [vmem:[%s910 + $0x88] sm:$0xf]
      %v2504 = vld [vmem:[%s910 + $0x8c] sm:$0x1]
      %v2505 = vld [vmem:[%s910 + $0x90] sm:$0xe]
      %v2506 = vld [vmem:[%s910 + $0x94] sm:$0xf]
      %v2507 = vld [vmem:[%s910 + $0x98] sm:$0x1]
      %v2508 = vld [vmem:[%s910 + $0x9c] sm:$0xe]
      %v2509 = vld [vmem:[%s910 + $0xa0] sm:$0xf]
      %v2510 = vld [vmem:[%s910 + $0xa4] sm:$0x1]
      %v2511 = vld [vmem:[%s910 + $0xa8] sm:$0xe]
      %v2512 = vld [vmem:[%s910 + $0xac] sm:$0xf]
      %v2513 = vld [vmem:[%s910 + $0xb0] sm:$0x1]
      %v2514 = vld [vmem:[%s910 + $0xb4] sm:$0xe]
      %v2515 = vld [vmem:[%s910 + $0xb8] sm:$0xf]
      %v2516 = vld [vmem:[%s910 + $0xbc] sm:$0x1]
      %v2565 = vrot.slane %v2469, 5
      %v2566 = vrot.slane %v2565, 4
      %v2567 = vrot.slane %v2470, 5
      %v2568 = vsel %vm1620, %v2566, %v2567
      %v2569 = vrot.slane %v2567, 4
      %v2570 = vrot.slane %v2471, 5
      %v2571 = vsel %vm1620, %v2569, %v2570
      %v2572 = vrot.slane %v2472, 5
      %v2573 = vrot.slane %v2572, 4
      %v2574 = vrot.slane %v2473, 5
      %v2575 = vsel %vm1620, %v2573, %v2574
      %v2576 = vrot.slane %v2574, 4
      %v2577 = vrot.slane %v2474, 5
      %v2578 = vsel %vm1620, %v2576, %v2577
      %v2579 = vrot.slane %v2475, 5
      %v2580 = vrot.slane %v2579, 4
      %v2581 = vrot.slane %v2476, 5
      %v2582 = vsel %vm1620, %v2580, %v2581
      %v2583 = vrot.slane %v2581, 4
      %v2584 = vrot.slane %v2477, 5
      %v2585 = vsel %vm1620, %v2583, %v2584
      %v2586 = vrot.slane %v2478, 5
      %v2587 = vrot.slane %v2586, 4
      %v2588 = vrot.slane %v2479, 5
      %v2589 = vsel %vm1620, %v2587, %v2588
      %v2590 = vrot.slane %v2588, 4
      %v2591 = vrot.slane %v2480, 5
      %v2592 = vsel %vm1620, %v2590, %v2591
      %v2593 = vrot.slane %v2481, 5
      %v2594 = vrot.slane %v2593, 4
      %v2595 = vrot.slane %v2482, 5
      %v2596 = vsel %vm1620, %v2594, %v2595
      %v2597 = vrot.slane %v2595, 4
      %v2598 = vrot.slane %v2483, 5
      %v2599 = vsel %vm1620, %v2597, %v2598
      %v2600 = vrot.slane %v2484, 5
      %v2601 = vrot.slane %v2600, 4
      %v2602 = vrot.slane %v2485, 5
      %v2603 = vsel %vm1620, %v2601, %v2602
      %v2604 = vrot.slane %v2602, 4
      %v2605 = vrot.slane %v2486, 5
      %v2606 = vsel %vm1620, %v2604, %v2605
      %v2607 = vrot.slane %v2487, 5
      %v2608 = vrot.slane %v2607, 4
      %v2609 = vrot.slane %v2488, 5
      %v2610 = vsel %vm1620, %v2608, %v2609
      %v2611 = vrot.slane %v2609, 4
      %v2612 = vrot.slane %v2489, 5
      %v2613 = vsel %vm1620, %v2611, %v2612
      %v2614 = vrot.slane %v2490, 5
      %v2615 = vrot.slane %v2614, 4
      %v2616 = vrot.slane %v2491, 5
      %v2617 = vsel %vm1620, %v2615, %v2616
      %v2618 = vrot.slane %v2616, 4
      %v2619 = vrot.slane %v2492, 5
      %v2620 = vsel %vm1620, %v2618, %v2619
      %v2621 = vrot.slane %v2493, 5
      %v2622 = vrot.slane %v2621, 4
      %v2623 = vrot.slane %v2494, 5
      %v2624 = vsel %vm1620, %v2622, %v2623
      %v2625 = vrot.slane %v2623, 4
      %v2626 = vrot.slane %v2495, 5
      %v2627 = vsel %vm1620, %v2625, %v2626
      %v2628 = vrot.slane %v2496, 5
      %v2629 = vrot.slane %v2628, 4
      %v2630 = vrot.slane %v2497, 5
      %v2631 = vsel %vm1620, %v2629, %v2630
      %v2632 = vrot.slane %v2630, 4
      %v2633 = vrot.slane %v2498, 5
      %v2634 = vsel %vm1620, %v2632, %v2633
      %v2635 = vrot.slane %v2499, 5
      %v2636 = vrot.slane %v2635, 4
      %v2637 = vrot.slane %v2500, 5
      %v2638 = vsel %vm1620, %v2636, %v2637
      %v2639 = vrot.slane %v2637, 4
      %v2640 = vrot.slane %v2501, 5
      %v2641 = vsel %vm1620, %v2639, %v2640
      %v2642 = vrot.slane %v2502, 5
      %v2643 = vrot.slane %v2642, 4
      %v2644 = vrot.slane %v2503, 5
      %v2645 = vsel %vm1620, %v2643, %v2644
      %v2646 = vrot.slane %v2644, 4
      %v2647 = vrot.slane %v2504, 5
      %v2648 = vsel %vm1620, %v2646, %v2647
      %v2649 = vrot.slane %v2505, 5
      %v2650 = vrot.slane %v2649, 4
      %v2651 = vrot.slane %v2506, 5
      %v2652 = vsel %vm1620, %v2650, %v2651
      %v2653 = vrot.slane %v2651, 4
      %v2654 = vrot.slane %v2507, 5
      %v2655 = vsel %vm1620, %v2653, %v2654
      %v2656 = vrot.slane %v2508, 5
      %v2657 = vrot.slane %v2656, 4
      %v2658 = vrot.slane %v2509, 5
      %v2659 = vsel %vm1620, %v2657, %v2658
      %v2660 = vrot.slane %v2658, 4
      %v2661 = vrot.slane %v2510, 5
      %v2662 = vsel %vm1620, %v2660, %v2661
      %v2663 = vrot.slane %v2511, 5
      %v2664 = vrot.slane %v2663, 4
      %v2665 = vrot.slane %v2512, 5
      %v2666 = vsel %vm1620, %v2664, %v2665
      %v2667 = vrot.slane %v2665, 4
      %v2668 = vrot.slane %v2513, 5
      %v2669 = vsel %vm1620, %v2667, %v2668
      %v2670 = vrot.slane %v2514, 5
      %v2671 = vrot.slane %v2670, 4
      %v2672 = vrot.slane %v2515, 5
      %v2673 = vsel %vm1620, %v2671, %v2672
      %v2674 = vrot.slane %v2672, 4
      %v2675 = vrot.slane %v2516, 5
      %v2676 = vsel %vm1620, %v2674, %v2675
      %2709 = vst [vmem:[#allocation3 + $0x8] sm:$0xf] %v2568
      %2710 = vst [vmem:[#allocation3 + $0x14] sm:$0xf] %v2571
      %2711 = vst [vmem:[#allocation3 + $0x20] sm:$0xf] %v2575
      %2712 = vst [vmem:[#allocation3 + $0x2c] sm:$0xf] %v2578
      %2713 = vst [vmem:[#allocation3 + $0x38] sm:$0xf] %v2582
      %2714 = vst [vmem:[#allocation3 + $0x44] sm:$0xf] %v2585
      %2715 = vst [vmem:[#allocation3 + $0x50] sm:$0xf] %v2589
      %2716 = vst [vmem:[#allocation3 + $0x5c] sm:$0xf] %v2592
      %2717 = vst [vmem:[#allocation3 + $0x68] sm:$0xf] %v2596
      %2718 = vst [vmem:[#allocation3 + $0x74] sm:$0xf] %v2599
      %2719 = vst [vmem:[#allocation3 + $0x80] sm:$0xf] %v2603
      %2720 = vst [vmem:[#allocation3 + $0x8c] sm:$0xf] %v2606
      %2721 = vst [vmem:[#allocation3 + $0x98] sm:$0xf] %v2610
      %2722 = vst [vmem:[#allocation3 + $0xa4] sm:$0xf] %v2613
      %2723 = vst [vmem:[#allocation3 + $0xb0] sm:$0xf] %v2617
      %2724 = vst [vmem:[#allocation3 + $0xbc] sm:$0xf] %v2620
      %2725 = vst [vmem:[#allocation3 + $0xc8] sm:$0xf] %v2624
      %2726 = vst [vmem:[#allocation3 + $0xd4] sm:$0xf] %v2627
      %2727 = vst [vmem:[#allocation3 + $0xe0] sm:$0xf] %v2631
      %2728 = vst [vmem:[#allocation3 + $0xec] sm:$0xf] %v2634
      %2729 = vst [vmem:[#allocation3 + $0xf8] sm:$0xf] %v2638
      %2730 = vst [vmem:[#allocation3 + $0x104] sm:$0xf] %v2641
      %2731 = vst [vmem:[#allocation3 + $0x110] sm:$0xf] %v2645
      %2732 = vst [vmem:[#allocation3 + $0x11c] sm:$0xf] %v2648
      %2733 = vst [vmem:[#allocation3 + $0x128] sm:$0xf] %v2652
      %2734 = vst [vmem:[#allocation3 + $0x134] sm:$0xf] %v2655
      %2735 = vst [vmem:[#allocation3 + $0x140] sm:$0xf] %v2659
      %2736 = vst [vmem:[#allocation3 + $0x14c] sm:$0xf] %v2662
      %2737 = vst [vmem:[#allocation3 + $0x158] sm:$0xf] %v2666
      %2738 = vst [vmem:[#allocation3 + $0x164] sm:$0xf] %v2669
      %2739 = vst [vmem:[#allocation3 + $0x170] sm:$0xf] %v2673
      %2740 = vst [vmem:[#allocation3 + $0x17c] sm:$0xf] %v2676
      %v2741 = vld [vmem:[#allocation3] sm:$0xff]
      %v2742 = vld [vmem:[#allocation3 + $0x8] sm:$0xf]
      %v2743 = vld [vmem:[#allocation3 + $0xc] sm:$0xff]
      %v2744 = vld [vmem:[#allocation3 + $0x14] sm:$0xf]
      %v2745 = vld [vmem:[#allocation3 + $0x18] sm:$0xff]
      %v2746 = vld [vmem:[#allocation3 + $0x20] sm:$0xf]
      %v2747 = vld [vmem:[#allocation3 + $0x24] sm:$0xff]
      %v2748 = vld [vmem:[#allocation3 + $0x2c] sm:$0xf]
      %v2749 = vld [vmem:[#allocation3 + $0x30] sm:$0xff]
      %v2750 = vld [vmem:[#allocation3 + $0x38] sm:$0xf]
      %v2751 = vld [vmem:[#allocation3 + $0x3c] sm:$0xff]
      %v2752 = vld [vmem:[#allocation3 + $0x44] sm:$0xf]
      %v2753 = vld [vmem:[#allocation3 + $0x48] sm:$0xff]
      %v2754 = vld [vmem:[#allocation3 + $0x50] sm:$0xf]
      %v2755 = vld [vmem:[#allocation3 + $0x54] sm:$0xff]
      %v2756 = vld [vmem:[#allocation3 + $0x5c] sm:$0xf]
      %v2757 = vld [vmem:[#allocation3 + $0x60] sm:$0xff]
      %v2758 = vld [vmem:[#allocation3 + $0x68] sm:$0xf]
      %v2759 = vld [vmem:[#allocation3 + $0x6c] sm:$0xff]
      %v2760 = vld [vmem:[#allocation3 + $0x74] sm:$0xf]
      %v2761 = vld [vmem:[#allocation3 + $0x78] sm:$0xff]
      %v2762 = vld [vmem:[#allocation3 + $0x80] sm:$0xf]
      %v2763 = vld [vmem:[#allocation3 + $0x84] sm:$0xff]
      %v2764 = vld [vmem:[#allocation3 + $0x8c] sm:$0xf]
      %v2765 = vld [vmem:[#allocation3 + $0x90] sm:$0xff]
      %v2766 = vld [vmem:[#allocation3 + $0x98] sm:$0xf]
      %v2767 = vld [vmem:[#allocation3 + $0x9c] sm:$0xff]
      %v2768 = vld [vmem:[#allocation3 + $0xa4] sm:$0xf]
      %v2769 = vld [vmem:[#allocation3 + $0xa8] sm:$0xff]
      %v2770 = vld [vmem:[#allocation3 + $0xb0] sm:$0xf]
      %v2771 = vld [vmem:[#allocation3 + $0xb4] sm:$0xff]
      %v2772 = vld [vmem:[#allocation3 + $0xbc] sm:$0xf]
      %v2773 = vld [vmem:[#allocation3 + $0xc0] sm:$0xff]
      %v2774 = vld [vmem:[#allocation3 + $0xc8] sm:$0xf]
      %v2775 = vld [vmem:[#allocation3 + $0xcc] sm:$0xff]
      %v2776 = vld [vmem:[#allocation3 + $0xd4] sm:$0xf]
      %v2777 = vld [vmem:[#allocation3 + $0xd8] sm:$0xff]
      %v2778 = vld [vmem:[#allocation3 + $0xe0] sm:$0xf]
      %v2779 = vld [vmem:[#allocation3 + $0xe4] sm:$0xff]
      %v2780 = vld [vmem:[#allocation3 + $0xec] sm:$0xf]
      %v2781 = vld [vmem:[#allocation3 + $0xf0] sm:$0xff]
      %v2782 = vld [vmem:[#allocation3 + $0xf8] sm:$0xf]
      %v2783 = vld [vmem:[#allocation3 + $0xfc] sm:$0xff]
      %v2784 = vld [vmem:[#allocation3 + $0x104] sm:$0xf]
      %v2785 = vld [vmem:[#allocation3 + $0x108] sm:$0xff]
      %v2786 = vld [vmem:[#allocation3 + $0x110] sm:$0xf]
      %v2787 = vld [vmem:[#allocation3 + $0x114] sm:$0xff]
      %v2788 = vld [vmem:[#allocation3 + $0x11c] sm:$0xf]
      %v2789 = vld [vmem:[#allocation3 + $0x120] sm:$0xff]
      %v2790 = vld [vmem:[#allocation3 + $0x128] sm:$0xf]
      %v2791 = vld [vmem:[#allocation3 + $0x12c] sm:$0xff]
      %v2792 = vld [vmem:[#allocation3 + $0x134] sm:$0xf]
      %v2793 = vld [vmem:[#allocation3 + $0x138] sm:$0xff]
      %v2794 = vld [vmem:[#allocation3 + $0x140] sm:$0xf]
      %v2795 = vld [vmem:[#allocation3 + $0x144] sm:$0xff]
      %v2796 = vld [vmem:[#allocation3 + $0x14c] sm:$0xf]
      %v2797 = vld [vmem:[#allocation3 + $0x150] sm:$0xff]
      %v2798 = vld [vmem:[#allocation3 + $0x158] sm:$0xf]
      %v2799 = vld [vmem:[#allocation3 + $0x15c] sm:$0xff]
      %v2800 = vld [vmem:[#allocation3 + $0x164] sm:$0xf]
      %v2801 = vld [vmem:[#allocation3 + $0x168] sm:$0xff]
      %v2802 = vld [vmem:[#allocation3 + $0x170] sm:$0xf]
      %v2803 = vld [vmem:[#allocation3 + $0x174] sm:$0xff]
      %v2804 = vld [vmem:[#allocation3 + $0x17c] sm:$0xf]
      %s2805 = scalar_lea.vmem %s4, 192
      %v2806 = vld [vmem:[%s2805] sm:$0xf]
      %v2807 = vld [vmem:[%s2805 + $0x4] sm:$0xf]
      %v2808 = vld [vmem:[%s2805 + $0x8] sm:$0xf]
      %v2809 = vld [vmem:[%s2805 + $0xc] sm:$0xf]
      %v2810 = vld [vmem:[%s2805 + $0x10] sm:$0xf]
      %v2811 = vld [vmem:[%s2805 + $0x14] sm:$0xf]
      %v2812 = vld [vmem:[%s2805 + $0x18] sm:$0xf]
      %v2813 = vld [vmem:[%s2805 + $0x1c] sm:$0xf]
      %v2814 = vld [vmem:[%s2805 + $0x20] sm:$0xf]
      %v2815 = vld [vmem:[%s2805 + $0x24] sm:$0xf]
      %v2816 = vld [vmem:[%s2805 + $0x28] sm:$0xf]
      %v2817 = vld [vmem:[%s2805 + $0x2c] sm:$0xf]
      %v2818 = vld [vmem:[%s2805 + $0x30] sm:$0xf]
      %v2819 = vld [vmem:[%s2805 + $0x34] sm:$0xf]
      %v2820 = vld [vmem:[%s2805 + $0x38] sm:$0xf]
      %v2821 = vld [vmem:[%s2805 + $0x3c] sm:$0xf]
      %v2822 = vld [vmem:[%s2805 + $0x40] sm:$0xf]
      %v2823 = vld [vmem:[%s2805 + $0x44] sm:$0xf]
      %v2824 = vld [vmem:[%s2805 + $0x48] sm:$0xf]
      %v2825 = vld [vmem:[%s2805 + $0x4c] sm:$0xf]
      %v2826 = vld [vmem:[%s2805 + $0x50] sm:$0xf]
      %v2827 = vld [vmem:[%s2805 + $0x54] sm:$0xf]
      %v2828 = vld [vmem:[%s2805 + $0x58] sm:$0xf]
      %v2829 = vld [vmem:[%s2805 + $0x5c] sm:$0xf]
      %v2830 = vld [vmem:[%s2805 + $0x60] sm:$0xf]
      %v2831 = vld [vmem:[%s2805 + $0x64] sm:$0xf]
      %v2832 = vld [vmem:[%s2805 + $0x68] sm:$0xf]
      %v2833 = vld [vmem:[%s2805 + $0x6c] sm:$0xf]
      %v2834 = vld [vmem:[%s2805 + $0x70] sm:$0xf]
      %v2835 = vld [vmem:[%s2805 + $0x74] sm:$0xf]
      %v2836 = vld [vmem:[%s2805 + $0x78] sm:$0xf]
      %v2837 = vld [vmem:[%s2805 + $0x7c] sm:$0xf]
      %v2838 = vld [vmem:[%s2805 + $0x80] sm:$0xf]
      %v2839 = vld [vmem:[%s2805 + $0x84] sm:$0xf]
      %v2840 = vld [vmem:[%s2805 + $0x88] sm:$0xf]
      %v2841 = vld [vmem:[%s2805 + $0x8c] sm:$0xf]
      %v2842 = vld [vmem:[%s2805 + $0x90] sm:$0xf]
      %v2843 = vld [vmem:[%s2805 + $0x94] sm:$0xf]
      %v2844 = vld [vmem:[%s2805 + $0x98] sm:$0xf]
      %v2845 = vld [vmem:[%s2805 + $0x9c] sm:$0xf]
      %v2846 = vld [vmem:[%s2805 + $0xa0] sm:$0xf]
      %v2847 = vld [vmem:[%s2805 + $0xa4] sm:$0xf]
      %v2848 = vld [vmem:[%s2805 + $0xa8] sm:$0xf]
      %v2849 = vld [vmem:[%s2805 + $0xac] sm:$0xf]
      %v2850 = vld [vmem:[%s2805 + $0xb0] sm:$0xf]
      %v2851 = vld [vmem:[%s2805 + $0xb4] sm:$0xf]
      %v2852 = vld [vmem:[%s2805 + $0xb8] sm:$0xf]
      %v2853 = vld [vmem:[%s2805 + $0xbc] sm:$0xf]
      %v2918 = vunpack.c.l.b16 %v2741
      %v2919 = vunpack.c.h.b16 %v2741
      %v2920 = vunpack.c.l.b16 %v2742
      %v2921 = vunpack.c.l.b16 %v2743
      %v2922 = vunpack.c.h.b16 %v2743
      %v2923 = vunpack.c.l.b16 %v2744
      %v2924 = vunpack.c.l.b16 %v2745
      %v2925 = vunpack.c.h.b16 %v2745
      %v2926 = vunpack.c.l.b16 %v2746
      %v2927 = vunpack.c.l.b16 %v2747
      %v2928 = vunpack.c.h.b16 %v2747
      %v2929 = vunpack.c.l.b16 %v2748
      %v2930 = vunpack.c.l.b16 %v2749
      %v2931 = vunpack.c.h.b16 %v2749
      %v2932 = vunpack.c.l.b16 %v2750
      %v2933 = vunpack.c.l.b16 %v2751
      %v2934 = vunpack.c.h.b16 %v2751
      %v2935 = vunpack.c.l.b16 %v2752
      %v2936 = vunpack.c.l.b16 %v2753
      %v2937 = vunpack.c.h.b16 %v2753
      %v2938 = vunpack.c.l.b16 %v2754
      %v2939 = vunpack.c.l.b16 %v2755
      %v2940 = vunpack.c.h.b16 %v2755
      %v2941 = vunpack.c.l.b16 %v2756
      %v2942 = vunpack.c.l.b16 %v2757
      %v2943 = vunpack.c.h.b16 %v2757
      %v2944 = vunpack.c.l.b16 %v2758
      %v2945 = vunpack.c.l.b16 %v2759
      %v2946 = vunpack.c.h.b16 %v2759
      %v2947 = vunpack.c.l.b16 %v2760
      %v2948 = vunpack.c.l.b16 %v2761
      %v2949 = vunpack.c.h.b16 %v2761
      %v2950 = vunpack.c.l.b16 %v2762
      %v2951 = vunpack.c.l.b16 %v2763
      %v2952 = vunpack.c.h.b16 %v2763
      %v2953 = vunpack.c.l.b16 %v2764
      %v2954 = vunpack.c.l.b16 %v2765
      %v2955 = vunpack.c.h.b16 %v2765
      %v2956 = vunpack.c.l.b16 %v2766
      %v2957 = vunpack.c.l.b16 %v2767
      %v2958 = vunpack.c.h.b16 %v2767
      %v2959 = vunpack.c.l.b16 %v2768
      %v2960 = vunpack.c.l.b16 %v2769
      %v2961 = vunpack.c.h.b16 %v2769
      %v2962 = vunpack.c.l.b16 %v2770
      %v2963 = vunpack.c.l.b16 %v2771
      %v2964 = vunpack.c.h.b16 %v2771
      %v2965 = vunpack.c.l.b16 %v2772
      %v2966 = vunpack.c.l.b16 %v2773
      %v2967 = vunpack.c.h.b16 %v2773
      %v2968 = vunpack.c.l.b16 %v2774
      %v2969 = vunpack.c.l.b16 %v2775
      %v2970 = vunpack.c.h.b16 %v2775
      %v2971 = vunpack.c.l.b16 %v2776
      %v2972 = vunpack.c.l.b16 %v2777
      %v2973 = vunpack.c.h.b16 %v2777
      %v2974 = vunpack.c.l.b16 %v2778
      %v2975 = vunpack.c.l.b16 %v2779
      %v2976 = vunpack.c.h.b16 %v2779
      %v2977 = vunpack.c.l.b16 %v2780
      %v2978 = vunpack.c.l.b16 %v2781
      %v2979 = vunpack.c.h.b16 %v2781
      %v2980 = vunpack.c.l.b16 %v2782
      %v2981 = vunpack.c.l.b16 %v2783
      %v2982 = vunpack.c.h.b16 %v2783
      %v2983 = vunpack.c.l.b16 %v2784
      %v2984 = vunpack.c.l.b16 %v2785
      %v2985 = vunpack.c.h.b16 %v2785
      %v2986 = vunpack.c.l.b16 %v2786
      %v2987 = vunpack.c.l.b16 %v2787
      %v2988 = vunpack.c.h.b16 %v2787
      %v2989 = vunpack.c.l.b16 %v2788
      %v2990 = vunpack.c.l.b16 %v2789
      %v2991 = vunpack.c.h.b16 %v2789
      %v2992 = vunpack.c.l.b16 %v2790
      %v2993 = vunpack.c.l.b16 %v2791
      %v2994 = vunpack.c.h.b16 %v2791
      %v2995 = vunpack.c.l.b16 %v2792
      %v2996 = vunpack.c.l.b16 %v2793
      %v2997 = vunpack.c.h.b16 %v2793
      %v2998 = vunpack.c.l.b16 %v2794
      %v2999 = vunpack.c.l.b16 %v2795
      %v3000 = vunpack.c.h.b16 %v2795
      %v3001 = vunpack.c.l.b16 %v2796
      %v3002 = vunpack.c.l.b16 %v2797
      %v3003 = vunpack.c.h.b16 %v2797
      %v3004 = vunpack.c.l.b16 %v2798
      %v3005 = vunpack.c.l.b16 %v2799
      %v3006 = vunpack.c.h.b16 %v2799
      %v3007 = vunpack.c.l.b16 %v2800
      %v3008 = vunpack.c.l.b16 %v2801
      %v3009 = vunpack.c.h.b16 %v2801
      %v3010 = vunpack.c.l.b16 %v2802
      %v3011 = vunpack.c.l.b16 %v2803
      %v3012 = vunpack.c.h.b16 %v2803
      %v3013 = vunpack.c.l.b16 %v2804
      %v3014 = vpack.c.b16 %v2921, %v2918
      %v3015 = vpack.c.b16 %v2922, %v2919
      %v3016 = vpack.c.b16 %v2923, %v2920
      %v3017 = vpack.c.b16 %v2927, %v2924
      %v3018 = vpack.c.b16 %v2928, %v2925
      %v3019 = vpack.c.b16 %v2929, %v2926
      %v3020 = vpack.c.b16 %v2933, %v2930
      %v3021 = vpack.c.b16 %v2934, %v2931
      %v3022 = vpack.c.b16 %v2935, %v2932
      %v3023 = vpack.c.b16 %v2939, %v2936
      %v3024 = vpack.c.b16 %v2940, %v2937
      %v3025 = vpack.c.b16 %v2941, %v2938
      %v3026 = vpack.c.b16 %v2945, %v2942
      %v3027 = vpack.c.b16 %v2946, %v2943
      %v3028 = vpack.c.b16 %v2947, %v2944
      %v3029 = vpack.c.b16 %v2951, %v2948
      %v3030 = vpack.c.b16 %v2952, %v2949
      %v3031 = vpack.c.b16 %v2953, %v2950
      %v3032 = vpack.c.b16 %v2957, %v2954
      %v3033 = vpack.c.b16 %v2958, %v2955
      %v3034 = vpack.c.b16 %v2959, %v2956
      %v3035 = vpack.c.b16 %v2963, %v2960
      %v3036 = vpack.c.b16 %v2964, %v2961
      %v3037 = vpack.c.b16 %v2965, %v2962
      %v3038 = vpack.c.b16 %v2969, %v2966
      %v3039 = vpack.c.b16 %v2970, %v2967
      %v3040 = vpack.c.b16 %v2971, %v2968
      %v3041 = vpack.c.b16 %v2975, %v2972
      %v3042 = vpack.c.b16 %v2976, %v2973
      %v3043 = vpack.c.b16 %v2977, %v2974
      %v3044 = vpack.c.b16 %v2981, %v2978
      %v3045 = vpack.c.b16 %v2982, %v2979
      %v3046 = vpack.c.b16 %v2983, %v2980
      %v3047 = vpack.c.b16 %v2987, %v2984
      %v3048 = vpack.c.b16 %v2988, %v2985
      %v3049 = vpack.c.b16 %v2989, %v2986
      %v3050 = vpack.c.b16 %v2993, %v2990
      %v3051 = vpack.c.b16 %v2994, %v2991
      %v3052 = vpack.c.b16 %v2995, %v2992
      %v3053 = vpack.c.b16 %v2999, %v2996
      %v3054 = vpack.c.b16 %v3000, %v2997
      %v3055 = vpack.c.b16 %v3001, %v2998
      %v3056 = vpack.c.b16 %v3005, %v3002
      %v3057 = vpack.c.b16 %v3006, %v3003
      %v3058 = vpack.c.b16 %v3007, %v3004
      %v3059 = vpack.c.b16 %v3011, %v3008
      %v3060 = vpack.c.b16 %v3012, %v3009
      %v3061 = vpack.c.b16 %v3013, %v3010
      %v3158 = vunpack.c.l.b16 %v2806
      %v3159 = vunpack.c.l.b16 %v2807
      %v3160 = vunpack.c.l.b16 %v2808
      %v3161 = vunpack.c.l.b16 %v2809
      %v3162 = vunpack.c.l.b16 %v2810
      %v3163 = vunpack.c.l.b16 %v2811
      %v3164 = vunpack.c.l.b16 %v2812
      %v3165 = vunpack.c.l.b16 %v2813
      %v3166 = vunpack.c.l.b16 %v2814
      %v3167 = vunpack.c.l.b16 %v2815
      %v3168 = vunpack.c.l.b16 %v2816
      %v3169 = vunpack.c.l.b16 %v2817
      %v3170 = vunpack.c.l.b16 %v2818
      %v3171 = vunpack.c.l.b16 %v2819
      %v3172 = vunpack.c.l.b16 %v2820
      %v3173 = vunpack.c.l.b16 %v2821
      %v3174 = vunpack.c.l.b16 %v2822
      %v3175 = vunpack.c.l.b16 %v2823
      %v3176 = vunpack.c.l.b16 %v2824
      %v3177 = vunpack.c.l.b16 %v2825
      %v3178 = vunpack.c.l.b16 %v2826
      %v3179 = vunpack.c.l.b16 %v2827
      %v3180 = vunpack.c.l.b16 %v2828
      %v3181 = vunpack.c.l.b16 %v2829
      %v3182 = vunpack.c.l.b16 %v2830
      %v3183 = vunpack.c.l.b16 %v2831
      %v3184 = vunpack.c.l.b16 %v2832
      %v3185 = vunpack.c.l.b16 %v2833
      %v3186 = vunpack.c.l.b16 %v2834
      %v3187 = vunpack.c.l.b16 %v2835
      %v3188 = vunpack.c.l.b16 %v2836
      %v3189 = vunpack.c.l.b16 %v2837
      %v3190 = vunpack.c.l.b16 %v2838
      %v3191 = vunpack.c.l.b16 %v2839
      %v3192 = vunpack.c.l.b16 %v2840
      %v3193 = vunpack.c.l.b16 %v2841
      %v3194 = vunpack.c.l.b16 %v2842
      %v3195 = vunpack.c.l.b16 %v2843
      %v3196 = vunpack.c.l.b16 %v2844
      %v3197 = vunpack.c.l.b16 %v2845
      %v3198 = vunpack.c.l.b16 %v2846
      %v3199 = vunpack.c.l.b16 %v2847
      %v3200 = vunpack.c.l.b16 %v2848
      %v3201 = vunpack.c.l.b16 %v2849
      %v3202 = vunpack.c.l.b16 %v2850
      %v3203 = vunpack.c.l.b16 %v2851
      %v3204 = vunpack.c.l.b16 %v2852
      %v3205 = vunpack.c.l.b16 %v2853
      %v3206 = vpack.c.b16 %v3159, %v3158
      %v3207 = vpack.c.b16 %v3161, %v3160
      %v3208 = vpack.c.b16 %v3163, %v3162
      %v3209 = vpack.c.b16 %v3165, %v3164
      %v3210 = vpack.c.b16 %v3167, %v3166
      %v3211 = vpack.c.b16 %v3169, %v3168
      %v3212 = vpack.c.b16 %v3171, %v3170
      %v3213 = vpack.c.b16 %v3173, %v3172
      %v3214 = vpack.c.b16 %v3175, %v3174
      %v3215 = vpack.c.b16 %v3177, %v3176
      %v3216 = vpack.c.b16 %v3179, %v3178
      %v3217 = vpack.c.b16 %v3181, %v3180
      %v3218 = vpack.c.b16 %v3183, %v3182
      %v3219 = vpack.c.b16 %v3185, %v3184
      %v3220 = vpack.c.b16 %v3187, %v3186
      %v3221 = vpack.c.b16 %v3189, %v3188
      %v3222 = vpack.c.b16 %v3191, %v3190
      %v3223 = vpack.c.b16 %v3193, %v3192
      %v3224 = vpack.c.b16 %v3195, %v3194
      %v3225 = vpack.c.b16 %v3197, %v3196
      %v3226 = vpack.c.b16 %v3199, %v3198
      %v3227 = vpack.c.b16 %v3201, %v3200
      %v3228 = vpack.c.b16 %v3203, %v3202
      %v3229 = vpack.c.b16 %v3205, %v3204
      %3254 = vmatprep.subr.bf16.mxu0 0
      %3255 = vmatpush1.bf16.msra.mxu0 %v3213
      %3256 = vmatprep.subr.bf16.mxu0 0
      %3257 = vmatpush1.bf16.msra.mxu0 %v3212
      %3258 = vmatprep.subr.bf16.mxu0 0
      %3259 = vmatpush1.bf16.msra.mxu0 %v3211
      %3260 = vmatprep.subr.bf16.mxu0 0
      %3261 = vmatpush1.bf16.msra.mxu0 %v3210
      %3262 = vmatprep.subr.bf16.mxu0 0
      %3263 = vmatpush1.bf16.msra.mxu0 %v3209
      %3264 = vmatprep.subr.bf16.mxu0 0
      %3265 = vmatpush1.bf16.msra.mxu0 %v3208
      %3266 = vmatprep.subr.bf16.mxu0 0
      %3267 = vmatpush1.bf16.msra.mxu0 %v3207
      %3268 = vmatprep.subr.bf16.mxu0 0
      %3269 = vmatpush1.bf16.msra.mxu0 %v3206
      %3270 = vmatprep.subr.bf16.mxu0 0
      %3271 = vmatpush2.bf16.msra.mxu0 %v3221
      %3272 = vmatprep.subr.bf16.mxu0 0
      %3273 = vmatpush2.bf16.msra.mxu0 %v3220
      %3274 = vmatprep.subr.bf16.mxu0 0
      %3275 = vmatpush2.bf16.msra.mxu0 %v3219
      %3276 = vmatprep.subr.bf16.mxu0 0
      %3277 = vmatpush2.bf16.msra.mxu0 %v3218
      %3278 = vmatprep.subr.bf16.mxu0 0
      %3279 = vmatpush2.bf16.msra.mxu0 %v3217
      %3280 = vmatprep.subr.bf16.mxu0 0
      %3281 = vmatpush2.bf16.msra.mxu0 %v3216
      %3282 = vmatprep.subr.bf16.mxu0 0
      %3283 = vmatpush2.bf16.msra.mxu0 %v3215
      %3284 = vmatprep.subr.bf16.mxu0 0
      %3285 = vmatpush2.bf16.msra.mxu0 %v3214
      %3286 = vmatprep.mubr.bf16.mxu0 %v3015
      %3287 = vmatmul.mubr.bf16.gmra.mxu0 %v3014
      %v3288 = vpop.f32.mrf.mxu0
      %v3289 = vadd.f32 0.0, %v3288
      %v3290 = vpop.f32.mrf.mxu0
      %v3291 = vpop.f32.mrf.mxu0
      %v3292 = vadd.f32 0.0, %v3291
      %v3293 = vpop.f32.mrf.mxu0
      %3294 = vmatprep.mubr.bf16.mxu0 %v3018
      %3295 = vmatmul.mubr.bf16.gmra.mxu0 %v3017
      %v3296 = vpop.f32.mrf.mxu0
      %v3297 = vadd.f32 0.0, %v3296
      %v3298 = vpop.f32.mrf.mxu0
      %v3299 = vpop.f32.mrf.mxu0
      %v3300 = vadd.f32 0.0, %v3299
      %v3301 = vpop.f32.mrf.mxu0
      %3302 = vmatprep.mubr.bf16.mxu0 %v3021
      %3303 = vmatmul.mubr.bf16.gmra.mxu0 %v3020
      %v3304 = vpop.f32.mrf.mxu0
      %v3305 = vadd.f32 0.0, %v3304
      %v3306 = vpop.f32.mrf.mxu0
      %v3307 = vpop.f32.mrf.mxu0
      %v3308 = vadd.f32 0.0, %v3307
      %v3309 = vpop.f32.mrf.mxu0
      %3310 = vmatprep.mubr.bf16.mxu0 %v3024
      %3311 = vmatmul.mubr.bf16.gmra.mxu0 %v3023
      %v3312 = vpop.f32.mrf.mxu0
      %v3313 = vadd.f32 0.0, %v3312
      %v3314 = vpop.f32.mrf.mxu0
      %v3315 = vpop.f32.mrf.mxu0
      %v3316 = vadd.f32 0.0, %v3315
      %v3317 = vpop.f32.mrf.mxu0
      %3318 = vmatprep.mubr.bf16.mxu0 %v3027
      %3319 = vmatmul.mubr.bf16.gmra.mxu0 %v3026
      %v3320 = vpop.f32.mrf.mxu0
      %v3321 = vadd.f32 0.0, %v3320
      %v3322 = vpop.f32.mrf.mxu0
      %v3323 = vpop.f32.mrf.mxu0
      %v3324 = vadd.f32 0.0, %v3323
      %v3325 = vpop.f32.mrf.mxu0
      %3326 = vmatprep.mubr.bf16.mxu0 %v3030
      %3327 = vmatmul.mubr.bf16.gmra.mxu0 %v3029
      %v3328 = vpop.f32.mrf.mxu0
      %v3329 = vadd.f32 0.0, %v3328
      %v3330 = vpop.f32.mrf.mxu0
      %v3331 = vpop.f32.mrf.mxu0
      %v3332 = vadd.f32 0.0, %v3331
      %v3333 = vpop.f32.mrf.mxu0
      %3334 = vmatprep.mubr.bf16.mxu0 %v3033
      %3335 = vmatmul.mubr.bf16.gmra.mxu0 %v3032
      %v3336 = vpop.f32.mrf.mxu0
      %v3337 = vadd.f32 0.0, %v3336
      %v3338 = vpop.f32.mrf.mxu0
      %v3339 = vpop.f32.mrf.mxu0
      %v3340 = vadd.f32 0.0, %v3339
      %v3341 = vpop.f32.mrf.mxu0
      %3342 = vmatprep.mubr.bf16.mxu0 %v3036
      %3343 = vmatmul.mubr.bf16.gmra.mxu0 %v3035
      %v3344 = vpop.f32.mrf.mxu0
      %v3345 = vadd.f32 0.0, %v3344
      %v3346 = vpop.f32.mrf.mxu0
      %v3347 = vpop.f32.mrf.mxu0
      %v3348 = vadd.f32 0.0, %v3347
      %v3349 = vpop.f32.mrf.mxu0
      %3350 = vmatprep.mubr.bf16.mxu0 %v3039
      %3351 = vmatmul.mubr.bf16.gmra.mxu0 %v3038
      %v3352 = vpop.f32.mrf.mxu0
      %v3353 = vadd.f32 0.0, %v3352
      %v3354 = vpop.f32.mrf.mxu0
      %v3355 = vpop.f32.mrf.mxu0
      %v3356 = vadd.f32 0.0, %v3355
      %v3357 = vpop.f32.mrf.mxu0
      %3358 = vmatprep.mubr.bf16.mxu0 %v3042
      %3359 = vmatmul.mubr.bf16.gmra.mxu0 %v3041
      %v3360 = vpop.f32.mrf.mxu0
      %v3361 = vadd.f32 0.0, %v3360
      %v3362 = vpop.f32.mrf.mxu0
      %v3363 = vpop.f32.mrf.mxu0
      %v3364 = vadd.f32 0.0, %v3363
      %v3365 = vpop.f32.mrf.mxu0
      %3366 = vmatprep.mubr.bf16.mxu0 %v3045
      %3367 = vmatmul.mubr.bf16.gmra.mxu0 %v3044
      %v3368 = vpop.f32.mrf.mxu0
      %v3369 = vadd.f32 0.0, %v3368
      %v3370 = vpop.f32.mrf.mxu0
      %v3371 = vpop.f32.mrf.mxu0
      %v3372 = vadd.f32 0.0, %v3371
      %v3373 = vpop.f32.mrf.mxu0
      %3374 = vmatprep.mubr.bf16.mxu0 %v3048
      %3375 = vmatmul.mubr.bf16.gmra.mxu0 %v3047
      %v3376 = vpop.f32.mrf.mxu0
      %v3377 = vadd.f32 0.0, %v3376
      %v3378 = vpop.f32.mrf.mxu0
      %v3379 = vpop.f32.mrf.mxu0
      %v3380 = vadd.f32 0.0, %v3379
      %v3381 = vpop.f32.mrf.mxu0
      %3382 = vmatprep.mubr.bf16.mxu0 %v3051
      %3383 = vmatmul.mubr.bf16.gmra.mxu0 %v3050
      %v3384 = vpop.f32.mrf.mxu0
      %v3385 = vadd.f32 0.0, %v3384
      %v3386 = vpop.f32.mrf.mxu0
      %v3387 = vpop.f32.mrf.mxu0
      %v3388 = vadd.f32 0.0, %v3387
      %v3389 = vpop.f32.mrf.mxu0
      %3390 = vmatprep.mubr.bf16.mxu0 %v3054
      %3391 = vmatmul.mubr.bf16.gmra.mxu0 %v3053
      %v3392 = vpop.f32.mrf.mxu0
      %v3393 = vadd.f32 0.0, %v3392
      %v3394 = vpop.f32.mrf.mxu0
      %v3395 = vpop.f32.mrf.mxu0
      %v3396 = vadd.f32 0.0, %v3395
      %v3397 = vpop.f32.mrf.mxu0
      %3398 = vmatprep.mubr.bf16.mxu0 %v3057
      %3399 = vmatmul.mubr.bf16.gmra.mxu0 %v3056
      %v3400 = vpop.f32.mrf.mxu0
      %v3401 = vadd.f32 0.0, %v3400
      %v3402 = vpop.f32.mrf.mxu0
      %v3403 = vpop.f32.mrf.mxu0
      %v3404 = vadd.f32 0.0, %v3403
      %v3405 = vpop.f32.mrf.mxu0
      %3406 = vmatprep.mubr.bf16.mxu0 %v3060
      %3407 = vmatmul.mubr.bf16.gmra.mxu0 %v3059
      %v3408 = vpop.f32.mrf.mxu0
      %v3409 = vadd.f32 0.0, %v3408
      %v3410 = vpop.f32.mrf.mxu0
      %v3411 = vpop.f32.mrf.mxu0
      %v3412 = vadd.f32 0.0, %v3411
      %v3413 = vpop.f32.mrf.mxu0
      %3414 = vdwg.mxu0
      %3415 = vmatprep.subr.bf16.mxu0 0
      %3416 = vmatpush1.bf16.msra.mxu0 %v3229
      %3417 = vmatprep.subr.bf16.mxu0 0
      %3418 = vmatpush1.bf16.msra.mxu0 %v3228
      %3419 = vmatprep.subr.bf16.mxu0 0
      %3420 = vmatpush1.bf16.msra.mxu0 %v3227
      %3421 = vmatprep.subr.bf16.mxu0 0
      %3422 = vmatpush1.bf16.msra.mxu0 %v3226
      %3423 = vmatprep.subr.bf16.mxu0 0
      %3424 = vmatpush1.bf16.msra.mxu0 %v3225
      %3425 = vmatprep.subr.bf16.mxu0 0
      %3426 = vmatpush1.bf16.msra.mxu0 %v3224
      %3427 = vmatprep.subr.bf16.mxu0 0
      %3428 = vmatpush1.bf16.msra.mxu0 %v3223
      %3429 = vmatprep.subr.bf16.mxu0 0
      %3430 = vmatpush1.bf16.msra.mxu0 %v3222
      %3431 = vmatprep.subr.bf16.mxu0 0
      %3432 = vmatpush2.bf16.msra.mxu0 0
      %3433 = vmatprep.subr.bf16.mxu0 0
      %3434 = vmatpush2.bf16.msra.mxu0 0
      %3435 = vmatprep.subr.bf16.mxu0 0
      %3436 = vmatpush2.bf16.msra.mxu0 0
      %3437 = vmatprep.subr.bf16.mxu0 0
      %3438 = vmatpush2.bf16.msra.mxu0 0
      %3439 = vmatprep.subr.bf16.mxu0 0
      %3440 = vmatpush2.bf16.msra.mxu0 0
      %3441 = vmatprep.subr.bf16.mxu0 0
      %3442 = vmatpush2.bf16.msra.mxu0 0
      %3443 = vmatprep.subr.bf16.mxu0 0
      %3444 = vmatpush2.bf16.msra.mxu0 0
      %3445 = vmatprep.subr.bf16.mxu0 0
      %3446 = vmatpush2.bf16.msra.mxu0 0
      %3447 = vmatprep.mubr.bf16.mxu0 0
      %3448 = vmatmul.mubr.bf16.gmra.mxu0 %v3016
      %v3449 = vpop.f32.mrf.mxu0
      %v3450 = vadd.f32 %v3289, %v3449
      %v3451 = vpop.f32.mrf.mxu0
      %v3452 = vpop.f32.mrf.mxu0
      %v3453 = vadd.f32 %v3292, %v3452
      %v3454 = vpop.f32.mrf.mxu0
      %3455 = vmatprep.mubr.bf16.mxu0 0
      %3456 = vmatmul.mubr.bf16.gmra.mxu0 %v3019
      %v3457 = vpop.f32.mrf.mxu0
      %v3458 = vadd.f32 %v3297, %v3457
      %v3459 = vpop.f32.mrf.mxu0
      %v3460 = vpop.f32.mrf.mxu0
      %v3461 = vadd.f32 %v3300, %v3460
      %v3462 = vpop.f32.mrf.mxu0
      %3463 = vmatprep.mubr.bf16.mxu0 0
      %3464 = vmatmul.mubr.bf16.gmra.mxu0 %v3022
      %v3465 = vpop.f32.mrf.mxu0
      %v3466 = vadd.f32 %v3305, %v3465
      %v3467 = vpop.f32.mrf.mxu0
      %v3468 = vpop.f32.mrf.mxu0
      %v3469 = vadd.f32 %v3308, %v3468
      %v3470 = vpop.f32.mrf.mxu0
      %3471 = vmatprep.mubr.bf16.mxu0 0
      %3472 = vmatmul.mubr.bf16.gmra.mxu0 %v3025
      %v3473 = vpop.f32.mrf.mxu0
      %v3474 = vadd.f32 %v3313, %v3473
      %v3475 = vpop.f32.mrf.mxu0
      %v3476 = vpop.f32.mrf.mxu0
      %v3477 = vadd.f32 %v3316, %v3476
      %v3478 = vpop.f32.mrf.mxu0
      %3479 = vmatprep.mubr.bf16.mxu0 0
      %3480 = vmatmul.mubr.bf16.gmra.mxu0 %v3028
      %v3481 = vpop.f32.mrf.mxu0
      %v3482 = vadd.f32 %v3321, %v3481
      %v3483 = vpop.f32.mrf.mxu0
      %v3484 = vpop.f32.mrf.mxu0
      %v3485 = vadd.f32 %v3324, %v3484
      %v3486 = vpop.f32.mrf.mxu0
      %3487 = vmatprep.mubr.bf16.mxu0 0
      %3488 = vmatmul.mubr.bf16.gmra.mxu0 %v3031
      %v3489 = vpop.f32.mrf.mxu0
      %v3490 = vadd.f32 %v3329, %v3489
      %v3491 = vpop.f32.mrf.mxu0
      %v3492 = vpop.f32.mrf.mxu0
      %v3493 = vadd.f32 %v3332, %v3492
      %v3494 = vpop.f32.mrf.mxu0
      %3495 = vmatprep.mubr.bf16.mxu0 0
      %3496 = vmatmul.mubr.bf16.gmra.mxu0 %v3034
      %v3497 = vpop.f32.mrf.mxu0
      %v3498 = vadd.f32 %v3337, %v3497
      %v3499 = vpop.f32.mrf.mxu0
      %v3500 = vpop.f32.mrf.mxu0
      %v3501 = vadd.f32 %v3340, %v3500
      %v3502 = vpop.f32.mrf.mxu0
      %3503 = vmatprep.mubr.bf16.mxu0 0
      %3504 = vmatmul.mubr.bf16.gmra.mxu0 %v3037
      %v3505 = vpop.f32.mrf.mxu0
      %v3506 = vadd.f32 %v3345, %v3505
      %v3507 = vpop.f32.mrf.mxu0
      %v3508 = vpop.f32.mrf.mxu0
      %v3509 = vadd.f32 %v3348, %v3508
      %v3510 = vpop.f32.mrf.mxu0
      %3511 = vmatprep.mubr.bf16.mxu0 0
      %3512 = vmatmul.mubr.bf16.gmra.mxu0 %v3040
      %v3513 = vpop.f32.mrf.mxu0
      %v3514 = vadd.f32 %v3353, %v3513
      %v3515 = vpop.f32.mrf.mxu0
      %v3516 = vpop.f32.mrf.mxu0
      %v3517 = vadd.f32 %v3356, %v3516
      %v3518 = vpop.f32.mrf.mxu0
      %3519 = vmatprep.mubr.bf16.mxu0 0
      %3520 = vmatmul.mubr.bf16.gmra.mxu0 %v3043
      %v3521 = vpop.f32.mrf.mxu0
      %v3522 = vadd.f32 %v3361, %v3521
      %v3523 = vpop.f32.mrf.mxu0
      %v3524 = vpop.f32.mrf.mxu0
      %v3525 = vadd.f32 %v3364, %v3524
      %v3526 = vpop.f32.mrf.mxu0
      %3527 = vmatprep.mubr.bf16.mxu0 0
      %3528 = vmatmul.mubr.bf16.gmra.mxu0 %v3046
      %v3529 = vpop.f32.mrf.mxu0
      %v3530 = vadd.f32 %v3369, %v3529
      %v3531 = vpop.f32.mrf.mxu0
      %v3532 = vpop.f32.mrf.mxu0
      %v3533 = vadd.f32 %v3372, %v3532
      %v3534 = vpop.f32.mrf.mxu0
      %3535 = vmatprep.mubr.bf16.mxu0 0
      %3536 = vmatmul.mubr.bf16.gmra.mxu0 %v3049
      %v3537 = vpop.f32.mrf.mxu0
      %v3538 = vadd.f32 %v3377, %v3537
      %v3539 = vpop.f32.mrf.mxu0
      %v3540 = vpop.f32.mrf.mxu0
      %v3541 = vadd.f32 %v3380, %v3540
      %v3542 = vpop.f32.mrf.mxu0
      %3543 = vmatprep.mubr.bf16.mxu0 0
      %3544 = vmatmul.mubr.bf16.gmra.mxu0 %v3052
      %v3545 = vpop.f32.mrf.mxu0
      %v3546 = vadd.f32 %v3385, %v3545
      %v3547 = vpop.f32.mrf.mxu0
      %v3548 = vpop.f32.mrf.mxu0
      %v3549 = vadd.f32 %v3388, %v3548
      %v3550 = vpop.f32.mrf.mxu0
      %3551 = vmatprep.mubr.bf16.mxu0 0
      %3552 = vmatmul.mubr.bf16.gmra.mxu0 %v3055
      %v3553 = vpop.f32.mrf.mxu0
      %v3554 = vadd.f32 %v3393, %v3553
      %v3555 = vpop.f32.mrf.mxu0
      %v3556 = vpop.f32.mrf.mxu0
      %v3557 = vadd.f32 %v3396, %v3556
      %v3558 = vpop.f32.mrf.mxu0
      %3559 = vmatprep.mubr.bf16.mxu0 0
      %3560 = vmatmul.mubr.bf16.gmra.mxu0 %v3058
      %v3561 = vpop.f32.mrf.mxu0
      %v3562 = vadd.f32 %v3401, %v3561
      %v3563 = vpop.f32.mrf.mxu0
      %v3564 = vpop.f32.mrf.mxu0
      %v3565 = vadd.f32 %v3404, %v3564
      %v3566 = vpop.f32.mrf.mxu0
      %3567 = vmatprep.mubr.bf16.mxu0 0
      %3568 = vmatmul.mubr.bf16.gmra.mxu0 %v3061
      %v3569 = vpop.f32.mrf.mxu0
      %v3570 = vadd.f32 %v3409, %v3569
      %v3571 = vpop.f32.mrf.mxu0
      %v3572 = vpop.f32.mrf.mxu0
      %v3573 = vadd.f32 %v3412, %v3572
      %v3574 = vpop.f32.mrf.mxu0
      %3575 = vdwg.mxu0
      %v3640 = vunpack.c.l.b16 %v1797
      %v3641 = vunpack.c.h.b16 %v1797
      %v3642 = vunpack.c.l.b16 %v1798
      %v3643 = vunpack.c.l.b16 %v1799
      %v3644 = vunpack.c.h.b16 %v1799
      %v3645 = vunpack.c.l.b16 %v1800
      %v3646 = vunpack.c.l.b16 %v1801
      %v3647 = vunpack.c.h.b16 %v1801
      %v3648 = vunpack.c.l.b16 %v1802
      %v3649 = vunpack.c.l.b16 %v1803
      %v3650 = vunpack.c.h.b16 %v1803
      %v3651 = vunpack.c.l.b16 %v1804
      %v3652 = vunpack.c.l.b16 %v1805
      %v3653 = vunpack.c.h.b16 %v1805
      %v3654 = vunpack.c.l.b16 %v1806
      %v3655 = vunpack.c.l.b16 %v1807
      %v3656 = vunpack.c.h.b16 %v1807
      %v3657 = vunpack.c.l.b16 %v1808
      %v3658 = vunpack.c.l.b16 %v1809
      %v3659 = vunpack.c.h.b16 %v1809
      %v3660 = vunpack.c.l.b16 %v1810
      %v3661 = vunpack.c.l.b16 %v1811
      %v3662 = vunpack.c.h.b16 %v1811
      %v3663 = vunpack.c.l.b16 %v1812
      %v3664 = vunpack.c.l.b16 %v1813
      %v3665 = vunpack.c.h.b16 %v1813
      %v3666 = vunpack.c.l.b16 %v1814
      %v3667 = vunpack.c.l.b16 %v1815
      %v3668 = vunpack.c.h.b16 %v1815
      %v3669 = vunpack.c.l.b16 %v1816
      %v3670 = vunpack.c.l.b16 %v1817
      %v3671 = vunpack.c.h.b16 %v1817
      %v3672 = vunpack.c.l.b16 %v1818
      %v3673 = vunpack.c.l.b16 %v1819
      %v3674 = vunpack.c.h.b16 %v1819
      %v3675 = vunpack.c.l.b16 %v1820
      %v3676 = vunpack.c.l.b16 %v1821
      %v3677 = vunpack.c.h.b16 %v1821
      %v3678 = vunpack.c.l.b16 %v1822
      %v3679 = vunpack.c.l.b16 %v1823
      %v3680 = vunpack.c.h.b16 %v1823
      %v3681 = vunpack.c.l.b16 %v1824
      %v3682 = vunpack.c.l.b16 %v1825
      %v3683 = vunpack.c.h.b16 %v1825
      %v3684 = vunpack.c.l.b16 %v1826
      %v3685 = vunpack.c.l.b16 %v1827
      %v3686 = vunpack.c.h.b16 %v1827
      %v3687 = vunpack.c.l.b16 %v1828
      %v3688 = vunpack.c.l.b16 %v1829
      %v3689 = vunpack.c.h.b16 %v1829
      %v3690 = vunpack.c.l.b16 %v1830
      %v3691 = vunpack.c.l.b16 %v1831
      %v3692 = vunpack.c.h.b16 %v1831
      %v3693 = vunpack.c.l.b16 %v1832
      %v3694 = vunpack.c.l.b16 %v1833
      %v3695 = vunpack.c.h.b16 %v1833
      %v3696 = vunpack.c.l.b16 %v1834
      %v3697 = vunpack.c.l.b16 %v1835
      %v3698 = vunpack.c.h.b16 %v1835
      %v3699 = vunpack.c.l.b16 %v1836
      %v3700 = vunpack.c.l.b16 %v1837
      %v3701 = vunpack.c.h.b16 %v1837
      %v3702 = vunpack.c.l.b16 %v1838
      %v3703 = vunpack.c.l.b16 %v1839
      %v3704 = vunpack.c.h.b16 %v1839
      %v3705 = vunpack.c.l.b16 %v1840
      %v3706 = vunpack.c.l.b16 %v1841
      %v3707 = vunpack.c.h.b16 %v1841
      %v3708 = vunpack.c.l.b16 %v1842
      %v3709 = vunpack.c.l.b16 %v1843
      %v3710 = vunpack.c.h.b16 %v1843
      %v3711 = vunpack.c.l.b16 %v1844
      %v3712 = vunpack.c.l.b16 %v1845
      %v3713 = vunpack.c.h.b16 %v1845
      %v3714 = vunpack.c.l.b16 %v1846
      %v3715 = vunpack.c.l.b16 %v1847
      %v3716 = vunpack.c.h.b16 %v1847
      %v3717 = vunpack.c.l.b16 %v1848
      %v3718 = vunpack.c.l.b16 %v1849
      %v3719 = vunpack.c.h.b16 %v1849
      %v3720 = vunpack.c.l.b16 %v1850
      %v3721 = vunpack.c.l.b16 %v1851
      %v3722 = vunpack.c.h.b16 %v1851
      %v3723 = vunpack.c.l.b16 %v1852
      %v3724 = vunpack.c.l.b16 %v1853
      %v3725 = vunpack.c.h.b16 %v1853
      %v3726 = vunpack.c.l.b16 %v1854
      %v3727 = vunpack.c.l.b16 %v1855
      %v3728 = vunpack.c.h.b16 %v1855
      %v3729 = vunpack.c.l.b16 %v1856
      %v3730 = vunpack.c.l.b16 %v1857
      %v3731 = vunpack.c.h.b16 %v1857
      %v3732 = vunpack.c.l.b16 %v1858
      %v3733 = vunpack.c.l.b16 %v1859
      %v3734 = vunpack.c.h.b16 %v1859
      %v3735 = vunpack.c.l.b16 %v1860
      %v3736 = vpack.c.b16 %v3643, %v3640
      %v3737 = vpack.c.b16 %v3644, %v3641
      %v3738 = vpack.c.b16 %v3645, %v3642
      %v3739 = vpack.c.b16 %v3649, %v3646
      %v3740 = vpack.c.b16 %v3650, %v3647
      %v3741 = vpack.c.b16 %v3651, %v3648
      %v3742 = vpack.c.b16 %v3655, %v3652
      %v3743 = vpack.c.b16 %v3656, %v3653
      %v3744 = vpack.c.b16 %v3657, %v3654
      %v3745 = vpack.c.b16 %v3661, %v3658
      %v3746 = vpack.c.b16 %v3662, %v3659
      %v3747 = vpack.c.b16 %v3663, %v3660
      %v3748 = vpack.c.b16 %v3667, %v3664
      %v3749 = vpack.c.b16 %v3668, %v3665
      %v3750 = vpack.c.b16 %v3669, %v3666
      %v3751 = vpack.c.b16 %v3673, %v3670
      %v3752 = vpack.c.b16 %v3674, %v3671
      %v3753 = vpack.c.b16 %v3675, %v3672
      %v3754 = vpack.c.b16 %v3679, %v3676
      %v3755 = vpack.c.b16 %v3680, %v3677
      %v3756 = vpack.c.b16 %v3681, %v3678
      %v3757 = vpack.c.b16 %v3685, %v3682
      %v3758 = vpack.c.b16 %v3686, %v3683
      %v3759 = vpack.c.b16 %v3687, %v3684
      %v3760 = vpack.c.b16 %v3691, %v3688
      %v3761 = vpack.c.b16 %v3692, %v3689
      %v3762 = vpack.c.b16 %v3693, %v3690
      %v3763 = vpack.c.b16 %v3697, %v3694
      %v3764 = vpack.c.b16 %v3698, %v3695
      %v3765 = vpack.c.b16 %v3699, %v3696
      %v3766 = vpack.c.b16 %v3703, %v3700
      %v3767 = vpack.c.b16 %v3704, %v3701
      %v3768 = vpack.c.b16 %v3705, %v3702
      %v3769 = vpack.c.b16 %v3709, %v3706
      %v3770 = vpack.c.b16 %v3710, %v3707
      %v3771 = vpack.c.b16 %v3711, %v3708
      %v3772 = vpack.c.b16 %v3715, %v3712
      %v3773 = vpack.c.b16 %v3716, %v3713
      %v3774 = vpack.c.b16 %v3717, %v3714
      %v3775 = vpack.c.b16 %v3721, %v3718
      %v3776 = vpack.c.b16 %v3722, %v3719
      %v3777 = vpack.c.b16 %v3723, %v3720
      %v3778 = vpack.c.b16 %v3727, %v3724
      %v3779 = vpack.c.b16 %v3728, %v3725
      %v3780 = vpack.c.b16 %v3729, %v3726
      %v3781 = vpack.c.b16 %v3733, %v3730
      %v3782 = vpack.c.b16 %v3734, %v3731
      %v3783 = vpack.c.b16 %v3735, %v3732
      %v3880 = vunpack.c.l.b16 %v1861
      %v3881 = vunpack.c.l.b16 %v1862
      %v3882 = vunpack.c.l.b16 %v1863
      %v3883 = vunpack.c.l.b16 %v1864
      %v3884 = vunpack.c.l.b16 %v1865
      %v3885 = vunpack.c.l.b16 %v1866
      %v3886 = vunpack.c.l.b16 %v1867
      %v3887 = vunpack.c.l.b16 %v1868
      %v3888 = vunpack.c.l.b16 %v1869
      %v3889 = vunpack.c.l.b16 %v1870
      %v3890 = vunpack.c.l.b16 %v1871
      %v3891 = vunpack.c.l.b16 %v1872
      %v3892 = vunpack.c.l.b16 %v1873
      %v3893 = vunpack.c.l.b16 %v1874
      %v3894 = vunpack.c.l.b16 %v1875
      %v3895 = vunpack.c.l.b16 %v1876
      %v3896 = vunpack.c.l.b16 %v1877
      %v3897 = vunpack.c.l.b16 %v1878
      %v3898 = vunpack.c.l.b16 %v1879
      %v3899 = vunpack.c.l.b16 %v1880
      %v3900 = vunpack.c.l.b16 %v1881
      %v3901 = vunpack.c.l.b16 %v1882
      %v3902 = vunpack.c.l.b16 %v1883
      %v3903 = vunpack.c.l.b16 %v1884
      %v3904 = vunpack.c.l.b16 %v1885
      %v3905 = vunpack.c.l.b16 %v1886
      %v3906 = vunpack.c.l.b16 %v1887
      %v3907 = vunpack.c.l.b16 %v1888
      %v3908 = vunpack.c.l.b16 %v1889
      %v3909 = vunpack.c.l.b16 %v1890
      %v3910 = vunpack.c.l.b16 %v1891
      %v3911 = vunpack.c.l.b16 %v1892
      %v3912 = vunpack.c.l.b16 %v1893
      %v3913 = vunpack.c.l.b16 %v1894
      %v3914 = vunpack.c.l.b16 %v1895
      %v3915 = vunpack.c.l.b16 %v1896
      %v3916 = vunpack.c.l.b16 %v1897
      %v3917 = vunpack.c.l.b16 %v1898
      %v3918 = vunpack.c.l.b16 %v1899
      %v3919 = vunpack.c.l.b16 %v1900
      %v3920 = vunpack.c.l.b16 %v1901
      %v3921 = vunpack.c.l.b16 %v1902
      %v3922 = vunpack.c.l.b16 %v1903
      %v3923 = vunpack.c.l.b16 %v1904
      %v3924 = vunpack.c.l.b16 %v1905
      %v3925 = vunpack.c.l.b16 %v1906
      %v3926 = vunpack.c.l.b16 %v1907
      %v3927 = vunpack.c.l.b16 %v1908
      %v3928 = vpack.c.b16 %v3881, %v3880
      %v3929 = vpack.c.b16 %v3883, %v3882
      %v3930 = vpack.c.b16 %v3885, %v3884
      %v3931 = vpack.c.b16 %v3887, %v3886
      %v3932 = vpack.c.b16 %v3889, %v3888
      %v3933 = vpack.c.b16 %v3891, %v3890
      %v3934 = vpack.c.b16 %v3893, %v3892
      %v3935 = vpack.c.b16 %v3895, %v3894
      %v3936 = vpack.c.b16 %v3897, %v3896
      %v3937 = vpack.c.b16 %v3899, %v3898
      %v3938 = vpack.c.b16 %v3901, %v3900
      %v3939 = vpack.c.b16 %v3903, %v3902
      %v3940 = vpack.c.b16 %v3905, %v3904
      %v3941 = vpack.c.b16 %v3907, %v3906
      %v3942 = vpack.c.b16 %v3909, %v3908
      %v3943 = vpack.c.b16 %v3911, %v3910
      %v3944 = vpack.c.b16 %v3913, %v3912
      %v3945 = vpack.c.b16 %v3915, %v3914
      %v3946 = vpack.c.b16 %v3917, %v3916
      %v3947 = vpack.c.b16 %v3919, %v3918
      %v3948 = vpack.c.b16 %v3921, %v3920
      %v3949 = vpack.c.b16 %v3923, %v3922
      %v3950 = vpack.c.b16 %v3925, %v3924
      %v3951 = vpack.c.b16 %v3927, %v3926
      %3976 = vmatprep.subr.bf16.mxu0 0
      %3977 = vmatpush1.bf16.msra.mxu0 %v3935
      %3978 = vmatprep.subr.bf16.mxu0 0
      %3979 = vmatpush1.bf16.msra.mxu0 %v3934
      %3980 = vmatprep.subr.bf16.mxu0 0
      %3981 = vmatpush1.bf16.msra.mxu0 %v3933
      %3982 = vmatprep.subr.bf16.mxu0 0
      %3983 = vmatpush1.bf16.msra.mxu0 %v3932
      %3984 = vmatprep.subr.bf16.mxu0 0
      %3985 = vmatpush1.bf16.msra.mxu0 %v3931
      %3986 = vmatprep.subr.bf16.mxu0 0
      %3987 = vmatpush1.bf16.msra.mxu0 %v3930
      %3988 = vmatprep.subr.bf16.mxu0 0
      %3989 = vmatpush1.bf16.msra.mxu0 %v3929
      %3990 = vmatprep.subr.bf16.mxu0 0
      %3991 = vmatpush1.bf16.msra.mxu0 %v3928
      %3992 = vmatprep.subr.bf16.mxu0 0
      %3993 = vmatpush2.bf16.msra.mxu0 %v3943
      %3994 = vmatprep.subr.bf16.mxu0 0
      %3995 = vmatpush2.bf16.msra.mxu0 %v3942
      %3996 = vmatprep.subr.bf16.mxu0 0
      %3997 = vmatpush2.bf16.msra.mxu0 %v3941
      %3998 = vmatprep.subr.bf16.mxu0 0
      %3999 = vmatpush2.bf16.msra.mxu0 %v3940
      %4000 = vmatprep.subr.bf16.mxu0 0
      %4001 = vmatpush2.bf16.msra.mxu0 %v3939
      %4002 = vmatprep.subr.bf16.mxu0 0
      %4003 = vmatpush2.bf16.msra.mxu0 %v3938
      %4004 = vmatprep.subr.bf16.mxu0 0
      %4005 = vmatpush2.bf16.msra.mxu0 %v3937
      %4006 = vmatprep.subr.bf16.mxu0 0
      %4007 = vmatpush2.bf16.msra.mxu0 %v3936
      %4008 = vmatprep.mubr.bf16.mxu0 %v3737
      %4009 = vmatmul.mubr.bf16.gmra.mxu0 %v3736
      %v4010 = vpop.f32.mrf.mxu0
      %v4011 = vadd.f32 %v3450, %v4010
      %v4012 = vpop.f32.mrf.mxu0
      %v4013 = vpop.f32.mrf.mxu0
      %v4014 = vadd.f32 %v3453, %v4013
      %v4015 = vpop.f32.mrf.mxu0
      %4016 = vmatprep.mubr.bf16.mxu0 %v3740
      %4017 = vmatmul.mubr.bf16.gmra.mxu0 %v3739
      %v4018 = vpop.f32.mrf.mxu0
      %v4019 = vadd.f32 %v3458, %v4018
      %v4020 = vpop.f32.mrf.mxu0
      %v4021 = vpop.f32.mrf.mxu0
      %v4022 = vadd.f32 %v3461, %v4021
      %v4023 = vpop.f32.mrf.mxu0
      %4024 = vmatprep.mubr.bf16.mxu0 %v3743
      %4025 = vmatmul.mubr.bf16.gmra.mxu0 %v3742
      %v4026 = vpop.f32.mrf.mxu0
      %v4027 = vadd.f32 %v3466, %v4026
      %v4028 = vpop.f32.mrf.mxu0
      %v4029 = vpop.f32.mrf.mxu0
      %v4030 = vadd.f32 %v3469, %v4029
      %v4031 = vpop.f32.mrf.mxu0
      %4032 = vmatprep.mubr.bf16.mxu0 %v3746
      %4033 = vmatmul.mubr.bf16.gmra.mxu0 %v3745
      %v4034 = vpop.f32.mrf.mxu0
      %v4035 = vadd.f32 %v3474, %v4034
      %v4036 = vpop.f32.mrf.mxu0
      %v4037 = vpop.f32.mrf.mxu0
      %v4038 = vadd.f32 %v3477, %v4037
      %v4039 = vpop.f32.mrf.mxu0
      %4040 = vmatprep.mubr.bf16.mxu0 %v3749
      %4041 = vmatmul.mubr.bf16.gmra.mxu0 %v3748
      %v4042 = vpop.f32.mrf.mxu0
      %v4043 = vadd.f32 %v3482, %v4042
      %v4044 = vpop.f32.mrf.mxu0
      %v4045 = vpop.f32.mrf.mxu0
      %v4046 = vadd.f32 %v3485, %v4045
      %v4047 = vpop.f32.mrf.mxu0
      %4048 = vmatprep.mubr.bf16.mxu0 %v3752
      %4049 = vmatmul.mubr.bf16.gmra.mxu0 %v3751
      %v4050 = vpop.f32.mrf.mxu0
      %v4051 = vadd.f32 %v3490, %v4050
      %v4052 = vpop.f32.mrf.mxu0
      %v4053 = vpop.f32.mrf.mxu0
      %v4054 = vadd.f32 %v3493, %v4053
      %v4055 = vpop.f32.mrf.mxu0
      %4056 = vmatprep.mubr.bf16.mxu0 %v3755
      %4057 = vmatmul.mubr.bf16.gmra.mxu0 %v3754
      %v4058 = vpop.f32.mrf.mxu0
      %v4059 = vadd.f32 %v3498, %v4058
      %v4060 = vpop.f32.mrf.mxu0
      %v4061 = vpop.f32.mrf.mxu0
      %v4062 = vadd.f32 %v3501, %v4061
      %v4063 = vpop.f32.mrf.mxu0
      %4064 = vmatprep.mubr.bf16.mxu0 %v3758
      %4065 = vmatmul.mubr.bf16.gmra.mxu0 %v3757
      %v4066 = vpop.f32.mrf.mxu0
      %v4067 = vadd.f32 %v3506, %v4066
      %v4068 = vpop.f32.mrf.mxu0
      %v4069 = vpop.f32.mrf.mxu0
      %v4070 = vadd.f32 %v3509, %v4069
      %v4071 = vpop.f32.mrf.mxu0
      %4072 = vmatprep.mubr.bf16.mxu0 %v3761
      %4073 = vmatmul.mubr.bf16.gmra.mxu0 %v3760
      %v4074 = vpop.f32.mrf.mxu0
      %v4075 = vadd.f32 %v3514, %v4074
      %v4076 = vpop.f32.mrf.mxu0
      %v4077 = vpop.f32.mrf.mxu0
      %v4078 = vadd.f32 %v3517, %v4077
      %v4079 = vpop.f32.mrf.mxu0
      %4080 = vmatprep.mubr.bf16.mxu0 %v3764
      %4081 = vmatmul.mubr.bf16.gmra.mxu0 %v3763
      %v4082 = vpop.f32.mrf.mxu0
      %v4083 = vadd.f32 %v3522, %v4082
      %v4084 = vpop.f32.mrf.mxu0
      %v4085 = vpop.f32.mrf.mxu0
      %v4086 = vadd.f32 %v3525, %v4085
      %v4087 = vpop.f32.mrf.mxu0
      %4088 = vmatprep.mubr.bf16.mxu0 %v3767
      %4089 = vmatmul.mubr.bf16.gmra.mxu0 %v3766
      %v4090 = vpop.f32.mrf.mxu0
      %v4091 = vadd.f32 %v3530, %v4090
      %v4092 = vpop.f32.mrf.mxu0
      %v4093 = vpop.f32.mrf.mxu0
      %v4094 = vadd.f32 %v3533, %v4093
      %v4095 = vpop.f32.mrf.mxu0
      %4096 = vmatprep.mubr.bf16.mxu0 %v3770
      %4097 = vmatmul.mubr.bf16.gmra.mxu0 %v3769
      %v4098 = vpop.f32.mrf.mxu0
      %v4099 = vadd.f32 %v3538, %v4098
      %v4100 = vpop.f32.mrf.mxu0
      %v4101 = vpop.f32.mrf.mxu0
      %v4102 = vadd.f32 %v3541, %v4101
      %v4103 = vpop.f32.mrf.mxu0
      %4104 = vmatprep.mubr.bf16.mxu0 %v3773
      %4105 = vmatmul.mubr.bf16.gmra.mxu0 %v3772
      %v4106 = vpop.f32.mrf.mxu0
      %v4107 = vadd.f32 %v3546, %v4106
      %v4108 = vpop.f32.mrf.mxu0
      %v4109 = vpop.f32.mrf.mxu0
      %v4110 = vadd.f32 %v3549, %v4109
      %v4111 = vpop.f32.mrf.mxu0
      %4112 = vmatprep.mubr.bf16.mxu0 %v3776
      %4113 = vmatmul.mubr.bf16.gmra.mxu0 %v3775
      %v4114 = vpop.f32.mrf.mxu0
      %v4115 = vadd.f32 %v3554, %v4114
      %v4116 = vpop.f32.mrf.mxu0
      %v4117 = vpop.f32.mrf.mxu0
      %v4118 = vadd.f32 %v3557, %v4117
      %v4119 = vpop.f32.mrf.mxu0
      %4120 = vmatprep.mubr.bf16.mxu0 %v3779
      %4121 = vmatmul.mubr.bf16.gmra.mxu0 %v3778
      %v4122 = vpop.f32.mrf.mxu0
      %v4123 = vadd.f32 %v3562, %v4122
      %v4124 = vpop.f32.mrf.mxu0
      %v4125 = vpop.f32.mrf.mxu0
      %v4126 = vadd.f32 %v3565, %v4125
      %v4127 = vpop.f32.mrf.mxu0
      %4128 = vmatprep.mubr.bf16.mxu0 %v3782
      %4129 = vmatmul.mubr.bf16.gmra.mxu0 %v3781
      %v4130 = vpop.f32.mrf.mxu0
      %v4131 = vadd.f32 %v3570, %v4130
      %v4132 = vpop.f32.mrf.mxu0
      %v4133 = vpop.f32.mrf.mxu0
      %v4134 = vadd.f32 %v3573, %v4133
      %v4135 = vpop.f32.mrf.mxu0
      %4136 = vdwg.mxu0
      %4137 = vmatprep.subr.bf16.mxu0 0
      %4138 = vmatpush1.bf16.msra.mxu0 %v3951
      %4139 = vmatprep.subr.bf16.mxu0 0
      %4140 = vmatpush1.bf16.msra.mxu0 %v3950
      %4141 = vmatprep.subr.bf16.mxu0 0
      %4142 = vmatpush1.bf16.msra.mxu0 %v3949
      %4143 = vmatprep.subr.bf16.mxu0 0
      %4144 = vmatpush1.bf16.msra.mxu0 %v3948
      %4145 = vmatprep.subr.bf16.mxu0 0
      %4146 = vmatpush1.bf16.msra.mxu0 %v3947
      %4147 = vmatprep.subr.bf16.mxu0 0
      %4148 = vmatpush1.bf16.msra.mxu0 %v3946
      %4149 = vmatprep.subr.bf16.mxu0 0
      %4150 = vmatpush1.bf16.msra.mxu0 %v3945
      %4151 = vmatprep.subr.bf16.mxu0 0
      %4152 = vmatpush1.bf16.msra.mxu0 %v3944
      %4153 = vmatprep.subr.bf16.mxu0 0
      %4154 = vmatpush2.bf16.msra.mxu0 0
      %4155 = vmatprep.subr.bf16.mxu0 0
      %4156 = vmatpush2.bf16.msra.mxu0 0
      %4157 = vmatprep.subr.bf16.mxu0 0
      %4158 = vmatpush2.bf16.msra.mxu0 0
      %4159 = vmatprep.subr.bf16.mxu0 0
      %4160 = vmatpush2.bf16.msra.mxu0 0
      %4161 = vmatprep.subr.bf16.mxu0 0
      %4162 = vmatpush2.bf16.msra.mxu0 0
      %4163 = vmatprep.subr.bf16.mxu0 0
      %4164 = vmatpush2.bf16.msra.mxu0 0
      %4165 = vmatprep.subr.bf16.mxu0 0
      %4166 = vmatpush2.bf16.msra.mxu0 0
      %4167 = vmatprep.subr.bf16.mxu0 0
      %4168 = vmatpush2.bf16.msra.mxu0 0
      %4169 = vmatprep.mubr.bf16.mxu0 0
      %4170 = vmatmul.mubr.bf16.gmra.mxu0 %v3738
      %v4171 = vpop.f32.mrf.mxu0
      %v4172 = vadd.f32 %v4011, %v4171
      %v4173 = vpop.f32.mrf.mxu0
      %v4174 = vpop.f32.mrf.mxu0
      %v4175 = vadd.f32 %v4014, %v4174
      %v4176 = vpop.f32.mrf.mxu0
      %4177 = vmatprep.mubr.bf16.mxu0 0
      %4178 = vmatmul.mubr.bf16.gmra.mxu0 %v3741
      %v4179 = vpop.f32.mrf.mxu0
      %v4180 = vadd.f32 %v4019, %v4179
      %v4181 = vpop.f32.mrf.mxu0
      %v4182 = vpop.f32.mrf.mxu0
      %v4183 = vadd.f32 %v4022, %v4182
      %v4184 = vpop.f32.mrf.mxu0
      %4185 = vmatprep.mubr.bf16.mxu0 0
      %4186 = vmatmul.mubr.bf16.gmra.mxu0 %v3744
      %v4187 = vpop.f32.mrf.mxu0
      %v4188 = vadd.f32 %v4027, %v4187
      %v4189 = vpop.f32.mrf.mxu0
      %v4190 = vpop.f32.mrf.mxu0
      %v4191 = vadd.f32 %v4030, %v4190
      %v4192 = vpop.f32.mrf.mxu0
      %4193 = vmatprep.mubr.bf16.mxu0 0
      %4194 = vmatmul.mubr.bf16.gmra.mxu0 %v3747
      %v4195 = vpop.f32.mrf.mxu0
      %v4196 = vadd.f32 %v4035, %v4195
      %v4197 = vpop.f32.mrf.mxu0
      %v4198 = vpop.f32.mrf.mxu0
      %v4199 = vadd.f32 %v4038, %v4198
      %v4200 = vpop.f32.mrf.mxu0
      %4201 = vmatprep.mubr.bf16.mxu0 0
      %4202 = vmatmul.mubr.bf16.gmra.mxu0 %v3750
      %v4203 = vpop.f32.mrf.mxu0
      %v4204 = vadd.f32 %v4043, %v4203
      %v4205 = vpop.f32.mrf.mxu0
      %v4206 = vpop.f32.mrf.mxu0
      %v4207 = vadd.f32 %v4046, %v4206
      %v4208 = vpop.f32.mrf.mxu0
      %4209 = vmatprep.mubr.bf16.mxu0 0
      %4210 = vmatmul.mubr.bf16.gmra.mxu0 %v3753
      %v4211 = vpop.f32.mrf.mxu0
      %v4212 = vadd.f32 %v4051, %v4211
      %v4213 = vpop.f32.mrf.mxu0
      %v4214 = vpop.f32.mrf.mxu0
      %v4215 = vadd.f32 %v4054, %v4214
      %v4216 = vpop.f32.mrf.mxu0
      %4217 = vmatprep.mubr.bf16.mxu0 0
      %4218 = vmatmul.mubr.bf16.gmra.mxu0 %v3756
      %v4219 = vpop.f32.mrf.mxu0
      %v4220 = vadd.f32 %v4059, %v4219
      %v4221 = vpop.f32.mrf.mxu0
      %v4222 = vpop.f32.mrf.mxu0
      %v4223 = vadd.f32 %v4062, %v4222
      %v4224 = vpop.f32.mrf.mxu0
      %4225 = vmatprep.mubr.bf16.mxu0 0
      %4226 = vmatmul.mubr.bf16.gmra.mxu0 %v3759
      %v4227 = vpop.f32.mrf.mxu0
      %v4228 = vadd.f32 %v4067, %v4227
      %v4229 = vpop.f32.mrf.mxu0
      %v4230 = vpop.f32.mrf.mxu0
      %v4231 = vadd.f32 %v4070, %v4230
      %v4232 = vpop.f32.mrf.mxu0
      %4233 = vmatprep.mubr.bf16.mxu0 0
      %4234 = vmatmul.mubr.bf16.gmra.mxu0 %v3762
      %v4235 = vpop.f32.mrf.mxu0
      %v4236 = vadd.f32 %v4075, %v4235
      %v4237 = vpop.f32.mrf.mxu0
      %v4238 = vpop.f32.mrf.mxu0
      %v4239 = vadd.f32 %v4078, %v4238
      %v4240 = vpop.f32.mrf.mxu0
      %4241 = vmatprep.mubr.bf16.mxu0 0
      %4242 = vmatmul.mubr.bf16.gmra.mxu0 %v3765
      %v4243 = vpop.f32.mrf.mxu0
      %v4244 = vadd.f32 %v4083, %v4243
      %v4245 = vpop.f32.mrf.mxu0
      %v4246 = vpop.f32.mrf.mxu0
      %v4247 = vadd.f32 %v4086, %v4246
      %v4248 = vpop.f32.mrf.mxu0
      %4249 = vmatprep.mubr.bf16.mxu0 0
      %4250 = vmatmul.mubr.bf16.gmra.mxu0 %v3768
      %v4251 = vpop.f32.mrf.mxu0
      %v4252 = vadd.f32 %v4091, %v4251
      %v4253 = vpop.f32.mrf.mxu0
      %v4254 = vpop.f32.mrf.mxu0
      %v4255 = vadd.f32 %v4094, %v4254
      %v4256 = vpop.f32.mrf.mxu0
      %4257 = vmatprep.mubr.bf16.mxu0 0
      %4258 = vmatmul.mubr.bf16.gmra.mxu0 %v3771
      %v4259 = vpop.f32.mrf.mxu0
      %v4260 = vadd.f32 %v4099, %v4259
      %v4261 = vpop.f32.mrf.mxu0
      %v4262 = vpop.f32.mrf.mxu0
      %v4263 = vadd.f32 %v4102, %v4262
      %v4264 = vpop.f32.mrf.mxu0
      %4265 = vmatprep.mubr.bf16.mxu0 0
      %4266 = vmatmul.mubr.bf16.gmra.mxu0 %v3774
      %v4267 = vpop.f32.mrf.mxu0
      %v4268 = vadd.f32 %v4107, %v4267
      %v4269 = vpop.f32.mrf.mxu0
      %v4270 = vpop.f32.mrf.mxu0
      %v4271 = vadd.f32 %v4110, %v4270
      %v4272 = vpop.f32.mrf.mxu0
      %4273 = vmatprep.mubr.bf16.mxu0 0
      %4274 = vmatmul.mubr.bf16.gmra.mxu0 %v3777
      %v4275 = vpop.f32.mrf.mxu0
      %v4276 = vadd.f32 %v4115, %v4275
      %v4277 = vpop.f32.mrf.mxu0
      %v4278 = vpop.f32.mrf.mxu0
      %v4279 = vadd.f32 %v4118, %v4278
      %v4280 = vpop.f32.mrf.mxu0
      %4281 = vmatprep.mubr.bf16.mxu0 0
      %4282 = vmatmul.mubr.bf16.gmra.mxu0 %v3780
      %v4283 = vpop.f32.mrf.mxu0
      %v4284 = vadd.f32 %v4123, %v4283
      %v4285 = vpop.f32.mrf.mxu0
      %v4286 = vpop.f32.mrf.mxu0
      %v4287 = vadd.f32 %v4126, %v4286
      %v4288 = vpop.f32.mrf.mxu0
      %4289 = vmatprep.mubr.bf16.mxu0 0
      %4290 = vmatmul.mubr.bf16.gmra.mxu0 %v3783
      %v4291 = vpop.f32.mrf.mxu0
      %v4292 = vadd.f32 %v4131, %v4291
      %v4293 = vpop.f32.mrf.mxu0
      %v4294 = vpop.f32.mrf.mxu0
      %v4295 = vadd.f32 %v4134, %v4294
      %v4296 = vpop.f32.mrf.mxu0
      %4297 = vdwg.mxu0
      %s4298 = scalar_lea.vmem [#allocation2], 24
      %v4299 = vld [vmem:[%s4298] sm:$0xf]
      %v4300 = vld [vmem:[%s4298 + $0x4] sm:$0xf]
      %v4301 = vld [vmem:[%s4298 + $0xc] sm:$0xf]
      %v4302 = vld [vmem:[%s4298 + $0x10] sm:$0xf]
      %v4303 = vld [vmem:[%s4298 + $0x18] sm:$0xf]
      %v4304 = vld [vmem:[%s4298 + $0x1c] sm:$0xf]
      %v4305 = vld [vmem:[%s4298 + $0x24] sm:$0xf]
      %v4306 = vld [vmem:[%s4298 + $0x28] sm:$0xf]
      %v4307 = vld [vmem:[%s4298 + $0x30] sm:$0xf]
      %v4308 = vld [vmem:[%s4298 + $0x34] sm:$0xf]
      %v4309 = vld [vmem:[%s4298 + $0x3c] sm:$0xf]
      %v4310 = vld [vmem:[%s4298 + $0x40] sm:$0xf]
      %v4311 = vld [vmem:[%s4298 + $0x48] sm:$0xf]
      %v4312 = vld [vmem:[%s4298 + $0x4c] sm:$0xf]
      %v4313 = vld [vmem:[%s4298 + $0x54] sm:$0xf]
      %v4314 = vld [vmem:[%s4298 + $0x58] sm:$0xf]
      %v4315 = vld [vmem:[%s4298 + $0x60] sm:$0xf]
      %v4316 = vld [vmem:[%s4298 + $0x64] sm:$0xf]
      %v4317 = vld [vmem:[%s4298 + $0x6c] sm:$0xf]
      %v4318 = vld [vmem:[%s4298 + $0x70] sm:$0xf]
      %v4319 = vld [vmem:[%s4298 + $0x78] sm:$0xf]
      %v4320 = vld [vmem:[%s4298 + $0x7c] sm:$0xf]
      %v4321 = vld [vmem:[%s4298 + $0x84] sm:$0xf]
      %v4322 = vld [vmem:[%s4298 + $0x88] sm:$0xf]
      %v4323 = vld [vmem:[%s4298 + $0x90] sm:$0xf]
      %v4324 = vld [vmem:[%s4298 + $0x94] sm:$0xf]
      %v4325 = vld [vmem:[%s4298 + $0x9c] sm:$0xf]
      %v4326 = vld [vmem:[%s4298 + $0xa0] sm:$0xf]
      %v4327 = vld [vmem:[%s4298 + $0xa8] sm:$0xf]
      %v4328 = vld [vmem:[%s4298 + $0xac] sm:$0xf]
      %v4329 = vld [vmem:[%s4298 + $0xb4] sm:$0xf]
      %v4330 = vld [vmem:[%s4298 + $0xb8] sm:$0xf]
      %4331 = vst [vmem:[#allocation3] sm:$0xf] %v4299
      %4332 = vst [vmem:[#allocation3 + $0xc] sm:$0xf] %v4300
      %4333 = vst [vmem:[#allocation3 + $0x18] sm:$0xf] %v4301
      %4334 = vst [vmem:[#allocation3 + $0x24] sm:$0xf] %v4302
      %4335 = vst [vmem:[#allocation3 + $0x30] sm:$0xf] %v4303
      %4336 = vst [vmem:[#allocation3 + $0x3c] sm:$0xf] %v4304
      %4337 = vst [vmem:[#allocation3 + $0x48] sm:$0xf] %v4305
      %4338 = vst [vmem:[#allocation3 + $0x54] sm:$0xf] %v4306
      %4339 = vst [vmem:[#allocation3 + $0x60] sm:$0xf] %v4307
      %4340 = vst [vmem:[#allocation3 + $0x6c] sm:$0xf] %v4308
      %4341 = vst [vmem:[#allocation3 + $0x78] sm:$0xf] %v4309
      %4342 = vst [vmem:[#allocation3 + $0x84] sm:$0xf] %v4310
      %4343 = vst [vmem:[#allocation3 + $0x90] sm:$0xf] %v4311
      %4344 = vst [vmem:[#allocation3 + $0x9c] sm:$0xf] %v4312
      %4345 = vst [vmem:[#allocation3 + $0xa8] sm:$0xf] %v4313
      %4346 = vst [vmem:[#allocation3 + $0xb4] sm:$0xf] %v4314
      %4347 = vst [vmem:[#allocation3 + $0xc0] sm:$0xf] %v4315
      %4348 = vst [vmem:[#allocation3 + $0xcc] sm:$0xf] %v4316
      %4349 = vst [vmem:[#allocation3 + $0xd8] sm:$0xf] %v4317
      %4350 = vst [vmem:[#allocation3 + $0xe4] sm:$0xf] %v4318
      %4351 = vst [vmem:[#allocation3 + $0xf0] sm:$0xf] %v4319
      %4352 = vst [vmem:[#allocation3 + $0xfc] sm:$0xf] %v4320
      %4353 = vst [vmem:[#allocation3 + $0x108] sm:$0xf] %v4321
      %4354 = vst [vmem:[#allocation3 + $0x114] sm:$0xf] %v4322
      %4355 = vst [vmem:[#allocation3 + $0x120] sm:$0xf] %v4323
      %4356 = vst [vmem:[#allocation3 + $0x12c] sm:$0xf] %v4324
      %4357 = vst [vmem:[#allocation3 + $0x138] sm:$0xf] %v4325
      %4358 = vst [vmem:[#allocation3 + $0x144] sm:$0xf] %v4326
      %4359 = vst [vmem:[#allocation3 + $0x150] sm:$0xf] %v4327
      %4360 = vst [vmem:[#allocation3 + $0x15c] sm:$0xf] %v4328
      %4361 = vst [vmem:[#allocation3 + $0x168] sm:$0xf] %v4329
      %4362 = vst [vmem:[#allocation3 + $0x174] sm:$0xf] %v4330
      %v4363 = vld [vmem:[%s4298] sm:$0xf]
      %v4364 = vld [vmem:[%s4298 + $0x4] sm:$0xf]
      %v4365 = vld [vmem:[%s4298 + $0x8] sm:$0x1]
      %v4366 = vld [vmem:[%s4298 + $0xc] sm:$0xf]
      %v4367 = vld [vmem:[%s4298 + $0x10] sm:$0xf]
      %v4368 = vld [vmem:[%s4298 + $0x14] sm:$0x1]
      %v4369 = vld [vmem:[%s4298 + $0x18] sm:$0xf]
      %v4370 = vld [vmem:[%s4298 + $0x1c] sm:$0xf]
      %v4371 = vld [vmem:[%s4298 + $0x20] sm:$0x1]
      %v4372 = vld [vmem:[%s4298 + $0x24] sm:$0xf]
      %v4373 = vld [vmem:[%s4298 + $0x28] sm:$0xf]
      %v4374 = vld [vmem:[%s4298 + $0x2c] sm:$0x1]
      %v4375 = vld [vmem:[%s4298 + $0x30] sm:$0xf]
      %v4376 = vld [vmem:[%s4298 + $0x34] sm:$0xf]
      %v4377 = vld [vmem:[%s4298 + $0x38] sm:$0x1]
      %v4378 = vld [vmem:[%s4298 + $0x3c] sm:$0xf]
      %v4379 = vld [vmem:[%s4298 + $0x40] sm:$0xf]
      %v4380 = vld [vmem:[%s4298 + $0x44] sm:$0x1]
      %v4381 = vld [vmem:[%s4298 + $0x48] sm:$0xf]
      %v4382 = vld [vmem:[%s4298 + $0x4c] sm:$0xf]
      %v4383 = vld [vmem:[%s4298 + $0x50] sm:$0x1]
      %v4384 = vld [vmem:[%s4298 + $0x54] sm:$0xf]
      %v4385 = vld [vmem:[%s4298 + $0x58] sm:$0xf]
      %v4386 = vld [vmem:[%s4298 + $0x5c] sm:$0x1]
      %v4387 = vld [vmem:[%s4298 + $0x60] sm:$0xf]
      %v4388 = vld [vmem:[%s4298 + $0x64] sm:$0xf]
      %v4389 = vld [vmem:[%s4298 + $0x68] sm:$0x1]
      %v4390 = vld [vmem:[%s4298 + $0x6c] sm:$0xf]
      %v4391 = vld [vmem:[%s4298 + $0x70] sm:$0xf]
      %v4392 = vld [vmem:[%s4298 + $0x74] sm:$0x1]
      %v4393 = vld [vmem:[%s4298 + $0x78] sm:$0xf]
      %v4394 = vld [vmem:[%s4298 + $0x7c] sm:$0xf]
      %v4395 = vld [vmem:[%s4298 + $0x80] sm:$0x1]
      %v4396 = vld [vmem:[%s4298 + $0x84] sm:$0xf]
      %v4397 = vld [vmem:[%s4298 + $0x88] sm:$0xf]
      %v4398 = vld [vmem:[%s4298 + $0x8c] sm:$0x1]
      %v4399 = vld [vmem:[%s4298 + $0x90] sm:$0xf]
      %v4400 = vld [vmem:[%s4298 + $0x94] sm:$0xf]
      %v4401 = vld [vmem:[%s4298 + $0x98] sm:$0x1]
      %v4402 = vld [vmem:[%s4298 + $0x9c] sm:$0xf]
      %v4403 = vld [vmem:[%s4298 + $0xa0] sm:$0xf]
      %v4404 = vld [vmem:[%s4298 + $0xa4] sm:$0x1]
      %v4405 = vld [vmem:[%s4298 + $0xa8] sm:$0xf]
      %v4406 = vld [vmem:[%s4298 + $0xac] sm:$0xf]
      %v4407 = vld [vmem:[%s4298 + $0xb0] sm:$0x1]
      %v4408 = vld [vmem:[%s4298 + $0xb4] sm:$0xf]
      %v4409 = vld [vmem:[%s4298 + $0xb8] sm:$0xf]
      %v4410 = vld [vmem:[%s4298 + $0xbc] sm:$0x1]
      %v4412 = vshrl.u32 %v4363, 16
      %v4414 = vrot.slane %v4412, 4
      %v4415 = vshll.u32 %v4363, 16
      %v4417 = vrot.slane %v4415, 5
      %v4418 = vor.u32 %v4414, %v4417
      %v4419 = vrot.slane %v4418, 4
      %v4421 = vshll.u32 %v4364, 16
      %v4423 = vrot.slane %v4421, 5
      %v4424 = vsel %vm1073, %v4419, %v4423
      %v4425 = vshrl.u32 %v4364, 16
      %v4427 = vrot.slane %v4425, 4
      %v4428 = vor.u32 %v4427, %v4423
      %v4429 = vrot.slane %v4428, 4
      %v4431 = vshll.u32 %v4365, 16
      %v4433 = vrot.slane %v4431, 5
      %v4434 = vsel %vm1073, %v4429, %v4433
      %v4436 = vshrl.u32 %v4366, 16
      %v4438 = vrot.slane %v4436, 4
      %v4439 = vshll.u32 %v4366, 16
      %v4441 = vrot.slane %v4439, 5
      %v4442 = vor.u32 %v4438, %v4441
      %v4443 = vrot.slane %v4442, 4
      %v4445 = vshll.u32 %v4367, 16
      %v4447 = vrot.slane %v4445, 5
      %v4448 = vsel %vm1073, %v4443, %v4447
      %v4449 = vshrl.u32 %v4367, 16
      %v4451 = vrot.slane %v4449, 4
      %v4452 = vor.u32 %v4451, %v4447
      %v4453 = vrot.slane %v4452, 4
      %v4455 = vshll.u32 %v4368, 16
      %v4457 = vrot.slane %v4455, 5
      %v4458 = vsel %vm1073, %v4453, %v4457
      %v4460 = vshrl.u32 %v4369, 16
      %v4462 = vrot.slane %v4460, 4
      %v4463 = vshll.u32 %v4369, 16
      %v4465 = vrot.slane %v4463, 5
      %v4466 = vor.u32 %v4462, %v4465
      %v4467 = vrot.slane %v4466, 4
      %v4469 = vshll.u32 %v4370, 16
      %v4471 = vrot.slane %v4469, 5
      %v4472 = vsel %vm1073, %v4467, %v4471
      %v4473 = vshrl.u32 %v4370, 16
      %v4475 = vrot.slane %v4473, 4
      %v4476 = vor.u32 %v4475, %v4471
      %v4477 = vrot.slane %v4476, 4
      %v4479 = vshll.u32 %v4371, 16
      %v4481 = vrot.slane %v4479, 5
      %v4482 = vsel %vm1073, %v4477, %v4481
      %v4484 = vshrl.u32 %v4372, 16
      %v4486 = vrot.slane %v4484, 4
      %v4487 = vshll.u32 %v4372, 16
      %v4489 = vrot.slane %v4487, 5
      %v4490 = vor.u32 %v4486, %v4489
      %v4491 = vrot.slane %v4490, 4
      %v4493 = vshll.u32 %v4373, 16
      %v4495 = vrot.slane %v4493, 5
      %v4496 = vsel %vm1073, %v4491, %v4495
      %v4497 = vshrl.u32 %v4373, 16
      %v4499 = vrot.slane %v4497, 4
      %v4500 = vor.u32 %v4499, %v4495
      %v4501 = vrot.slane %v4500, 4
      %v4503 = vshll.u32 %v4374, 16
      %v4505 = vrot.slane %v4503, 5
      %v4506 = vsel %vm1073, %v4501, %v4505
      %v4508 = vshrl.u32 %v4375, 16
      %v4510 = vrot.slane %v4508, 4
      %v4511 = vshll.u32 %v4375, 16
      %v4513 = vrot.slane %v4511, 5
      %v4514 = vor.u32 %v4510, %v4513
      %v4515 = vrot.slane %v4514, 4
      %v4517 = vshll.u32 %v4376, 16
      %v4519 = vrot.slane %v4517, 5
      %v4520 = vsel %vm1073, %v4515, %v4519
      %v4521 = vshrl.u32 %v4376, 16
      %v4523 = vrot.slane %v4521, 4
      %v4524 = vor.u32 %v4523, %v4519
      %v4525 = vrot.slane %v4524, 4
      %v4527 = vshll.u32 %v4377, 16
      %v4529 = vrot.slane %v4527, 5
      %v4530 = vsel %vm1073, %v4525, %v4529
      %v4532 = vshrl.u32 %v4378, 16
      %v4534 = vrot.slane %v4532, 4
      %v4535 = vshll.u32 %v4378, 16
      %v4537 = vrot.slane %v4535, 5
      %v4538 = vor.u32 %v4534, %v4537
      %v4539 = vrot.slane %v4538, 4
      %v4541 = vshll.u32 %v4379, 16
      %v4543 = vrot.slane %v4541, 5
      %v4544 = vsel %vm1073, %v4539, %v4543
      %v4545 = vshrl.u32 %v4379, 16
      %v4547 = vrot.slane %v4545, 4
      %v4548 = vor.u32 %v4547, %v4543
      %v4549 = vrot.slane %v4548, 4
      %v4551 = vshll.u32 %v4380, 16
      %v4553 = vrot.slane %v4551, 5
      %v4554 = vsel %vm1073, %v4549, %v4553
      %v4556 = vshrl.u32 %v4381, 16
      %v4558 = vrot.slane %v4556, 4
      %v4559 = vshll.u32 %v4381, 16
      %v4561 = vrot.slane %v4559, 5
      %v4562 = vor.u32 %v4558, %v4561
      %v4563 = vrot.slane %v4562, 4
      %v4565 = vshll.u32 %v4382, 16
      %v4567 = vrot.slane %v4565, 5
      %v4568 = vsel %vm1073, %v4563, %v4567
      %v4569 = vshrl.u32 %v4382, 16
      %v4571 = vrot.slane %v4569, 4
      %v4572 = vor.u32 %v4571, %v4567
      %v4573 = vrot.slane %v4572, 4
      %v4575 = vshll.u32 %v4383, 16
      %v4577 = vrot.slane %v4575, 5
      %v4578 = vsel %vm1073, %v4573, %v4577
      %v4580 = vshrl.u32 %v4384, 16
      %v4582 = vrot.slane %v4580, 4
      %v4583 = vshll.u32 %v4384, 16
      %v4585 = vrot.slane %v4583, 5
      %v4586 = vor.u32 %v4582, %v4585
      %v4587 = vrot.slane %v4586, 4
      %v4589 = vshll.u32 %v4385, 16
      %v4591 = vrot.slane %v4589, 5
      %v4592 = vsel %vm1073, %v4587, %v4591
      %v4593 = vshrl.u32 %v4385, 16
      %v4595 = vrot.slane %v4593, 4
      %v4596 = vor.u32 %v4595, %v4591
      %v4597 = vrot.slane %v4596, 4
      %v4599 = vshll.u32 %v4386, 16
      %v4601 = vrot.slane %v4599, 5
      %v4602 = vsel %vm1073, %v4597, %v4601
      %v4604 = vshrl.u32 %v4387, 16
      %v4606 = vrot.slane %v4604, 4
      %v4607 = vshll.u32 %v4387, 16
      %v4609 = vrot.slane %v4607, 5
      %v4610 = vor.u32 %v4606, %v4609
      %v4611 = vrot.slane %v4610, 4
      %v4613 = vshll.u32 %v4388, 16
      %v4615 = vrot.slane %v4613, 5
      %v4616 = vsel %vm1073, %v4611, %v4615
      %v4617 = vshrl.u32 %v4388, 16
      %v4619 = vrot.slane %v4617, 4
      %v4620 = vor.u32 %v4619, %v4615
      %v4621 = vrot.slane %v4620, 4
      %v4623 = vshll.u32 %v4389, 16
      %v4625 = vrot.slane %v4623, 5
      %v4626 = vsel %vm1073, %v4621, %v4625
      %v4628 = vshrl.u32 %v4390, 16
      %v4630 = vrot.slane %v4628, 4
      %v4631 = vshll.u32 %v4390, 16
      %v4633 = vrot.slane %v4631, 5
      %v4634 = vor.u32 %v4630, %v4633
      %v4635 = vrot.slane %v4634, 4
      %v4637 = vshll.u32 %v4391, 16
      %v4639 = vrot.slane %v4637, 5
      %v4640 = vsel %vm1073, %v4635, %v4639
      %v4641 = vshrl.u32 %v4391, 16
      %v4643 = vrot.slane %v4641, 4
      %v4644 = vor.u32 %v4643, %v4639
      %v4645 = vrot.slane %v4644, 4
      %v4647 = vshll.u32 %v4392, 16
      %v4649 = vrot.slane %v4647, 5
      %v4650 = vsel %vm1073, %v4645, %v4649
      %v4652 = vshrl.u32 %v4393, 16
      %v4654 = vrot.slane %v4652, 4
      %v4655 = vshll.u32 %v4393, 16
      %v4657 = vrot.slane %v4655, 5
      %v4658 = vor.u32 %v4654, %v4657
      %v4659 = vrot.slane %v4658, 4
      %v4661 = vshll.u32 %v4394, 16
      %v4663 = vrot.slane %v4661, 5
      %v4664 = vsel %vm1073, %v4659, %v4663
      %v4665 = vshrl.u32 %v4394, 16
      %v4667 = vrot.slane %v4665, 4
      %v4668 = vor.u32 %v4667, %v4663
      %v4669 = vrot.slane %v4668, 4
      %v4671 = vshll.u32 %v4395, 16
      %v4673 = vrot.slane %v4671, 5
      %v4674 = vsel %vm1073, %v4669, %v4673
      %v4676 = vshrl.u32 %v4396, 16
      %v4678 = vrot.slane %v4676, 4
      %v4679 = vshll.u32 %v4396, 16
      %v4681 = vrot.slane %v4679, 5
      %v4682 = vor.u32 %v4678, %v4681
      %v4683 = vrot.slane %v4682, 4
      %v4685 = vshll.u32 %v4397, 16
      %v4687 = vrot.slane %v4685, 5
      %v4688 = vsel %vm1073, %v4683, %v4687
      %v4689 = vshrl.u32 %v4397, 16
      %v4691 = vrot.slane %v4689, 4
      %v4692 = vor.u32 %v4691, %v4687
      %v4693 = vrot.slane %v4692, 4
      %v4695 = vshll.u32 %v4398, 16
      %v4697 = vrot.slane %v4695, 5
      %v4698 = vsel %vm1073, %v4693, %v4697
      %v4700 = vshrl.u32 %v4399, 16
      %v4702 = vrot.slane %v4700, 4
      %v4703 = vshll.u32 %v4399, 16
      %v4705 = vrot.slane %v4703, 5
      %v4706 = vor.u32 %v4702, %v4705
      %v4707 = vrot.slane %v4706, 4
      %v4709 = vshll.u32 %v4400, 16
      %v4711 = vrot.slane %v4709, 5
      %v4712 = vsel %vm1073, %v4707, %v4711
      %v4713 = vshrl.u32 %v4400, 16
      %v4715 = vrot.slane %v4713, 4
      %v4716 = vor.u32 %v4715, %v4711
      %v4717 = vrot.slane %v4716, 4
      %v4719 = vshll.u32 %v4401, 16
      %v4721 = vrot.slane %v4719, 5
      %v4722 = vsel %vm1073, %v4717, %v4721
      %v4724 = vshrl.u32 %v4402, 16
      %v4726 = vrot.slane %v4724, 4
      %v4727 = vshll.u32 %v4402, 16
      %v4729 = vrot.slane %v4727, 5
      %v4730 = vor.u32 %v4726, %v4729
      %v4731 = vrot.slane %v4730, 4
      %v4733 = vshll.u32 %v4403, 16
      %v4735 = vrot.slane %v4733, 5
      %v4736 = vsel %vm1073, %v4731, %v4735
      %v4737 = vshrl.u32 %v4403, 16
      %v4739 = vrot.slane %v4737, 4
      %v4740 = vor.u32 %v4739, %v4735
      %v4741 = vrot.slane %v4740, 4
      %v4743 = vshll.u32 %v4404, 16
      %v4745 = vrot.slane %v4743, 5
      %v4746 = vsel %vm1073, %v4741, %v4745
      %v4748 = vshrl.u32 %v4405, 16
      %v4750 = vrot.slane %v4748, 4
      %v4751 = vshll.u32 %v4405, 16
      %v4753 = vrot.slane %v4751, 5
      %v4754 = vor.u32 %v4750, %v4753
      %v4755 = vrot.slane %v4754, 4
      %v4757 = vshll.u32 %v4406, 16
      %v4759 = vrot.slane %v4757, 5
      %v4760 = vsel %vm1073, %v4755, %v4759
      %v4761 = vshrl.u32 %v4406, 16
      %v4763 = vrot.slane %v4761, 4
      %v4764 = vor.u32 %v4763, %v4759
      %v4765 = vrot.slane %v4764, 4
      %v4767 = vshll.u32 %v4407, 16
      %v4769 = vrot.slane %v4767, 5
      %v4770 = vsel %vm1073, %v4765, %v4769
      %v4772 = vshrl.u32 %v4408, 16
      %v4774 = vrot.slane %v4772, 4
      %v4775 = vshll.u32 %v4408, 16
      %v4777 = vrot.slane %v4775, 5
      %v4778 = vor.u32 %v4774, %v4777
      %v4779 = vrot.slane %v4778, 4
      %v4781 = vshll.u32 %v4409, 16
      %v4783 = vrot.slane %v4781, 5
      %v4784 = vsel %vm1073, %v4779, %v4783
      %v4785 = vshrl.u32 %v4409, 16
      %v4787 = vrot.slane %v4785, 4
      %v4788 = vor.u32 %v4787, %v4783
      %v4789 = vrot.slane %v4788, 4
      %v4791 = vshll.u32 %v4410, 16
      %v4793 = vrot.slane %v4791, 5
      %v4794 = vsel %vm1073, %v4789, %v4793
      %4827 = vst [vmem:[#allocation3 + $0x4] sm:$0xf] %v4424
      %4828 = vst [vmem:[#allocation3 + $0x10] sm:$0xf] %v4434
      %4829 = vst [vmem:[#allocation3 + $0x1c] sm:$0xf] %v4448
      %4830 = vst [vmem:[#allocation3 + $0x28] sm:$0xf] %v4458
      %4831 = vst [vmem:[#allocation3 + $0x34] sm:$0xf] %v4472
      %4832 = vst [vmem:[#allocation3 + $0x40] sm:$0xf] %v4482
      %4833 = vst [vmem:[#allocation3 + $0x4c] sm:$0xf] %v4496
      %4834 = vst [vmem:[#allocation3 + $0x58] sm:$0xf] %v4506
      %4835 = vst [vmem:[#allocation3 + $0x64] sm:$0xf] %v4520
      %4836 = vst [vmem:[#allocation3 + $0x70] sm:$0xf] %v4530
      %4837 = vst [vmem:[#allocation3 + $0x7c] sm:$0xf] %v4544
      %4838 = vst [vmem:[#allocation3 + $0x88] sm:$0xf] %v4554
      %4839 = vst [vmem:[#allocation3 + $0x94] sm:$0xf] %v4568
      %4840 = vst [vmem:[#allocation3 + $0xa0] sm:$0xf] %v4578
      %4841 = vst [vmem:[#allocation3 + $0xac] sm:$0xf] %v4592
      %4842 = vst [vmem:[#allocation3 + $0xb8] sm:$0xf] %v4602
      %4843 = vst [vmem:[#allocation3 + $0xc4] sm:$0xf] %v4616
      %4844 = vst [vmem:[#allocation3 + $0xd0] sm:$0xf] %v4626
      %4845 = vst [vmem:[#allocation3 + $0xdc] sm:$0xf] %v4640
      %4846 = vst [vmem:[#allocation3 + $0xe8] sm:$0xf] %v4650
      %4847 = vst [vmem:[#allocation3 + $0xf4] sm:$0xf] %v4664
      %4848 = vst [vmem:[#allocation3 + $0x100] sm:$0xf] %v4674
      %4849 = vst [vmem:[#allocation3 + $0x10c] sm:$0xf] %v4688
      %4850 = vst [vmem:[#allocation3 + $0x118] sm:$0xf] %v4698
      %4851 = vst [vmem:[#allocation3 + $0x124] sm:$0xf] %v4712
      %4852 = vst [vmem:[#allocation3 + $0x130] sm:$0xf] %v4722
      %4853 = vst [vmem:[#allocation3 + $0x13c] sm:$0xf] %v4736
      %4854 = vst [vmem:[#allocation3 + $0x148] sm:$0xf] %v4746
      %4855 = vst [vmem:[#allocation3 + $0x154] sm:$0xf] %v4760
      %4856 = vst [vmem:[#allocation3 + $0x160] sm:$0xf] %v4770
      %4857 = vst [vmem:[#allocation3 + $0x16c] sm:$0xf] %v4784
      %4858 = vst [vmem:[#allocation3 + $0x178] sm:$0xf] %v4794
      %v4859 = vld [vmem:[%s4298] sm:$0xe]
      %v4860 = vld [vmem:[%s4298 + $0x4] sm:$0xf]
      %v4861 = vld [vmem:[%s4298 + $0x8] sm:$0x1]
      %v4862 = vld [vmem:[%s4298 + $0xc] sm:$0xe]
      %v4863 = vld [vmem:[%s4298 + $0x10] sm:$0xf]
      %v4864 = vld [vmem:[%s4298 + $0x14] sm:$0x1]
      %v4865 = vld [vmem:[%s4298 + $0x18] sm:$0xe]
      %v4866 = vld [vmem:[%s4298 + $0x1c] sm:$0xf]
      %v4867 = vld [vmem:[%s4298 + $0x20] sm:$0x1]
      %v4868 = vld [vmem:[%s4298 + $0x24] sm:$0xe]
      %v4869 = vld [vmem:[%s4298 + $0x28] sm:$0xf]
      %v4870 = vld [vmem:[%s4298 + $0x2c] sm:$0x1]
      %v4871 = vld [vmem:[%s4298 + $0x30] sm:$0xe]
      %v4872 = vld [vmem:[%s4298 + $0x34] sm:$0xf]
      %v4873 = vld [vmem:[%s4298 + $0x38] sm:$0x1]
      %v4874 = vld [vmem:[%s4298 + $0x3c] sm:$0xe]
      %v4875 = vld [vmem:[%s4298 + $0x40] sm:$0xf]
      %v4876 = vld [vmem:[%s4298 + $0x44] sm:$0x1]
      %v4877 = vld [vmem:[%s4298 + $0x48] sm:$0xe]
      %v4878 = vld [vmem:[%s4298 + $0x4c] sm:$0xf]
      %v4879 = vld [vmem:[%s4298 + $0x50] sm:$0x1]
      %v4880 = vld [vmem:[%s4298 + $0x54] sm:$0xe]
      %v4881 = vld [vmem:[%s4298 + $0x58] sm:$0xf]
      %v4882 = vld [vmem:[%s4298 + $0x5c] sm:$0x1]
      %v4883 = vld [vmem:[%s4298 + $0x60] sm:$0xe]
      %v4884 = vld [vmem:[%s4298 + $0x64] sm:$0xf]
      %v4885 = vld [vmem:[%s4298 + $0x68] sm:$0x1]
      %v4886 = vld [vmem:[%s4298 + $0x6c] sm:$0xe]
      %v4887 = vld [vmem:[%s4298 + $0x70] sm:$0xf]
      %v4888 = vld [vmem:[%s4298 + $0x74] sm:$0x1]
      %v4889 = vld [vmem:[%s4298 + $0x78] sm:$0xe]
      %v4890 = vld [vmem:[%s4298 + $0x7c] sm:$0xf]
      %v4891 = vld [vmem:[%s4298 + $0x80] sm:$0x1]
      %v4892 = vld [vmem:[%s4298 + $0x84] sm:$0xe]
      %v4893 = vld [vmem:[%s4298 + $0x88] sm:$0xf]
      %v4894 = vld [vmem:[%s4298 + $0x8c] sm:$0x1]
      %v4895 = vld [vmem:[%s4298 + $0x90] sm:$0xe]
      %v4896 = vld [vmem:[%s4298 + $0x94] sm:$0xf]
      %v4897 = vld [vmem:[%s4298 + $0x98] sm:$0x1]
      %v4898 = vld [vmem:[%s4298 + $0x9c] sm:$0xe]
      %v4899 = vld [vmem:[%s4298 + $0xa0] sm:$0xf]
      %v4900 = vld [vmem:[%s4298 + $0xa4] sm:$0x1]
      %v4901 = vld [vmem:[%s4298 + $0xa8] sm:$0xe]
      %v4902 = vld [vmem:[%s4298 + $0xac] sm:$0xf]
      %v4903 = vld [vmem:[%s4298 + $0xb0] sm:$0x1]
      %v4904 = vld [vmem:[%s4298 + $0xb4] sm:$0xe]
      %v4905 = vld [vmem:[%s4298 + $0xb8] sm:$0xf]
      %v4906 = vld [vmem:[%s4298 + $0xbc] sm:$0x1]
      %v4955 = vrot.slane %v4859, 5
      %v4956 = vrot.slane %v4955, 4
      %v4957 = vrot.slane %v4860, 5
      %v4958 = vsel %vm1620, %v4956, %v4957
      %v4959 = vrot.slane %v4957, 4
      %v4960 = vrot.slane %v4861, 5
      %v4961 = vsel %vm1620, %v4959, %v4960
      %v4962 = vrot.slane %v4862, 5
      %v4963 = vrot.slane %v4962, 4
      %v4964 = vrot.slane %v4863, 5
      %v4965 = vsel %vm1620, %v4963, %v4964
      %v4966 = vrot.slane %v4964, 4
      %v4967 = vrot.slane %v4864, 5
      %v4968 = vsel %vm1620, %v4966, %v4967
      %v4969 = vrot.slane %v4865, 5
      %v4970 = vrot.slane %v4969, 4
      %v4971 = vrot.slane %v4866, 5
      %v4972 = vsel %vm1620, %v4970, %v4971
      %v4973 = vrot.slane %v4971, 4
      %v4974 = vrot.slane %v4867, 5
      %v4975 = vsel %vm1620, %v4973, %v4974
      %v4976 = vrot.slane %v4868, 5
      %v4977 = vrot.slane %v4976, 4
      %v4978 = vrot.slane %v4869, 5
      %v4979 = vsel %vm1620, %v4977, %v4978
      %v4980 = vrot.slane %v4978, 4
      %v4981 = vrot.slane %v4870, 5
      %v4982 = vsel %vm1620, %v4980, %v4981
      %v4983 = vrot.slane %v4871, 5
      %v4984 = vrot.slane %v4983, 4
      %v4985 = vrot.slane %v4872, 5
      %v4986 = vsel %vm1620, %v4984, %v4985
      %v4987 = vrot.slane %v4985, 4
      %v4988 = vrot.slane %v4873, 5
      %v4989 = vsel %vm1620, %v4987, %v4988
      %v4990 = vrot.slane %v4874, 5
      %v4991 = vrot.slane %v4990, 4
      %v4992 = vrot.slane %v4875, 5
      %v4993 = vsel %vm1620, %v4991, %v4992
      %v4994 = vrot.slane %v4992, 4
      %v4995 = vrot.slane %v4876, 5
      %v4996 = vsel %vm1620, %v4994, %v4995
      %v4997 = vrot.slane %v4877, 5
      %v4998 = vrot.slane %v4997, 4
      %v4999 = vrot.slane %v4878, 5
      %v5000 = vsel %vm1620, %v4998, %v4999
      %v5001 = vrot.slane %v4999, 4
      %v5002 = vrot.slane %v4879, 5
      %v5003 = vsel %vm1620, %v5001, %v5002
      %v5004 = vrot.slane %v4880, 5
      %v5005 = vrot.slane %v5004, 4
      %v5006 = vrot.slane %v4881, 5
      %v5007 = vsel %vm1620, %v5005, %v5006
      %v5008 = vrot.slane %v5006, 4
      %v5009 = vrot.slane %v4882, 5
      %v5010 = vsel %vm1620, %v5008, %v5009
      %v5011 = vrot.slane %v4883, 5
      %v5012 = vrot.slane %v5011, 4
      %v5013 = vrot.slane %v4884, 5
      %v5014 = vsel %vm1620, %v5012, %v5013
      %v5015 = vrot.slane %v5013, 4
      %v5016 = vrot.slane %v4885, 5
      %v5017 = vsel %vm1620, %v5015, %v5016
      %v5018 = vrot.slane %v4886, 5
      %v5019 = vrot.slane %v5018, 4
      %v5020 = vrot.slane %v4887, 5
      %v5021 = vsel %vm1620, %v5019, %v5020
      %v5022 = vrot.slane %v5020, 4
      %v5023 = vrot.slane %v4888, 5
      %v5024 = vsel %vm1620, %v5022, %v5023
      %v5025 = vrot.slane %v4889, 5
      %v5026 = vrot.slane %v5025, 4
      %v5027 = vrot.slane %v4890, 5
      %v5028 = vsel %vm1620, %v5026, %v5027
      %v5029 = vrot.slane %v5027, 4
      %v5030 = vrot.slane %v4891, 5
      %v5031 = vsel %vm1620, %v5029, %v5030
      %v5032 = vrot.slane %v4892, 5
      %v5033 = vrot.slane %v5032, 4
      %v5034 = vrot.slane %v4893, 5
      %v5035 = vsel %vm1620, %v5033, %v5034
      %v5036 = vrot.slane %v5034, 4
      %v5037 = vrot.slane %v4894, 5
      %v5038 = vsel %vm1620, %v5036, %v5037
      %v5039 = vrot.slane %v4895, 5
      %v5040 = vrot.slane %v5039, 4
      %v5041 = vrot.slane %v4896, 5
      %v5042 = vsel %vm1620, %v5040, %v5041
      %v5043 = vrot.slane %v5041, 4
      %v5044 = vrot.slane %v4897, 5
      %v5045 = vsel %vm1620, %v5043, %v5044
      %v5046 = vrot.slane %v4898, 5
      %v5047 = vrot.slane %v5046, 4
      %v5048 = vrot.slane %v4899, 5
      %v5049 = vsel %vm1620, %v5047, %v5048
      %v5050 = vrot.slane %v5048, 4
      %v5051 = vrot.slane %v4900, 5
      %v5052 = vsel %vm1620, %v5050, %v5051
      %v5053 = vrot.slane %v4901, 5
      %v5054 = vrot.slane %v5053, 4
      %v5055 = vrot.slane %v4902, 5
      %v5056 = vsel %vm1620, %v5054, %v5055
      %v5057 = vrot.slane %v5055, 4
      %v5058 = vrot.slane %v4903, 5
      %v5059 = vsel %vm1620, %v5057, %v5058
      %v5060 = vrot.slane %v4904, 5
      %v5061 = vrot.slane %v5060, 4
      %v5062 = vrot.slane %v4905, 5
      %v5063 = vsel %vm1620, %v5061, %v5062
      %v5064 = vrot.slane %v5062, 4
      %v5065 = vrot.slane %v4906, 5
      %v5066 = vsel %vm1620, %v5064, %v5065
      %5099 = vst [vmem:[#allocation3 + $0x8] sm:$0xf] %v4958
      %5100 = vst [vmem:[#allocation3 + $0x14] sm:$0xf] %v4961
      %5101 = vst [vmem:[#allocation3 + $0x20] sm:$0xf] %v4965
      %5102 = vst [vmem:[#allocation3 + $0x2c] sm:$0xf] %v4968
      %5103 = vst [vmem:[#allocation3 + $0x38] sm:$0xf] %v4972
      %5104 = vst [vmem:[#allocation3 + $0x44] sm:$0xf] %v4975
      %5105 = vst [vmem:[#allocation3 + $0x50] sm:$0xf] %v4979
      %5106 = vst [vmem:[#allocation3 + $0x5c] sm:$0xf] %v4982
      %5107 = vst [vmem:[#allocation3 + $0x68] sm:$0xf] %v4986
      %5108 = vst [vmem:[#allocation3 + $0x74] sm:$0xf] %v4989
      %5109 = vst [vmem:[#allocation3 + $0x80] sm:$0xf] %v4993
      %5110 = vst [vmem:[#allocation3 + $0x8c] sm:$0xf] %v4996
      %5111 = vst [vmem:[#allocation3 + $0x98] sm:$0xf] %v5000
      %5112 = vst [vmem:[#allocation3 + $0xa4] sm:$0xf] %v5003
      %5113 = vst [vmem:[#allocation3 + $0xb0] sm:$0xf] %v5007
      %5114 = vst [vmem:[#allocation3 + $0xbc] sm:$0xf] %v5010
      %5115 = vst [vmem:[#allocation3 + $0xc8] sm:$0xf] %v5014
      %5116 = vst [vmem:[#allocation3 + $0xd4] sm:$0xf] %v5017
      %5117 = vst [vmem:[#allocation3 + $0xe0] sm:$0xf] %v5021
      %5118 = vst [vmem:[#allocation3 + $0xec] sm:$0xf] %v5024
      %5119 = vst [vmem:[#allocation3 + $0xf8] sm:$0xf] %v5028
      %5120 = vst [vmem:[#allocation3 + $0x104] sm:$0xf] %v5031
      %5121 = vst [vmem:[#allocation3 + $0x110] sm:$0xf] %v5035
      %5122 = vst [vmem:[#allocation3 + $0x11c] sm:$0xf] %v5038
      %5123 = vst [vmem:[#allocation3 + $0x128] sm:$0xf] %v5042
      %5124 = vst [vmem:[#allocation3 + $0x134] sm:$0xf] %v5045
      %5125 = vst [vmem:[#allocation3 + $0x140] sm:$0xf] %v5049
      %5126 = vst [vmem:[#allocation3 + $0x14c] sm:$0xf] %v5052
      %5127 = vst [vmem:[#allocation3 + $0x158] sm:$0xf] %v5056
      %5128 = vst [vmem:[#allocation3 + $0x164] sm:$0xf] %v5059
      %5129 = vst [vmem:[#allocation3 + $0x170] sm:$0xf] %v5063
      %5130 = vst [vmem:[#allocation3 + $0x17c] sm:$0xf] %v5066
      %v5131 = vld [vmem:[#allocation3] sm:$0xff]
      %v5132 = vld [vmem:[#allocation3 + $0x8] sm:$0xf]
      %v5133 = vld [vmem:[#allocation3 + $0xc] sm:$0xff]
      %v5134 = vld [vmem:[#allocation3 + $0x14] sm:$0xf]
      %v5135 = vld [vmem:[#allocation3 + $0x18] sm:$0xff]
      %v5136 = vld [vmem:[#allocation3 + $0x20] sm:$0xf]
      %v5137 = vld [vmem:[#allocation3 + $0x24] sm:$0xff]
      %v5138 = vld [vmem:[#allocation3 + $0x2c] sm:$0xf]
      %v5139 = vld [vmem:[#allocation3 + $0x30] sm:$0xff]
      %v5140 = vld [vmem:[#allocation3 + $0x38] sm:$0xf]
      %v5141 = vld [vmem:[#allocation3 + $0x3c] sm:$0xff]
      %v5142 = vld [vmem:[#allocation3 + $0x44] sm:$0xf]
      %v5143 = vld [vmem:[#allocation3 + $0x48] sm:$0xff]
      %v5144 = vld [vmem:[#allocation3 + $0x50] sm:$0xf]
      %v5145 = vld [vmem:[#allocation3 + $0x54] sm:$0xff]
      %v5146 = vld [vmem:[#allocation3 + $0x5c] sm:$0xf]
      %v5147 = vld [vmem:[#allocation3 + $0x60] sm:$0xff]
      %v5148 = vld [vmem:[#allocation3 + $0x68] sm:$0xf]
      %v5149 = vld [vmem:[#allocation3 + $0x6c] sm:$0xff]
      %v5150 = vld [vmem:[#allocation3 + $0x74] sm:$0xf]
      %v5151 = vld [vmem:[#allocation3 + $0x78] sm:$0xff]
      %v5152 = vld [vmem:[#allocation3 + $0x80] sm:$0xf]
      %v5153 = vld [vmem:[#allocation3 + $0x84] sm:$0xff]
      %v5154 = vld [vmem:[#allocation3 + $0x8c] sm:$0xf]
      %v5155 = vld [vmem:[#allocation3 + $0x90] sm:$0xff]
      %v5156 = vld [vmem:[#allocation3 + $0x98] sm:$0xf]
      %v5157 = vld [vmem:[#allocation3 + $0x9c] sm:$0xff]
      %v5158 = vld [vmem:[#allocation3 + $0xa4] sm:$0xf]
      %v5159 = vld [vmem:[#allocation3 + $0xa8] sm:$0xff]
      %v5160 = vld [vmem:[#allocation3 + $0xb0] sm:$0xf]
      %v5161 = vld [vmem:[#allocation3 + $0xb4] sm:$0xff]
      %v5162 = vld [vmem:[#allocation3 + $0xbc] sm:$0xf]
      %v5163 = vld [vmem:[#allocation3 + $0xc0] sm:$0xff]
      %v5164 = vld [vmem:[#allocation3 + $0xc8] sm:$0xf]
      %v5165 = vld [vmem:[#allocation3 + $0xcc] sm:$0xff]
      %v5166 = vld [vmem:[#allocation3 + $0xd4] sm:$0xf]
      %v5167 = vld [vmem:[#allocation3 + $0xd8] sm:$0xff]
      %v5168 = vld [vmem:[#allocation3 + $0xe0] sm:$0xf]
      %v5169 = vld [vmem:[#allocation3 + $0xe4] sm:$0xff]
      %v5170 = vld [vmem:[#allocation3 + $0xec] sm:$0xf]
      %v5171 = vld [vmem:[#allocation3 + $0xf0] sm:$0xff]
      %v5172 = vld [vmem:[#allocation3 + $0xf8] sm:$0xf]
      %v5173 = vld [vmem:[#allocation3 + $0xfc] sm:$0xff]
      %v5174 = vld [vmem:[#allocation3 + $0x104] sm:$0xf]
      %v5175 = vld [vmem:[#allocation3 + $0x108] sm:$0xff]
      %v5176 = vld [vmem:[#allocation3 + $0x110] sm:$0xf]
      %v5177 = vld [vmem:[#allocation3 + $0x114] sm:$0xff]
      %v5178 = vld [vmem:[#allocation3 + $0x11c] sm:$0xf]
      %v5179 = vld [vmem:[#allocation3 + $0x120] sm:$0xff]
      %v5180 = vld [vmem:[#allocation3 + $0x128] sm:$0xf]
      %v5181 = vld [vmem:[#allocation3 + $0x12c] sm:$0xff]
      %v5182 = vld [vmem:[#allocation3 + $0x134] sm:$0xf]
      %v5183 = vld [vmem:[#allocation3 + $0x138] sm:$0xff]
      %v5184 = vld [vmem:[#allocation3 + $0x140] sm:$0xf]
      %v5185 = vld [vmem:[#allocation3 + $0x144] sm:$0xff]
      %v5186 = vld [vmem:[#allocation3 + $0x14c] sm:$0xf]
      %v5187 = vld [vmem:[#allocation3 + $0x150] sm:$0xff]
      %v5188 = vld [vmem:[#allocation3 + $0x158] sm:$0xf]
      %v5189 = vld [vmem:[#allocation3 + $0x15c] sm:$0xff]
      %v5190 = vld [vmem:[#allocation3 + $0x164] sm:$0xf]
      %v5191 = vld [vmem:[#allocation3 + $0x168] sm:$0xff]
      %v5192 = vld [vmem:[#allocation3 + $0x170] sm:$0xf]
      %v5193 = vld [vmem:[#allocation3 + $0x174] sm:$0xff]
      %v5194 = vld [vmem:[#allocation3 + $0x17c] sm:$0xf]
      %s5195 = scalar_lea.vmem %s4, 384
      %v5196 = vld [vmem:[%s5195] sm:$0xf]
      %v5197 = vld [vmem:[%s5195 + $0x4] sm:$0xf]
      %v5198 = vld [vmem:[%s5195 + $0x8] sm:$0xf]
      %v5199 = vld [vmem:[%s5195 + $0xc] sm:$0xf]
      %v5200 = vld [vmem:[%s5195 + $0x10] sm:$0xf]
      %v5201 = vld [vmem:[%s5195 + $0x14] sm:$0xf]
      %v5202 = vld [vmem:[%s5195 + $0x18] sm:$0xf]
      %v5203 = vld [vmem:[%s5195 + $0x1c] sm:$0xf]
      %v5204 = vld [vmem:[%s5195 + $0x20] sm:$0xf]
      %v5205 = vld [vmem:[%s5195 + $0x24] sm:$0xf]
      %v5206 = vld [vmem:[%s5195 + $0x28] sm:$0xf]
      %v5207 = vld [vmem:[%s5195 + $0x2c] sm:$0xf]
      %v5208 = vld [vmem:[%s5195 + $0x30] sm:$0xf]
      %v5209 = vld [vmem:[%s5195 + $0x34] sm:$0xf]
      %v5210 = vld [vmem:[%s5195 + $0x38] sm:$0xf]
      %v5211 = vld [vmem:[%s5195 + $0x3c] sm:$0xf]
      %v5212 = vld [vmem:[%s5195 + $0x40] sm:$0xf]
      %v5213 = vld [vmem:[%s5195 + $0x44] sm:$0xf]
      %v5214 = vld [vmem:[%s5195 + $0x48] sm:$0xf]
      %v5215 = vld [vmem:[%s5195 + $0x4c] sm:$0xf]
      %v5216 = vld [vmem:[%s5195 + $0x50] sm:$0xf]
      %v5217 = vld [vmem:[%s5195 + $0x54] sm:$0xf]
      %v5218 = vld [vmem:[%s5195 + $0x58] sm:$0xf]
      %v5219 = vld [vmem:[%s5195 + $0x5c] sm:$0xf]
      %v5220 = vld [vmem:[%s5195 + $0x60] sm:$0xf]
      %v5221 = vld [vmem:[%s5195 + $0x64] sm:$0xf]
      %v5222 = vld [vmem:[%s5195 + $0x68] sm:$0xf]
      %v5223 = vld [vmem:[%s5195 + $0x6c] sm:$0xf]
      %v5224 = vld [vmem:[%s5195 + $0x70] sm:$0xf]
      %v5225 = vld [vmem:[%s5195 + $0x74] sm:$0xf]
      %v5226 = vld [vmem:[%s5195 + $0x78] sm:$0xf]
      %v5227 = vld [vmem:[%s5195 + $0x7c] sm:$0xf]
      %v5228 = vld [vmem:[%s5195 + $0x80] sm:$0xf]
      %v5229 = vld [vmem:[%s5195 + $0x84] sm:$0xf]
      %v5230 = vld [vmem:[%s5195 + $0x88] sm:$0xf]
      %v5231 = vld [vmem:[%s5195 + $0x8c] sm:$0xf]
      %v5232 = vld [vmem:[%s5195 + $0x90] sm:$0xf]
      %v5233 = vld [vmem:[%s5195 + $0x94] sm:$0xf]
      %v5234 = vld [vmem:[%s5195 + $0x98] sm:$0xf]
      %v5235 = vld [vmem:[%s5195 + $0x9c] sm:$0xf]
      %v5236 = vld [vmem:[%s5195 + $0xa0] sm:$0xf]
      %v5237 = vld [vmem:[%s5195 + $0xa4] sm:$0xf]
      %v5238 = vld [vmem:[%s5195 + $0xa8] sm:$0xf]
      %v5239 = vld [vmem:[%s5195 + $0xac] sm:$0xf]
      %v5240 = vld [vmem:[%s5195 + $0xb0] sm:$0xf]
      %v5241 = vld [vmem:[%s5195 + $0xb4] sm:$0xf]
      %v5242 = vld [vmem:[%s5195 + $0xb8] sm:$0xf]
      %v5243 = vld [vmem:[%s5195 + $0xbc] sm:$0xf]
      %v5308 = vunpack.c.l.b16 %v5131
      %v5309 = vunpack.c.h.b16 %v5131
      %v5310 = vunpack.c.l.b16 %v5132
      %v5311 = vunpack.c.l.b16 %v5133
      %v5312 = vunpack.c.h.b16 %v5133
      %v5313 = vunpack.c.l.b16 %v5134
      %v5314 = vunpack.c.l.b16 %v5135
      %v5315 = vunpack.c.h.b16 %v5135
      %v5316 = vunpack.c.l.b16 %v5136
      %v5317 = vunpack.c.l.b16 %v5137
      %v5318 = vunpack.c.h.b16 %v5137
      %v5319 = vunpack.c.l.b16 %v5138
      %v5320 = vunpack.c.l.b16 %v5139
      %v5321 = vunpack.c.h.b16 %v5139
      %v5322 = vunpack.c.l.b16 %v5140
      %v5323 = vunpack.c.l.b16 %v5141
      %v5324 = vunpack.c.h.b16 %v5141
      %v5325 = vunpack.c.l.b16 %v5142
      %v5326 = vunpack.c.l.b16 %v5143
      %v5327 = vunpack.c.h.b16 %v5143
      %v5328 = vunpack.c.l.b16 %v5144
      %v5329 = vunpack.c.l.b16 %v5145
      %v5330 = vunpack.c.h.b16 %v5145
      %v5331 = vunpack.c.l.b16 %v5146
      %v5332 = vunpack.c.l.b16 %v5147
      %v5333 = vunpack.c.h.b16 %v5147
      %v5334 = vunpack.c.l.b16 %v5148
      %v5335 = vunpack.c.l.b16 %v5149
      %v5336 = vunpack.c.h.b16 %v5149
      %v5337 = vunpack.c.l.b16 %v5150
      %v5338 = vunpack.c.l.b16 %v5151
      %v5339 = vunpack.c.h.b16 %v5151
      %v5340 = vunpack.c.l.b16 %v5152
      %v5341 = vunpack.c.l.b16 %v5153
      %v5342 = vunpack.c.h.b16 %v5153
      %v5343 = vunpack.c.l.b16 %v5154
      %v5344 = vunpack.c.l.b16 %v5155
      %v5345 = vunpack.c.h.b16 %v5155
      %v5346 = vunpack.c.l.b16 %v5156
      %v5347 = vunpack.c.l.b16 %v5157
      %v5348 = vunpack.c.h.b16 %v5157
      %v5349 = vunpack.c.l.b16 %v5158
      %v5350 = vunpack.c.l.b16 %v5159
      %v5351 = vunpack.c.h.b16 %v5159
      %v5352 = vunpack.c.l.b16 %v5160
      %v5353 = vunpack.c.l.b16 %v5161
      %v5354 = vunpack.c.h.b16 %v5161
      %v5355 = vunpack.c.l.b16 %v5162
      %v5356 = vunpack.c.l.b16 %v5163
      %v5357 = vunpack.c.h.b16 %v5163
      %v5358 = vunpack.c.l.b16 %v5164
      %v5359 = vunpack.c.l.b16 %v5165
      %v5360 = vunpack.c.h.b16 %v5165
      %v5361 = vunpack.c.l.b16 %v5166
      %v5362 = vunpack.c.l.b16 %v5167
      %v5363 = vunpack.c.h.b16 %v5167
      %v5364 = vunpack.c.l.b16 %v5168
      %v5365 = vunpack.c.l.b16 %v5169
      %v5366 = vunpack.c.h.b16 %v5169
      %v5367 = vunpack.c.l.b16 %v5170
      %v5368 = vunpack.c.l.b16 %v5171
      %v5369 = vunpack.c.h.b16 %v5171
      %v5370 = vunpack.c.l.b16 %v5172
      %v5371 = vunpack.c.l.b16 %v5173
      %v5372 = vunpack.c.h.b16 %v5173
      %v5373 = vunpack.c.l.b16 %v5174
      %v5374 = vunpack.c.l.b16 %v5175
      %v5375 = vunpack.c.h.b16 %v5175
      %v5376 = vunpack.c.l.b16 %v5176
      %v5377 = vunpack.c.l.b16 %v5177
      %v5378 = vunpack.c.h.b16 %v5177
      %v5379 = vunpack.c.l.b16 %v5178
      %v5380 = vunpack.c.l.b16 %v5179
      %v5381 = vunpack.c.h.b16 %v5179
      %v5382 = vunpack.c.l.b16 %v5180
      %v5383 = vunpack.c.l.b16 %v5181
      %v5384 = vunpack.c.h.b16 %v5181
      %v5385 = vunpack.c.l.b16 %v5182
      %v5386 = vunpack.c.l.b16 %v5183
      %v5387 = vunpack.c.h.b16 %v5183
      %v5388 = vunpack.c.l.b16 %v5184
      %v5389 = vunpack.c.l.b16 %v5185
      %v5390 = vunpack.c.h.b16 %v5185
      %v5391 = vunpack.c.l.b16 %v5186
      %v5392 = vunpack.c.l.b16 %v5187
      %v5393 = vunpack.c.h.b16 %v5187
      %v5394 = vunpack.c.l.b16 %v5188
      %v5395 = vunpack.c.l.b16 %v5189
      %v5396 = vunpack.c.h.b16 %v5189
      %v5397 = vunpack.c.l.b16 %v5190
      %v5398 = vunpack.c.l.b16 %v5191
      %v5399 = vunpack.c.h.b16 %v5191
      %v5400 = vunpack.c.l.b16 %v5192
      %v5401 = vunpack.c.l.b16 %v5193
      %v5402 = vunpack.c.h.b16 %v5193
      %v5403 = vunpack.c.l.b16 %v5194
      %v5404 = vpack.c.b16 %v5311, %v5308
      %v5405 = vpack.c.b16 %v5312, %v5309
      %v5406 = vpack.c.b16 %v5313, %v5310
      %v5407 = vpack.c.b16 %v5317, %v5314
      %v5408 = vpack.c.b16 %v5318, %v5315
      %v5409 = vpack.c.b16 %v5319, %v5316
      %v5410 = vpack.c.b16 %v5323, %v5320
      %v5411 = vpack.c.b16 %v5324, %v5321
      %v5412 = vpack.c.b16 %v5325, %v5322
      %v5413 = vpack.c.b16 %v5329, %v5326
      %v5414 = vpack.c.b16 %v5330, %v5327
      %v5415 = vpack.c.b16 %v5331, %v5328
      %v5416 = vpack.c.b16 %v5335, %v5332
      %v5417 = vpack.c.b16 %v5336, %v5333
      %v5418 = vpack.c.b16 %v5337, %v5334
      %v5419 = vpack.c.b16 %v5341, %v5338
      %v5420 = vpack.c.b16 %v5342, %v5339
      %v5421 = vpack.c.b16 %v5343, %v5340
      %v5422 = vpack.c.b16 %v5347, %v5344
      %v5423 = vpack.c.b16 %v5348, %v5345
      %v5424 = vpack.c.b16 %v5349, %v5346
      %v5425 = vpack.c.b16 %v5353, %v5350
      %v5426 = vpack.c.b16 %v5354, %v5351
      %v5427 = vpack.c.b16 %v5355, %v5352
      %v5428 = vpack.c.b16 %v5359, %v5356
      %v5429 = vpack.c.b16 %v5360, %v5357
      %v5430 = vpack.c.b16 %v5361, %v5358
      %v5431 = vpack.c.b16 %v5365, %v5362
      %v5432 = vpack.c.b16 %v5366, %v5363
      %v5433 = vpack.c.b16 %v5367, %v5364
      %v5434 = vpack.c.b16 %v5371, %v5368
      %v5435 = vpack.c.b16 %v5372, %v5369
      %v5436 = vpack.c.b16 %v5373, %v5370
      %v5437 = vpack.c.b16 %v5377, %v5374
      %v5438 = vpack.c.b16 %v5378, %v5375
      %v5439 = vpack.c.b16 %v5379, %v5376
      %v5440 = vpack.c.b16 %v5383, %v5380
      %v5441 = vpack.c.b16 %v5384, %v5381
      %v5442 = vpack.c.b16 %v5385, %v5382
      %v5443 = vpack.c.b16 %v5389, %v5386
      %v5444 = vpack.c.b16 %v5390, %v5387
      %v5445 = vpack.c.b16 %v5391, %v5388
      %v5446 = vpack.c.b16 %v5395, %v5392
      %v5447 = vpack.c.b16 %v5396, %v5393
      %v5448 = vpack.c.b16 %v5397, %v5394
      %v5449 = vpack.c.b16 %v5401, %v5398
      %v5450 = vpack.c.b16 %v5402, %v5399
      %v5451 = vpack.c.b16 %v5403, %v5400
      %v5548 = vunpack.c.l.b16 %v5196
      %v5549 = vunpack.c.l.b16 %v5197
      %v5550 = vunpack.c.l.b16 %v5198
      %v5551 = vunpack.c.l.b16 %v5199
      %v5552 = vunpack.c.l.b16 %v5200
      %v5553 = vunpack.c.l.b16 %v5201
      %v5554 = vunpack.c.l.b16 %v5202
      %v5555 = vunpack.c.l.b16 %v5203
      %v5556 = vunpack.c.l.b16 %v5204
      %v5557 = vunpack.c.l.b16 %v5205
      %v5558 = vunpack.c.l.b16 %v5206
      %v5559 = vunpack.c.l.b16 %v5207
      %v5560 = vunpack.c.l.b16 %v5208
      %v5561 = vunpack.c.l.b16 %v5209
      %v5562 = vunpack.c.l.b16 %v5210
      %v5563 = vunpack.c.l.b16 %v5211
      %v5564 = vunpack.c.l.b16 %v5212
      %v5565 = vunpack.c.l.b16 %v5213
      %v5566 = vunpack.c.l.b16 %v5214
      %v5567 = vunpack.c.l.b16 %v5215
      %v5568 = vunpack.c.l.b16 %v5216
      %v5569 = vunpack.c.l.b16 %v5217
      %v5570 = vunpack.c.l.b16 %v5218
      %v5571 = vunpack.c.l.b16 %v5219
      %v5572 = vunpack.c.l.b16 %v5220
      %v5573 = vunpack.c.l.b16 %v5221
      %v5574 = vunpack.c.l.b16 %v5222
      %v5575 = vunpack.c.l.b16 %v5223
      %v5576 = vunpack.c.l.b16 %v5224
      %v5577 = vunpack.c.l.b16 %v5225
      %v5578 = vunpack.c.l.b16 %v5226
      %v5579 = vunpack.c.l.b16 %v5227
      %v5580 = vunpack.c.l.b16 %v5228
      %v5581 = vunpack.c.l.b16 %v5229
      %v5582 = vunpack.c.l.b16 %v5230
      %v5583 = vunpack.c.l.b16 %v5231
      %v5584 = vunpack.c.l.b16 %v5232
      %v5585 = vunpack.c.l.b16 %v5233
      %v5586 = vunpack.c.l.b16 %v5234
      %v5587 = vunpack.c.l.b16 %v5235
      %v5588 = vunpack.c.l.b16 %v5236
      %v5589 = vunpack.c.l.b16 %v5237
      %v5590 = vunpack.c.l.b16 %v5238
      %v5591 = vunpack.c.l.b16 %v5239
      %v5592 = vunpack.c.l.b16 %v5240
      %v5593 = vunpack.c.l.b16 %v5241
      %v5594 = vunpack.c.l.b16 %v5242
      %v5595 = vunpack.c.l.b16 %v5243
      %v5596 = vpack.c.b16 %v5549, %v5548
      %v5597 = vpack.c.b16 %v5551, %v5550
      %v5598 = vpack.c.b16 %v5553, %v5552
      %v5599 = vpack.c.b16 %v5555, %v5554
      %v5600 = vpack.c.b16 %v5557, %v5556
      %v5601 = vpack.c.b16 %v5559, %v5558
      %v5602 = vpack.c.b16 %v5561, %v5560
      %v5603 = vpack.c.b16 %v5563, %v5562
      %v5604 = vpack.c.b16 %v5565, %v5564
      %v5605 = vpack.c.b16 %v5567, %v5566
      %v5606 = vpack.c.b16 %v5569, %v5568
      %v5607 = vpack.c.b16 %v5571, %v5570
      %v5608 = vpack.c.b16 %v5573, %v5572
      %v5609 = vpack.c.b16 %v5575, %v5574
      %v5610 = vpack.c.b16 %v5577, %v5576
      %v5611 = vpack.c.b16 %v5579, %v5578
      %v5612 = vpack.c.b16 %v5581, %v5580
      %v5613 = vpack.c.b16 %v5583, %v5582
      %v5614 = vpack.c.b16 %v5585, %v5584
      %v5615 = vpack.c.b16 %v5587, %v5586
      %v5616 = vpack.c.b16 %v5589, %v5588
      %v5617 = vpack.c.b16 %v5591, %v5590
      %v5618 = vpack.c.b16 %v5593, %v5592
      %v5619 = vpack.c.b16 %v5595, %v5594
      %5644 = vmatprep.subr.bf16.mxu0 0
      %5645 = vmatpush1.bf16.msra.mxu0 %v5603
      %5646 = vmatprep.subr.bf16.mxu0 0
      %5647 = vmatpush1.bf16.msra.mxu0 %v5602
      %5648 = vmatprep.subr.bf16.mxu0 0
      %5649 = vmatpush1.bf16.msra.mxu0 %v5601
      %5650 = vmatprep.subr.bf16.mxu0 0
      %5651 = vmatpush1.bf16.msra.mxu0 %v5600
      %5652 = vmatprep.subr.bf16.mxu0 0
      %5653 = vmatpush1.bf16.msra.mxu0 %v5599
      %5654 = vmatprep.subr.bf16.mxu0 0
      %5655 = vmatpush1.bf16.msra.mxu0 %v5598
      %5656 = vmatprep.subr.bf16.mxu0 0
      %5657 = vmatpush1.bf16.msra.mxu0 %v5597
      %5658 = vmatprep.subr.bf16.mxu0 0
      %5659 = vmatpush1.bf16.msra.mxu0 %v5596
      %5660 = vmatprep.subr.bf16.mxu0 0
      %5661 = vmatpush2.bf16.msra.mxu0 %v5611
      %5662 = vmatprep.subr.bf16.mxu0 0
      %5663 = vmatpush2.bf16.msra.mxu0 %v5610
      %5664 = vmatprep.subr.bf16.mxu0 0
      %5665 = vmatpush2.bf16.msra.mxu0 %v5609
      %5666 = vmatprep.subr.bf16.mxu0 0
      %5667 = vmatpush2.bf16.msra.mxu0 %v5608
      %5668 = vmatprep.subr.bf16.mxu0 0
      %5669 = vmatpush2.bf16.msra.mxu0 %v5607
      %5670 = vmatprep.subr.bf16.mxu0 0
      %5671 = vmatpush2.bf16.msra.mxu0 %v5606
      %5672 = vmatprep.subr.bf16.mxu0 0
      %5673 = vmatpush2.bf16.msra.mxu0 %v5605
      %5674 = vmatprep.subr.bf16.mxu0 0
      %5675 = vmatpush2.bf16.msra.mxu0 %v5604
      %5676 = vmatprep.mubr.bf16.mxu0 %v5405
      %5677 = vmatmul.mubr.bf16.gmra.mxu0 %v5404
      %v5678 = vpop.f32.mrf.mxu0
      %v5679 = vadd.f32 0.0, %v5678
      %v5680 = vpop.f32.mrf.mxu0
      %v5681 = vpop.f32.mrf.mxu0
      %v5682 = vadd.f32 0.0, %v5681
      %v5683 = vpop.f32.mrf.mxu0
      %5684 = vmatprep.mubr.bf16.mxu0 %v5408
      %5685 = vmatmul.mubr.bf16.gmra.mxu0 %v5407
      %v5686 = vpop.f32.mrf.mxu0
      %v5687 = vadd.f32 0.0, %v5686
      %v5688 = vpop.f32.mrf.mxu0
      %v5689 = vpop.f32.mrf.mxu0
      %v5690 = vadd.f32 0.0, %v5689
      %v5691 = vpop.f32.mrf.mxu0
      %5692 = vmatprep.mubr.bf16.mxu0 %v5411
      %5693 = vmatmul.mubr.bf16.gmra.mxu0 %v5410
      %v5694 = vpop.f32.mrf.mxu0
      %v5695 = vadd.f32 0.0, %v5694
      %v5696 = vpop.f32.mrf.mxu0
      %v5697 = vpop.f32.mrf.mxu0
      %v5698 = vadd.f32 0.0, %v5697
      %v5699 = vpop.f32.mrf.mxu0
      %5700 = vmatprep.mubr.bf16.mxu0 %v5414
      %5701 = vmatmul.mubr.bf16.gmra.mxu0 %v5413
      %v5702 = vpop.f32.mrf.mxu0
      %v5703 = vadd.f32 0.0, %v5702
      %v5704 = vpop.f32.mrf.mxu0
      %v5705 = vpop.f32.mrf.mxu0
      %v5706 = vadd.f32 0.0, %v5705
      %v5707 = vpop.f32.mrf.mxu0
      %5708 = vmatprep.mubr.bf16.mxu0 %v5417
      %5709 = vmatmul.mubr.bf16.gmra.mxu0 %v5416
      %v5710 = vpop.f32.mrf.mxu0
      %v5711 = vadd.f32 0.0, %v5710
      %v5712 = vpop.f32.mrf.mxu0
      %v5713 = vpop.f32.mrf.mxu0
      %v5714 = vadd.f32 0.0, %v5713
      %v5715 = vpop.f32.mrf.mxu0
      %5716 = vmatprep.mubr.bf16.mxu0 %v5420
      %5717 = vmatmul.mubr.bf16.gmra.mxu0 %v5419
      %v5718 = vpop.f32.mrf.mxu0
      %v5719 = vadd.f32 0.0, %v5718
      %v5720 = vpop.f32.mrf.mxu0
      %v5721 = vpop.f32.mrf.mxu0
      %v5722 = vadd.f32 0.0, %v5721
      %v5723 = vpop.f32.mrf.mxu0
      %5724 = vmatprep.mubr.bf16.mxu0 %v5423
      %5725 = vmatmul.mubr.bf16.gmra.mxu0 %v5422
      %v5726 = vpop.f32.mrf.mxu0
      %v5727 = vadd.f32 0.0, %v5726
      %v5728 = vpop.f32.mrf.mxu0
      %v5729 = vpop.f32.mrf.mxu0
      %v5730 = vadd.f32 0.0, %v5729
      %v5731 = vpop.f32.mrf.mxu0
      %5732 = vmatprep.mubr.bf16.mxu0 %v5426
      %5733 = vmatmul.mubr.bf16.gmra.mxu0 %v5425
      %v5734 = vpop.f32.mrf.mxu0
      %v5735 = vadd.f32 0.0, %v5734
      %v5736 = vpop.f32.mrf.mxu0
      %v5737 = vpop.f32.mrf.mxu0
      %v5738 = vadd.f32 0.0, %v5737
      %v5739 = vpop.f32.mrf.mxu0
      %5740 = vmatprep.mubr.bf16.mxu0 %v5429
      %5741 = vmatmul.mubr.bf16.gmra.mxu0 %v5428
      %v5742 = vpop.f32.mrf.mxu0
      %v5743 = vadd.f32 0.0, %v5742
      %v5744 = vpop.f32.mrf.mxu0
      %v5745 = vpop.f32.mrf.mxu0
      %v5746 = vadd.f32 0.0, %v5745
      %v5747 = vpop.f32.mrf.mxu0
      %5748 = vmatprep.mubr.bf16.mxu0 %v5432
      %5749 = vmatmul.mubr.bf16.gmra.mxu0 %v5431
      %v5750 = vpop.f32.mrf.mxu0
      %v5751 = vadd.f32 0.0, %v5750
      %v5752 = vpop.f32.mrf.mxu0
      %v5753 = vpop.f32.mrf.mxu0
      %v5754 = vadd.f32 0.0, %v5753
      %v5755 = vpop.f32.mrf.mxu0
      %5756 = vmatprep.mubr.bf16.mxu0 %v5435
      %5757 = vmatmul.mubr.bf16.gmra.mxu0 %v5434
      %v5758 = vpop.f32.mrf.mxu0
      %v5759 = vadd.f32 0.0, %v5758
      %v5760 = vpop.f32.mrf.mxu0
      %v5761 = vpop.f32.mrf.mxu0
      %v5762 = vadd.f32 0.0, %v5761
      %v5763 = vpop.f32.mrf.mxu0
      %5764 = vmatprep.mubr.bf16.mxu0 %v5438
      %5765 = vmatmul.mubr.bf16.gmra.mxu0 %v5437
      %v5766 = vpop.f32.mrf.mxu0
      %v5767 = vadd.f32 0.0, %v5766
      %v5768 = vpop.f32.mrf.mxu0
      %v5769 = vpop.f32.mrf.mxu0
      %v5770 = vadd.f32 0.0, %v5769
      %v5771 = vpop.f32.mrf.mxu0
      %5772 = vmatprep.mubr.bf16.mxu0 %v5441
      %5773 = vmatmul.mubr.bf16.gmra.mxu0 %v5440
      %v5774 = vpop.f32.mrf.mxu0
      %v5775 = vadd.f32 0.0, %v5774
      %v5776 = vpop.f32.mrf.mxu0
      %v5777 = vpop.f32.mrf.mxu0
      %v5778 = vadd.f32 0.0, %v5777
      %v5779 = vpop.f32.mrf.mxu0
      %5780 = vmatprep.mubr.bf16.mxu0 %v5444
      %5781 = vmatmul.mubr.bf16.gmra.mxu0 %v5443
      %v5782 = vpop.f32.mrf.mxu0
      %v5783 = vadd.f32 0.0, %v5782
      %v5784 = vpop.f32.mrf.mxu0
      %v5785 = vpop.f32.mrf.mxu0
      %v5786 = vadd.f32 0.0, %v5785
      %v5787 = vpop.f32.mrf.mxu0
      %5788 = vmatprep.mubr.bf16.mxu0 %v5447
      %5789 = vmatmul.mubr.bf16.gmra.mxu0 %v5446
      %v5790 = vpop.f32.mrf.mxu0
      %v5791 = vadd.f32 0.0, %v5790
      %v5792 = vpop.f32.mrf.mxu0
      %v5793 = vpop.f32.mrf.mxu0
      %v5794 = vadd.f32 0.0, %v5793
      %v5795 = vpop.f32.mrf.mxu0
      %5796 = vmatprep.mubr.bf16.mxu0 %v5450
      %5797 = vmatmul.mubr.bf16.gmra.mxu0 %v5449
      %v5798 = vpop.f32.mrf.mxu0
      %v5799 = vadd.f32 0.0, %v5798
      %v5800 = vpop.f32.mrf.mxu0
      %v5801 = vpop.f32.mrf.mxu0
      %v5802 = vadd.f32 0.0, %v5801
      %v5803 = vpop.f32.mrf.mxu0
      %5804 = vdwg.mxu0
      %5805 = vmatprep.subr.bf16.mxu0 0
      %5806 = vmatpush1.bf16.msra.mxu0 %v5619
      %5807 = vmatprep.subr.bf16.mxu0 0
      %5808 = vmatpush1.bf16.msra.mxu0 %v5618
      %5809 = vmatprep.subr.bf16.mxu0 0
      %5810 = vmatpush1.bf16.msra.mxu0 %v5617
      %5811 = vmatprep.subr.bf16.mxu0 0
      %5812 = vmatpush1.bf16.msra.mxu0 %v5616
      %5813 = vmatprep.subr.bf16.mxu0 0
      %5814 = vmatpush1.bf16.msra.mxu0 %v5615
      %5815 = vmatprep.subr.bf16.mxu0 0
      %5816 = vmatpush1.bf16.msra.mxu0 %v5614
      %5817 = vmatprep.subr.bf16.mxu0 0
      %5818 = vmatpush1.bf16.msra.mxu0 %v5613
      %5819 = vmatprep.subr.bf16.mxu0 0
      %5820 = vmatpush1.bf16.msra.mxu0 %v5612
      %5821 = vmatprep.subr.bf16.mxu0 0
      %5822 = vmatpush2.bf16.msra.mxu0 0
      %5823 = vmatprep.subr.bf16.mxu0 0
      %5824 = vmatpush2.bf16.msra.mxu0 0
      %5825 = vmatprep.subr.bf16.mxu0 0
      %5826 = vmatpush2.bf16.msra.mxu0 0
      %5827 = vmatprep.subr.bf16.mxu0 0
      %5828 = vmatpush2.bf16.msra.mxu0 0
      %5829 = vmatprep.subr.bf16.mxu0 0
      %5830 = vmatpush2.bf16.msra.mxu0 0
      %5831 = vmatprep.subr.bf16.mxu0 0
      %5832 = vmatpush2.bf16.msra.mxu0 0
      %5833 = vmatprep.subr.bf16.mxu0 0
      %5834 = vmatpush2.bf16.msra.mxu0 0
      %5835 = vmatprep.subr.bf16.mxu0 0
      %5836 = vmatpush2.bf16.msra.mxu0 0
      %5837 = vmatprep.mubr.bf16.mxu0 0
      %5838 = vmatmul.mubr.bf16.gmra.mxu0 %v5406
      %v5839 = vpop.f32.mrf.mxu0
      %v5840 = vadd.f32 %v5679, %v5839
      %v5841 = vpop.f32.mrf.mxu0
      %v5842 = vpop.f32.mrf.mxu0
      %v5843 = vadd.f32 %v5682, %v5842
      %v5844 = vpop.f32.mrf.mxu0
      %5845 = vmatprep.mubr.bf16.mxu0 0
      %5846 = vmatmul.mubr.bf16.gmra.mxu0 %v5409
      %v5847 = vpop.f32.mrf.mxu0
      %v5848 = vadd.f32 %v5687, %v5847
      %v5849 = vpop.f32.mrf.mxu0
      %v5850 = vpop.f32.mrf.mxu0
      %v5851 = vadd.f32 %v5690, %v5850
      %v5852 = vpop.f32.mrf.mxu0
      %5853 = vmatprep.mubr.bf16.mxu0 0
      %5854 = vmatmul.mubr.bf16.gmra.mxu0 %v5412
      %v5855 = vpop.f32.mrf.mxu0
      %v5856 = vadd.f32 %v5695, %v5855
      %v5857 = vpop.f32.mrf.mxu0
      %v5858 = vpop.f32.mrf.mxu0
      %v5859 = vadd.f32 %v5698, %v5858
      %v5860 = vpop.f32.mrf.mxu0
      %5861 = vmatprep.mubr.bf16.mxu0 0
      %5862 = vmatmul.mubr.bf16.gmra.mxu0 %v5415
      %v5863 = vpop.f32.mrf.mxu0
      %v5864 = vadd.f32 %v5703, %v5863
      %v5865 = vpop.f32.mrf.mxu0
      %v5866 = vpop.f32.mrf.mxu0
      %v5867 = vadd.f32 %v5706, %v5866
      %v5868 = vpop.f32.mrf.mxu0
      %5869 = vmatprep.mubr.bf16.mxu0 0
      %5870 = vmatmul.mubr.bf16.gmra.mxu0 %v5418
      %v5871 = vpop.f32.mrf.mxu0
      %v5872 = vadd.f32 %v5711, %v5871
      %v5873 = vpop.f32.mrf.mxu0
      %v5874 = vpop.f32.mrf.mxu0
      %v5875 = vadd.f32 %v5714, %v5874
      %v5876 = vpop.f32.mrf.mxu0
      %5877 = vmatprep.mubr.bf16.mxu0 0
      %5878 = vmatmul.mubr.bf16.gmra.mxu0 %v5421
      %v5879 = vpop.f32.mrf.mxu0
      %v5880 = vadd.f32 %v5719, %v5879
      %v5881 = vpop.f32.mrf.mxu0
      %v5882 = vpop.f32.mrf.mxu0
      %v5883 = vadd.f32 %v5722, %v5882
      %v5884 = vpop.f32.mrf.mxu0
      %5885 = vmatprep.mubr.bf16.mxu0 0
      %5886 = vmatmul.mubr.bf16.gmra.mxu0 %v5424
      %v5887 = vpop.f32.mrf.mxu0
      %v5888 = vadd.f32 %v5727, %v5887
      %v5889 = vpop.f32.mrf.mxu0
      %v5890 = vpop.f32.mrf.mxu0
      %v5891 = vadd.f32 %v5730, %v5890
      %v5892 = vpop.f32.mrf.mxu0
      %5893 = vmatprep.mubr.bf16.mxu0 0
      %5894 = vmatmul.mubr.bf16.gmra.mxu0 %v5427
      %v5895 = vpop.f32.mrf.mxu0
      %v5896 = vadd.f32 %v5735, %v5895
      %v5897 = vpop.f32.mrf.mxu0
      %v5898 = vpop.f32.mrf.mxu0
      %v5899 = vadd.f32 %v5738, %v5898
      %v5900 = vpop.f32.mrf.mxu0
      %5901 = vmatprep.mubr.bf16.mxu0 0
      %5902 = vmatmul.mubr.bf16.gmra.mxu0 %v5430
      %v5903 = vpop.f32.mrf.mxu0
      %v5904 = vadd.f32 %v5743, %v5903
      %v5905 = vpop.f32.mrf.mxu0
      %v5906 = vpop.f32.mrf.mxu0
      %v5907 = vadd.f32 %v5746, %v5906
      %v5908 = vpop.f32.mrf.mxu0
      %5909 = vmatprep.mubr.bf16.mxu0 0
      %5910 = vmatmul.mubr.bf16.gmra.mxu0 %v5433
      %v5911 = vpop.f32.mrf.mxu0
      %v5912 = vadd.f32 %v5751, %v5911
      %v5913 = vpop.f32.mrf.mxu0
      %v5914 = vpop.f32.mrf.mxu0
      %v5915 = vadd.f32 %v5754, %v5914
      %v5916 = vpop.f32.mrf.mxu0
      %5917 = vmatprep.mubr.bf16.mxu0 0
      %5918 = vmatmul.mubr.bf16.gmra.mxu0 %v5436
      %v5919 = vpop.f32.mrf.mxu0
      %v5920 = vadd.f32 %v5759, %v5919
      %v5921 = vpop.f32.mrf.mxu0
      %v5922 = vpop.f32.mrf.mxu0
      %v5923 = vadd.f32 %v5762, %v5922
      %v5924 = vpop.f32.mrf.mxu0
      %5925 = vmatprep.mubr.bf16.mxu0 0
      %5926 = vmatmul.mubr.bf16.gmra.mxu0 %v5439
      %v5927 = vpop.f32.mrf.mxu0
      %v5928 = vadd.f32 %v5767, %v5927
      %v5929 = vpop.f32.mrf.mxu0
      %v5930 = vpop.f32.mrf.mxu0
      %v5931 = vadd.f32 %v5770, %v5930
      %v5932 = vpop.f32.mrf.mxu0
      %5933 = vmatprep.mubr.bf16.mxu0 0
      %5934 = vmatmul.mubr.bf16.gmra.mxu0 %v5442
      %v5935 = vpop.f32.mrf.mxu0
      %v5936 = vadd.f32 %v5775, %v5935
      %v5937 = vpop.f32.mrf.mxu0
      %v5938 = vpop.f32.mrf.mxu0
      %v5939 = vadd.f32 %v5778, %v5938
      %v5940 = vpop.f32.mrf.mxu0
      %5941 = vmatprep.mubr.bf16.mxu0 0
      %5942 = vmatmul.mubr.bf16.gmra.mxu0 %v5445
      %v5943 = vpop.f32.mrf.mxu0
      %v5944 = vadd.f32 %v5783, %v5943
      %v5945 = vpop.f32.mrf.mxu0
      %v5946 = vpop.f32.mrf.mxu0
      %v5947 = vadd.f32 %v5786, %v5946
      %v5948 = vpop.f32.mrf.mxu0
      %5949 = vmatprep.mubr.bf16.mxu0 0
      %5950 = vmatmul.mubr.bf16.gmra.mxu0 %v5448
      %v5951 = vpop.f32.mrf.mxu0
      %v5952 = vadd.f32 %v5791, %v5951
      %v5953 = vpop.f32.mrf.mxu0
      %v5954 = vpop.f32.mrf.mxu0
      %v5955 = vadd.f32 %v5794, %v5954
      %v5956 = vpop.f32.mrf.mxu0
      %5957 = vmatprep.mubr.bf16.mxu0 0
      %5958 = vmatmul.mubr.bf16.gmra.mxu0 %v5451
      %v5959 = vpop.f32.mrf.mxu0
      %v5960 = vadd.f32 %v5799, %v5959
      %v5961 = vpop.f32.mrf.mxu0
      %v5962 = vpop.f32.mrf.mxu0
      %v5963 = vadd.f32 %v5802, %v5962
      %v5964 = vpop.f32.mrf.mxu0
      %5965 = vdwg.mxu0
      %v5966 = vadd.f32 %v4172, %v5840
      %v5967 = vadd.f32 %v4175, %v5843
      %v5968 = vadd.f32 %v4180, %v5848
      %v5969 = vadd.f32 %v4183, %v5851
      %v5970 = vadd.f32 %v4188, %v5856
      %v5971 = vadd.f32 %v4191, %v5859
      %v5972 = vadd.f32 %v4196, %v5864
      %v5973 = vadd.f32 %v4199, %v5867
      %v5974 = vadd.f32 %v4204, %v5872
      %v5975 = vadd.f32 %v4207, %v5875
      %v5976 = vadd.f32 %v4212, %v5880
      %v5977 = vadd.f32 %v4215, %v5883
      %v5978 = vadd.f32 %v4220, %v5888
      %v5979 = vadd.f32 %v4223, %v5891
      %v5980 = vadd.f32 %v4228, %v5896
      %v5981 = vadd.f32 %v4231, %v5899
      %v5982 = vadd.f32 %v4236, %v5904
      %v5983 = vadd.f32 %v4239, %v5907
      %v5984 = vadd.f32 %v4244, %v5912
      %v5985 = vadd.f32 %v4247, %v5915
      %v5986 = vadd.f32 %v4252, %v5920
      %v5987 = vadd.f32 %v4255, %v5923
      %v5988 = vadd.f32 %v4260, %v5928
      %v5989 = vadd.f32 %v4263, %v5931
      %v5990 = vadd.f32 %v4268, %v5936
      %v5991 = vadd.f32 %v4271, %v5939
      %v5992 = vadd.f32 %v4276, %v5944
      %v5993 = vadd.f32 %v4279, %v5947
      %v5994 = vadd.f32 %v4284, %v5952
      %v5995 = vadd.f32 %v4287, %v5955
      %v5996 = vadd.f32 %v4292, %v5960
      %v5997 = vadd.f32 %v4295, %v5963
      %v5998 = vld [vmem:[%s5] sm:$0x1]
      %v6000 = vlaneseq
      %v6001 = vshrl.u32 %v6000, 7
      %v6002 = vsub.s32 0, %v6001
      %v6003 = vrot.slane %v5998, %v6002
      %v6005 = vadd.f32 %v5966, %v6003
      %v6006 = vadd.f32 %v5967, %v6003
      %v6007 = vadd.f32 %v5968, %v6003
      %v6008 = vadd.f32 %v5969, %v6003
      %v6009 = vadd.f32 %v5970, %v6003
      %v6010 = vadd.f32 %v5971, %v6003
      %v6011 = vadd.f32 %v5972, %v6003
      %v6012 = vadd.f32 %v5973, %v6003
      %v6013 = vadd.f32 %v5974, %v6003
      %v6014 = vadd.f32 %v5975, %v6003
      %v6015 = vadd.f32 %v5976, %v6003
      %v6016 = vadd.f32 %v5977, %v6003
      %v6017 = vadd.f32 %v5978, %v6003
      %v6018 = vadd.f32 %v5979, %v6003
      %v6019 = vadd.f32 %v5980, %v6003
      %v6020 = vadd.f32 %v5981, %v6003
      %v6021 = vadd.f32 %v5982, %v6003
      %v6022 = vadd.f32 %v5983, %v6003
      %v6023 = vadd.f32 %v5984, %v6003
      %v6024 = vadd.f32 %v5985, %v6003
      %v6025 = vadd.f32 %v5986, %v6003
      %v6026 = vadd.f32 %v5987, %v6003
      %v6027 = vadd.f32 %v5988, %v6003
      %v6028 = vadd.f32 %v5989, %v6003
      %v6029 = vadd.f32 %v5990, %v6003
      %v6030 = vadd.f32 %v5991, %v6003
      %v6031 = vadd.f32 %v5992, %v6003
      %v6032 = vadd.f32 %v5993, %v6003
      %v6033 = vadd.f32 %v5994, %v6003
      %v6034 = vadd.f32 %v5995, %v6003
      %v6035 = vadd.f32 %v5996, %v6003
      %v6036 = vadd.f32 %v5997, %v6003
      %v6037 = vadd.f32 %v6005, %v6006
      %v6038 = vadd.f32 %v6037, %v6007
      %v6039 = vadd.f32 %v6038, %v6008
      %v6040 = vadd.f32 %v6039, %v6009
      %v6041 = vadd.f32 %v6040, %v6010
      %v6042 = vadd.f32 %v6041, %v6011
      %v6043 = vadd.f32 %v6042, %v6012
      %v6044 = vadd.f32 %v6043, %v6013
      %v6045 = vadd.f32 %v6044, %v6014
      %v6046 = vadd.f32 %v6045, %v6015
      %v6047 = vadd.f32 %v6046, %v6016
      %v6048 = vadd.f32 %v6047, %v6017
      %v6049 = vadd.f32 %v6048, %v6018
      %v6050 = vadd.f32 %v6049, %v6019
      %v6051 = vadd.f32 %v6050, %v6020
      %v6052 = vadd.f32 %v6051, %v6021
      %v6053 = vadd.f32 %v6052, %v6022
      %v6054 = vadd.f32 %v6053, %v6023
      %v6055 = vadd.f32 %v6054, %v6024
      %v6056 = vadd.f32 %v6055, %v6025
      %v6057 = vadd.f32 %v6056, %v6026
      %v6058 = vadd.f32 %v6057, %v6027
      %v6059 = vadd.f32 %v6058, %v6028
      %v6060 = vadd.f32 %v6059, %v6029
      %v6061 = vadd.f32 %v6060, %v6030
      %v6062 = vadd.f32 %v6061, %v6031
      %v6063 = vadd.f32 %v6062, %v6032
      %v6064 = vadd.f32 %v6063, %v6033
      %v6065 = vadd.f32 %v6064, %v6034
      %v6066 = vadd.f32 %v6065, %v6035
      %v6067 = vadd.f32 %v6066, %v6036
      %v6068 = vrot.slane %v6067, 4
      %v6069 = vadd.f32 %v6067, %v6068
      %v6070 = vrot.slane %v6069, 2
      %v6071 = vadd.f32 %v6069, %v6070
      %v6072 = vrot.slane %v6071, 1
      %v6073 = vadd.f32 %v6071, %v6072
      %v6074 = vmul.f32 %v6005, %v6005
      %v6075 = vmul.f32 %v6006, %v6006
      %v6076 = vmul.f32 %v6007, %v6007
      %v6077 = vmul.f32 %v6008, %v6008
      %v6078 = vmul.f32 %v6009, %v6009
      %v6079 = vmul.f32 %v6010, %v6010
      %v6080 = vmul.f32 %v6011, %v6011
      %v6081 = vmul.f32 %v6012, %v6012
      %v6082 = vmul.f32 %v6013, %v6013
      %v6083 = vmul.f32 %v6014, %v6014
      %v6084 = vmul.f32 %v6015, %v6015
      %v6085 = vmul.f32 %v6016, %v6016
      %v6086 = vmul.f32 %v6017, %v6017
      %v6087 = vmul.f32 %v6018, %v6018
      %v6088 = vmul.f32 %v6019, %v6019
      %v6089 = vmul.f32 %v6020, %v6020
      %v6090 = vmul.f32 %v6021, %v6021
      %v6091 = vmul.f32 %v6022, %v6022
      %v6092 = vmul.f32 %v6023, %v6023
      %v6093 = vmul.f32 %v6024, %v6024
      %v6094 = vmul.f32 %v6025, %v6025
      %v6095 = vmul.f32 %v6026, %v6026
      %v6096 = vmul.f32 %v6027, %v6027
      %v6097 = vmul.f32 %v6028, %v6028
      %v6098 = vmul.f32 %v6029, %v6029
      %v6099 = vmul.f32 %v6030, %v6030
      %v6100 = vmul.f32 %v6031, %v6031
      %v6101 = vmul.f32 %v6032, %v6032
      %v6102 = vmul.f32 %v6033, %v6033
      %v6103 = vmul.f32 %v6034, %v6034
      %v6104 = vmul.f32 %v6035, %v6035
      %v6105 = vmul.f32 %v6036, %v6036
      %v6106 = vadd.f32 %v6074, %v6075
      %v6107 = vadd.f32 %v6106, %v6076
      %v6108 = vadd.f32 %v6107, %v6077
      %v6109 = vadd.f32 %v6108, %v6078
      %v6110 = vadd.f32 %v6109, %v6079
      %v6111 = vadd.f32 %v6110, %v6080
      %v6112 = vadd.f32 %v6111, %v6081
      %v6113 = vadd.f32 %v6112, %v6082
      %v6114 = vadd.f32 %v6113, %v6083
      %v6115 = vadd.f32 %v6114, %v6084
      %v6116 = vadd.f32 %v6115, %v6085
      %v6117 = vadd.f32 %v6116, %v6086
      %v6118 = vadd.f32 %v6117, %v6087
      %v6119 = vadd.f32 %v6118, %v6088
      %v6120 = vadd.f32 %v6119, %v6089
      %v6121 = vadd.f32 %v6120, %v6090
      %v6122 = vadd.f32 %v6121, %v6091
      %v6123 = vadd.f32 %v6122, %v6092
      %v6124 = vadd.f32 %v6123, %v6093
      %v6125 = vadd.f32 %v6124, %v6094
      %v6126 = vadd.f32 %v6125, %v6095
      %v6127 = vadd.f32 %v6126, %v6096
      %v6128 = vadd.f32 %v6127, %v6097
      %v6129 = vadd.f32 %v6128, %v6098
      %v6130 = vadd.f32 %v6129, %v6099
      %v6131 = vadd.f32 %v6130, %v6100
      %v6132 = vadd.f32 %v6131, %v6101
      %v6133 = vadd.f32 %v6132, %v6102
      %v6134 = vadd.f32 %v6133, %v6103
      %v6135 = vadd.f32 %v6134, %v6104
      %v6136 = vadd.f32 %v6135, %v6105
      %v6137 = vrot.slane %v6136, 4
      %v6138 = vadd.f32 %v6136, %v6137
      %v6139 = vrot.slane %v6138, 2
      %v6140 = vadd.f32 %v6138, %v6139
      %v6141 = vrot.slane %v6140, 1
      %v6142 = vadd.f32 %v6140, %v6141
      %vm6143 = vcmask 1040384
      %v6144 = vsel %vm6143, %v6073, %v6142
      %6145 = vst [vmem:[%s290] sm:$0x3] %v6144
      %v6146 = vpack.c.bf16 %v6006, %v6005
      %v6147 = vpack.c.bf16 %v6008, %v6007
      %v6148 = vpack.c.bf16 %v6010, %v6009
      %v6149 = vpack.c.bf16 %v6012, %v6011
      %v6150 = vpack.c.bf16 %v6014, %v6013
      %v6151 = vpack.c.bf16 %v6016, %v6015
      %v6152 = vpack.c.bf16 %v6018, %v6017
      %v6153 = vpack.c.bf16 %v6020, %v6019
      %v6154 = vpack.c.bf16 %v6022, %v6021
      %v6155 = vpack.c.bf16 %v6024, %v6023
      %v6156 = vpack.c.bf16 %v6026, %v6025
      %v6157 = vpack.c.bf16 %v6028, %v6027
      %v6158 = vpack.c.bf16 %v6030, %v6029
      %v6159 = vpack.c.bf16 %v6032, %v6031
      %v6160 = vpack.c.bf16 %v6034, %v6033
      %v6161 = vpack.c.bf16 %v6036, %v6035
      %v6178 = vunpack.c.l.b16 %v6146
      %v6179 = vunpack.c.h.b16 %v6146
      %v6180 = vunpack.c.l.b16 %v6147
      %v6181 = vunpack.c.h.b16 %v6147
      %v6182 = vunpack.c.l.b16 %v6148
      %v6183 = vunpack.c.h.b16 %v6148
      %v6184 = vunpack.c.l.b16 %v6149
      %v6185 = vunpack.c.h.b16 %v6149
      %v6186 = vunpack.c.l.b16 %v6150
      %v6187 = vunpack.c.h.b16 %v6150
      %v6188 = vunpack.c.l.b16 %v6151
      %v6189 = vunpack.c.h.b16 %v6151
      %v6190 = vunpack.c.l.b16 %v6152
      %v6191 = vunpack.c.h.b16 %v6152
      %v6192 = vunpack.c.l.b16 %v6153
      %v6193 = vunpack.c.h.b16 %v6153
      %v6194 = vunpack.c.l.b16 %v6154
      %v6195 = vunpack.c.h.b16 %v6154
      %v6196 = vunpack.c.l.b16 %v6155
      %v6197 = vunpack.c.h.b16 %v6155
      %v6198 = vunpack.c.l.b16 %v6156
      %v6199 = vunpack.c.h.b16 %v6156
      %v6200 = vunpack.c.l.b16 %v6157
      %v6201 = vunpack.c.h.b16 %v6157
      %v6202 = vunpack.c.l.b16 %v6158
      %v6203 = vunpack.c.h.b16 %v6158
      %v6204 = vunpack.c.l.b16 %v6159
      %v6205 = vunpack.c.h.b16 %v6159
      %v6206 = vunpack.c.l.b16 %v6160
      %v6207 = vunpack.c.h.b16 %v6160
      %v6208 = vunpack.c.l.b16 %v6161
      %v6209 = vunpack.c.h.b16 %v6161
      %v6210 = vpack.c.b16 %v6178, %v6178
      %v6211 = vpack.c.b16 %v6179, %v6179
      %v6212 = vpack.c.b16 %v6180, %v6180
      %v6213 = vpack.c.b16 %v6181, %v6181
      %v6214 = vpack.c.b16 %v6182, %v6182
      %v6215 = vpack.c.b16 %v6183, %v6183
      %v6216 = vpack.c.b16 %v6184, %v6184
      %v6217 = vpack.c.b16 %v6185, %v6185
      %v6218 = vpack.c.b16 %v6186, %v6186
      %v6219 = vpack.c.b16 %v6187, %v6187
      %v6220 = vpack.c.b16 %v6188, %v6188
      %v6221 = vpack.c.b16 %v6189, %v6189
      %v6222 = vpack.c.b16 %v6190, %v6190
      %v6223 = vpack.c.b16 %v6191, %v6191
      %v6224 = vpack.c.b16 %v6192, %v6192
      %v6225 = vpack.c.b16 %v6193, %v6193
      %v6226 = vpack.c.b16 %v6194, %v6194
      %v6227 = vpack.c.b16 %v6195, %v6195
      %v6228 = vpack.c.b16 %v6196, %v6196
      %v6229 = vpack.c.b16 %v6197, %v6197
      %v6230 = vpack.c.b16 %v6198, %v6198
      %v6231 = vpack.c.b16 %v6199, %v6199
      %v6232 = vpack.c.b16 %v6200, %v6200
      %v6233 = vpack.c.b16 %v6201, %v6201
      %v6234 = vpack.c.b16 %v6202, %v6202
      %v6235 = vpack.c.b16 %v6203, %v6203
      %v6236 = vpack.c.b16 %v6204, %v6204
      %v6237 = vpack.c.b16 %v6205, %v6205
      %v6238 = vpack.c.b16 %v6206, %v6206
      %v6239 = vpack.c.b16 %v6207, %v6207
      %v6240 = vpack.c.b16 %v6208, %v6208
      %v6241 = vpack.c.b16 %v6209, %v6209
      %6274 = vst [vmem:[%s286] sm:$0xf] %v6210
      %6275 = vst [vmem:[%s286 + $0x4] sm:$0xf] %v6211
      %6276 = vst [vmem:[%s286 + $0x8] sm:$0xf] %v6212
      %6277 = vst [vmem:[%s286 + $0xc] sm:$0xf] %v6213
      %6278 = vst [vmem:[%s286 + $0x10] sm:$0xf] %v6214
      %6279 = vst [vmem:[%s286 + $0x14] sm:$0xf] %v6215
      %6280 = vst [vmem:[%s286 + $0x18] sm:$0xf] %v6216
      %6281 = vst [vmem:[%s286 + $0x1c] sm:$0xf] %v6217
      %6282 = vst [vmem:[%s286 + $0x20] sm:$0xf] %v6218
      %6283 = vst [vmem:[%s286 + $0x24] sm:$0xf] %v6219
      %6284 = vst [vmem:[%s286 + $0x28] sm:$0xf] %v6220
      %6285 = vst [vmem:[%s286 + $0x2c] sm:$0xf] %v6221
      %6286 = vst [vmem:[%s286 + $0x30] sm:$0xf] %v6222
      %6287 = vst [vmem:[%s286 + $0x34] sm:$0xf] %v6223
      %6288 = vst [vmem:[%s286 + $0x38] sm:$0xf] %v6224
      %6289 = vst [vmem:[%s286 + $0x3c] sm:$0xf] %v6225
      %6290 = vst [vmem:[%s286 + $0x40] sm:$0xf] %v6226
      %6291 = vst [vmem:[%s286 + $0x44] sm:$0xf] %v6227
      %6292 = vst [vmem:[%s286 + $0x48] sm:$0xf] %v6228
      %6293 = vst [vmem:[%s286 + $0x4c] sm:$0xf] %v6229
      %6294 = vst [vmem:[%s286 + $0x50] sm:$0xf] %v6230
      %6295 = vst [vmem:[%s286 + $0x54] sm:$0xf] %v6231
      %6296 = vst [vmem:[%s286 + $0x58] sm:$0xf] %v6232
      %6297 = vst [vmem:[%s286 + $0x5c] sm:$0xf] %v6233
      %6298 = vst [vmem:[%s286 + $0x60] sm:$0xf] %v6234
      %6299 = vst [vmem:[%s286 + $0x64] sm:$0xf] %v6235
      %6300 = vst [vmem:[%s286 + $0x68] sm:$0xf] %v6236
      %6301 = vst [vmem:[%s286 + $0x6c] sm:$0xf] %v6237
      %6302 = vst [vmem:[%s286 + $0x70] sm:$0xf] %v6238
      %6303 = vst [vmem:[%s286 + $0x74] sm:$0xf] %v6239
      %6304 = vst [vmem:[%s286 + $0x78] sm:$0xf] %v6240
      %6305 = vst [vmem:[%s286 + $0x7c] sm:$0xf] %v6241
      %p6306 = scmp.lt.s32.totalorder %s20, 1
      %s6307 = scalar_select %p6306, %s20, 1
      %s6308 = smul.addr %s6307, 32
      %s6309 = smul.addr %s6308, 4
      %s6310 = scalar_lea.vmem %s6, %s6309
      %p6311 = scmp.lt.s32.totalorder %s20, 1
      %s6312 = scalar_select %p6311, %s20, 1
      %s6313 = smul.addr %s6312, 2
      %s6314 = scalar_lea.vmem %s7, %s6313
      // Predicated region
      $region45: #{residual_block.4} parent=43 // pred_check
        %p6315 = pneg %p169
      $region46: #{residual_block.4} parent=43 // pred_check_branch
        %6317 = sbr.rel (%p6315) target = $region48
      $region47: #{residual_block.4} parent=43 // pred_region
        _
      $region48: #{residual_block.4} parent=43 // pred_fallthru
        _
      // Predicated region
      $region49: #{residual_block.4} parent=43 // pred_check
        %p6318 = pneg %p195
      $region50: #{residual_block.4} parent=43 // pred_check_branch
        %6320 = sbr.rel (%p6318) target = $region52
      $region51: #{residual_block.4} parent=43 // pred_region
        _
      $region52: #{residual_block.4} parent=43 // pred_fallthru
        _
    $region44: #{residual_block.4} parent=5 // pred_fallthru
      _
    %p6321 = scmp.le.s32.totalorder 2, %s15
    // Predicated region
    $region53: #{residual_block.4} parent=5 // pred_check
      %p6322 = pneg %p6321
    $region54: #{residual_block.4} parent=5 // pred_check_branch
      %6324 = sbr.rel (%p6322) target = $region56
    $region55: #{residual_block.4} parent=5 // pred_region
      %s6325 = ssub.s32 %s15, 2
      // Predicated region
      $region57: #{residual_block.4} parent=55 // pred_check
        %p6326 = pneg %p175
      $region58: #{residual_block.4} parent=55 // pred_check_branch
        %6328 = sbr.rel (%p6326) target = $region60
      $region59: #{residual_block.4} parent=55 // pred_region
        %p6329 = scmp.lt.s32.totalorder %s21, 1
        %s6330 = scalar_select %p6329, %s21, 1
        %s6331 = smul.addr %s6330, 32
        %s6332 = smul.addr %s6331, 4
        %s6333 = scalar_lea.vmem %s6, %s6332
      $region60: #{residual_block.4} parent=55 // pred_fallthru
        _
      // Predicated region
      $region61: #{residual_block.4} parent=55 // pred_check
        %p6334 = pneg %p201
      $region62: #{residual_block.4} parent=55 // pred_check_branch
        %6336 = sbr.rel (%p6334) target = $region64
      $region63: #{residual_block.4} parent=55 // pred_region
        %p6337 = scmp.lt.s32.totalorder %s21, 1
        %s6338 = scalar_select %p6337, %s21, 1
        %s6339 = smul.addr %s6338, 2
        %s6340 = scalar_lea.vmem %s7, %s6339
      $region64: #{residual_block.4} parent=55 // pred_fallthru
        _
    $region56: #{residual_block.4} parent=5 // pred_fallthru
      _
  $region6: #{residual_block.4} parent=0 // loop_footer
    %s19 = sadd.s32 1, %s15
  $region7: #{residual_block.4} parent=0 // loop_footer_branch
    %14 = sbr.rel target = $region3
  $region8: #{residual_block.4} parent=0 // loop_exit
    _

</llo_original>
